<compile_context>
chip_gen: v7x
topology: tpu7x:2x2x1
jax: 0.10.0
libtpu: 0.0.40
codegen_flags: <defaults>
</compile_context>

<pallas_src>
import jax
import jax.numpy as jnp
from jax.experimental import pallas as pl
from jax.experimental.pallas import tpu as pltpu

NEG_INF = -1000000000.0
NUM_PRED_SLOTS = 12  # hard-coded "12" in the reference forward()


def _sigmoid(v):
    # numerically-stable logistic: no inf intermediates for large |v|
    p = jnp.exp(-jnp.abs(v))
    return jnp.where(v >= 0.0, 1.0 / (1.0 + p), p / (1.0 + p))


# ----------------------------------------------------------------------------
# Fused kernel: per-batch bi-GRU (mean over time) -> 2x dense GCN -> head ->
# per-class masked log-softmax over nodes.
# ----------------------------------------------------------------------------
def _tgnn_kernel(x_ref, wih_ref, whh_ref, bx_ref, bhn_ref,
                 a_ref, w1_ref, b1_ref, w2_ref, b2_ref, wc_ref, bc_ref,
                 mask_ref, out_ref):
    """x_ref:   (T, N, F)   time-major slab for this batch
       wih_ref: (6, F, H)   input->gate weights, order [f_r, f_z, f_n, b_r, b_z, b_n]
       whh_ref: (6, H, H)   hidden->gate weights, same order
       bx_ref:  (6, 1, H)   input-side gate bias (b_ih + b_hh folded for r,z; b_ih for n)
       bhn_ref: (2, 1, H)   b_hh of the n-gate, [forward, backward]
       a_ref:   (N, N)      normalized dense adjacency
       w1/w2:   (2H, 2H); b1/b2: (1, 2H); wc: (2H, 1); bc: (1, 1)
       mask_ref:(N, C); out_ref: (1, N, 12)."""
    T, N, F = x_ref.shape
    H = whh_ref.shape[2]

    # ---- bi-GRU: input projections hoisted (one big-M matmul per gate/dir) ----
    x2d = x_ref[...].reshape(T * N, F)
    wih = wih_ref[...]
    bx = bx_ref[...]

    def proj(g):
        return (jnp.dot(x2d, wih[g], preferred_element_type=jnp.float32)
                + bx[g]).reshape(T, N, H)

    gxr_f, gxz_f, gxn_f = proj(0), proj(1), proj(2)
    gxr_b, gxz_b, gxn_b = proj(3), proj(4), proj(5)

    whh = whh_ref[...]
    bhn_f = bhn_ref[0]
    bhn_b = bhn_ref[1]

    h_f = jnp.zeros((N, H), jnp.float32)
    h_b = jnp.zeros((N, H), jnp.float32)
    acc_f = jnp.zeros((N, H), jnp.float32)
    acc_b = jnp.zeros((N, H), jnp.float32)

    # T is small & static; interleave the two independent direction chains.
    for t in range(T):
        tb = T - 1 - t
        ghr_f = jnp.dot(h_f, whh[0], preferred_element_type=jnp.float32)
        ghz_f = jnp.dot(h_f, whh[1], preferred_element_type=jnp.float32)
        ghn_f = jnp.dot(h_f, whh[2], preferred_element_type=jnp.float32) + bhn_f
        ghr_b = jnp.dot(h_b, whh[3], preferred_element_type=jnp.float32)
        ghz_b = jnp.dot(h_b, whh[4], preferred_element_type=jnp.float32)
        ghn_b = jnp.dot(h_b, whh[5], preferred_element_type=jnp.float32) + bhn_b

        r_f = _sigmoid(gxr_f[t] + ghr_f)
        z_f = _sigmoid(gxz_f[t] + ghz_f)
        n_f = jnp.tanh(gxn_f[t] + r_f * ghn_f)
        h_f = (1.0 - z_f) * n_f + z_f * h_f
        acc_f = acc_f + h_f

        r_b = _sigmoid(gxr_b[tb] + ghr_b)
        z_b = _sigmoid(gxz_b[tb] + ghz_b)
        n_b = jnp.tanh(gxn_b[tb] + r_b * ghn_b)
        h_b = (1.0 - z_b) * n_b + z_b * h_b
        acc_b = acc_b + h_b

    inv_t = 1.0 / T
    temporal = jnp.concatenate([acc_f * inv_t, acc_b * inv_t], axis=1)   # (N, 2H)

    # ---- 2x dense GCN + classifier head ----
    a = a_ref[...]
    h1 = jnp.dot(a, jnp.dot(temporal, w1_ref[...], preferred_element_type=jnp.float32),
                 preferred_element_type=jnp.float32) + b1_ref[...]
    h1 = jnp.maximum(h1, 0.0)
    h2 = jnp.dot(a, jnp.dot(h1, w2_ref[...], preferred_element_type=jnp.float32),
                 preferred_element_type=jnp.float32) + b2_ref[...]
    h2 = jnp.maximum(h2, 0.0)
    logits = jnp.dot(h2, wc_ref[...], preferred_element_type=jnp.float32) + bc_ref[...]  # (N, 1)

    # ---- per-class masked log-softmax over nodes ----
    masks = mask_ref[...]                                # (N, C)
    C = masks.shape[1]
    masked = jnp.where(masks == 0.0, NEG_INF, logits)    # broadcast (N,1) -> (N,C)
    m = jnp.max(masked, axis=0, keepdims=True)           # (1, C)
    shifted = masked - m
    lse = jnp.log(jnp.sum(jnp.exp(shifted), axis=0, keepdims=True))
    log_probs = shifted - lse                            # (N, C)

    if C < NUM_PRED_SLOTS:                               # slots >= C stay zero (as in PyTorch)
        full = jnp.concatenate(
            [log_probs, jnp.zeros((N, NUM_PRED_SLOTS - C), jnp.float32)], axis=1)
    else:
        full = log_probs
    out_ref[0] = full                                    # single full-tile store


# ----------------------------------------------------------------------------
# Wrapper: layout plumbing, gate repacking, adjacency normalization.
# ----------------------------------------------------------------------------
def temporal_gnn_forward(params, x, edges, masks, hidden_dim):
    B, N, T, F = x.shape
    H = hidden_dim
    D2 = 2 * H
    C = masks.shape[1]
    assert C <= NUM_PRED_SLOTS, "masks has more classes than the 12 prediction slots"

    # Time-major node layout so the kernel only indexes the leading (time) dim.
    x_t = jnp.transpose(x.astype(jnp.float32), (2, 0, 1, 3)).reshape(T, B * N, F)

    def gates(w):  # (*, 3H) -> [r, z, n] each (*, H)
        return [w[..., 0:H], w[..., H:2 * H], w[..., 2 * H:3 * H]]

    wih = jnp.stack(gates(params["wih_f"]) + gates(params["wih_b"]))   # (6, F, H)
    whh = jnp.stack(gates(params["whh_f"]) + gates(params["whh_b"]))   # (6, H, H)
    bih_f, bhh_f = gates(params["bih_f"]), gates(params["bhh_f"])
    bih_b, bhh_b = gates(params["bih_b"]), gates(params["bhh_b"])
    # Fold b_hh into the hoisted input projection for r,z; keep b_hh_n separate
    # (it must be scaled by r inside the recurrence).
    bx = jnp.stack([bih_f[0] + bhh_f[0], bih_f[1] + bhh_f[1], bih_f[2],
                    bih_b[0] + bhh_b[0], bih_b[1] + bhh_b[1], bih_b[2]])  # (6, 1, H)
    bhn = jnp.stack([bhh_f[2], bhh_b[2]])                                  # (2, 1, H)

    # TODO(synk): GCNConv is not defined in the reference module; assume the standard
    # dense GCN propagation  out = D^-1/2 (A + I) D^-1/2 @ X @ W + b.
    a_hat = edges.astype(jnp.float32) + jnp.eye(N, dtype=jnp.float32)
    deg = jnp.sum(a_hat, axis=1)
    d_is = jnp.where(deg > 0, 1.0 / jnp.sqrt(deg), 0.0)
    a_norm = a_hat * d_is[:, None] * d_is[None, :]

    masks_f = masks.astype(jnp.float32)

    args = [x_t, wih, whh, bx, bhn, a_norm,
            params["w1"], params["b1"], params["w2"], params["b2"],
            params["wc"], params["bc"], masks_f]

    def full_spec(shape):
        nd = len(shape)
        return pl.BlockSpec(shape, lambda b, nd=nd: (0,) * nd)

    in_specs = [pl.BlockSpec((T, N, F), lambda b: (0, b, 0))] + \
               [full_spec(a.shape) for a in args[1:]]

    preds = pl.pallas_call(
        _tgnn_kernel,
        out_shape=jax.ShapeDtypeStruct((B, N, NUM_PRED_SLOTS), jnp.float32),
        grid=(B,),
        in_specs=in_specs,
        out_specs=pl.BlockSpec((1, N, NUM_PRED_SLOTS), lambda b: (b, 0, 0)),
        compiler_params=pltpu.CompilerParams(
            dimension_semantics=("parallel",)),   # megacore split over batch on v7x
    )(*args)

    return jnp.transpose(preds, (0, 2, 1))               # (B, 12, N), matches PyTorch


# ----------------------------------------------------------------------------
# Deterministic parameter init (shapes per the module __init__)
# ----------------------------------------------------------------------------
def init_params(key, input_dim, hidden_dim):
    H = hidden_dim
    D2 = 2 * H
    ks = jax.random.split(key, 14)
    sg = 1.0 / (H ** 0.5)
    sl = 1.0 / (D2 ** 0.5)
    u = lambda k, shape, s: jax.random.uniform(k, shape, jnp.float32, -s, s)
    return dict(
        wih_f=u(ks[0], (input_dim, 3 * H), sg), whh_f=u(ks[1], (H, 3 * H), sg),
        bih_f=u(ks[2], (1, 3 * H), sg),         bhh_f=u(ks[3], (1, 3 * H), sg),
        wih_b=u(ks[4], (input_dim, 3 * H), sg), whh_b=u(ks[5], (H, 3 * H), sg),
        bih_b=u(ks[6], (1, 3 * H), sg),         bhh_b=u(ks[7], (1, 3 * H), sg),
        w1=u(ks[8], (D2, D2), sl), b1=u(ks[9], (1, D2), sl),
        w2=u(ks[10], (D2, D2), sl), b2=u(ks[11], (1, D2), sl),
        wc=u(ks[12], (D2, 1), sl), bc=u(ks[13], (1, 1), sl),
    )


# ----------------------------------------------------------------------------
# Pure-JAX reference (same semantics) for a correctness check
# ----------------------------------------------------------------------------
def reference_forward(params, x, edges, masks, hidden_dim):
    B, N, T, F = x.shape
    H = hidden_dim
    x_flat = x.reshape(B * N, T, F).astype(jnp.float32)

    def gru_dir(wih, whh, bih, bhh, reverse):
        h = jnp.zeros((B * N, H), jnp.float32)
        acc = jnp.zeros((B * N, H), jnp.float32)
        steps = range(T - 1, -1, -1) if reverse else range(T)
        for t in steps:
            gx = x_flat[:, t, :] @ wih + bih
            gh = h @ whh + bhh
            r = jax.nn.sigmoid(gx[:, :H] + gh[:, :H])
            z = jax.nn.sigmoid(gx[:, H:2 * H] + gh[:, H:2 * H])
            n = jnp.tanh(gx[:, 2 * H:] + r * gh[:, 2 * H:])
            h = (1 - z) * n + z * h
            acc = acc + h
        return acc / T

    fwd = gru_dir(params["wih_f"], params["whh_f"], params["bih_f"], params["bhh_f"], False)
    bwd = gru_dir(params["wih_b"], params["whh_b"], params["bih_b"], params["bhh_b"], True)
    temporal = jnp.concatenate([fwd, bwd], axis=1).reshape(B, N, 2 * H)

    a_hat = edges.astype(jnp.float32) + jnp.eye(N, dtype=jnp.float32)
    deg = jnp.sum(a_hat, axis=1)
    d_is = jnp.where(deg > 0, 1.0 / jnp.sqrt(deg), 0.0)
    a_norm = a_hat * d_is[:, None] * d_is[None, :]

    h1 = jax.nn.relu(jnp.einsum("nm,bmd->bnd", a_norm, temporal @ params["w1"]) + params["b1"])
    h2 = jax.nn.relu(jnp.einsum("nm,bmd->bnd", a_norm, h1 @ params["w2"]) + params["b2"])
    logits = (h2 @ params["wc"])[..., 0] + params["bc"][0, 0]   # (B, N)

    out = jnp.zeros((B, NUM_PRED_SLOTS, N), jnp.float32)
    masks_f = masks.astype(jnp.float32)
    for c in range(masks.shape[1]):
        masked = jnp.where(masks_f[None, :, c] == 0.0, NEG_INF, logits)
        out = out.at[:, c, :].set(jax.nn.log_softmax(masked, axis=1))
    return out


if __name__ == "__main__":
    B, N, T, F, H, C = 2, 8, 8, 4, 16, 3
    key = jax.random.PRNGKey(0)
    kx, ke, km, kp = jax.random.split(key, 4)

    x = jax.random.normal(kx, (B, N, T, F), jnp.float32)
    e = (jax.random.uniform(ke, (N, N)) < 0.4).astype(jnp.float32)
    edges = jnp.maximum(e, e.T) * (1.0 - jnp.eye(N, dtype=jnp.float32))
    masks = (jax.random.uniform(km, (N, C)) < 0.6).astype(jnp.float32)
    masks = masks.at[0, :].set(1.0)  # every class has at least one valid node

    params = init_params(kp, F, H)

    out = temporal_gnn_forward(params, x, edges, masks, H)
    out = jax.block_until_ready(out)

    ref = reference_forward(params, x, edges, masks, H)
    assert out.shape == (B, NUM_PRED_SLOTS, N)
    assert jnp.allclose(out, ref, rtol=1e-3, atol=1e-3), float(jnp.max(jnp.abs(out - ref)))
    print("KERNEL_OK")
</pallas_src>

<mosaic_0001>
module attributes {stable_mosaic.version = 11 : i64} {
  func.func @_tgnn_kernel(%arg0: i32, %arg1: memref<8x8x4xf32, #tpu.memory_space<vmem>>, %arg2: memref<6x4x16xf32, #tpu.memory_space<vmem>>, %arg3: memref<6x16x16xf32, #tpu.memory_space<vmem>>, %arg4: memref<6x1x16xf32, #tpu.memory_space<vmem>>, %arg5: memref<2x1x16xf32, #tpu.memory_space<vmem>>, %arg6: memref<8x8xf32, #tpu.memory_space<vmem>>, %arg7: memref<32x32xf32, #tpu.memory_space<vmem>>, %arg8: memref<1x32xf32, #tpu.memory_space<vmem>>, %arg9: memref<32x32xf32, #tpu.memory_space<vmem>>, %arg10: memref<1x32xf32, #tpu.memory_space<vmem>>, %arg11: memref<32x1xf32, #tpu.memory_space<vmem>>, %arg12: memref<1x1xf32, #tpu.memory_space<vmem>>, %arg13: memref<8x3xf32, #tpu.memory_space<vmem>>, %arg14: memref<1x8x12xf32, #tpu.memory_space<vmem>>) attributes {dimension_semantics = [#tpu.dimension_semantics<parallel>], iteration_bounds = array<i64: 2>, scalar_prefetch = 0 : i64, scratch_operands = 0 : i64, tpu.core_type = #tpu.core_type<tc>, window_params = [{transform_indices = @transform_0, window_bounds = array<i64: 8, 8, 4>}, {pipeline_mode = #tpu.pipeline_mode<synchronous>, transform_indices = @transform_1, window_bounds = array<i64: 6, 4, 16>}, {pipeline_mode = #tpu.pipeline_mode<synchronous>, transform_indices = @transform_2, window_bounds = array<i64: 6, 16, 16>}, {pipeline_mode = #tpu.pipeline_mode<synchronous>, transform_indices = @transform_3, window_bounds = array<i64: 6, 1, 16>}, {pipeline_mode = #tpu.pipeline_mode<synchronous>, transform_indices = @transform_4, window_bounds = array<i64: 2, 1, 16>}, {pipeline_mode = #tpu.pipeline_mode<synchronous>, transform_indices = @transform_5, window_bounds = array<i64: 8, 8>}, {pipeline_mode = #tpu.pipeline_mode<synchronous>, transform_indices = @transform_6, window_bounds = array<i64: 32, 32>}, {pipeline_mode = #tpu.pipeline_mode<synchronous>, transform_indices = @transform_7, window_bounds = array<i64: 1, 32>}, {pipeline_mode = #tpu.pipeline_mode<synchronous>, transform_indices = @transform_8, window_bounds = array<i64: 32, 32>}, {pipeline_mode = #tpu.pipeline_mode<synchronous>, transform_indices = @transform_9, window_bounds = array<i64: 1, 32>}, {pipeline_mode = #tpu.pipeline_mode<synchronous>, transform_indices = @transform_10, window_bounds = array<i64: 32, 1>}, {pipeline_mode = #tpu.pipeline_mode<synchronous>, transform_indices = @transform_11, window_bounds = array<i64: 1, 1>}, {pipeline_mode = #tpu.pipeline_mode<synchronous>, transform_indices = @transform_12, window_bounds = array<i64: 8, 3>}, {transform_indices = @transform_13, window_bounds = array<i64: 1, 8, 12>}]} {
    %c0 = arith.constant 0 : index
    %c0_0 = arith.constant 0 : index
    %c0_1 = arith.constant 0 : index
    %0 = vector.load %arg1[%c0, %c0_0, %c0_1] : memref<8x8x4xf32, #tpu.memory_space<vmem>>, vector<8x8x4xf32>
    %1 = vector.shape_cast %0 : vector<8x8x4xf32> to vector<64x4xf32>
    %c0_2 = arith.constant 0 : index
    %c0_3 = arith.constant 0 : index
    %c0_4 = arith.constant 0 : index
    %2 = vector.load %arg2[%c0_2, %c0_3, %c0_4] : memref<6x4x16xf32, #tpu.memory_space<vmem>>, vector<6x4x16xf32>
    %c0_5 = arith.constant 0 : index
    %c0_6 = arith.constant 0 : index
    %c0_7 = arith.constant 0 : index
    %3 = vector.load %arg4[%c0_5, %c0_6, %c0_7] : memref<6x1x16xf32, #tpu.memory_space<vmem>>, vector<6x1x16xf32>
    %4 = vector.extract_strided_slice %2 {offsets = [0, 0, 0], sizes = [1, 4, 16], strides = [1, 1, 1]} : vector<6x4x16xf32> to vector<1x4x16xf32>
    %5 = vector.shape_cast %4 : vector<1x4x16xf32> to vector<4x16xf32>
    %cst = arith.constant dense<0.000000e+00> : vector<64x16xf32>
    %6 = tpu.matmul %1, %5, %cst {dimension_numbers = #tpu.dot_dimension_numbers<[1], [0], [0], [1], [0, 0, 1, 1], [], []>} : vector<64x4xf32>, vector<4x16xf32>, vector<64x16xf32> -> vector<64x16xf32>
    %7 = vector.extract_strided_slice %3 {offsets = [0, 0, 0], sizes = [1, 1, 16], strides = [1, 1, 1]} : vector<6x1x16xf32> to vector<1x1x16xf32>
    %8 = vector.shape_cast %7 : vector<1x1x16xf32> to vector<1x16xf32>
    %9 = vector.broadcast %8 : vector<1x16xf32> to vector<64x16xf32>
    %10 = arith.addf %6, %9 : vector<64x16xf32>
    %11 = vector.shape_cast %10 : vector<64x16xf32> to vector<8x8x16xf32>
    %12 = vector.extract_strided_slice %2 {offsets = [1, 0, 0], sizes = [1, 4, 16], strides = [1, 1, 1]} : vector<6x4x16xf32> to vector<1x4x16xf32>
    %13 = vector.shape_cast %12 : vector<1x4x16xf32> to vector<4x16xf32>
    %cst_8 = arith.constant dense<0.000000e+00> : vector<64x16xf32>
    %14 = tpu.matmul %1, %13, %cst_8 {dimension_numbers = #tpu.dot_dimension_numbers<[1], [0], [0], [1], [0, 0, 1, 1], [], []>} : vector<64x4xf32>, vector<4x16xf32>, vector<64x16xf32> -> vector<64x16xf32>
    %15 = vector.extract_strided_slice %3 {offsets = [1, 0, 0], sizes = [1, 1, 16], strides = [1, 1, 1]} : vector<6x1x16xf32> to vector<1x1x16xf32>
    %16 = vector.shape_cast %15 : vector<1x1x16xf32> to vector<1x16xf32>
    %17 = vector.broadcast %16 : vector<1x16xf32> to vector<64x16xf32>
    %18 = arith.addf %14, %17 : vector<64x16xf32>
    %19 = vector.shape_cast %18 : vector<64x16xf32> to vector<8x8x16xf32>
    %20 = vector.extract_strided_slice %2 {offsets = [2, 0, 0], sizes = [1, 4, 16], strides = [1, 1, 1]} : vector<6x4x16xf32> to vector<1x4x16xf32>
    %21 = vector.shape_cast %20 : vector<1x4x16xf32> to vector<4x16xf32>
    %cst_9 = arith.constant dense<0.000000e+00> : vector<64x16xf32>
    %22 = tpu.matmul %1, %21, %cst_9 {dimension_numbers = #tpu.dot_dimension_numbers<[1], [0], [0], [1], [0, 0, 1, 1], [], []>} : vector<64x4xf32>, vector<4x16xf32>, vector<64x16xf32> -> vector<64x16xf32>
    %23 = vector.extract_strided_slice %3 {offsets = [2, 0, 0], sizes = [1, 1, 16], strides = [1, 1, 1]} : vector<6x1x16xf32> to vector<1x1x16xf32>
    %24 = vector.shape_cast %23 : vector<1x1x16xf32> to vector<1x16xf32>
    %25 = vector.broadcast %24 : vector<1x16xf32> to vector<64x16xf32>
    %26 = arith.addf %22, %25 : vector<64x16xf32>
    %27 = vector.shape_cast %26 : vector<64x16xf32> to vector<8x8x16xf32>
    %28 = vector.extract_strided_slice %2 {offsets = [3, 0, 0], sizes = [1, 4, 16], strides = [1, 1, 1]} : vector<6x4x16xf32> to vector<1x4x16xf32>
    %29 = vector.shape_cast %28 : vector<1x4x16xf32> to vector<4x16xf32>
    %cst_10 = arith.constant dense<0.000000e+00> : vector<64x16xf32>
    %30 = tpu.matmul %1, %29, %cst_10 {dimension_numbers = #tpu.dot_dimension_numbers<[1], [0], [0], [1], [0, 0, 1, 1], [], []>} : vector<64x4xf32>, vector<4x16xf32>, vector<64x16xf32> -> vector<64x16xf32>
    %31 = vector.extract_strided_slice %3 {offsets = [3, 0, 0], sizes = [1, 1, 16], strides = [1, 1, 1]} : vector<6x1x16xf32> to vector<1x1x16xf32>
    %32 = vector.shape_cast %31 : vector<1x1x16xf32> to vector<1x16xf32>
    %33 = vector.broadcast %32 : vector<1x16xf32> to vector<64x16xf32>
    %34 = arith.addf %30, %33 : vector<64x16xf32>
    %35 = vector.shape_cast %34 : vector<64x16xf32> to vector<8x8x16xf32>
    %36 = vector.extract_strided_slice %2 {offsets = [4, 0, 0], sizes = [1, 4, 16], strides = [1, 1, 1]} : vector<6x4x16xf32> to vector<1x4x16xf32>
    %37 = vector.shape_cast %36 : vector<1x4x16xf32> to vector<4x16xf32>
    %cst_11 = arith.constant dense<0.000000e+00> : vector<64x16xf32>
    %38 = tpu.matmul %1, %37, %cst_11 {dimension_numbers = #tpu.dot_dimension_numbers<[1], [0], [0], [1], [0, 0, 1, 1], [], []>} : vector<64x4xf32>, vector<4x16xf32>, vector<64x16xf32> -> vector<64x16xf32>
    %39 = vector.extract_strided_slice %3 {offsets = [4, 0, 0], sizes = [1, 1, 16], strides = [1, 1, 1]} : vector<6x1x16xf32> to vector<1x1x16xf32>
    %40 = vector.shape_cast %39 : vector<1x1x16xf32> to vector<1x16xf32>
    %41 = vector.broadcast %40 : vector<1x16xf32> to vector<64x16xf32>
    %42 = arith.addf %38, %41 : vector<64x16xf32>
    %43 = vector.shape_cast %42 : vector<64x16xf32> to vector<8x8x16xf32>
    %44 = vector.extract_strided_slice %2 {offsets = [5, 0, 0], sizes = [1, 4, 16], strides = [1, 1, 1]} : vector<6x4x16xf32> to vector<1x4x16xf32>
    %45 = vector.shape_cast %44 : vector<1x4x16xf32> to vector<4x16xf32>
    %cst_12 = arith.constant dense<0.000000e+00> : vector<64x16xf32>
    %46 = tpu.matmul %1, %45, %cst_12 {dimension_numbers = #tpu.dot_dimension_numbers<[1], [0], [0], [1], [0, 0, 1, 1], [], []>} : vector<64x4xf32>, vector<4x16xf32>, vector<64x16xf32> -> vector<64x16xf32>
    %47 = vector.extract_strided_slice %3 {offsets = [5, 0, 0], sizes = [1, 1, 16], strides = [1, 1, 1]} : vector<6x1x16xf32> to vector<1x1x16xf32>
    %48 = vector.shape_cast %47 : vector<1x1x16xf32> to vector<1x16xf32>
    %49 = vector.broadcast %48 : vector<1x16xf32> to vector<64x16xf32>
    %50 = arith.addf %46, %49 : vector<64x16xf32>
    %51 = vector.shape_cast %50 : vector<64x16xf32> to vector<8x8x16xf32>
    %c0_13 = arith.constant 0 : index
    %c0_14 = arith.constant 0 : index
    %c0_15 = arith.constant 0 : index
    %52 = vector.load %arg3[%c0_13, %c0_14, %c0_15] : memref<6x16x16xf32, #tpu.memory_space<vmem>>, vector<6x16x16xf32>
    %c0_16 = arith.constant 0 : index
    %c0_17 = arith.constant 0 : index
    %c0_18 = arith.constant 0 : index
    %53 = vector.load %arg5[%c0_16, %c0_17, %c0_18] : memref<2x1x16xf32, #tpu.memory_space<vmem>>, vector<1x1x16xf32>
    %54 = vector.shape_cast %53 : vector<1x1x16xf32> to vector<1x16xf32>
    %c1 = arith.constant 1 : index
    %c0_19 = arith.constant 0 : index
    %c0_20 = arith.constant 0 : index
    %55 = vector.load %arg5[%c1, %c0_19, %c0_20] : memref<2x1x16xf32, #tpu.memory_space<vmem>>, vector<1x1x16xf32>
    %56 = vector.shape_cast %55 : vector<1x1x16xf32> to vector<1x16xf32>
    %cst_21 = arith.constant 0.000000e+00 : f32
    %57 = vector.broadcast %cst_21 : f32 to vector<8x16xf32>
    %cst_22 = arith.constant 0.000000e+00 : f32
    %58 = vector.broadcast %cst_22 : f32 to vector<8x16xf32>
    %cst_23 = arith.constant 0.000000e+00 : f32
    %59 = vector.broadcast %cst_23 : f32 to vector<8x16xf32>
    %cst_24 = arith.constant 0.000000e+00 : f32
    %60 = vector.broadcast %cst_24 : f32 to vector<8x16xf32>
    %61 = vector.extract_strided_slice %52 {offsets = [0, 0, 0], sizes = [1, 16, 16], strides = [1, 1, 1]} : vector<6x16x16xf32> to vector<1x16x16xf32>
    %62 = vector.shape_cast %61 : vector<1x16x16xf32> to vector<16x16xf32>
    %cst_25 = arith.constant dense<0.000000e+00> : vector<8x16xf32>
    %63 = tpu.matmul %57, %62, %cst_25 {dimension_numbers = #tpu.dot_dimension_numbers<[1], [0], [0], [1], [0, 0, 1, 1], [], []>} : vector<8x16xf32>, vector<16x16xf32>, vector<8x16xf32> -> vector<8x16xf32>
    %64 = vector.extract_strided_slice %52 {offsets = [1, 0, 0], sizes = [1, 16, 16], strides = [1, 1, 1]} : vector<6x16x16xf32> to vector<1x16x16xf32>
    %65 = vector.shape_cast %64 : vector<1x16x16xf32> to vector<16x16xf32>
    %cst_26 = arith.constant dense<0.000000e+00> : vector<8x16xf32>
    %66 = tpu.matmul %57, %65, %cst_26 {dimension_numbers = #tpu.dot_dimension_numbers<[1], [0], [0], [1], [0, 0, 1, 1], [], []>} : vector<8x16xf32>, vector<16x16xf32>, vector<8x16xf32> -> vector<8x16xf32>
    %67 = vector.extract_strided_slice %52 {offsets = [2, 0, 0], sizes = [1, 16, 16], strides = [1, 1, 1]} : vector<6x16x16xf32> to vector<1x16x16xf32>
    %68 = vector.shape_cast %67 : vector<1x16x16xf32> to vector<16x16xf32>
    %cst_27 = arith.constant dense<0.000000e+00> : vector<8x16xf32>
    %69 = tpu.matmul %57, %68, %cst_27 {dimension_numbers = #tpu.dot_dimension_numbers<[1], [0], [0], [1], [0, 0, 1, 1], [], []>} : vector<8x16xf32>, vector<16x16xf32>, vector<8x16xf32> -> vector<8x16xf32>
    %70 = vector.broadcast %54 : vector<1x16xf32> to vector<8x16xf32>
    %71 = arith.addf %69, %70 : vector<8x16xf32>
    %72 = vector.extract_strided_slice %52 {offsets = [3, 0, 0], sizes = [1, 16, 16], strides = [1, 1, 1]} : vector<6x16x16xf32> to vector<1x16x16xf32>
    %73 = vector.shape_cast %72 : vector<1x16x16xf32> to vector<16x16xf32>
    %cst_28 = arith.constant dense<0.000000e+00> : vector<8x16xf32>
    %74 = tpu.matmul %58, %73, %cst_28 {dimension_numbers = #tpu.dot_dimension_numbers<[1], [0], [0], [1], [0, 0, 1, 1], [], []>} : vector<8x16xf32>, vector<16x16xf32>, vector<8x16xf32> -> vector<8x16xf32>
    %75 = vector.extract_strided_slice %52 {offsets = [4, 0, 0], sizes = [1, 16, 16], strides = [1, 1, 1]} : vector<6x16x16xf32> to vector<1x16x16xf32>
    %76 = vector.shape_cast %75 : vector<1x16x16xf32> to vector<16x16xf32>
    %cst_29 = arith.constant dense<0.000000e+00> : vector<8x16xf32>
    %77 = tpu.matmul %58, %76, %cst_29 {dimension_numbers = #tpu.dot_dimension_numbers<[1], [0], [0], [1], [0, 0, 1, 1], [], []>} : vector<8x16xf32>, vector<16x16xf32>, vector<8x16xf32> -> vector<8x16xf32>
    %78 = vector.extract_strided_slice %52 {offsets = [5, 0, 0], sizes = [1, 16, 16], strides = [1, 1, 1]} : vector<6x16x16xf32> to vector<1x16x16xf32>
    %79 = vector.shape_cast %78 : vector<1x16x16xf32> to vector<16x16xf32>
    %cst_30 = arith.constant dense<0.000000e+00> : vector<8x16xf32>
    %80 = tpu.matmul %58, %79, %cst_30 {dimension_numbers = #tpu.dot_dimension_numbers<[1], [0], [0], [1], [0, 0, 1, 1], [], []>} : vector<8x16xf32>, vector<16x16xf32>, vector<8x16xf32> -> vector<8x16xf32>
    %81 = vector.broadcast %56 : vector<1x16xf32> to vector<8x16xf32>
    %82 = arith.addf %80, %81 : vector<8x16xf32>
    %83 = vector.extract_strided_slice %11 {offsets = [0, 0, 0], sizes = [1, 8, 16], strides = [1, 1, 1]} : vector<8x8x16xf32> to vector<1x8x16xf32>
    %84 = vector.shape_cast %83 : vector<1x8x16xf32> to vector<8x16xf32>
    %85 = arith.addf %84, %63 : vector<8x16xf32>
    %86 = math.absf %85 : vector<8x16xf32>
    %cst_31 = arith.constant 0.000000e+00 : f32
    %87 = vector.broadcast %cst_31 : f32 to vector<8x16xf32>
    %88 = arith.subf %87, %86 : vector<8x16xf32>
    %89 = math.exp %88 : vector<8x16xf32>
    %cst_32 = arith.constant 0.000000e+00 : f32
    %90 = vector.broadcast %cst_32 : f32 to vector<8x16xf32>
    %91 = arith.cmpf oge, %85, %90 : vector<8x16xf32>
    %cst_33 = arith.constant 1.000000e+00 : f32
    %92 = vector.broadcast %cst_33 : f32 to vector<8x16xf32>
    %93 = arith.addf %92, %89 : vector<8x16xf32>
    %cst_34 = arith.constant 1.000000e+00 : f32
    %94 = vector.broadcast %cst_34 : f32 to vector<8x16xf32>
    %95 = arith.divf %94, %93 : vector<8x16xf32>
    %cst_35 = arith.constant 1.000000e+00 : f32
    %96 = vector.broadcast %cst_35 : f32 to vector<8x16xf32>
    %97 = arith.addf %96, %89 : vector<8x16xf32>
    %98 = arith.divf %89, %97 : vector<8x16xf32>
    %99 = arith.select %91, %95, %98 : vector<8x16xi1>, vector<8x16xf32>
    %100 = vector.extract_strided_slice %19 {offsets = [0, 0, 0], sizes = [1, 8, 16], strides = [1, 1, 1]} : vector<8x8x16xf32> to vector<1x8x16xf32>
    %101 = vector.shape_cast %100 : vector<1x8x16xf32> to vector<8x16xf32>
    %102 = arith.addf %101, %66 : vector<8x16xf32>
    %103 = math.absf %102 : vector<8x16xf32>
    %cst_36 = arith.constant 0.000000e+00 : f32
    %104 = vector.broadcast %cst_36 : f32 to vector<8x16xf32>
    %105 = arith.subf %104, %103 : vector<8x16xf32>
    %106 = math.exp %105 : vector<8x16xf32>
    %cst_37 = arith.constant 0.000000e+00 : f32
    %107 = vector.broadcast %cst_37 : f32 to vector<8x16xf32>
    %108 = arith.cmpf oge, %102, %107 : vector<8x16xf32>
    %cst_38 = arith.constant 1.000000e+00 : f32
    %109 = vector.broadcast %cst_38 : f32 to vector<8x16xf32>
    %110 = arith.addf %109, %106 : vector<8x16xf32>
    %cst_39 = arith.constant 1.000000e+00 : f32
    %111 = vector.broadcast %cst_39 : f32 to vector<8x16xf32>
    %112 = arith.divf %111, %110 : vector<8x16xf32>
    %cst_40 = arith.constant 1.000000e+00 : f32
    %113 = vector.broadcast %cst_40 : f32 to vector<8x16xf32>
    %114 = arith.addf %113, %106 : vector<8x16xf32>
    %115 = arith.divf %106, %114 : vector<8x16xf32>
    %116 = arith.select %108, %112, %115 : vector<8x16xi1>, vector<8x16xf32>
    %117 = vector.extract_strided_slice %27 {offsets = [0, 0, 0], sizes = [1, 8, 16], strides = [1, 1, 1]} : vector<8x8x16xf32> to vector<1x8x16xf32>
    %118 = vector.shape_cast %117 : vector<1x8x16xf32> to vector<8x16xf32>
    %119 = arith.mulf %99, %71 : vector<8x16xf32>
    %120 = arith.addf %118, %119 : vector<8x16xf32>
    %121 = math.tanh %120 : vector<8x16xf32>
    %cst_41 = arith.constant 1.000000e+00 : f32
    %122 = vector.broadcast %cst_41 : f32 to vector<8x16xf32>
    %123 = arith.subf %122, %116 : vector<8x16xf32>
    %124 = arith.mulf %123, %121 : vector<8x16xf32>
    %125 = arith.mulf %116, %57 : vector<8x16xf32>
    %126 = arith.addf %124, %125 : vector<8x16xf32>
    %127 = arith.addf %59, %126 : vector<8x16xf32>
    %128 = vector.extract_strided_slice %35 {offsets = [7, 0, 0], sizes = [1, 8, 16], strides = [1, 1, 1]} : vector<8x8x16xf32> to vector<1x8x16xf32>
    %129 = vector.shape_cast %128 : vector<1x8x16xf32> to vector<8x16xf32>
    %130 = arith.addf %129, %74 : vector<8x16xf32>
    %131 = math.absf %130 : vector<8x16xf32>
    %cst_42 = arith.constant 0.000000e+00 : f32
    %132 = vector.broadcast %cst_42 : f32 to vector<8x16xf32>
    %133 = arith.subf %132, %131 : vector<8x16xf32>
    %134 = math.exp %133 : vector<8x16xf32>
    %cst_43 = arith.constant 0.000000e+00 : f32
    %135 = vector.broadcast %cst_43 : f32 to vector<8x16xf32>
    %136 = arith.cmpf oge, %130, %135 : vector<8x16xf32>
    %cst_44 = arith.constant 1.000000e+00 : f32
    %137 = vector.broadcast %cst_44 : f32 to vector<8x16xf32>
    %138 = arith.addf %137, %134 : vector<8x16xf32>
    %cst_45 = arith.constant 1.000000e+00 : f32
    %139 = vector.broadcast %cst_45 : f32 to vector<8x16xf32>
    %140 = arith.divf %139, %138 : vector<8x16xf32>
    %cst_46 = arith.constant 1.000000e+00 : f32
    %141 = vector.broadcast %cst_46 : f32 to vector<8x16xf32>
    %142 = arith.addf %141, %134 : vector<8x16xf32>
    %143 = arith.divf %134, %142 : vector<8x16xf32>
    %144 = arith.select %136, %140, %143 : vector<8x16xi1>, vector<8x16xf32>
    %145 = vector.extract_strided_slice %43 {offsets = [7, 0, 0], sizes = [1, 8, 16], strides = [1, 1, 1]} : vector<8x8x16xf32> to vector<1x8x16xf32>
    %146 = vector.shape_cast %145 : vector<1x8x16xf32> to vector<8x16xf32>
    %147 = arith.addf %146, %77 : vector<8x16xf32>
    %148 = math.absf %147 : vector<8x16xf32>
    %cst_47 = arith.constant 0.000000e+00 : f32
    %149 = vector.broadcast %cst_47 : f32 to vector<8x16xf32>
    %150 = arith.subf %149, %148 : vector<8x16xf32>
    %151 = math.exp %150 : vector<8x16xf32>
    %cst_48 = arith.constant 0.000000e+00 : f32
    %152 = vector.broadcast %cst_48 : f32 to vector<8x16xf32>
    %153 = arith.cmpf oge, %147, %152 : vector<8x16xf32>
    %cst_49 = arith.constant 1.000000e+00 : f32
    %154 = vector.broadcast %cst_49 : f32 to vector<8x16xf32>
    %155 = arith.addf %154, %151 : vector<8x16xf32>
    %cst_50 = arith.constant 1.000000e+00 : f32
    %156 = vector.broadcast %cst_50 : f32 to vector<8x16xf32>
    %157 = arith.divf %156, %155 : vector<8x16xf32>
    %cst_51 = arith.constant 1.000000e+00 : f32
    %158 = vector.broadcast %cst_51 : f32 to vector<8x16xf32>
    %159 = arith.addf %158, %151 : vector<8x16xf32>
    %160 = arith.divf %151, %159 : vector<8x16xf32>
    %161 = arith.select %153, %157, %160 : vector<8x16xi1>, vector<8x16xf32>
    %162 = vector.extract_strided_slice %51 {offsets = [7, 0, 0], sizes = [1, 8, 16], strides = [1, 1, 1]} : vector<8x8x16xf32> to vector<1x8x16xf32>
    %163 = vector.shape_cast %162 : vector<1x8x16xf32> to vector<8x16xf32>
    %164 = arith.mulf %144, %82 : vector<8x16xf32>
    %165 = arith.addf %163, %164 : vector<8x16xf32>
    %166 = math.tanh %165 : vector<8x16xf32>
    %cst_52 = arith.constant 1.000000e+00 : f32
    %167 = vector.broadcast %cst_52 : f32 to vector<8x16xf32>
    %168 = arith.subf %167, %161 : vector<8x16xf32>
    %169 = arith.mulf %168, %166 : vector<8x16xf32>
    %170 = arith.mulf %161, %58 : vector<8x16xf32>
    %171 = arith.addf %169, %170 : vector<8x16xf32>
    %172 = arith.addf %60, %171 : vector<8x16xf32>
    %173 = vector.extract_strided_slice %52 {offsets = [0, 0, 0], sizes = [1, 16, 16], strides = [1, 1, 1]} : vector<6x16x16xf32> to vector<1x16x16xf32>
    %174 = vector.shape_cast %173 : vector<1x16x16xf32> to vector<16x16xf32>
    %cst_53 = arith.constant dense<0.000000e+00> : vector<8x16xf32>
    %175 = tpu.matmul %126, %174, %cst_53 {dimension_numbers = #tpu.dot_dimension_numbers<[1], [0], [0], [1], [0, 0, 1, 1], [], []>} : vector<8x16xf32>, vector<16x16xf32>, vector<8x16xf32> -> vector<8x16xf32>
    %176 = vector.extract_strided_slice %52 {offsets = [1, 0, 0], sizes = [1, 16, 16], strides = [1, 1, 1]} : vector<6x16x16xf32> to vector<1x16x16xf32>
    %177 = vector.shape_cast %176 : vector<1x16x16xf32> to vector<16x16xf32>
    %cst_54 = arith.constant dense<0.000000e+00> : vector<8x16xf32>
    %178 = tpu.matmul %126, %177, %cst_54 {dimension_numbers = #tpu.dot_dimension_numbers<[1], [0], [0], [1], [0, 0, 1, 1], [], []>} : vector<8x16xf32>, vector<16x16xf32>, vector<8x16xf32> -> vector<8x16xf32>
    %179 = vector.extract_strided_slice %52 {offsets = [2, 0, 0], sizes = [1, 16, 16], strides = [1, 1, 1]} : vector<6x16x16xf32> to vector<1x16x16xf32>
    %180 = vector.shape_cast %179 : vector<1x16x16xf32> to vector<16x16xf32>
    %cst_55 = arith.constant dense<0.000000e+00> : vector<8x16xf32>
    %181 = tpu.matmul %126, %180, %cst_55 {dimension_numbers = #tpu.dot_dimension_numbers<[1], [0], [0], [1], [0, 0, 1, 1], [], []>} : vector<8x16xf32>, vector<16x16xf32>, vector<8x16xf32> -> vector<8x16xf32>
    %182 = vector.broadcast %54 : vector<1x16xf32> to vector<8x16xf32>
    %183 = arith.addf %181, %182 : vector<8x16xf32>
    %184 = vector.extract_strided_slice %52 {offsets = [3, 0, 0], sizes = [1, 16, 16], strides = [1, 1, 1]} : vector<6x16x16xf32> to vector<1x16x16xf32>
    %185 = vector.shape_cast %184 : vector<1x16x16xf32> to vector<16x16xf32>
    %cst_56 = arith.constant dense<0.000000e+00> : vector<8x16xf32>
    %186 = tpu.matmul %171, %185, %cst_56 {dimension_numbers = #tpu.dot_dimension_numbers<[1], [0], [0], [1], [0, 0, 1, 1], [], []>} : vector<8x16xf32>, vector<16x16xf32>, vector<8x16xf32> -> vector<8x16xf32>
    %187 = vector.extract_strided_slice %52 {offsets = [4, 0, 0], sizes = [1, 16, 16], strides = [1, 1, 1]} : vector<6x16x16xf32> to vector<1x16x16xf32>
    %188 = vector.shape_cast %187 : vector<1x16x16xf32> to vector<16x16xf32>
    %cst_57 = arith.constant dense<0.000000e+00> : vector<8x16xf32>
    %189 = tpu.matmul %171, %188, %cst_57 {dimension_numbers = #tpu.dot_dimension_numbers<[1], [0], [0], [1], [0, 0, 1, 1], [], []>} : vector<8x16xf32>, vector<16x16xf32>, vector<8x16xf32> -> vector<8x16xf32>
    %190 = vector.extract_strided_slice %52 {offsets = [5, 0, 0], sizes = [1, 16, 16], strides = [1, 1, 1]} : vector<6x16x16xf32> to vector<1x16x16xf32>
    %191 = vector.shape_cast %190 : vector<1x16x16xf32> to vector<16x16xf32>
    %cst_58 = arith.constant dense<0.000000e+00> : vector<8x16xf32>
    %192 = tpu.matmul %171, %191, %cst_58 {dimension_numbers = #tpu.dot_dimension_numbers<[1], [0], [0], [1], [0, 0, 1, 1], [], []>} : vector<8x16xf32>, vector<16x16xf32>, vector<8x16xf32> -> vector<8x16xf32>
    %193 = vector.broadcast %56 : vector<1x16xf32> to vector<8x16xf32>
    %194 = arith.addf %192, %193 : vector<8x16xf32>
    %195 = vector.extract_strided_slice %11 {offsets = [1, 0, 0], sizes = [1, 8, 16], strides = [1, 1, 1]} : vector<8x8x16xf32> to vector<1x8x16xf32>
    %196 = vector.shape_cast %195 : vector<1x8x16xf32> to vector<8x16xf32>
    %197 = arith.addf %196, %175 : vector<8x16xf32>
    %198 = math.absf %197 : vector<8x16xf32>
    %cst_59 = arith.constant 0.000000e+00 : f32
    %199 = vector.broadcast %cst_59 : f32 to vector<8x16xf32>
    %200 = arith.subf %199, %198 : vector<8x16xf32>
    %201 = math.exp %200 : vector<8x16xf32>
    %cst_60 = arith.constant 0.000000e+00 : f32
    %202 = vector.broadcast %cst_60 : f32 to vector<8x16xf32>
    %203 = arith.cmpf oge, %197, %202 : vector<8x16xf32>
    %cst_61 = arith.constant 1.000000e+00 : f32
    %204 = vector.broadcast %cst_61 : f32 to vector<8x16xf32>
    %205 = arith.addf %204, %201 : vector<8x16xf32>
    %cst_62 = arith.constant 1.000000e+00 : f32
    %206 = vector.broadcast %cst_62 : f32 to vector<8x16xf32>
    %207 = arith.divf %206, %205 : vector<8x16xf32>
    %cst_63 = arith.constant 1.000000e+00 : f32
    %208 = vector.broadcast %cst_63 : f32 to vector<8x16xf32>
    %209 = arith.addf %208, %201 : vector<8x16xf32>
    %210 = arith.divf %201, %209 : vector<8x16xf32>
    %211 = arith.select %203, %207, %210 : vector<8x16xi1>, vector<8x16xf32>
    %212 = vector.extract_strided_slice %19 {offsets = [1, 0, 0], sizes = [1, 8, 16], strides = [1, 1, 1]} : vector<8x8x16xf32> to vector<1x8x16xf32>
    %213 = vector.shape_cast %212 : vector<1x8x16xf32> to vector<8x16xf32>
    %214 = arith.addf %213, %178 : vector<8x16xf32>
    %215 = math.absf %214 : vector<8x16xf32>
    %cst_64 = arith.constant 0.000000e+00 : f32
    %216 = vector.broadcast %cst_64 : f32 to vector<8x16xf32>
    %217 = arith.subf %216, %215 : vector<8x16xf32>
    %218 = math.exp %217 : vector<8x16xf32>
    %cst_65 = arith.constant 0.000000e+00 : f32
    %219 = vector.broadcast %cst_65 : f32 to vector<8x16xf32>
    %220 = arith.cmpf oge, %214, %219 : vector<8x16xf32>
    %cst_66 = arith.constant 1.000000e+00 : f32
    %221 = vector.broadcast %cst_66 : f32 to vector<8x16xf32>
    %222 = arith.addf %221, %218 : vector<8x16xf32>
    %cst_67 = arith.constant 1.000000e+00 : f32
    %223 = vector.broadcast %cst_67 : f32 to vector<8x16xf32>
    %224 = arith.divf %223, %222 : vector<8x16xf32>
    %cst_68 = arith.constant 1.000000e+00 : f32
    %225 = vector.broadcast %cst_68 : f32 to vector<8x16xf32>
    %226 = arith.addf %225, %218 : vector<8x16xf32>
    %227 = arith.divf %218, %226 : vector<8x16xf32>
    %228 = arith.select %220, %224, %227 : vector<8x16xi1>, vector<8x16xf32>
    %229 = vector.extract_strided_slice %27 {offsets = [1, 0, 0], sizes = [1, 8, 16], strides = [1, 1, 1]} : vector<8x8x16xf32> to vector<1x8x16xf32>
    %230 = vector.shape_cast %229 : vector<1x8x16xf32> to vector<8x16xf32>
    %231 = arith.mulf %211, %183 : vector<8x16xf32>
    %232 = arith.addf %230, %231 : vector<8x16xf32>
    %233 = math.tanh %232 : vector<8x16xf32>
    %cst_69 = arith.constant 1.000000e+00 : f32
    %234 = vector.broadcast %cst_69 : f32 to vector<8x16xf32>
    %235 = arith.subf %234, %228 : vector<8x16xf32>
    %236 = arith.mulf %235, %233 : vector<8x16xf32>
    %237 = arith.mulf %228, %126 : vector<8x16xf32>
    %238 = arith.addf %236, %237 : vector<8x16xf32>
    %239 = arith.addf %127, %238 : vector<8x16xf32>
    %240 = vector.extract_strided_slice %35 {offsets = [6, 0, 0], sizes = [1, 8, 16], strides = [1, 1, 1]} : vector<8x8x16xf32> to vector<1x8x16xf32>
    %241 = vector.shape_cast %240 : vector<1x8x16xf32> to vector<8x16xf32>
    %242 = arith.addf %241, %186 : vector<8x16xf32>
    %243 = math.absf %242 : vector<8x16xf32>
    %cst_70 = arith.constant 0.000000e+00 : f32
    %244 = vector.broadcast %cst_70 : f32 to vector<8x16xf32>
    %245 = arith.subf %244, %243 : vector<8x16xf32>
    %246 = math.exp %245 : vector<8x16xf32>
    %cst_71 = arith.constant 0.000000e+00 : f32
    %247 = vector.broadcast %cst_71 : f32 to vector<8x16xf32>
    %248 = arith.cmpf oge, %242, %247 : vector<8x16xf32>
    %cst_72 = arith.constant 1.000000e+00 : f32
    %249 = vector.broadcast %cst_72 : f32 to vector<8x16xf32>
    %250 = arith.addf %249, %246 : vector<8x16xf32>
    %cst_73 = arith.constant 1.000000e+00 : f32
    %251 = vector.broadcast %cst_73 : f32 to vector<8x16xf32>
    %252 = arith.divf %251, %250 : vector<8x16xf32>
    %cst_74 = arith.constant 1.000000e+00 : f32
    %253 = vector.broadcast %cst_74 : f32 to vector<8x16xf32>
    %254 = arith.addf %253, %246 : vector<8x16xf32>
    %255 = arith.divf %246, %254 : vector<8x16xf32>
    %256 = arith.select %248, %252, %255 : vector<8x16xi1>, vector<8x16xf32>
    %257 = vector.extract_strided_slice %43 {offsets = [6, 0, 0], sizes = [1, 8, 16], strides = [1, 1, 1]} : vector<8x8x16xf32> to vector<1x8x16xf32>
    %258 = vector.shape_cast %257 : vector<1x8x16xf32> to vector<8x16xf32>
    %259 = arith.addf %258, %189 : vector<8x16xf32>
    %260 = math.absf %259 : vector<8x16xf32>
    %cst_75 = arith.constant 0.000000e+00 : f32
    %261 = vector.broadcast %cst_75 : f32 to vector<8x16xf32>
    %262 = arith.subf %261, %260 : vector<8x16xf32>
    %263 = math.exp %262 : vector<8x16xf32>
    %cst_76 = arith.constant 0.000000e+00 : f32
    %264 = vector.broadcast %cst_76 : f32 to vector<8x16xf32>
    %265 = arith.cmpf oge, %259, %264 : vector<8x16xf32>
    %cst_77 = arith.constant 1.000000e+00 : f32
    %266 = vector.broadcast %cst_77 : f32 to vector<8x16xf32>
    %267 = arith.addf %266, %263 : vector<8x16xf32>
    %cst_78 = arith.constant 1.000000e+00 : f32
    %268 = vector.broadcast %cst_78 : f32 to vector<8x16xf32>
    %269 = arith.divf %268, %267 : vector<8x16xf32>
    %cst_79 = arith.constant 1.000000e+00 : f32
    %270 = vector.broadcast %cst_79 : f32 to vector<8x16xf32>
    %271 = arith.addf %270, %263 : vector<8x16xf32>
    %272 = arith.divf %263, %271 : vector<8x16xf32>
    %273 = arith.select %265, %269, %272 : vector<8x16xi1>, vector<8x16xf32>
    %274 = vector.extract_strided_slice %51 {offsets = [6, 0, 0], sizes = [1, 8, 16], strides = [1, 1, 1]} : vector<8x8x16xf32> to vector<1x8x16xf32>
    %275 = vector.shape_cast %274 : vector<1x8x16xf32> to vector<8x16xf32>
    %276 = arith.mulf %256, %194 : vector<8x16xf32>
    %277 = arith.addf %275, %276 : vector<8x16xf32>
    %278 = math.tanh %277 : vector<8x16xf32>
    %cst_80 = arith.constant 1.000000e+00 : f32
    %279 = vector.broadcast %cst_80 : f32 to vector<8x16xf32>
    %280 = arith.subf %279, %273 : vector<8x16xf32>
    %281 = arith.mulf %280, %278 : vector<8x16xf32>
    %282 = arith.mulf %273, %171 : vector<8x16xf32>
    %283 = arith.addf %281, %282 : vector<8x16xf32>
    %284 = arith.addf %172, %283 : vector<8x16xf32>
    %285 = vector.extract_strided_slice %52 {offsets = [0, 0, 0], sizes = [1, 16, 16], strides = [1, 1, 1]} : vector<6x16x16xf32> to vector<1x16x16xf32>
    %286 = vector.shape_cast %285 : vector<1x16x16xf32> to vector<16x16xf32>
    %cst_81 = arith.constant dense<0.000000e+00> : vector<8x16xf32>
    %287 = tpu.matmul %238, %286, %cst_81 {dimension_numbers = #tpu.dot_dimension_numbers<[1], [0], [0], [1], [0, 0, 1, 1], [], []>} : vector<8x16xf32>, vector<16x16xf32>, vector<8x16xf32> -> vector<8x16xf32>
    %288 = vector.extract_strided_slice %52 {offsets = [1, 0, 0], sizes = [1, 16, 16], strides = [1, 1, 1]} : vector<6x16x16xf32> to vector<1x16x16xf32>
    %289 = vector.shape_cast %288 : vector<1x16x16xf32> to vector<16x16xf32>
    %cst_82 = arith.constant dense<0.000000e+00> : vector<8x16xf32>
    %290 = tpu.matmul %238, %289, %cst_82 {dimension_numbers = #tpu.dot_dimension_numbers<[1], [0], [0], [1], [0, 0, 1, 1], [], []>} : vector<8x16xf32>, vector<16x16xf32>, vector<8x16xf32> -> vector<8x16xf32>
    %291 = vector.extract_strided_slice %52 {offsets = [2, 0, 0], sizes = [1, 16, 16], strides = [1, 1, 1]} : vector<6x16x16xf32> to vector<1x16x16xf32>
    %292 = vector.shape_cast %291 : vector<1x16x16xf32> to vector<16x16xf32>
    %cst_83 = arith.constant dense<0.000000e+00> : vector<8x16xf32>
    %293 = tpu.matmul %238, %292, %cst_83 {dimension_numbers = #tpu.dot_dimension_numbers<[1], [0], [0], [1], [0, 0, 1, 1], [], []>} : vector<8x16xf32>, vector<16x16xf32>, vector<8x16xf32> -> vector<8x16xf32>
    %294 = vector.broadcast %54 : vector<1x16xf32> to vector<8x16xf32>
    %295 = arith.addf %293, %294 : vector<8x16xf32>
    %296 = vector.extract_strided_slice %52 {offsets = [3, 0, 0], sizes = [1, 16, 16], strides = [1, 1, 1]} : vector<6x16x16xf32> to vector<1x16x16xf32>
    %297 = vector.shape_cast %296 : vector<1x16x16xf32> to vector<16x16xf32>
    %cst_84 = arith.constant dense<0.000000e+00> : vector<8x16xf32>
    %298 = tpu.matmul %283, %297, %cst_84 {dimension_numbers = #tpu.dot_dimension_numbers<[1], [0], [0], [1], [0, 0, 1, 1], [], []>} : vector<8x16xf32>, vector<16x16xf32>, vector<8x16xf32> -> vector<8x16xf32>
    %299 = vector.extract_strided_slice %52 {offsets = [4, 0, 0], sizes = [1, 16, 16], strides = [1, 1, 1]} : vector<6x16x16xf32> to vector<1x16x16xf32>
    %300 = vector.shape_cast %299 : vector<1x16x16xf32> to vector<16x16xf32>
    %cst_85 = arith.constant dense<0.000000e+00> : vector<8x16xf32>
    %301 = tpu.matmul %283, %300, %cst_85 {dimension_numbers = #tpu.dot_dimension_numbers<[1], [0], [0], [1], [0, 0, 1, 1], [], []>} : vector<8x16xf32>, vector<16x16xf32>, vector<8x16xf32> -> vector<8x16xf32>
    %302 = vector.extract_strided_slice %52 {offsets = [5, 0, 0], sizes = [1, 16, 16], strides = [1, 1, 1]} : vector<6x16x16xf32> to vector<1x16x16xf32>
    %303 = vector.shape_cast %302 : vector<1x16x16xf32> to vector<16x16xf32>
    %cst_86 = arith.constant dense<0.000000e+00> : vector<8x16xf32>
    %304 = tpu.matmul %283, %303, %cst_86 {dimension_numbers = #tpu.dot_dimension_numbers<[1], [0], [0], [1], [0, 0, 1, 1], [], []>} : vector<8x16xf32>, vector<16x16xf32>, vector<8x16xf32> -> vector<8x16xf32>
    %305 = vector.broadcast %56 : vector<1x16xf32> to vector<8x16xf32>
    %306 = arith.addf %304, %305 : vector<8x16xf32>
    %307 = vector.extract_strided_slice %11 {offsets = [2, 0, 0], sizes = [1, 8, 16], strides = [1, 1, 1]} : vector<8x8x16xf32> to vector<1x8x16xf32>
    %308 = vector.shape_cast %307 : vector<1x8x16xf32> to vector<8x16xf32>
    %309 = arith.addf %308, %287 : vector<8x16xf32>
    %310 = math.absf %309 : vector<8x16xf32>
    %cst_87 = arith.constant 0.000000e+00 : f32
    %311 = vector.broadcast %cst_87 : f32 to vector<8x16xf32>
    %312 = arith.subf %311, %310 : vector<8x16xf32>
    %313 = math.exp %312 : vector<8x16xf32>
    %cst_88 = arith.constant 0.000000e+00 : f32
    %314 = vector.broadcast %cst_88 : f32 to vector<8x16xf32>
    %315 = arith.cmpf oge, %309, %314 : vector<8x16xf32>
    %cst_89 = arith.constant 1.000000e+00 : f32
    %316 = vector.broadcast %cst_89 : f32 to vector<8x16xf32>
    %317 = arith.addf %316, %313 : vector<8x16xf32>
    %cst_90 = arith.constant 1.000000e+00 : f32
    %318 = vector.broadcast %cst_90 : f32 to vector<8x16xf32>
    %319 = arith.divf %318, %317 : vector<8x16xf32>
    %cst_91 = arith.constant 1.000000e+00 : f32
    %320 = vector.broadcast %cst_91 : f32 to vector<8x16xf32>
    %321 = arith.addf %320, %313 : vector<8x16xf32>
    %322 = arith.divf %313, %321 : vector<8x16xf32>
    %323 = arith.select %315, %319, %322 : vector<8x16xi1>, vector<8x16xf32>
    %324 = vector.extract_strided_slice %19 {offsets = [2, 0, 0], sizes = [1, 8, 16], strides = [1, 1, 1]} : vector<8x8x16xf32> to vector<1x8x16xf32>
    %325 = vector.shape_cast %324 : vector<1x8x16xf32> to vector<8x16xf32>
    %326 = arith.addf %325, %290 : vector<8x16xf32>
    %327 = math.absf %326 : vector<8x16xf32>
    %cst_92 = arith.constant 0.000000e+00 : f32
    %328 = vector.broadcast %cst_92 : f32 to vector<8x16xf32>
    %329 = arith.subf %328, %327 : vector<8x16xf32>
    %330 = math.exp %329 : vector<8x16xf32>
    %cst_93 = arith.constant 0.000000e+00 : f32
    %331 = vector.broadcast %cst_93 : f32 to vector<8x16xf32>
    %332 = arith.cmpf oge, %326, %331 : vector<8x16xf32>
    %cst_94 = arith.constant 1.000000e+00 : f32
    %333 = vector.broadcast %cst_94 : f32 to vector<8x16xf32>
    %334 = arith.addf %333, %330 : vector<8x16xf32>
    %cst_95 = arith.constant 1.000000e+00 : f32
    %335 = vector.broadcast %cst_95 : f32 to vector<8x16xf32>
    %336 = arith.divf %335, %334 : vector<8x16xf32>
    %cst_96 = arith.constant 1.000000e+00 : f32
    %337 = vector.broadcast %cst_96 : f32 to vector<8x16xf32>
    %338 = arith.addf %337, %330 : vector<8x16xf32>
    %339 = arith.divf %330, %338 : vector<8x16xf32>
    %340 = arith.select %332, %336, %339 : vector<8x16xi1>, vector<8x16xf32>
    %341 = vector.extract_strided_slice %27 {offsets = [2, 0, 0], sizes = [1, 8, 16], strides = [1, 1, 1]} : vector<8x8x16xf32> to vector<1x8x16xf32>
    %342 = vector.shape_cast %341 : vector<1x8x16xf32> to vector<8x16xf32>
    %343 = arith.mulf %323, %295 : vector<8x16xf32>
    %344 = arith.addf %342, %343 : vector<8x16xf32>
    %345 = math.tanh %344 : vector<8x16xf32>
    %cst_97 = arith.constant 1.000000e+00 : f32
    %346 = vector.broadcast %cst_97 : f32 to vector<8x16xf32>
    %347 = arith.subf %346, %340 : vector<8x16xf32>
    %348 = arith.mulf %347, %345 : vector<8x16xf32>
    %349 = arith.mulf %340, %238 : vector<8x16xf32>
    %350 = arith.addf %348, %349 : vector<8x16xf32>
    %351 = arith.addf %239, %350 : vector<8x16xf32>
    %352 = vector.extract_strided_slice %35 {offsets = [5, 0, 0], sizes = [1, 8, 16], strides = [1, 1, 1]} : vector<8x8x16xf32> to vector<1x8x16xf32>
    %353 = vector.shape_cast %352 : vector<1x8x16xf32> to vector<8x16xf32>
    %354 = arith.addf %353, %298 : vector<8x16xf32>
    %355 = math.absf %354 : vector<8x16xf32>
    %cst_98 = arith.constant 0.000000e+00 : f32
    %356 = vector.broadcast %cst_98 : f32 to vector<8x16xf32>
    %357 = arith.subf %356, %355 : vector<8x16xf32>
    %358 = math.exp %357 : vector<8x16xf32>
    %cst_99 = arith.constant 0.000000e+00 : f32
    %359 = vector.broadcast %cst_99 : f32 to vector<8x16xf32>
    %360 = arith.cmpf oge, %354, %359 : vector<8x16xf32>
    %cst_100 = arith.constant 1.000000e+00 : f32
    %361 = vector.broadcast %cst_100 : f32 to vector<8x16xf32>
    %362 = arith.addf %361, %358 : vector<8x16xf32>
    %cst_101 = arith.constant 1.000000e+00 : f32
    %363 = vector.broadcast %cst_101 : f32 to vector<8x16xf32>
    %364 = arith.divf %363, %362 : vector<8x16xf32>
    %cst_102 = arith.constant 1.000000e+00 : f32
    %365 = vector.broadcast %cst_102 : f32 to vector<8x16xf32>
    %366 = arith.addf %365, %358 : vector<8x16xf32>
    %367 = arith.divf %358, %366 : vector<8x16xf32>
    %368 = arith.select %360, %364, %367 : vector<8x16xi1>, vector<8x16xf32>
    %369 = vector.extract_strided_slice %43 {offsets = [5, 0, 0], sizes = [1, 8, 16], strides = [1, 1, 1]} : vector<8x8x16xf32> to vector<1x8x16xf32>
    %370 = vector.shape_cast %369 : vector<1x8x16xf32> to vector<8x16xf32>
    %371 = arith.addf %370, %301 : vector<8x16xf32>
    %372 = math.absf %371 : vector<8x16xf32>
    %cst_103 = arith.constant 0.000000e+00 : f32
    %373 = vector.broadcast %cst_103 : f32 to vector<8x16xf32>
    %374 = arith.subf %373, %372 : vector<8x16xf32>
    %375 = math.exp %374 : vector<8x16xf32>
    %cst_104 = arith.constant 0.000000e+00 : f32
    %376 = vector.broadcast %cst_104 : f32 to vector<8x16xf32>
    %377 = arith.cmpf oge, %371, %376 : vector<8x16xf32>
    %cst_105 = arith.constant 1.000000e+00 : f32
    %378 = vector.broadcast %cst_105 : f32 to vector<8x16xf32>
    %379 = arith.addf %378, %375 : vector<8x16xf32>
    %cst_106 = arith.constant 1.000000e+00 : f32
    %380 = vector.broadcast %cst_106 : f32 to vector<8x16xf32>
    %381 = arith.divf %380, %379 : vector<8x16xf32>
    %cst_107 = arith.constant 1.000000e+00 : f32
    %382 = vector.broadcast %cst_107 : f32 to vector<8x16xf32>
    %383 = arith.addf %382, %375 : vector<8x16xf32>
    %384 = arith.divf %375, %383 : vector<8x16xf32>
    %385 = arith.select %377, %381, %384 : vector<8x16xi1>, vector<8x16xf32>
    %386 = vector.extract_strided_slice %51 {offsets = [5, 0, 0], sizes = [1, 8, 16], strides = [1, 1, 1]} : vector<8x8x16xf32> to vector<1x8x16xf32>
    %387 = vector.shape_cast %386 : vector<1x8x16xf32> to vector<8x16xf32>
    %388 = arith.mulf %368, %306 : vector<8x16xf32>
    %389 = arith.addf %387, %388 : vector<8x16xf32>
    %390 = math.tanh %389 : vector<8x16xf32>
    %cst_108 = arith.constant 1.000000e+00 : f32
    %391 = vector.broadcast %cst_108 : f32 to vector<8x16xf32>
    %392 = arith.subf %391, %385 : vector<8x16xf32>
    %393 = arith.mulf %392, %390 : vector<8x16xf32>
    %394 = arith.mulf %385, %283 : vector<8x16xf32>
    %395 = arith.addf %393, %394 : vector<8x16xf32>
    %396 = arith.addf %284, %395 : vector<8x16xf32>
    %397 = vector.extract_strided_slice %52 {offsets = [0, 0, 0], sizes = [1, 16, 16], strides = [1, 1, 1]} : vector<6x16x16xf32> to vector<1x16x16xf32>
    %398 = vector.shape_cast %397 : vector<1x16x16xf32> to vector<16x16xf32>
    %cst_109 = arith.constant dense<0.000000e+00> : vector<8x16xf32>
    %399 = tpu.matmul %350, %398, %cst_109 {dimension_numbers = #tpu.dot_dimension_numbers<[1], [0], [0], [1], [0, 0, 1, 1], [], []>} : vector<8x16xf32>, vector<16x16xf32>, vector<8x16xf32> -> vector<8x16xf32>
    %400 = vector.extract_strided_slice %52 {offsets = [1, 0, 0], sizes = [1, 16, 16], strides = [1, 1, 1]} : vector<6x16x16xf32> to vector<1x16x16xf32>
    %401 = vector.shape_cast %400 : vector<1x16x16xf32> to vector<16x16xf32>
    %cst_110 = arith.constant dense<0.000000e+00> : vector<8x16xf32>
    %402 = tpu.matmul %350, %401, %cst_110 {dimension_numbers = #tpu.dot_dimension_numbers<[1], [0], [0], [1], [0, 0, 1, 1], [], []>} : vector<8x16xf32>, vector<16x16xf32>, vector<8x16xf32> -> vector<8x16xf32>
    %403 = vector.extract_strided_slice %52 {offsets = [2, 0, 0], sizes = [1, 16, 16], strides = [1, 1, 1]} : vector<6x16x16xf32> to vector<1x16x16xf32>
    %404 = vector.shape_cast %403 : vector<1x16x16xf32> to vector<16x16xf32>
    %cst_111 = arith.constant dense<0.000000e+00> : vector<8x16xf32>
    %405 = tpu.matmul %350, %404, %cst_111 {dimension_numbers = #tpu.dot_dimension_numbers<[1], [0], [0], [1], [0, 0, 1, 1], [], []>} : vector<8x16xf32>, vector<16x16xf32>, vector<8x16xf32> -> vector<8x16xf32>
    %406 = vector.broadcast %54 : vector<1x16xf32> to vector<8x16xf32>
    %407 = arith.addf %405, %406 : vector<8x16xf32>
    %408 = vector.extract_strided_slice %52 {offsets = [3, 0, 0], sizes = [1, 16, 16], strides = [1, 1, 1]} : vector<6x16x16xf32> to vector<1x16x16xf32>
    %409 = vector.shape_cast %408 : vector<1x16x16xf32> to vector<16x16xf32>
    %cst_112 = arith.constant dense<0.000000e+00> : vector<8x16xf32>
    %410 = tpu.matmul %395, %409, %cst_112 {dimension_numbers = #tpu.dot_dimension_numbers<[1], [0], [0], [1], [0, 0, 1, 1], [], []>} : vector<8x16xf32>, vector<16x16xf32>, vector<8x16xf32> -> vector<8x16xf32>
    %411 = vector.extract_strided_slice %52 {offsets = [4, 0, 0], sizes = [1, 16, 16], strides = [1, 1, 1]} : vector<6x16x16xf32> to vector<1x16x16xf32>
    %412 = vector.shape_cast %411 : vector<1x16x16xf32> to vector<16x16xf32>
    %cst_113 = arith.constant dense<0.000000e+00> : vector<8x16xf32>
    %413 = tpu.matmul %395, %412, %cst_113 {dimension_numbers = #tpu.dot_dimension_numbers<[1], [0], [0], [1], [0, 0, 1, 1], [], []>} : vector<8x16xf32>, vector<16x16xf32>, vector<8x16xf32> -> vector<8x16xf32>
    %414 = vector.extract_strided_slice %52 {offsets = [5, 0, 0], sizes = [1, 16, 16], strides = [1, 1, 1]} : vector<6x16x16xf32> to vector<1x16x16xf32>
    %415 = vector.shape_cast %414 : vector<1x16x16xf32> to vector<16x16xf32>
    %cst_114 = arith.constant dense<0.000000e+00> : vector<8x16xf32>
    %416 = tpu.matmul %395, %415, %cst_114 {dimension_numbers = #tpu.dot_dimension_numbers<[1], [0], [0], [1], [0, 0, 1, 1], [], []>} : vector<8x16xf32>, vector<16x16xf32>, vector<8x16xf32> -> vector<8x16xf32>
    %417 = vector.broadcast %56 : vector<1x16xf32> to vector<8x16xf32>
    %418 = arith.addf %416, %417 : vector<8x16xf32>
    %419 = vector.extract_strided_slice %11 {offsets = [3, 0, 0], sizes = [1, 8, 16], strides = [1, 1, 1]} : vector<8x8x16xf32> to vector<1x8x16xf32>
    %420 = vector.shape_cast %419 : vector<1x8x16xf32> to vector<8x16xf32>
    %421 = arith.addf %420, %399 : vector<8x16xf32>
    %422 = math.absf %421 : vector<8x16xf32>
    %cst_115 = arith.constant 0.000000e+00 : f32
    %423 = vector.broadcast %cst_115 : f32 to vector<8x16xf32>
    %424 = arith.subf %423, %422 : vector<8x16xf32>
    %425 = math.exp %424 : vector<8x16xf32>
    %cst_116 = arith.constant 0.000000e+00 : f32
    %426 = vector.broadcast %cst_116 : f32 to vector<8x16xf32>
    %427 = arith.cmpf oge, %421, %426 : vector<8x16xf32>
    %cst_117 = arith.constant 1.000000e+00 : f32
    %428 = vector.broadcast %cst_117 : f32 to vector<8x16xf32>
    %429 = arith.addf %428, %425 : vector<8x16xf32>
    %cst_118 = arith.constant 1.000000e+00 : f32
    %430 = vector.broadcast %cst_118 : f32 to vector<8x16xf32>
    %431 = arith.divf %430, %429 : vector<8x16xf32>
    %cst_119 = arith.constant 1.000000e+00 : f32
    %432 = vector.broadcast %cst_119 : f32 to vector<8x16xf32>
    %433 = arith.addf %432, %425 : vector<8x16xf32>
    %434 = arith.divf %425, %433 : vector<8x16xf32>
    %435 = arith.select %427, %431, %434 : vector<8x16xi1>, vector<8x16xf32>
    %436 = vector.extract_strided_slice %19 {offsets = [3, 0, 0], sizes = [1, 8, 16], strides = [1, 1, 1]} : vector<8x8x16xf32> to vector<1x8x16xf32>
    %437 = vector.shape_cast %436 : vector<1x8x16xf32> to vector<8x16xf32>
    %438 = arith.addf %437, %402 : vector<8x16xf32>
    %439 = math.absf %438 : vector<8x16xf32>
    %cst_120 = arith.constant 0.000000e+00 : f32
    %440 = vector.broadcast %cst_120 : f32 to vector<8x16xf32>
    %441 = arith.subf %440, %439 : vector<8x16xf32>
    %442 = math.exp %441 : vector<8x16xf32>
    %cst_121 = arith.constant 0.000000e+00 : f32
    %443 = vector.broadcast %cst_121 : f32 to vector<8x16xf32>
    %444 = arith.cmpf oge, %438, %443 : vector<8x16xf32>
    %cst_122 = arith.constant 1.000000e+00 : f32
    %445 = vector.broadcast %cst_122 : f32 to vector<8x16xf32>
    %446 = arith.addf %445, %442 : vector<8x16xf32>
    %cst_123 = arith.constant 1.000000e+00 : f32
    %447 = vector.broadcast %cst_123 : f32 to vector<8x16xf32>
    %448 = arith.divf %447, %446 : vector<8x16xf32>
    %cst_124 = arith.constant 1.000000e+00 : f32
    %449 = vector.broadcast %cst_124 : f32 to vector<8x16xf32>
    %450 = arith.addf %449, %442 : vector<8x16xf32>
    %451 = arith.divf %442, %450 : vector<8x16xf32>
    %452 = arith.select %444, %448, %451 : vector<8x16xi1>, vector<8x16xf32>
    %453 = vector.extract_strided_slice %27 {offsets = [3, 0, 0], sizes = [1, 8, 16], strides = [1, 1, 1]} : vector<8x8x16xf32> to vector<1x8x16xf32>
    %454 = vector.shape_cast %453 : vector<1x8x16xf32> to vector<8x16xf32>
    %455 = arith.mulf %435, %407 : vector<8x16xf32>
    %456 = arith.addf %454, %455 : vector<8x16xf32>
    %457 = math.tanh %456 : vector<8x16xf32>
    %cst_125 = arith.constant 1.000000e+00 : f32
    %458 = vector.broadcast %cst_125 : f32 to vector<8x16xf32>
    %459 = arith.subf %458, %452 : vector<8x16xf32>
    %460 = arith.mulf %459, %457 : vector<8x16xf32>
    %461 = arith.mulf %452, %350 : vector<8x16xf32>
    %462 = arith.addf %460, %461 : vector<8x16xf32>
    %463 = arith.addf %351, %462 : vector<8x16xf32>
    %464 = vector.extract_strided_slice %35 {offsets = [4, 0, 0], sizes = [1, 8, 16], strides = [1, 1, 1]} : vector<8x8x16xf32> to vector<1x8x16xf32>
    %465 = vector.shape_cast %464 : vector<1x8x16xf32> to vector<8x16xf32>
    %466 = arith.addf %465, %410 : vector<8x16xf32>
    %467 = math.absf %466 : vector<8x16xf32>
    %cst_126 = arith.constant 0.000000e+00 : f32
    %468 = vector.broadcast %cst_126 : f32 to vector<8x16xf32>
    %469 = arith.subf %468, %467 : vector<8x16xf32>
    %470 = math.exp %469 : vector<8x16xf32>
    %cst_127 = arith.constant 0.000000e+00 : f32
    %471 = vector.broadcast %cst_127 : f32 to vector<8x16xf32>
    %472 = arith.cmpf oge, %466, %471 : vector<8x16xf32>
    %cst_128 = arith.constant 1.000000e+00 : f32
    %473 = vector.broadcast %cst_128 : f32 to vector<8x16xf32>
    %474 = arith.addf %473, %470 : vector<8x16xf32>
    %cst_129 = arith.constant 1.000000e+00 : f32
    %475 = vector.broadcast %cst_129 : f32 to vector<8x16xf32>
    %476 = arith.divf %475, %474 : vector<8x16xf32>
    %cst_130 = arith.constant 1.000000e+00 : f32
    %477 = vector.broadcast %cst_130 : f32 to vector<8x16xf32>
    %478 = arith.addf %477, %470 : vector<8x16xf32>
    %479 = arith.divf %470, %478 : vector<8x16xf32>
    %480 = arith.select %472, %476, %479 : vector<8x16xi1>, vector<8x16xf32>
    %481 = vector.extract_strided_slice %43 {offsets = [4, 0, 0], sizes = [1, 8, 16], strides = [1, 1, 1]} : vector<8x8x16xf32> to vector<1x8x16xf32>
    %482 = vector.shape_cast %481 : vector<1x8x16xf32> to vector<8x16xf32>
    %483 = arith.addf %482, %413 : vector<8x16xf32>
    %484 = math.absf %483 : vector<8x16xf32>
    %cst_131 = arith.constant 0.000000e+00 : f32
    %485 = vector.broadcast %cst_131 : f32 to vector<8x16xf32>
    %486 = arith.subf %485, %484 : vector<8x16xf32>
    %487 = math.exp %486 : vector<8x16xf32>
    %cst_132 = arith.constant 0.000000e+00 : f32
    %488 = vector.broadcast %cst_132 : f32 to vector<8x16xf32>
    %489 = arith.cmpf oge, %483, %488 : vector<8x16xf32>
    %cst_133 = arith.constant 1.000000e+00 : f32
    %490 = vector.broadcast %cst_133 : f32 to vector<8x16xf32>
    %491 = arith.addf %490, %487 : vector<8x16xf32>
    %cst_134 = arith.constant 1.000000e+00 : f32
    %492 = vector.broadcast %cst_134 : f32 to vector<8x16xf32>
    %493 = arith.divf %492, %491 : vector<8x16xf32>
    %cst_135 = arith.constant 1.000000e+00 : f32
    %494 = vector.broadcast %cst_135 : f32 to vector<8x16xf32>
    %495 = arith.addf %494, %487 : vector<8x16xf32>
    %496 = arith.divf %487, %495 : vector<8x16xf32>
    %497 = arith.select %489, %493, %496 : vector<8x16xi1>, vector<8x16xf32>
    %498 = vector.extract_strided_slice %51 {offsets = [4, 0, 0], sizes = [1, 8, 16], strides = [1, 1, 1]} : vector<8x8x16xf32> to vector<1x8x16xf32>
    %499 = vector.shape_cast %498 : vector<1x8x16xf32> to vector<8x16xf32>
    %500 = arith.mulf %480, %418 : vector<8x16xf32>
    %501 = arith.addf %499, %500 : vector<8x16xf32>
    %502 = math.tanh %501 : vector<8x16xf32>
    %cst_136 = arith.constant 1.000000e+00 : f32
    %503 = vector.broadcast %cst_136 : f32 to vector<8x16xf32>
    %504 = arith.subf %503, %497 : vector<8x16xf32>
    %505 = arith.mulf %504, %502 : vector<8x16xf32>
    %506 = arith.mulf %497, %395 : vector<8x16xf32>
    %507 = arith.addf %505, %506 : vector<8x16xf32>
    %508 = arith.addf %396, %507 : vector<8x16xf32>
    %509 = vector.extract_strided_slice %52 {offsets = [0, 0, 0], sizes = [1, 16, 16], strides = [1, 1, 1]} : vector<6x16x16xf32> to vector<1x16x16xf32>
    %510 = vector.shape_cast %509 : vector<1x16x16xf32> to vector<16x16xf32>
    %cst_137 = arith.constant dense<0.000000e+00> : vector<8x16xf32>
    %511 = tpu.matmul %462, %510, %cst_137 {dimension_numbers = #tpu.dot_dimension_numbers<[1], [0], [0], [1], [0, 0, 1, 1], [], []>} : vector<8x16xf32>, vector<16x16xf32>, vector<8x16xf32> -> vector<8x16xf32>
    %512 = vector.extract_strided_slice %52 {offsets = [1, 0, 0], sizes = [1, 16, 16], strides = [1, 1, 1]} : vector<6x16x16xf32> to vector<1x16x16xf32>
    %513 = vector.shape_cast %512 : vector<1x16x16xf32> to vector<16x16xf32>
    %cst_138 = arith.constant dense<0.000000e+00> : vector<8x16xf32>
    %514 = tpu.matmul %462, %513, %cst_138 {dimension_numbers = #tpu.dot_dimension_numbers<[1], [0], [0], [1], [0, 0, 1, 1], [], []>} : vector<8x16xf32>, vector<16x16xf32>, vector<8x16xf32> -> vector<8x16xf32>
    %515 = vector.extract_strided_slice %52 {offsets = [2, 0, 0], sizes = [1, 16, 16], strides = [1, 1, 1]} : vector<6x16x16xf32> to vector<1x16x16xf32>
    %516 = vector.shape_cast %515 : vector<1x16x16xf32> to vector<16x16xf32>
    %cst_139 = arith.constant dense<0.000000e+00> : vector<8x16xf32>
    %517 = tpu.matmul %462, %516, %cst_139 {dimension_numbers = #tpu.dot_dimension_numbers<[1], [0], [0], [1], [0, 0, 1, 1], [], []>} : vector<8x16xf32>, vector<16x16xf32>, vector<8x16xf32> -> vector<8x16xf32>
    %518 = vector.broadcast %54 : vector<1x16xf32> to vector<8x16xf32>
    %519 = arith.addf %517, %518 : vector<8x16xf32>
    %520 = vector.extract_strided_slice %52 {offsets = [3, 0, 0], sizes = [1, 16, 16], strides = [1, 1, 1]} : vector<6x16x16xf32> to vector<1x16x16xf32>
    %521 = vector.shape_cast %520 : vector<1x16x16xf32> to vector<16x16xf32>
    %cst_140 = arith.constant dense<0.000000e+00> : vector<8x16xf32>
    %522 = tpu.matmul %507, %521, %cst_140 {dimension_numbers = #tpu.dot_dimension_numbers<[1], [0], [0], [1], [0, 0, 1, 1], [], []>} : vector<8x16xf32>, vector<16x16xf32>, vector<8x16xf32> -> vector<8x16xf32>
    %523 = vector.extract_strided_slice %52 {offsets = [4, 0, 0], sizes = [1, 16, 16], strides = [1, 1, 1]} : vector<6x16x16xf32> to vector<1x16x16xf32>
    %524 = vector.shape_cast %523 : vector<1x16x16xf32> to vector<16x16xf32>
    %cst_141 = arith.constant dense<0.000000e+00> : vector<8x16xf32>
    %525 = tpu.matmul %507, %524, %cst_141 {dimension_numbers = #tpu.dot_dimension_numbers<[1], [0], [0], [1], [0, 0, 1, 1], [], []>} : vector<8x16xf32>, vector<16x16xf32>, vector<8x16xf32> -> vector<8x16xf32>
    %526 = vector.extract_strided_slice %52 {offsets = [5, 0, 0], sizes = [1, 16, 16], strides = [1, 1, 1]} : vector<6x16x16xf32> to vector<1x16x16xf32>
    %527 = vector.shape_cast %526 : vector<1x16x16xf32> to vector<16x16xf32>
    %cst_142 = arith.constant dense<0.000000e+00> : vector<8x16xf32>
    %528 = tpu.matmul %507, %527, %cst_142 {dimension_numbers = #tpu.dot_dimension_numbers<[1], [0], [0], [1], [0, 0, 1, 1], [], []>} : vector<8x16xf32>, vector<16x16xf32>, vector<8x16xf32> -> vector<8x16xf32>
    %529 = vector.broadcast %56 : vector<1x16xf32> to vector<8x16xf32>
    %530 = arith.addf %528, %529 : vector<8x16xf32>
    %531 = vector.extract_strided_slice %11 {offsets = [4, 0, 0], sizes = [1, 8, 16], strides = [1, 1, 1]} : vector<8x8x16xf32> to vector<1x8x16xf32>
    %532 = vector.shape_cast %531 : vector<1x8x16xf32> to vector<8x16xf32>
    %533 = arith.addf %532, %511 : vector<8x16xf32>
    %534 = math.absf %533 : vector<8x16xf32>
    %cst_143 = arith.constant 0.000000e+00 : f32
    %535 = vector.broadcast %cst_143 : f32 to vector<8x16xf32>
    %536 = arith.subf %535, %534 : vector<8x16xf32>
    %537 = math.exp %536 : vector<8x16xf32>
    %cst_144 = arith.constant 0.000000e+00 : f32
    %538 = vector.broadcast %cst_144 : f32 to vector<8x16xf32>
    %539 = arith.cmpf oge, %533, %538 : vector<8x16xf32>
    %cst_145 = arith.constant 1.000000e+00 : f32
    %540 = vector.broadcast %cst_145 : f32 to vector<8x16xf32>
    %541 = arith.addf %540, %537 : vector<8x16xf32>
    %cst_146 = arith.constant 1.000000e+00 : f32
    %542 = vector.broadcast %cst_146 : f32 to vector<8x16xf32>
    %543 = arith.divf %542, %541 : vector<8x16xf32>
    %cst_147 = arith.constant 1.000000e+00 : f32
    %544 = vector.broadcast %cst_147 : f32 to vector<8x16xf32>
    %545 = arith.addf %544, %537 : vector<8x16xf32>
    %546 = arith.divf %537, %545 : vector<8x16xf32>
    %547 = arith.select %539, %543, %546 : vector<8x16xi1>, vector<8x16xf32>
    %548 = vector.extract_strided_slice %19 {offsets = [4, 0, 0], sizes = [1, 8, 16], strides = [1, 1, 1]} : vector<8x8x16xf32> to vector<1x8x16xf32>
    %549 = vector.shape_cast %548 : vector<1x8x16xf32> to vector<8x16xf32>
    %550 = arith.addf %549, %514 : vector<8x16xf32>
    %551 = math.absf %550 : vector<8x16xf32>
    %cst_148 = arith.constant 0.000000e+00 : f32
    %552 = vector.broadcast %cst_148 : f32 to vector<8x16xf32>
    %553 = arith.subf %552, %551 : vector<8x16xf32>
    %554 = math.exp %553 : vector<8x16xf32>
    %cst_149 = arith.constant 0.000000e+00 : f32
    %555 = vector.broadcast %cst_149 : f32 to vector<8x16xf32>
    %556 = arith.cmpf oge, %550, %555 : vector<8x16xf32>
    %cst_150 = arith.constant 1.000000e+00 : f32
    %557 = vector.broadcast %cst_150 : f32 to vector<8x16xf32>
    %558 = arith.addf %557, %554 : vector<8x16xf32>
    %cst_151 = arith.constant 1.000000e+00 : f32
    %559 = vector.broadcast %cst_151 : f32 to vector<8x16xf32>
    %560 = arith.divf %559, %558 : vector<8x16xf32>
    %cst_152 = arith.constant 1.000000e+00 : f32
    %561 = vector.broadcast %cst_152 : f32 to vector<8x16xf32>
    %562 = arith.addf %561, %554 : vector<8x16xf32>
    %563 = arith.divf %554, %562 : vector<8x16xf32>
    %564 = arith.select %556, %560, %563 : vector<8x16xi1>, vector<8x16xf32>
    %565 = vector.extract_strided_slice %27 {offsets = [4, 0, 0], sizes = [1, 8, 16], strides = [1, 1, 1]} : vector<8x8x16xf32> to vector<1x8x16xf32>
    %566 = vector.shape_cast %565 : vector<1x8x16xf32> to vector<8x16xf32>
    %567 = arith.mulf %547, %519 : vector<8x16xf32>
    %568 = arith.addf %566, %567 : vector<8x16xf32>
    %569 = math.tanh %568 : vector<8x16xf32>
    %cst_153 = arith.constant 1.000000e+00 : f32
    %570 = vector.broadcast %cst_153 : f32 to vector<8x16xf32>
    %571 = arith.subf %570, %564 : vector<8x16xf32>
    %572 = arith.mulf %571, %569 : vector<8x16xf32>
    %573 = arith.mulf %564, %462 : vector<8x16xf32>
    %574 = arith.addf %572, %573 : vector<8x16xf32>
    %575 = arith.addf %463, %574 : vector<8x16xf32>
    %576 = vector.extract_strided_slice %35 {offsets = [3, 0, 0], sizes = [1, 8, 16], strides = [1, 1, 1]} : vector<8x8x16xf32> to vector<1x8x16xf32>
    %577 = vector.shape_cast %576 : vector<1x8x16xf32> to vector<8x16xf32>
    %578 = arith.addf %577, %522 : vector<8x16xf32>
    %579 = math.absf %578 : vector<8x16xf32>
    %cst_154 = arith.constant 0.000000e+00 : f32
    %580 = vector.broadcast %cst_154 : f32 to vector<8x16xf32>
    %581 = arith.subf %580, %579 : vector<8x16xf32>
    %582 = math.exp %581 : vector<8x16xf32>
    %cst_155 = arith.constant 0.000000e+00 : f32
    %583 = vector.broadcast %cst_155 : f32 to vector<8x16xf32>
    %584 = arith.cmpf oge, %578, %583 : vector<8x16xf32>
    %cst_156 = arith.constant 1.000000e+00 : f32
    %585 = vector.broadcast %cst_156 : f32 to vector<8x16xf32>
    %586 = arith.addf %585, %582 : vector<8x16xf32>
    %cst_157 = arith.constant 1.000000e+00 : f32
    %587 = vector.broadcast %cst_157 : f32 to vector<8x16xf32>
    %588 = arith.divf %587, %586 : vector<8x16xf32>
    %cst_158 = arith.constant 1.000000e+00 : f32
    %589 = vector.broadcast %cst_158 : f32 to vector<8x16xf32>
    %590 = arith.addf %589, %582 : vector<8x16xf32>
    %591 = arith.divf %582, %590 : vector<8x16xf32>
    %592 = arith.select %584, %588, %591 : vector<8x16xi1>, vector<8x16xf32>
    %593 = vector.extract_strided_slice %43 {offsets = [3, 0, 0], sizes = [1, 8, 16], strides = [1, 1, 1]} : vector<8x8x16xf32> to vector<1x8x16xf32>
    %594 = vector.shape_cast %593 : vector<1x8x16xf32> to vector<8x16xf32>
    %595 = arith.addf %594, %525 : vector<8x16xf32>
    %596 = math.absf %595 : vector<8x16xf32>
    %cst_159 = arith.constant 0.000000e+00 : f32
    %597 = vector.broadcast %cst_159 : f32 to vector<8x16xf32>
    %598 = arith.subf %597, %596 : vector<8x16xf32>
    %599 = math.exp %598 : vector<8x16xf32>
    %cst_160 = arith.constant 0.000000e+00 : f32
    %600 = vector.broadcast %cst_160 : f32 to vector<8x16xf32>
    %601 = arith.cmpf oge, %595, %600 : vector<8x16xf32>
    %cst_161 = arith.constant 1.000000e+00 : f32
    %602 = vector.broadcast %cst_161 : f32 to vector<8x16xf32>
    %603 = arith.addf %602, %599 : vector<8x16xf32>
    %cst_162 = arith.constant 1.000000e+00 : f32
    %604 = vector.broadcast %cst_162 : f32 to vector<8x16xf32>
    %605 = arith.divf %604, %603 : vector<8x16xf32>
    %cst_163 = arith.constant 1.000000e+00 : f32
    %606 = vector.broadcast %cst_163 : f32 to vector<8x16xf32>
    %607 = arith.addf %606, %599 : vector<8x16xf32>
    %608 = arith.divf %599, %607 : vector<8x16xf32>
    %609 = arith.select %601, %605, %608 : vector<8x16xi1>, vector<8x16xf32>
    %610 = vector.extract_strided_slice %51 {offsets = [3, 0, 0], sizes = [1, 8, 16], strides = [1, 1, 1]} : vector<8x8x16xf32> to vector<1x8x16xf32>
    %611 = vector.shape_cast %610 : vector<1x8x16xf32> to vector<8x16xf32>
    %612 = arith.mulf %592, %530 : vector<8x16xf32>
    %613 = arith.addf %611, %612 : vector<8x16xf32>
    %614 = math.tanh %613 : vector<8x16xf32>
    %cst_164 = arith.constant 1.000000e+00 : f32
    %615 = vector.broadcast %cst_164 : f32 to vector<8x16xf32>
    %616 = arith.subf %615, %609 : vector<8x16xf32>
    %617 = arith.mulf %616, %614 : vector<8x16xf32>
    %618 = arith.mulf %609, %507 : vector<8x16xf32>
    %619 = arith.addf %617, %618 : vector<8x16xf32>
    %620 = arith.addf %508, %619 : vector<8x16xf32>
    %621 = vector.extract_strided_slice %52 {offsets = [0, 0, 0], sizes = [1, 16, 16], strides = [1, 1, 1]} : vector<6x16x16xf32> to vector<1x16x16xf32>
    %622 = vector.shape_cast %621 : vector<1x16x16xf32> to vector<16x16xf32>
    %cst_165 = arith.constant dense<0.000000e+00> : vector<8x16xf32>
    %623 = tpu.matmul %574, %622, %cst_165 {dimension_numbers = #tpu.dot_dimension_numbers<[1], [0], [0], [1], [0, 0, 1, 1], [], []>} : vector<8x16xf32>, vector<16x16xf32>, vector<8x16xf32> -> vector<8x16xf32>
    %624 = vector.extract_strided_slice %52 {offsets = [1, 0, 0], sizes = [1, 16, 16], strides = [1, 1, 1]} : vector<6x16x16xf32> to vector<1x16x16xf32>
    %625 = vector.shape_cast %624 : vector<1x16x16xf32> to vector<16x16xf32>
    %cst_166 = arith.constant dense<0.000000e+00> : vector<8x16xf32>
    %626 = tpu.matmul %574, %625, %cst_166 {dimension_numbers = #tpu.dot_dimension_numbers<[1], [0], [0], [1], [0, 0, 1, 1], [], []>} : vector<8x16xf32>, vector<16x16xf32>, vector<8x16xf32> -> vector<8x16xf32>
    %627 = vector.extract_strided_slice %52 {offsets = [2, 0, 0], sizes = [1, 16, 16], strides = [1, 1, 1]} : vector<6x16x16xf32> to vector<1x16x16xf32>
    %628 = vector.shape_cast %627 : vector<1x16x16xf32> to vector<16x16xf32>
    %cst_167 = arith.constant dense<0.000000e+00> : vector<8x16xf32>
    %629 = tpu.matmul %574, %628, %cst_167 {dimension_numbers = #tpu.dot_dimension_numbers<[1], [0], [0], [1], [0, 0, 1, 1], [], []>} : vector<8x16xf32>, vector<16x16xf32>, vector<8x16xf32> -> vector<8x16xf32>
    %630 = vector.broadcast %54 : vector<1x16xf32> to vector<8x16xf32>
    %631 = arith.addf %629, %630 : vector<8x16xf32>
    %632 = vector.extract_strided_slice %52 {offsets = [3, 0, 0], sizes = [1, 16, 16], strides = [1, 1, 1]} : vector<6x16x16xf32> to vector<1x16x16xf32>
    %633 = vector.shape_cast %632 : vector<1x16x16xf32> to vector<16x16xf32>
    %cst_168 = arith.constant dense<0.000000e+00> : vector<8x16xf32>
    %634 = tpu.matmul %619, %633, %cst_168 {dimension_numbers = #tpu.dot_dimension_numbers<[1], [0], [0], [1], [0, 0, 1, 1], [], []>} : vector<8x16xf32>, vector<16x16xf32>, vector<8x16xf32> -> vector<8x16xf32>
    %635 = vector.extract_strided_slice %52 {offsets = [4, 0, 0], sizes = [1, 16, 16], strides = [1, 1, 1]} : vector<6x16x16xf32> to vector<1x16x16xf32>
    %636 = vector.shape_cast %635 : vector<1x16x16xf32> to vector<16x16xf32>
    %cst_169 = arith.constant dense<0.000000e+00> : vector<8x16xf32>
    %637 = tpu.matmul %619, %636, %cst_169 {dimension_numbers = #tpu.dot_dimension_numbers<[1], [0], [0], [1], [0, 0, 1, 1], [], []>} : vector<8x16xf32>, vector<16x16xf32>, vector<8x16xf32> -> vector<8x16xf32>
    %638 = vector.extract_strided_slice %52 {offsets = [5, 0, 0], sizes = [1, 16, 16], strides = [1, 1, 1]} : vector<6x16x16xf32> to vector<1x16x16xf32>
    %639 = vector.shape_cast %638 : vector<1x16x16xf32> to vector<16x16xf32>
    %cst_170 = arith.constant dense<0.000000e+00> : vector<8x16xf32>
    %640 = tpu.matmul %619, %639, %cst_170 {dimension_numbers = #tpu.dot_dimension_numbers<[1], [0], [0], [1], [0, 0, 1, 1], [], []>} : vector<8x16xf32>, vector<16x16xf32>, vector<8x16xf32> -> vector<8x16xf32>
    %641 = vector.broadcast %56 : vector<1x16xf32> to vector<8x16xf32>
    %642 = arith.addf %640, %641 : vector<8x16xf32>
    %643 = vector.extract_strided_slice %11 {offsets = [5, 0, 0], sizes = [1, 8, 16], strides = [1, 1, 1]} : vector<8x8x16xf32> to vector<1x8x16xf32>
    %644 = vector.shape_cast %643 : vector<1x8x16xf32> to vector<8x16xf32>
    %645 = arith.addf %644, %623 : vector<8x16xf32>
    %646 = math.absf %645 : vector<8x16xf32>
    %cst_171 = arith.constant 0.000000e+00 : f32
    %647 = vector.broadcast %cst_171 : f32 to vector<8x16xf32>
    %648 = arith.subf %647, %646 : vector<8x16xf32>
    %649 = math.exp %648 : vector<8x16xf32>
    %cst_172 = arith.constant 0.000000e+00 : f32
    %650 = vector.broadcast %cst_172 : f32 to vector<8x16xf32>
    %651 = arith.cmpf oge, %645, %650 : vector<8x16xf32>
    %cst_173 = arith.constant 1.000000e+00 : f32
    %652 = vector.broadcast %cst_173 : f32 to vector<8x16xf32>
    %653 = arith.addf %652, %649 : vector<8x16xf32>
    %cst_174 = arith.constant 1.000000e+00 : f32
    %654 = vector.broadcast %cst_174 : f32 to vector<8x16xf32>
    %655 = arith.divf %654, %653 : vector<8x16xf32>
    %cst_175 = arith.constant 1.000000e+00 : f32
    %656 = vector.broadcast %cst_175 : f32 to vector<8x16xf32>
    %657 = arith.addf %656, %649 : vector<8x16xf32>
    %658 = arith.divf %649, %657 : vector<8x16xf32>
    %659 = arith.select %651, %655, %658 : vector<8x16xi1>, vector<8x16xf32>
    %660 = vector.extract_strided_slice %19 {offsets = [5, 0, 0], sizes = [1, 8, 16], strides = [1, 1, 1]} : vector<8x8x16xf32> to vector<1x8x16xf32>
    %661 = vector.shape_cast %660 : vector<1x8x16xf32> to vector<8x16xf32>
    %662 = arith.addf %661, %626 : vector<8x16xf32>
    %663 = math.absf %662 : vector<8x16xf32>
    %cst_176 = arith.constant 0.000000e+00 : f32
    %664 = vector.broadcast %cst_176 : f32 to vector<8x16xf32>
    %665 = arith.subf %664, %663 : vector<8x16xf32>
    %666 = math.exp %665 : vector<8x16xf32>
    %cst_177 = arith.constant 0.000000e+00 : f32
    %667 = vector.broadcast %cst_177 : f32 to vector<8x16xf32>
    %668 = arith.cmpf oge, %662, %667 : vector<8x16xf32>
    %cst_178 = arith.constant 1.000000e+00 : f32
    %669 = vector.broadcast %cst_178 : f32 to vector<8x16xf32>
    %670 = arith.addf %669, %666 : vector<8x16xf32>
    %cst_179 = arith.constant 1.000000e+00 : f32
    %671 = vector.broadcast %cst_179 : f32 to vector<8x16xf32>
    %672 = arith.divf %671, %670 : vector<8x16xf32>
    %cst_180 = arith.constant 1.000000e+00 : f32
    %673 = vector.broadcast %cst_180 : f32 to vector<8x16xf32>
    %674 = arith.addf %673, %666 : vector<8x16xf32>
    %675 = arith.divf %666, %674 : vector<8x16xf32>
    %676 = arith.select %668, %672, %675 : vector<8x16xi1>, vector<8x16xf32>
    %677 = vector.extract_strided_slice %27 {offsets = [5, 0, 0], sizes = [1, 8, 16], strides = [1, 1, 1]} : vector<8x8x16xf32> to vector<1x8x16xf32>
    %678 = vector.shape_cast %677 : vector<1x8x16xf32> to vector<8x16xf32>
    %679 = arith.mulf %659, %631 : vector<8x16xf32>
    %680 = arith.addf %678, %679 : vector<8x16xf32>
    %681 = math.tanh %680 : vector<8x16xf32>
    %cst_181 = arith.constant 1.000000e+00 : f32
    %682 = vector.broadcast %cst_181 : f32 to vector<8x16xf32>
    %683 = arith.subf %682, %676 : vector<8x16xf32>
    %684 = arith.mulf %683, %681 : vector<8x16xf32>
    %685 = arith.mulf %676, %574 : vector<8x16xf32>
    %686 = arith.addf %684, %685 : vector<8x16xf32>
    %687 = arith.addf %575, %686 : vector<8x16xf32>
    %688 = vector.extract_strided_slice %35 {offsets = [2, 0, 0], sizes = [1, 8, 16], strides = [1, 1, 1]} : vector<8x8x16xf32> to vector<1x8x16xf32>
    %689 = vector.shape_cast %688 : vector<1x8x16xf32> to vector<8x16xf32>
    %690 = arith.addf %689, %634 : vector<8x16xf32>
    %691 = math.absf %690 : vector<8x16xf32>
    %cst_182 = arith.constant 0.000000e+00 : f32
    %692 = vector.broadcast %cst_182 : f32 to vector<8x16xf32>
    %693 = arith.subf %692, %691 : vector<8x16xf32>
    %694 = math.exp %693 : vector<8x16xf32>
    %cst_183 = arith.constant 0.000000e+00 : f32
    %695 = vector.broadcast %cst_183 : f32 to vector<8x16xf32>
    %696 = arith.cmpf oge, %690, %695 : vector<8x16xf32>
    %cst_184 = arith.constant 1.000000e+00 : f32
    %697 = vector.broadcast %cst_184 : f32 to vector<8x16xf32>
    %698 = arith.addf %697, %694 : vector<8x16xf32>
    %cst_185 = arith.constant 1.000000e+00 : f32
    %699 = vector.broadcast %cst_185 : f32 to vector<8x16xf32>
    %700 = arith.divf %699, %698 : vector<8x16xf32>
    %cst_186 = arith.constant 1.000000e+00 : f32
    %701 = vector.broadcast %cst_186 : f32 to vector<8x16xf32>
    %702 = arith.addf %701, %694 : vector<8x16xf32>
    %703 = arith.divf %694, %702 : vector<8x16xf32>
    %704 = arith.select %696, %700, %703 : vector<8x16xi1>, vector<8x16xf32>
    %705 = vector.extract_strided_slice %43 {offsets = [2, 0, 0], sizes = [1, 8, 16], strides = [1, 1, 1]} : vector<8x8x16xf32> to vector<1x8x16xf32>
    %706 = vector.shape_cast %705 : vector<1x8x16xf32> to vector<8x16xf32>
    %707 = arith.addf %706, %637 : vector<8x16xf32>
    %708 = math.absf %707 : vector<8x16xf32>
    %cst_187 = arith.constant 0.000000e+00 : f32
    %709 = vector.broadcast %cst_187 : f32 to vector<8x16xf32>
    %710 = arith.subf %709, %708 : vector<8x16xf32>
    %711 = math.exp %710 : vector<8x16xf32>
    %cst_188 = arith.constant 0.000000e+00 : f32
    %712 = vector.broadcast %cst_188 : f32 to vector<8x16xf32>
    %713 = arith.cmpf oge, %707, %712 : vector<8x16xf32>
    %cst_189 = arith.constant 1.000000e+00 : f32
    %714 = vector.broadcast %cst_189 : f32 to vector<8x16xf32>
    %715 = arith.addf %714, %711 : vector<8x16xf32>
    %cst_190 = arith.constant 1.000000e+00 : f32
    %716 = vector.broadcast %cst_190 : f32 to vector<8x16xf32>
    %717 = arith.divf %716, %715 : vector<8x16xf32>
    %cst_191 = arith.constant 1.000000e+00 : f32
    %718 = vector.broadcast %cst_191 : f32 to vector<8x16xf32>
    %719 = arith.addf %718, %711 : vector<8x16xf32>
    %720 = arith.divf %711, %719 : vector<8x16xf32>
    %721 = arith.select %713, %717, %720 : vector<8x16xi1>, vector<8x16xf32>
    %722 = vector.extract_strided_slice %51 {offsets = [2, 0, 0], sizes = [1, 8, 16], strides = [1, 1, 1]} : vector<8x8x16xf32> to vector<1x8x16xf32>
    %723 = vector.shape_cast %722 : vector<1x8x16xf32> to vector<8x16xf32>
    %724 = arith.mulf %704, %642 : vector<8x16xf32>
    %725 = arith.addf %723, %724 : vector<8x16xf32>
    %726 = math.tanh %725 : vector<8x16xf32>
    %cst_192 = arith.constant 1.000000e+00 : f32
    %727 = vector.broadcast %cst_192 : f32 to vector<8x16xf32>
    %728 = arith.subf %727, %721 : vector<8x16xf32>
    %729 = arith.mulf %728, %726 : vector<8x16xf32>
    %730 = arith.mulf %721, %619 : vector<8x16xf32>
    %731 = arith.addf %729, %730 : vector<8x16xf32>
    %732 = arith.addf %620, %731 : vector<8x16xf32>
    %733 = vector.extract_strided_slice %52 {offsets = [0, 0, 0], sizes = [1, 16, 16], strides = [1, 1, 1]} : vector<6x16x16xf32> to vector<1x16x16xf32>
    %734 = vector.shape_cast %733 : vector<1x16x16xf32> to vector<16x16xf32>
    %cst_193 = arith.constant dense<0.000000e+00> : vector<8x16xf32>
    %735 = tpu.matmul %686, %734, %cst_193 {dimension_numbers = #tpu.dot_dimension_numbers<[1], [0], [0], [1], [0, 0, 1, 1], [], []>} : vector<8x16xf32>, vector<16x16xf32>, vector<8x16xf32> -> vector<8x16xf32>
    %736 = vector.extract_strided_slice %52 {offsets = [1, 0, 0], sizes = [1, 16, 16], strides = [1, 1, 1]} : vector<6x16x16xf32> to vector<1x16x16xf32>
    %737 = vector.shape_cast %736 : vector<1x16x16xf32> to vector<16x16xf32>
    %cst_194 = arith.constant dense<0.000000e+00> : vector<8x16xf32>
    %738 = tpu.matmul %686, %737, %cst_194 {dimension_numbers = #tpu.dot_dimension_numbers<[1], [0], [0], [1], [0, 0, 1, 1], [], []>} : vector<8x16xf32>, vector<16x16xf32>, vector<8x16xf32> -> vector<8x16xf32>
    %739 = vector.extract_strided_slice %52 {offsets = [2, 0, 0], sizes = [1, 16, 16], strides = [1, 1, 1]} : vector<6x16x16xf32> to vector<1x16x16xf32>
    %740 = vector.shape_cast %739 : vector<1x16x16xf32> to vector<16x16xf32>
    %cst_195 = arith.constant dense<0.000000e+00> : vector<8x16xf32>
    %741 = tpu.matmul %686, %740, %cst_195 {dimension_numbers = #tpu.dot_dimension_numbers<[1], [0], [0], [1], [0, 0, 1, 1], [], []>} : vector<8x16xf32>, vector<16x16xf32>, vector<8x16xf32> -> vector<8x16xf32>
    %742 = vector.broadcast %54 : vector<1x16xf32> to vector<8x16xf32>
    %743 = arith.addf %741, %742 : vector<8x16xf32>
    %744 = vector.extract_strided_slice %52 {offsets = [3, 0, 0], sizes = [1, 16, 16], strides = [1, 1, 1]} : vector<6x16x16xf32> to vector<1x16x16xf32>
    %745 = vector.shape_cast %744 : vector<1x16x16xf32> to vector<16x16xf32>
    %cst_196 = arith.constant dense<0.000000e+00> : vector<8x16xf32>
    %746 = tpu.matmul %731, %745, %cst_196 {dimension_numbers = #tpu.dot_dimension_numbers<[1], [0], [0], [1], [0, 0, 1, 1], [], []>} : vector<8x16xf32>, vector<16x16xf32>, vector<8x16xf32> -> vector<8x16xf32>
    %747 = vector.extract_strided_slice %52 {offsets = [4, 0, 0], sizes = [1, 16, 16], strides = [1, 1, 1]} : vector<6x16x16xf32> to vector<1x16x16xf32>
    %748 = vector.shape_cast %747 : vector<1x16x16xf32> to vector<16x16xf32>
    %cst_197 = arith.constant dense<0.000000e+00> : vector<8x16xf32>
    %749 = tpu.matmul %731, %748, %cst_197 {dimension_numbers = #tpu.dot_dimension_numbers<[1], [0], [0], [1], [0, 0, 1, 1], [], []>} : vector<8x16xf32>, vector<16x16xf32>, vector<8x16xf32> -> vector<8x16xf32>
    %750 = vector.extract_strided_slice %52 {offsets = [5, 0, 0], sizes = [1, 16, 16], strides = [1, 1, 1]} : vector<6x16x16xf32> to vector<1x16x16xf32>
    %751 = vector.shape_cast %750 : vector<1x16x16xf32> to vector<16x16xf32>
    %cst_198 = arith.constant dense<0.000000e+00> : vector<8x16xf32>
    %752 = tpu.matmul %731, %751, %cst_198 {dimension_numbers = #tpu.dot_dimension_numbers<[1], [0], [0], [1], [0, 0, 1, 1], [], []>} : vector<8x16xf32>, vector<16x16xf32>, vector<8x16xf32> -> vector<8x16xf32>
    %753 = vector.broadcast %56 : vector<1x16xf32> to vector<8x16xf32>
    %754 = arith.addf %752, %753 : vector<8x16xf32>
    %755 = vector.extract_strided_slice %11 {offsets = [6, 0, 0], sizes = [1, 8, 16], strides = [1, 1, 1]} : vector<8x8x16xf32> to vector<1x8x16xf32>
    %756 = vector.shape_cast %755 : vector<1x8x16xf32> to vector<8x16xf32>
    %757 = arith.addf %756, %735 : vector<8x16xf32>
    %758 = math.absf %757 : vector<8x16xf32>
    %cst_199 = arith.constant 0.000000e+00 : f32
    %759 = vector.broadcast %cst_199 : f32 to vector<8x16xf32>
    %760 = arith.subf %759, %758 : vector<8x16xf32>
    %761 = math.exp %760 : vector<8x16xf32>
    %cst_200 = arith.constant 0.000000e+00 : f32
    %762 = vector.broadcast %cst_200 : f32 to vector<8x16xf32>
    %763 = arith.cmpf oge, %757, %762 : vector<8x16xf32>
    %cst_201 = arith.constant 1.000000e+00 : f32
    %764 = vector.broadcast %cst_201 : f32 to vector<8x16xf32>
    %765 = arith.addf %764, %761 : vector<8x16xf32>
    %cst_202 = arith.constant 1.000000e+00 : f32
    %766 = vector.broadcast %cst_202 : f32 to vector<8x16xf32>
    %767 = arith.divf %766, %765 : vector<8x16xf32>
    %cst_203 = arith.constant 1.000000e+00 : f32
    %768 = vector.broadcast %cst_203 : f32 to vector<8x16xf32>
    %769 = arith.addf %768, %761 : vector<8x16xf32>
    %770 = arith.divf %761, %769 : vector<8x16xf32>
    %771 = arith.select %763, %767, %770 : vector<8x16xi1>, vector<8x16xf32>
    %772 = vector.extract_strided_slice %19 {offsets = [6, 0, 0], sizes = [1, 8, 16], strides = [1, 1, 1]} : vector<8x8x16xf32> to vector<1x8x16xf32>
    %773 = vector.shape_cast %772 : vector<1x8x16xf32> to vector<8x16xf32>
    %774 = arith.addf %773, %738 : vector<8x16xf32>
    %775 = math.absf %774 : vector<8x16xf32>
    %cst_204 = arith.constant 0.000000e+00 : f32
    %776 = vector.broadcast %cst_204 : f32 to vector<8x16xf32>
    %777 = arith.subf %776, %775 : vector<8x16xf32>
    %778 = math.exp %777 : vector<8x16xf32>
    %cst_205 = arith.constant 0.000000e+00 : f32
    %779 = vector.broadcast %cst_205 : f32 to vector<8x16xf32>
    %780 = arith.cmpf oge, %774, %779 : vector<8x16xf32>
    %cst_206 = arith.constant 1.000000e+00 : f32
    %781 = vector.broadcast %cst_206 : f32 to vector<8x16xf32>
    %782 = arith.addf %781, %778 : vector<8x16xf32>
    %cst_207 = arith.constant 1.000000e+00 : f32
    %783 = vector.broadcast %cst_207 : f32 to vector<8x16xf32>
    %784 = arith.divf %783, %782 : vector<8x16xf32>
    %cst_208 = arith.constant 1.000000e+00 : f32
    %785 = vector.broadcast %cst_208 : f32 to vector<8x16xf32>
    %786 = arith.addf %785, %778 : vector<8x16xf32>
    %787 = arith.divf %778, %786 : vector<8x16xf32>
    %788 = arith.select %780, %784, %787 : vector<8x16xi1>, vector<8x16xf32>
    %789 = vector.extract_strided_slice %27 {offsets = [6, 0, 0], sizes = [1, 8, 16], strides = [1, 1, 1]} : vector<8x8x16xf32> to vector<1x8x16xf32>
    %790 = vector.shape_cast %789 : vector<1x8x16xf32> to vector<8x16xf32>
    %791 = arith.mulf %771, %743 : vector<8x16xf32>
    %792 = arith.addf %790, %791 : vector<8x16xf32>
    %793 = math.tanh %792 : vector<8x16xf32>
    %cst_209 = arith.constant 1.000000e+00 : f32
    %794 = vector.broadcast %cst_209 : f32 to vector<8x16xf32>
    %795 = arith.subf %794, %788 : vector<8x16xf32>
    %796 = arith.mulf %795, %793 : vector<8x16xf32>
    %797 = arith.mulf %788, %686 : vector<8x16xf32>
    %798 = arith.addf %796, %797 : vector<8x16xf32>
    %799 = arith.addf %687, %798 : vector<8x16xf32>
    %800 = vector.extract_strided_slice %35 {offsets = [1, 0, 0], sizes = [1, 8, 16], strides = [1, 1, 1]} : vector<8x8x16xf32> to vector<1x8x16xf32>
    %801 = vector.shape_cast %800 : vector<1x8x16xf32> to vector<8x16xf32>
    %802 = arith.addf %801, %746 : vector<8x16xf32>
    %803 = math.absf %802 : vector<8x16xf32>
    %cst_210 = arith.constant 0.000000e+00 : f32
    %804 = vector.broadcast %cst_210 : f32 to vector<8x16xf32>
    %805 = arith.subf %804, %803 : vector<8x16xf32>
    %806 = math.exp %805 : vector<8x16xf32>
    %cst_211 = arith.constant 0.000000e+00 : f32
    %807 = vector.broadcast %cst_211 : f32 to vector<8x16xf32>
    %808 = arith.cmpf oge, %802, %807 : vector<8x16xf32>
    %cst_212 = arith.constant 1.000000e+00 : f32
    %809 = vector.broadcast %cst_212 : f32 to vector<8x16xf32>
    %810 = arith.addf %809, %806 : vector<8x16xf32>
    %cst_213 = arith.constant 1.000000e+00 : f32
    %811 = vector.broadcast %cst_213 : f32 to vector<8x16xf32>
    %812 = arith.divf %811, %810 : vector<8x16xf32>
    %cst_214 = arith.constant 1.000000e+00 : f32
    %813 = vector.broadcast %cst_214 : f32 to vector<8x16xf32>
    %814 = arith.addf %813, %806 : vector<8x16xf32>
    %815 = arith.divf %806, %814 : vector<8x16xf32>
    %816 = arith.select %808, %812, %815 : vector<8x16xi1>, vector<8x16xf32>
    %817 = vector.extract_strided_slice %43 {offsets = [1, 0, 0], sizes = [1, 8, 16], strides = [1, 1, 1]} : vector<8x8x16xf32> to vector<1x8x16xf32>
    %818 = vector.shape_cast %817 : vector<1x8x16xf32> to vector<8x16xf32>
    %819 = arith.addf %818, %749 : vector<8x16xf32>
    %820 = math.absf %819 : vector<8x16xf32>
    %cst_215 = arith.constant 0.000000e+00 : f32
    %821 = vector.broadcast %cst_215 : f32 to vector<8x16xf32>
    %822 = arith.subf %821, %820 : vector<8x16xf32>
    %823 = math.exp %822 : vector<8x16xf32>
    %cst_216 = arith.constant 0.000000e+00 : f32
    %824 = vector.broadcast %cst_216 : f32 to vector<8x16xf32>
    %825 = arith.cmpf oge, %819, %824 : vector<8x16xf32>
    %cst_217 = arith.constant 1.000000e+00 : f32
    %826 = vector.broadcast %cst_217 : f32 to vector<8x16xf32>
    %827 = arith.addf %826, %823 : vector<8x16xf32>
    %cst_218 = arith.constant 1.000000e+00 : f32
    %828 = vector.broadcast %cst_218 : f32 to vector<8x16xf32>
    %829 = arith.divf %828, %827 : vector<8x16xf32>
    %cst_219 = arith.constant 1.000000e+00 : f32
    %830 = vector.broadcast %cst_219 : f32 to vector<8x16xf32>
    %831 = arith.addf %830, %823 : vector<8x16xf32>
    %832 = arith.divf %823, %831 : vector<8x16xf32>
    %833 = arith.select %825, %829, %832 : vector<8x16xi1>, vector<8x16xf32>
    %834 = vector.extract_strided_slice %51 {offsets = [1, 0, 0], sizes = [1, 8, 16], strides = [1, 1, 1]} : vector<8x8x16xf32> to vector<1x8x16xf32>
    %835 = vector.shape_cast %834 : vector<1x8x16xf32> to vector<8x16xf32>
    %836 = arith.mulf %816, %754 : vector<8x16xf32>
    %837 = arith.addf %835, %836 : vector<8x16xf32>
    %838 = math.tanh %837 : vector<8x16xf32>
    %cst_220 = arith.constant 1.000000e+00 : f32
    %839 = vector.broadcast %cst_220 : f32 to vector<8x16xf32>
    %840 = arith.subf %839, %833 : vector<8x16xf32>
    %841 = arith.mulf %840, %838 : vector<8x16xf32>
    %842 = arith.mulf %833, %731 : vector<8x16xf32>
    %843 = arith.addf %841, %842 : vector<8x16xf32>
    %844 = arith.addf %732, %843 : vector<8x16xf32>
    %845 = vector.extract_strided_slice %52 {offsets = [0, 0, 0], sizes = [1, 16, 16], strides = [1, 1, 1]} : vector<6x16x16xf32> to vector<1x16x16xf32>
    %846 = vector.shape_cast %845 : vector<1x16x16xf32> to vector<16x16xf32>
    %cst_221 = arith.constant dense<0.000000e+00> : vector<8x16xf32>
    %847 = tpu.matmul %798, %846, %cst_221 {dimension_numbers = #tpu.dot_dimension_numbers<[1], [0], [0], [1], [0, 0, 1, 1], [], []>} : vector<8x16xf32>, vector<16x16xf32>, vector<8x16xf32> -> vector<8x16xf32>
    %848 = vector.extract_strided_slice %52 {offsets = [1, 0, 0], sizes = [1, 16, 16], strides = [1, 1, 1]} : vector<6x16x16xf32> to vector<1x16x16xf32>
    %849 = vector.shape_cast %848 : vector<1x16x16xf32> to vector<16x16xf32>
    %cst_222 = arith.constant dense<0.000000e+00> : vector<8x16xf32>
    %850 = tpu.matmul %798, %849, %cst_222 {dimension_numbers = #tpu.dot_dimension_numbers<[1], [0], [0], [1], [0, 0, 1, 1], [], []>} : vector<8x16xf32>, vector<16x16xf32>, vector<8x16xf32> -> vector<8x16xf32>
    %851 = vector.extract_strided_slice %52 {offsets = [2, 0, 0], sizes = [1, 16, 16], strides = [1, 1, 1]} : vector<6x16x16xf32> to vector<1x16x16xf32>
    %852 = vector.shape_cast %851 : vector<1x16x16xf32> to vector<16x16xf32>
    %cst_223 = arith.constant dense<0.000000e+00> : vector<8x16xf32>
    %853 = tpu.matmul %798, %852, %cst_223 {dimension_numbers = #tpu.dot_dimension_numbers<[1], [0], [0], [1], [0, 0, 1, 1], [], []>} : vector<8x16xf32>, vector<16x16xf32>, vector<8x16xf32> -> vector<8x16xf32>
    %854 = vector.broadcast %54 : vector<1x16xf32> to vector<8x16xf32>
    %855 = arith.addf %853, %854 : vector<8x16xf32>
    %856 = vector.extract_strided_slice %52 {offsets = [3, 0, 0], sizes = [1, 16, 16], strides = [1, 1, 1]} : vector<6x16x16xf32> to vector<1x16x16xf32>
    %857 = vector.shape_cast %856 : vector<1x16x16xf32> to vector<16x16xf32>
    %cst_224 = arith.constant dense<0.000000e+00> : vector<8x16xf32>
    %858 = tpu.matmul %843, %857, %cst_224 {dimension_numbers = #tpu.dot_dimension_numbers<[1], [0], [0], [1], [0, 0, 1, 1], [], []>} : vector<8x16xf32>, vector<16x16xf32>, vector<8x16xf32> -> vector<8x16xf32>
    %859 = vector.extract_strided_slice %52 {offsets = [4, 0, 0], sizes = [1, 16, 16], strides = [1, 1, 1]} : vector<6x16x16xf32> to vector<1x16x16xf32>
    %860 = vector.shape_cast %859 : vector<1x16x16xf32> to vector<16x16xf32>
    %cst_225 = arith.constant dense<0.000000e+00> : vector<8x16xf32>
    %861 = tpu.matmul %843, %860, %cst_225 {dimension_numbers = #tpu.dot_dimension_numbers<[1], [0], [0], [1], [0, 0, 1, 1], [], []>} : vector<8x16xf32>, vector<16x16xf32>, vector<8x16xf32> -> vector<8x16xf32>
    %862 = vector.extract_strided_slice %52 {offsets = [5, 0, 0], sizes = [1, 16, 16], strides = [1, 1, 1]} : vector<6x16x16xf32> to vector<1x16x16xf32>
    %863 = vector.shape_cast %862 : vector<1x16x16xf32> to vector<16x16xf32>
    %cst_226 = arith.constant dense<0.000000e+00> : vector<8x16xf32>
    %864 = tpu.matmul %843, %863, %cst_226 {dimension_numbers = #tpu.dot_dimension_numbers<[1], [0], [0], [1], [0, 0, 1, 1], [], []>} : vector<8x16xf32>, vector<16x16xf32>, vector<8x16xf32> -> vector<8x16xf32>
    %865 = vector.broadcast %56 : vector<1x16xf32> to vector<8x16xf32>
    %866 = arith.addf %864, %865 : vector<8x16xf32>
    %867 = vector.extract_strided_slice %11 {offsets = [7, 0, 0], sizes = [1, 8, 16], strides = [1, 1, 1]} : vector<8x8x16xf32> to vector<1x8x16xf32>
    %868 = vector.shape_cast %867 : vector<1x8x16xf32> to vector<8x16xf32>
    %869 = arith.addf %868, %847 : vector<8x16xf32>
    %870 = math.absf %869 : vector<8x16xf32>
    %cst_227 = arith.constant 0.000000e+00 : f32
    %871 = vector.broadcast %cst_227 : f32 to vector<8x16xf32>
    %872 = arith.subf %871, %870 : vector<8x16xf32>
    %873 = math.exp %872 : vector<8x16xf32>
    %cst_228 = arith.constant 0.000000e+00 : f32
    %874 = vector.broadcast %cst_228 : f32 to vector<8x16xf32>
    %875 = arith.cmpf oge, %869, %874 : vector<8x16xf32>
    %cst_229 = arith.constant 1.000000e+00 : f32
    %876 = vector.broadcast %cst_229 : f32 to vector<8x16xf32>
    %877 = arith.addf %876, %873 : vector<8x16xf32>
    %cst_230 = arith.constant 1.000000e+00 : f32
    %878 = vector.broadcast %cst_230 : f32 to vector<8x16xf32>
    %879 = arith.divf %878, %877 : vector<8x16xf32>
    %cst_231 = arith.constant 1.000000e+00 : f32
    %880 = vector.broadcast %cst_231 : f32 to vector<8x16xf32>
    %881 = arith.addf %880, %873 : vector<8x16xf32>
    %882 = arith.divf %873, %881 : vector<8x16xf32>
    %883 = arith.select %875, %879, %882 : vector<8x16xi1>, vector<8x16xf32>
    %884 = vector.extract_strided_slice %19 {offsets = [7, 0, 0], sizes = [1, 8, 16], strides = [1, 1, 1]} : vector<8x8x16xf32> to vector<1x8x16xf32>
    %885 = vector.shape_cast %884 : vector<1x8x16xf32> to vector<8x16xf32>
    %886 = arith.addf %885, %850 : vector<8x16xf32>
    %887 = math.absf %886 : vector<8x16xf32>
    %cst_232 = arith.constant 0.000000e+00 : f32
    %888 = vector.broadcast %cst_232 : f32 to vector<8x16xf32>
    %889 = arith.subf %888, %887 : vector<8x16xf32>
    %890 = math.exp %889 : vector<8x16xf32>
    %cst_233 = arith.constant 0.000000e+00 : f32
    %891 = vector.broadcast %cst_233 : f32 to vector<8x16xf32>
    %892 = arith.cmpf oge, %886, %891 : vector<8x16xf32>
    %cst_234 = arith.constant 1.000000e+00 : f32
    %893 = vector.broadcast %cst_234 : f32 to vector<8x16xf32>
    %894 = arith.addf %893, %890 : vector<8x16xf32>
    %cst_235 = arith.constant 1.000000e+00 : f32
    %895 = vector.broadcast %cst_235 : f32 to vector<8x16xf32>
    %896 = arith.divf %895, %894 : vector<8x16xf32>
    %cst_236 = arith.constant 1.000000e+00 : f32
    %897 = vector.broadcast %cst_236 : f32 to vector<8x16xf32>
    %898 = arith.addf %897, %890 : vector<8x16xf32>
    %899 = arith.divf %890, %898 : vector<8x16xf32>
    %900 = arith.select %892, %896, %899 : vector<8x16xi1>, vector<8x16xf32>
    %901 = vector.extract_strided_slice %27 {offsets = [7, 0, 0], sizes = [1, 8, 16], strides = [1, 1, 1]} : vector<8x8x16xf32> to vector<1x8x16xf32>
    %902 = vector.shape_cast %901 : vector<1x8x16xf32> to vector<8x16xf32>
    %903 = arith.mulf %883, %855 : vector<8x16xf32>
    %904 = arith.addf %902, %903 : vector<8x16xf32>
    %905 = math.tanh %904 : vector<8x16xf32>
    %cst_237 = arith.constant 1.000000e+00 : f32
    %906 = vector.broadcast %cst_237 : f32 to vector<8x16xf32>
    %907 = arith.subf %906, %900 : vector<8x16xf32>
    %908 = arith.mulf %907, %905 : vector<8x16xf32>
    %909 = arith.mulf %900, %798 : vector<8x16xf32>
    %910 = arith.addf %908, %909 : vector<8x16xf32>
    %911 = arith.addf %799, %910 : vector<8x16xf32>
    %912 = vector.extract_strided_slice %35 {offsets = [0, 0, 0], sizes = [1, 8, 16], strides = [1, 1, 1]} : vector<8x8x16xf32> to vector<1x8x16xf32>
    %913 = vector.shape_cast %912 : vector<1x8x16xf32> to vector<8x16xf32>
    %914 = arith.addf %913, %858 : vector<8x16xf32>
    %915 = math.absf %914 : vector<8x16xf32>
    %cst_238 = arith.constant 0.000000e+00 : f32
    %916 = vector.broadcast %cst_238 : f32 to vector<8x16xf32>
    %917 = arith.subf %916, %915 : vector<8x16xf32>
    %918 = math.exp %917 : vector<8x16xf32>
    %cst_239 = arith.constant 0.000000e+00 : f32
    %919 = vector.broadcast %cst_239 : f32 to vector<8x16xf32>
    %920 = arith.cmpf oge, %914, %919 : vector<8x16xf32>
    %cst_240 = arith.constant 1.000000e+00 : f32
    %921 = vector.broadcast %cst_240 : f32 to vector<8x16xf32>
    %922 = arith.addf %921, %918 : vector<8x16xf32>
    %cst_241 = arith.constant 1.000000e+00 : f32
    %923 = vector.broadcast %cst_241 : f32 to vector<8x16xf32>
    %924 = arith.divf %923, %922 : vector<8x16xf32>
    %cst_242 = arith.constant 1.000000e+00 : f32
    %925 = vector.broadcast %cst_242 : f32 to vector<8x16xf32>
    %926 = arith.addf %925, %918 : vector<8x16xf32>
    %927 = arith.divf %918, %926 : vector<8x16xf32>
    %928 = arith.select %920, %924, %927 : vector<8x16xi1>, vector<8x16xf32>
    %929 = vector.extract_strided_slice %43 {offsets = [0, 0, 0], sizes = [1, 8, 16], strides = [1, 1, 1]} : vector<8x8x16xf32> to vector<1x8x16xf32>
    %930 = vector.shape_cast %929 : vector<1x8x16xf32> to vector<8x16xf32>
    %931 = arith.addf %930, %861 : vector<8x16xf32>
    %932 = math.absf %931 : vector<8x16xf32>
    %cst_243 = arith.constant 0.000000e+00 : f32
    %933 = vector.broadcast %cst_243 : f32 to vector<8x16xf32>
    %934 = arith.subf %933, %932 : vector<8x16xf32>
    %935 = math.exp %934 : vector<8x16xf32>
    %cst_244 = arith.constant 0.000000e+00 : f32
    %936 = vector.broadcast %cst_244 : f32 to vector<8x16xf32>
    %937 = arith.cmpf oge, %931, %936 : vector<8x16xf32>
    %cst_245 = arith.constant 1.000000e+00 : f32
    %938 = vector.broadcast %cst_245 : f32 to vector<8x16xf32>
    %939 = arith.addf %938, %935 : vector<8x16xf32>
    %cst_246 = arith.constant 1.000000e+00 : f32
    %940 = vector.broadcast %cst_246 : f32 to vector<8x16xf32>
    %941 = arith.divf %940, %939 : vector<8x16xf32>
    %cst_247 = arith.constant 1.000000e+00 : f32
    %942 = vector.broadcast %cst_247 : f32 to vector<8x16xf32>
    %943 = arith.addf %942, %935 : vector<8x16xf32>
    %944 = arith.divf %935, %943 : vector<8x16xf32>
    %945 = arith.select %937, %941, %944 : vector<8x16xi1>, vector<8x16xf32>
    %946 = vector.extract_strided_slice %51 {offsets = [0, 0, 0], sizes = [1, 8, 16], strides = [1, 1, 1]} : vector<8x8x16xf32> to vector<1x8x16xf32>
    %947 = vector.shape_cast %946 : vector<1x8x16xf32> to vector<8x16xf32>
    %948 = arith.mulf %928, %866 : vector<8x16xf32>
    %949 = arith.addf %947, %948 : vector<8x16xf32>
    %950 = math.tanh %949 : vector<8x16xf32>
    %cst_248 = arith.constant 1.000000e+00 : f32
    %951 = vector.broadcast %cst_248 : f32 to vector<8x16xf32>
    %952 = arith.subf %951, %945 : vector<8x16xf32>
    %953 = arith.mulf %952, %950 : vector<8x16xf32>
    %954 = arith.mulf %945, %843 : vector<8x16xf32>
    %955 = arith.addf %953, %954 : vector<8x16xf32>
    %956 = arith.addf %844, %955 : vector<8x16xf32>
    %cst_249 = arith.constant 1.250000e-01 : f32
    %957 = vector.broadcast %cst_249 : f32 to vector<8x16xf32>
    %958 = arith.mulf %911, %957 : vector<8x16xf32>
    %cst_250 = arith.constant 1.250000e-01 : f32
    %959 = vector.broadcast %cst_250 : f32 to vector<8x16xf32>
    %960 = arith.mulf %956, %959 : vector<8x16xf32>
    %961 = tpu.concatenate %958, %960 in 1 : vector<8x16xf32>, vector<8x16xf32> -> vector<8x32xf32>
    %c0_251 = arith.constant 0 : index
    %c0_252 = arith.constant 0 : index
    %962 = vector.load %arg6[%c0_251, %c0_252] : memref<8x8xf32, #tpu.memory_space<vmem>>, vector<8x8xf32>
    %c0_253 = arith.constant 0 : index
    %c0_254 = arith.constant 0 : index
    %963 = vector.load %arg7[%c0_253, %c0_254] : memref<32x32xf32, #tpu.memory_space<vmem>>, vector<32x32xf32>
    %cst_255 = arith.constant dense<0.000000e+00> : vector<8x32xf32>
    %964 = tpu.matmul %961, %963, %cst_255 {dimension_numbers = #tpu.dot_dimension_numbers<[1], [0], [0], [1], [0, 0, 1, 1], [], []>} : vector<8x32xf32>, vector<32x32xf32>, vector<8x32xf32> -> vector<8x32xf32>
    %cst_256 = arith.constant dense<0.000000e+00> : vector<8x32xf32>
    %965 = tpu.matmul %962, %964, %cst_256 {dimension_numbers = #tpu.dot_dimension_numbers<[1], [0], [0], [1], [0, 0, 1, 1], [], []>} : vector<8x8xf32>, vector<8x32xf32>, vector<8x32xf32> -> vector<8x32xf32>
    %c0_257 = arith.constant 0 : index
    %c0_258 = arith.constant 0 : index
    %966 = vector.load %arg8[%c0_257, %c0_258] : memref<1x32xf32, #tpu.memory_space<vmem>>, vector<1x32xf32>
    %967 = vector.broadcast %966 : vector<1x32xf32> to vector<8x32xf32>
    %968 = arith.addf %965, %967 : vector<8x32xf32>
    %cst_259 = arith.constant 0.000000e+00 : f32
    %969 = vector.broadcast %cst_259 : f32 to vector<8x32xf32>
    %970 = arith.maximumf %968, %969 : vector<8x32xf32>
    %c0_260 = arith.constant 0 : index
    %c0_261 = arith.constant 0 : index
    %971 = vector.load %arg9[%c0_260, %c0_261] : memref<32x32xf32, #tpu.memory_space<vmem>>, vector<32x32xf32>
    %cst_262 = arith.constant dense<0.000000e+00> : vector<8x32xf32>
    %972 = tpu.matmul %970, %971, %cst_262 {dimension_numbers = #tpu.dot_dimension_numbers<[1], [0], [0], [1], [0, 0, 1, 1], [], []>} : vector<8x32xf32>, vector<32x32xf32>, vector<8x32xf32> -> vector<8x32xf32>
    %cst_263 = arith.constant dense<0.000000e+00> : vector<8x32xf32>
    %973 = tpu.matmul %962, %972, %cst_263 {dimension_numbers = #tpu.dot_dimension_numbers<[1], [0], [0], [1], [0, 0, 1, 1], [], []>} : vector<8x8xf32>, vector<8x32xf32>, vector<8x32xf32> -> vector<8x32xf32>
    %c0_264 = arith.constant 0 : index
    %c0_265 = arith.constant 0 : index
    %974 = vector.load %arg10[%c0_264, %c0_265] : memref<1x32xf32, #tpu.memory_space<vmem>>, vector<1x32xf32>
    %975 = vector.broadcast %974 : vector<1x32xf32> to vector<8x32xf32>
    %976 = arith.addf %973, %975 : vector<8x32xf32>
    %cst_266 = arith.constant 0.000000e+00 : f32
    %977 = vector.broadcast %cst_266 : f32 to vector<8x32xf32>
    %978 = arith.maximumf %976, %977 : vector<8x32xf32>
    %c0_267 = arith.constant 0 : index
    %c0_268 = arith.constant 0 : index
    %979 = vector.load %arg11[%c0_267, %c0_268] : memref<32x1xf32, #tpu.memory_space<vmem>>, vector<32x1xf32>
    %cst_269 = arith.constant dense<0.000000e+00> : vector<8x1xf32>
    %980 = tpu.matmul %978, %979, %cst_269 {dimension_numbers = #tpu.dot_dimension_numbers<[1], [0], [0], [1], [0, 0, 1, 1], [], []>} : vector<8x32xf32>, vector<32x1xf32>, vector<8x1xf32> -> vector<8x1xf32>
    %c0_270 = arith.constant 0 : index
    %c0_271 = arith.constant 0 : index
    %981 = vector.load %arg12[%c0_270, %c0_271] : memref<1x1xf32, #tpu.memory_space<vmem>>, vector<1x1xf32>
    %982 = vector.broadcast %981 : vector<1x1xf32> to vector<8x1xf32>
    %983 = arith.addf %980, %982 : vector<8x1xf32>
    %c0_272 = arith.constant 0 : index
    %c0_273 = arith.constant 0 : index
    %984 = vector.load %arg13[%c0_272, %c0_273] : memref<8x3xf32, #tpu.memory_space<vmem>>, vector<8x3xf32>
    %cst_274 = arith.constant 0.000000e+00 : f32
    %985 = vector.broadcast %cst_274 : f32 to vector<8x3xf32>
    %986 = arith.cmpf oeq, %984, %985 : vector<8x3xf32>
    %cst_275 = arith.constant -1.000000e+09 : f32
    %987 = vector.broadcast %cst_275 : f32 to vector<8x3xf32>
    %988 = vector.shape_cast %983 : vector<8x1xf32> to vector<8x1xf32>
    %989 = vector.broadcast %988 : vector<8x1xf32> to vector<8x3xf32>
    %990 = arith.select %986, %987, %989 : vector<8x3xi1>, vector<8x3xf32>
    %cst_276 = arith.constant dense<0xFF800000> : vector<3xf32>
    %991 = vector.multi_reduction <maximumf>, %990, %cst_276 [0] : vector<8x3xf32> to vector<3xf32>
    %992 = vector.shape_cast %991 : vector<3xf32> to vector<1x3xf32>
    %993 = vector.broadcast %992 : vector<1x3xf32> to vector<8x3xf32>
    %994 = arith.subf %990, %993 : vector<8x3xf32>
    %995 = math.exp %994 : vector<8x3xf32>
    %cst_277 = arith.constant dense<0.000000e+00> : vector<3xf32>
    %996 = vector.multi_reduction <add>, %995, %cst_277 [0] : vector<8x3xf32> to vector<3xf32>
    %997 = vector.shape_cast %996 : vector<3xf32> to vector<1x3xf32>
    %998 = math.log %997 : vector<1x3xf32>
    %999 = vector.broadcast %998 : vector<1x3xf32> to vector<8x3xf32>
    %1000 = arith.subf %994, %999 : vector<8x3xf32>
    %cst_278 = arith.constant 0.000000e+00 : f32
    %1001 = vector.broadcast %cst_278 : f32 to vector<8x9xf32>
    %1002 = tpu.concatenate %1000, %1001 in 1 : vector<8x3xf32>, vector<8x9xf32> -> vector<8x12xf32>
    %c0_279 = arith.constant 0 : index
    %c0_280 = arith.constant 0 : index
    %c0_281 = arith.constant 0 : index
    %1003 = vector.load %arg14[%c0_279, %c0_280, %c0_281] : memref<1x8x12xf32, #tpu.memory_space<vmem>>, vector<1x8x12xf32>
    %1004 = vector.shape_cast %1003 : vector<1x8x12xf32> to vector<8x12xf32>
    %1005 = vector.shape_cast %1002 : vector<8x12xf32> to vector<1x8x12xf32>
    tpu.vector_store %arg14[%c0_279, %c0_280, %c0_281], %1005 {strides = array<i32>} : memref<1x8x12xf32, #tpu.memory_space<vmem>>, vector<1x8x12xf32>,
    return
  }
  func.func @transform_0(%arg0: i32) -> (i32, i32, i32) {
    %c0_i32 = arith.constant 0 : i32
    %c0_i32_0 = arith.constant 0 : i32
    %c0_i32_1 = arith.constant 0 : i32
    return %c0_i32, %arg0, %c0_i32_0 : i32, i32, i32
  }
  func.func @transform_1(%arg0: i32) -> (i32, i32, i32) {
    %c0_i32 = arith.constant 0 : i32
    %c0_i32_0 = arith.constant 0 : i32
    %c0_i32_1 = arith.constant 0 : i32
    %c0_i32_2 = arith.constant 0 : i32
    return %c0_i32, %c0_i32_0, %c0_i32_1 : i32, i32, i32
  }
  func.func @transform_2(%arg0: i32) -> (i32, i32, i32) {
    %c0_i32 = arith.constant 0 : i32
    %c0_i32_0 = arith.constant 0 : i32
    %c0_i32_1 = arith.constant 0 : i32
    %c0_i32_2 = arith.constant 0 : i32
    return %c0_i32, %c0_i32_0, %c0_i32_1 : i32, i32, i32
  }
  func.func @transform_3(%arg0: i32) -> (i32, i32, i32) {
    %c0_i32 = arith.constant 0 : i32
    %c0_i32_0 = arith.constant 0 : i32
    %c0_i32_1 = arith.constant 0 : i32
    %c0_i32_2 = arith.constant 0 : i32
    return %c0_i32, %c0_i32_0, %c0_i32_1 : i32, i32, i32
  }
  func.func @transform_4(%arg0: i32) -> (i32, i32, i32) {
    %c0_i32 = arith.constant 0 : i32
    %c0_i32_0 = arith.constant 0 : i32
    %c0_i32_1 = arith.constant 0 : i32
    %c0_i32_2 = arith.constant 0 : i32
    return %c0_i32, %c0_i32_0, %c0_i32_1 : i32, i32, i32
  }
  func.func @transform_5(%arg0: i32) -> (i32, i32) {
    %c0_i32 = arith.constant 0 : i32
    %c0_i32_0 = arith.constant 0 : i32
    %c0_i32_1 = arith.constant 0 : i32
    return %c0_i32, %c0_i32_0 : i32, i32
  }
  func.func @transform_6(%arg0: i32) -> (i32, i32) {
    %c0_i32 = arith.constant 0 : i32
    %c0_i32_0 = arith.constant 0 : i32
    %c0_i32_1 = arith.constant 0 : i32
    return %c0_i32, %c0_i32_0 : i32, i32
  }
  func.func @transform_7(%arg0: i32) -> (i32, i32) {
    %c0_i32 = arith.constant 0 : i32
    %c0_i32_0 = arith.constant 0 : i32
    %c0_i32_1 = arith.constant 0 : i32
    return %c0_i32, %c0_i32_0 : i32, i32
  }
  func.func @transform_8(%arg0: i32) -> (i32, i32) {
    %c0_i32 = arith.constant 0 : i32
    %c0_i32_0 = arith.constant 0 : i32
    %c0_i32_1 = arith.constant 0 : i32
    return %c0_i32, %c0_i32_0 : i32, i32
  }
  func.func @transform_9(%arg0: i32) -> (i32, i32) {
    %c0_i32 = arith.constant 0 : i32
    %c0_i32_0 = arith.constant 0 : i32
    %c0_i32_1 = arith.constant 0 : i32
    return %c0_i32, %c0_i32_0 : i32, i32
  }
  func.func @transform_10(%arg0: i32) -> (i32, i32) {
    %c0_i32 = arith.constant 0 : i32
    %c0_i32_0 = arith.constant 0 : i32
    %c0_i32_1 = arith.constant 0 : i32
    return %c0_i32, %c0_i32_0 : i32, i32
  }
  func.func @transform_11(%arg0: i32) -> (i32, i32) {
    %c0_i32 = arith.constant 0 : i32
    %c0_i32_0 = arith.constant 0 : i32
    %c0_i32_1 = arith.constant 0 : i32
    return %c0_i32, %c0_i32_0 : i32, i32
  }
  func.func @transform_12(%arg0: i32) -> (i32, i32) {
    %c0_i32 = arith.constant 0 : i32
    %c0_i32_0 = arith.constant 0 : i32
    %c0_i32_1 = arith.constant 0 : i32
    return %c0_i32, %c0_i32_0 : i32, i32
  }
  func.func @transform_13(%arg0: i32) -> (i32, i32, i32) {
    %c0_i32 = arith.constant 0 : i32
    %c0_i32_0 = arith.constant 0 : i32
    %c0_i32_1 = arith.constant 0 : i32
    return %arg0, %c0_i32, %c0_i32_0 : i32, i32, i32
  }
}

</mosaic_0001>

<llo_original>
// kernel: tpu_custom_call.1
$region0: #{tpu_custom_call.1}
  #allocation0 [shape = 'u32[]', space=smem, size = 0x4, offset = 0x4, fixed_abs, tag = 'smem constant byte address 0x4 - core index']
  #allocation1 [shape = 'u32[144,128]{1,0:T(1,128)}', space=vmem, size = 0x12000, scoped, tag = 'internal scratch']
  #allocation2 [shape = 'f32[1,1]{1,0:T(1,128)S(1)}', space=vmem, size = 0x200, scoped, tag = 'scoped memory for tpu_custom_call.1']
  %s0 = inlined_call_operand.vmem [shape: f32[8,16,4], index: 0, kind: input, shape index: {}]
  %s1 = inlined_call_operand.hbm [shape: f32[6,4,16], index: 1, kind: input, shape index: {}]
  %s2 = inlined_call_operand.vmem [shape: f32[6,16,16], index: 2, kind: input, shape index: {}]
  %s3 = inlined_call_operand.vmem [shape: f32[6,1,16], index: 3, kind: input, shape index: {}]
  %s4 = inlined_call_operand.vmem [shape: f32[2,1,16], index: 4, kind: input, shape index: {}]
  %s5 = inlined_call_operand.vmem [shape: f32[8,8], index: 5, kind: input, shape index: {}]
  %s6 = inlined_call_operand.vmem [shape: f32[32,32], index: 6, kind: input, shape index: {}]
  %s7 = inlined_call_operand.vmem [shape: f32[1,32], index: 7, kind: input, shape index: {}]
  %s8 = inlined_call_operand.vmem [shape: f32[32,32], index: 8, kind: input, shape index: {}]
  %s9 = inlined_call_operand.vmem [shape: f32[1,32], index: 9, kind: input, shape index: {}]
  %s10 = inlined_call_operand.vmem [shape: f32[32,1], index: 10, kind: input, shape index: {}]
  %s11 = inlined_call_operand.<no memory space> [shape: f32[1,1], index: 11, kind: input, shape index: {}]
  %s12 = inlined_call_operand.vmem [shape: f32[8,3], index: 12, kind: input, shape index: {}]
  %s13 = inlined_call_operand.hbm [shape: f32[2,8,12], index: 13, kind: output, shape index: {}]
  %s14 = sld [smem:[#allocation0]]
  $region127: #{tpu_custom_call.1} parent=0
    _
  %s16 = ssub.s32 1, %s14
  %s17 = scalar_select 0, %s16, %s14
  %v18 = vstv %s11
  %19 = vst [vmem:[#allocation2] sm:$0x1] %v18
  $region1: #{tpu_custom_call.1} parent=0
    #allocation3 [shape = 'u8[65536]{0}', space=vmem, size = 0x10000, scoped, tag = 'input window, operand 0']
    #allocation4 [shape = 'u8[12288]{0}', space=vmem, size = 0x3000, scoped, tag = 'input window, operand 1, single buffered']
    #allocation5 [shape = 's32[2]{0}', space=sflag, size = 0x8, scoped, tag = 'scoped memory for tpu_custom_call.1']
    #allocation6 [shape = 's32[2]{0}', space=sflag, size = 0x8, scoped, tag = 'scoped memory for tpu_custom_call.1']
    #allocation7 [shape = 'u8[8192]{0}', space=vmem, size = 0x2000, scoped, tag = 'output window, operand 0']
    %20 = vsyncpa [#allocation5], 0
    %21 = vsyncpa [#allocation6], 0
    %s22 = scalar_lea.sflag [#allocation6], 1
    %23 = vsyncpa %s22, 0
    loop: start=0, step=1, limit=4
    $region2: #{tpu_custom_call.1} parent=1 // loop_pre_header
      _
    $region3: #{tpu_custom_call.1} parent=1 // loop_header
      %s25 = sphi 0, %s29
      %p26 = scmp.ge.s32.totalorder %s25, 4
      %s35 = sphi 0, %s37
      %s38 = sphi 0, %s35
      %s39 = sphi 0, %s38
      %s55 = sphi 0, %s39
      %s59 = sphi 0, %s59
      %s61 = sphi 0, %s59
      %s62 = sphi 0, %s61
      %s76 = sphi 0, %s62
      %s80 = sphi 0, %s80
      %s82 = sphi 0, %s80
      %s83 = sphi 0, %s82
      %s97 = sphi 0, %s83
      %s101 = sphi 0, %s101
      %s103 = sphi 0, %s101
      %s104 = sphi 0, %s103
      %s118 = sphi 0, %s104
      %s122 = sphi 0, %s122
      %s124 = sphi 0, %s122
      %s125 = sphi 0, %s124
      %s139 = sphi 0, %s125
      %s143 = sphi 0, %s143
      %s145 = sphi 0, %s143
      %s146 = sphi 0, %s145
      %s160 = sphi 0, %s146
      %s164 = sphi 0, %s164
      %s166 = sphi 0, %s164
      %s167 = sphi 0, %s166
      %s181 = sphi 0, %s167
      %s185 = sphi 0, %s185
      %s187 = sphi 0, %s185
      %s188 = sphi 0, %s187
      %s202 = sphi 0, %s188
      %s206 = sphi 0, %s206
      %s208 = sphi 0, %s206
      %s209 = sphi 0, %s208
      %s223 = sphi 0, %s209
      %s227 = sphi 0, %s227
      %s229 = sphi 0, %s227
      %s230 = sphi 0, %s229
      %s244 = sphi 0, %s230
      %s248 = sphi 0, %s248
      %s250 = sphi 0, %s248
      %s251 = sphi 0, %s250
      %s265 = sphi 0, %s251
      %s269 = sphi 0, %s269
      %s271 = sphi 0, %s269
      %s272 = sphi 0, %s271
      %s286 = sphi 0, %s272
      %s290 = sphi 0, %s290
      %s292 = sphi 0, %s290
      %s293 = sphi 0, %s292
      %s307 = sphi 0, %s293
      %s313 = sphi 0, %s315
      %s316 = sphi 0, %s313
      %s317 = sphi 0, %s316
      %s333 = sphi 0, %s317
    $region4: #{tpu_custom_call.1} parent=1 // loop_header_branch
      %28 = sbr.rel (%p26) target = $region8
    $region5: #{tpu_custom_call.1} parent=1 // loop_body
      %s30 = ssub.s32 %s25, 1
      %s31 = ssub.s32 %s25, 2
      %s32 = sadd.s32 %s25, 1
      %s33 = ssub.s32 %s25, %s32
      %p34 = scmp.eq.s32.totalorder %s33, 0
      %s36 = sadd.s32 %s35, 1
      %s37 = scalar_select %p34, %s35, %s36
      %p40 = pneg %p34
      %p41 = scmp.eq.s32.totalorder %s25, 1
      %p42 = por %p40, %p41
      %p43 = scmp.ne.s32.totalorder %s35, %s38
      %p44 = scmp.eq.s32.totalorder %s25, 0
      %p45 = por %p43, %p44
      %p46 = scmp.ne.s32.totalorder %s35, %s38
      %p47 = scmp.eq.s32.totalorder %s30, 1
      %p48 = por %p46, %p47
      %p49 = scmp.ne.s32.totalorder %s38, %s39
      %p50 = scmp.eq.s32.totalorder %s30, 0
      %p51 = por %p49, %p50
      %p52 = scmp.ne.s32.totalorder %s38, %s39
      %p53 = scmp.eq.s32.totalorder %s31, 1
      %p54 = por %p52, %p53
      %p56 = scmp.ne.s32.totalorder %s39, %s55
      %p57 = scmp.eq.s32.totalorder %s31, 0
      %p58 = por %p56, %p57
      %s60 = sadd.s32 %s59, 1
      %p63 = scmp.eq.s32.totalorder %s25, 1
      %p64 = scmp.ne.s32.totalorder %s59, %s61
      %p65 = scmp.eq.s32.totalorder %s25, 0
      %p66 = por %p64, %p65
      %p67 = scmp.ne.s32.totalorder %s59, %s61
      %p68 = scmp.eq.s32.totalorder %s30, 1
      %p69 = por %p67, %p68
      %p70 = scmp.ne.s32.totalorder %s61, %s62
      %p71 = scmp.eq.s32.totalorder %s30, 0
      %p72 = por %p70, %p71
      %p73 = scmp.ne.s32.totalorder %s61, %s62
      %p74 = scmp.eq.s32.totalorder %s31, 1
      %p75 = por %p73, %p74
      %p77 = scmp.ne.s32.totalorder %s62, %s76
      %p78 = scmp.eq.s32.totalorder %s31, 0
      %p79 = por %p77, %p78
      %s81 = sadd.s32 %s80, 1
      %p84 = scmp.eq.s32.totalorder %s25, 1
      %p85 = scmp.ne.s32.totalorder %s80, %s82
      %p86 = scmp.eq.s32.totalorder %s25, 0
      %p87 = por %p85, %p86
      %p88 = scmp.ne.s32.totalorder %s80, %s82
      %p89 = scmp.eq.s32.totalorder %s30, 1
      %p90 = por %p88, %p89
      %p91 = scmp.ne.s32.totalorder %s82, %s83
      %p92 = scmp.eq.s32.totalorder %s30, 0
      %p93 = por %p91, %p92
      %p94 = scmp.ne.s32.totalorder %s82, %s83
      %p95 = scmp.eq.s32.totalorder %s31, 1
      %p96 = por %p94, %p95
      %p98 = scmp.ne.s32.totalorder %s83, %s97
      %p99 = scmp.eq.s32.totalorder %s31, 0
      %p100 = por %p98, %p99
      %s102 = sadd.s32 %s101, 1
      %p105 = scmp.eq.s32.totalorder %s25, 1
      %p106 = scmp.ne.s32.totalorder %s101, %s103
      %p107 = scmp.eq.s32.totalorder %s25, 0
      %p108 = por %p106, %p107
      %p109 = scmp.ne.s32.totalorder %s101, %s103
      %p110 = scmp.eq.s32.totalorder %s30, 1
      %p111 = por %p109, %p110
      %p112 = scmp.ne.s32.totalorder %s103, %s104
      %p113 = scmp.eq.s32.totalorder %s30, 0
      %p114 = por %p112, %p113
      %p115 = scmp.ne.s32.totalorder %s103, %s104
      %p116 = scmp.eq.s32.totalorder %s31, 1
      %p117 = por %p115, %p116
      %p119 = scmp.ne.s32.totalorder %s104, %s118
      %p120 = scmp.eq.s32.totalorder %s31, 0
      %p121 = por %p119, %p120
      %s123 = sadd.s32 %s122, 1
      %p126 = scmp.eq.s32.totalorder %s25, 1
      %p127 = scmp.ne.s32.totalorder %s122, %s124
      %p128 = scmp.eq.s32.totalorder %s25, 0
      %p129 = por %p127, %p128
      %p130 = scmp.ne.s32.totalorder %s122, %s124
      %p131 = scmp.eq.s32.totalorder %s30, 1
      %p132 = por %p130, %p131
      %p133 = scmp.ne.s32.totalorder %s124, %s125
      %p134 = scmp.eq.s32.totalorder %s30, 0
      %p135 = por %p133, %p134
      %p136 = scmp.ne.s32.totalorder %s124, %s125
      %p137 = scmp.eq.s32.totalorder %s31, 1
      %p138 = por %p136, %p137
      %p140 = scmp.ne.s32.totalorder %s125, %s139
      %p141 = scmp.eq.s32.totalorder %s31, 0
      %p142 = por %p140, %p141
      %s144 = sadd.s32 %s143, 1
      %p147 = scmp.eq.s32.totalorder %s25, 1
      %p148 = scmp.ne.s32.totalorder %s143, %s145
      %p149 = scmp.eq.s32.totalorder %s25, 0
      %p150 = por %p148, %p149
      %p151 = scmp.ne.s32.totalorder %s143, %s145
      %p152 = scmp.eq.s32.totalorder %s30, 1
      %p153 = por %p151, %p152
      %p154 = scmp.ne.s32.totalorder %s145, %s146
      %p155 = scmp.eq.s32.totalorder %s30, 0
      %p156 = por %p154, %p155
      %p157 = scmp.ne.s32.totalorder %s145, %s146
      %p158 = scmp.eq.s32.totalorder %s31, 1
      %p159 = por %p157, %p158
      %p161 = scmp.ne.s32.totalorder %s146, %s160
      %p162 = scmp.eq.s32.totalorder %s31, 0
      %p163 = por %p161, %p162
      %s165 = sadd.s32 %s164, 1
      %p168 = scmp.eq.s32.totalorder %s25, 1
      %p169 = scmp.ne.s32.totalorder %s164, %s166
      %p170 = scmp.eq.s32.totalorder %s25, 0
      %p171 = por %p169, %p170
      %p172 = scmp.ne.s32.totalorder %s164, %s166
      %p173 = scmp.eq.s32.totalorder %s30, 1
      %p174 = por %p172, %p173
      %p175 = scmp.ne.s32.totalorder %s166, %s167
      %p176 = scmp.eq.s32.totalorder %s30, 0
      %p177 = por %p175, %p176
      %p178 = scmp.ne.s32.totalorder %s166, %s167
      %p179 = scmp.eq.s32.totalorder %s31, 1
      %p180 = por %p178, %p179
      %p182 = scmp.ne.s32.totalorder %s167, %s181
      %p183 = scmp.eq.s32.totalorder %s31, 0
      %p184 = por %p182, %p183
      %s186 = sadd.s32 %s185, 1
      %p189 = scmp.eq.s32.totalorder %s25, 1
      %p190 = scmp.ne.s32.totalorder %s185, %s187
      %p191 = scmp.eq.s32.totalorder %s25, 0
      %p192 = por %p190, %p191
      %p193 = scmp.ne.s32.totalorder %s185, %s187
      %p194 = scmp.eq.s32.totalorder %s30, 1
      %p195 = por %p193, %p194
      %p196 = scmp.ne.s32.totalorder %s187, %s188
      %p197 = scmp.eq.s32.totalorder %s30, 0
      %p198 = por %p196, %p197
      %p199 = scmp.ne.s32.totalorder %s187, %s188
      %p200 = scmp.eq.s32.totalorder %s31, 1
      %p201 = por %p199, %p200
      %p203 = scmp.ne.s32.totalorder %s188, %s202
      %p204 = scmp.eq.s32.totalorder %s31, 0
      %p205 = por %p203, %p204
      %s207 = sadd.s32 %s206, 1
      %p210 = scmp.eq.s32.totalorder %s25, 1
      %p211 = scmp.ne.s32.totalorder %s206, %s208
      %p212 = scmp.eq.s32.totalorder %s25, 0
      %p213 = por %p211, %p212
      %p214 = scmp.ne.s32.totalorder %s206, %s208
      %p215 = scmp.eq.s32.totalorder %s30, 1
      %p216 = por %p214, %p215
      %p217 = scmp.ne.s32.totalorder %s208, %s209
      %p218 = scmp.eq.s32.totalorder %s30, 0
      %p219 = por %p217, %p218
      %p220 = scmp.ne.s32.totalorder %s208, %s209
      %p221 = scmp.eq.s32.totalorder %s31, 1
      %p222 = por %p220, %p221
      %p224 = scmp.ne.s32.totalorder %s209, %s223
      %p225 = scmp.eq.s32.totalorder %s31, 0
      %p226 = por %p224, %p225
      %s228 = sadd.s32 %s227, 1
      %p231 = scmp.eq.s32.totalorder %s25, 1
      %p232 = scmp.ne.s32.totalorder %s227, %s229
      %p233 = scmp.eq.s32.totalorder %s25, 0
      %p234 = por %p232, %p233
      %p235 = scmp.ne.s32.totalorder %s227, %s229
      %p236 = scmp.eq.s32.totalorder %s30, 1
      %p237 = por %p235, %p236
      %p238 = scmp.ne.s32.totalorder %s229, %s230
      %p239 = scmp.eq.s32.totalorder %s30, 0
      %p240 = por %p238, %p239
      %p241 = scmp.ne.s32.totalorder %s229, %s230
      %p242 = scmp.eq.s32.totalorder %s31, 1
      %p243 = por %p241, %p242
      %p245 = scmp.ne.s32.totalorder %s230, %s244
      %p246 = scmp.eq.s32.totalorder %s31, 0
      %p247 = por %p245, %p246
      %s249 = sadd.s32 %s248, 1
      %p252 = scmp.eq.s32.totalorder %s25, 1
      %p253 = scmp.ne.s32.totalorder %s248, %s250
      %p254 = scmp.eq.s32.totalorder %s25, 0
      %p255 = por %p253, %p254
      %p256 = scmp.ne.s32.totalorder %s248, %s250
      %p257 = scmp.eq.s32.totalorder %s30, 1
      %p258 = por %p256, %p257
      %p259 = scmp.ne.s32.totalorder %s250, %s251
      %p260 = scmp.eq.s32.totalorder %s30, 0
      %p261 = por %p259, %p260
      %p262 = scmp.ne.s32.totalorder %s250, %s251
      %p263 = scmp.eq.s32.totalorder %s31, 1
      %p264 = por %p262, %p263
      %p266 = scmp.ne.s32.totalorder %s251, %s265
      %p267 = scmp.eq.s32.totalorder %s31, 0
      %p268 = por %p266, %p267
      %s270 = sadd.s32 %s269, 1
      %p273 = scmp.eq.s32.totalorder %s25, 1
      %p274 = scmp.ne.s32.totalorder %s269, %s271
      %p275 = scmp.eq.s32.totalorder %s25, 0
      %p276 = por %p274, %p275
      %p277 = scmp.ne.s32.totalorder %s269, %s271
      %p278 = scmp.eq.s32.totalorder %s30, 1
      %p279 = por %p277, %p278
      %p280 = scmp.ne.s32.totalorder %s271, %s272
      %p281 = scmp.eq.s32.totalorder %s30, 0
      %p282 = por %p280, %p281
      %p283 = scmp.ne.s32.totalorder %s271, %s272
      %p284 = scmp.eq.s32.totalorder %s31, 1
      %p285 = por %p283, %p284
      %p287 = scmp.ne.s32.totalorder %s272, %s286
      %p288 = scmp.eq.s32.totalorder %s31, 0
      %p289 = por %p287, %p288
      %s291 = sadd.s32 %s290, 1
      %p294 = scmp.eq.s32.totalorder %s25, 1
      %p295 = scmp.ne.s32.totalorder %s290, %s292
      %p296 = scmp.eq.s32.totalorder %s25, 0
      %p297 = por %p295, %p296
      %p298 = scmp.ne.s32.totalorder %s290, %s292
      %p299 = scmp.eq.s32.totalorder %s30, 1
      %p300 = por %p298, %p299
      %p301 = scmp.ne.s32.totalorder %s292, %s293
      %p302 = scmp.eq.s32.totalorder %s30, 0
      %p303 = por %p301, %p302
      %p304 = scmp.ne.s32.totalorder %s292, %s293
      %p305 = scmp.eq.s32.totalorder %s31, 1
      %p306 = por %p304, %p305
      %p308 = scmp.ne.s32.totalorder %s293, %s307
      %p309 = scmp.eq.s32.totalorder %s31, 0
      %p310 = por %p308, %p309
      %s311 = ssub.s32 %s25, %s32
      %p312 = scmp.eq.s32.totalorder %s311, 0
      %s314 = sadd.s32 %s313, 1
      %s315 = scalar_select %p312, %s313, %s314
      %p318 = pneg %p312
      %p319 = scmp.eq.s32.totalorder %s25, 1
      %p320 = por %p318, %p319
      %p321 = scmp.ne.s32.totalorder %s313, %s316
      %p322 = scmp.eq.s32.totalorder %s25, 0
      %p323 = por %p321, %p322
      %p324 = scmp.ne.s32.totalorder %s313, %s316
      %p325 = scmp.eq.s32.totalorder %s30, 1
      %p326 = por %p324, %p325
      %p327 = scmp.ne.s32.totalorder %s316, %s317
      %p328 = scmp.eq.s32.totalorder %s30, 0
      %p329 = por %p327, %p328
      %p330 = scmp.ne.s32.totalorder %s316, %s317
      %p331 = scmp.eq.s32.totalorder %s31, 1
      %p332 = por %p330, %p331
      %p334 = scmp.ne.s32.totalorder %s317, %s333
      %p335 = scmp.eq.s32.totalorder %s31, 0
      %p336 = por %p334, %p335
      %p337 = scmp.le.s32.totalorder 1, %s25
      %p338 = scmp.lt.s32.totalorder %s25, 3
      %p339 = pnand %p337, %p338
      %p340 = pneg %p339
      // Predicated region
      $region9: #{tpu_custom_call.1} parent=5 // pred_check
        _
      $region10: #{tpu_custom_call.1} parent=5 // pred_check_branch
        %342 = sbr.rel (%p339) target = $region12
      $region11: #{tpu_custom_call.1} parent=5 // pred_region
        %s343 = ssub.s32 %s25, 1
        // Predicated region
        $region13: #{tpu_custom_call.1} parent=11 // pred_check
          %p344 = pneg %p72
        $region14: #{tpu_custom_call.1} parent=11 // pred_check_branch
          %346 = sbr.rel (%p344) target = $region16
        $region15: #{tpu_custom_call.1} parent=11 // pred_region
          %s348 = ssub.s32 384, 384
          %349 = vsyncadd [#allocation5], %s348
          %s350 = sshll.u32 [#allocation4], 4
          %s351 = int_to_ptr.vmem [resolvable:$true] %s350
          %356 = dma.hbm_to_vmem [thread:$0]  %s1, 384, %s351, [#allocation5], 64, 64, 4
        $region16: #{tpu_custom_call.1} parent=11 // pred_fallthru
          _
        // Predicated region
        $region17: #{tpu_custom_call.1} parent=11 // pred_check
          %p357 = pneg %p93
        $region18: #{tpu_custom_call.1} parent=11 // pred_check_branch
          %359 = sbr.rel (%p357) target = $region20
        $region19: #{tpu_custom_call.1} parent=11 // pred_region
          _
        $region20: #{tpu_custom_call.1} parent=11 // pred_fallthru
          _
        // Predicated region
        $region21: #{tpu_custom_call.1} parent=11 // pred_check
          %p360 = pneg %p114
        $region22: #{tpu_custom_call.1} parent=11 // pred_check_branch
          %362 = sbr.rel (%p360) target = $region24
        $region23: #{tpu_custom_call.1} parent=11 // pred_region
          _
        $region24: #{tpu_custom_call.1} parent=11 // pred_fallthru
          _
        // Predicated region
        $region25: #{tpu_custom_call.1} parent=11 // pred_check
          %p363 = pneg %p135
        $region26: #{tpu_custom_call.1} parent=11 // pred_check_branch
          %365 = sbr.rel (%p363) target = $region28
        $region27: #{tpu_custom_call.1} parent=11 // pred_region
          _
        $region28: #{tpu_custom_call.1} parent=11 // pred_fallthru
          _
        // Predicated region
        $region29: #{tpu_custom_call.1} parent=11 // pred_check
          %p366 = pneg %p156
        $region30: #{tpu_custom_call.1} parent=11 // pred_check_branch
          %368 = sbr.rel (%p366) target = $region32
        $region31: #{tpu_custom_call.1} parent=11 // pred_region
          _
        $region32: #{tpu_custom_call.1} parent=11 // pred_fallthru
          _
        // Predicated region
        $region33: #{tpu_custom_call.1} parent=11 // pred_check
          %p369 = pneg %p177
        $region34: #{tpu_custom_call.1} parent=11 // pred_check_branch
          %371 = sbr.rel (%p369) target = $region36
        $region35: #{tpu_custom_call.1} parent=11 // pred_region
          _
        $region36: #{tpu_custom_call.1} parent=11 // pred_fallthru
          _
        // Predicated region
        $region37: #{tpu_custom_call.1} parent=11 // pred_check
          %p372 = pneg %p198
        $region38: #{tpu_custom_call.1} parent=11 // pred_check_branch
          %374 = sbr.rel (%p372) target = $region40
        $region39: #{tpu_custom_call.1} parent=11 // pred_region
          _
        $region40: #{tpu_custom_call.1} parent=11 // pred_fallthru
          _
        // Predicated region
        $region41: #{tpu_custom_call.1} parent=11 // pred_check
          %p375 = pneg %p219
        $region42: #{tpu_custom_call.1} parent=11 // pred_check_branch
          %377 = sbr.rel (%p375) target = $region44
        $region43: #{tpu_custom_call.1} parent=11 // pred_region
          _
        $region44: #{tpu_custom_call.1} parent=11 // pred_fallthru
          _
        // Predicated region
        $region45: #{tpu_custom_call.1} parent=11 // pred_check
          %p378 = pneg %p240
        $region46: #{tpu_custom_call.1} parent=11 // pred_check_branch
          %380 = sbr.rel (%p378) target = $region48
        $region47: #{tpu_custom_call.1} parent=11 // pred_region
          _
        $region48: #{tpu_custom_call.1} parent=11 // pred_fallthru
          _
        // Predicated region
        $region49: #{tpu_custom_call.1} parent=11 // pred_check
          %p381 = pneg %p261
        $region50: #{tpu_custom_call.1} parent=11 // pred_check_branch
          %383 = sbr.rel (%p381) target = $region52
        $region51: #{tpu_custom_call.1} parent=11 // pred_region
          _
        $region52: #{tpu_custom_call.1} parent=11 // pred_fallthru
          _
        // Predicated region
        $region53: #{tpu_custom_call.1} parent=11 // pred_check
          %p384 = pneg %p282
        $region54: #{tpu_custom_call.1} parent=11 // pred_check_branch
          %386 = sbr.rel (%p384) target = $region56
        $region55: #{tpu_custom_call.1} parent=11 // pred_region
          _
        $region56: #{tpu_custom_call.1} parent=11 // pred_fallthru
          _
        // Predicated region
        $region57: #{tpu_custom_call.1} parent=11 // pred_check
          %p387 = pneg %p303
        $region58: #{tpu_custom_call.1} parent=11 // pred_check_branch
          %389 = sbr.rel (%p387) target = $region60
        $region59: #{tpu_custom_call.1} parent=11 // pred_region
          _
        $region60: #{tpu_custom_call.1} parent=11 // pred_fallthru
          _
      $region12: #{tpu_custom_call.1} parent=5 // pred_fallthru
        _
      %p390 = scmp.lt.s32.totalorder %s25, 2
      // Predicated region
      $region61: #{tpu_custom_call.1} parent=5 // pred_check
        %p391 = pneg %p390
      $region62: #{tpu_custom_call.1} parent=5 // pred_check_branch
        %393 = sbr.rel (%p391) target = $region64
      $region63: #{tpu_custom_call.1} parent=5 // pred_region
        // Predicated region
        $region65: #{tpu_custom_call.1} parent=63 // pred_check
          %p394 = pneg %p45
        $region66: #{tpu_custom_call.1} parent=63 // pred_check_branch
          %396 = sbr.rel (%p394) target = $region68
        $region67: #{tpu_custom_call.1} parent=63 // pred_region
          %s397 = sand.u32 %s35, 1
          %s398 = sand.u32 %s35, 1
          %s399 = smul.addr %s398, 64
          %s400 = scalar_lea.vmem [#allocation3], %s399
          %s401 = smul.addr %s25, 8
          %s402 = scalar_lea.vmem %s0, %s401
          // Predicated region
          $region69: #{tpu_custom_call.1} parent=67 // pred_check
            _
          $region70: #{tpu_custom_call.1} parent=67 // pred_check_branch
            %404 = sbr.rel (0) target = $region72
          $region71: #{tpu_custom_call.1} parent=67 // pred_region
            // Predicated region
            $region73: #{tpu_custom_call.1} parent=71 // pred_check
              _
            $region74: #{tpu_custom_call.1} parent=71 // pred_check_branch
              %406 = sbr.rel (0) target = $region76
            $region75: #{tpu_custom_call.1} parent=71 // pred_region
              // Predicated region
              $region88: #{tpu_custom_call.1} parent=75 // pred_check
                _
              $region89: #{tpu_custom_call.1} parent=75 // pred_check_branch
                %435 = sbr.rel (0) target = $region91
              $region90: #{tpu_custom_call.1} parent=75 // pred_region
                loop: start=0, step=1, limit=1
                $region92: #{tpu_custom_call.1} parent=90 // loop_pre_header
                  _
                $region93: #{tpu_custom_call.1} parent=90 // loop_header
                  %s437 = sphi 0, %s441
                  %p438 = scmp.ge.s32.totalorder %s437, 1
                  %s442 = sphi %s402, %s402
                  %s443 = sphi %s400, %s400
                $region94: #{tpu_custom_call.1} parent=90 // loop_header_branch
                  %440 = sbr.rel (%p438) target = $region98
                $region95: #{tpu_custom_call.1} parent=90 // loop_body
                  %v444 = vld [vmem:[%s442] sm:$0xff]
                  %445 = vst [vmem:[%s443] sm:$0xff] %v444
                  %v446 = vld [vmem:[%s442 + $0x10] sm:$0xff]
                  %447 = vst [vmem:[%s443 + $0x8] sm:$0xff] %v446
                  %v448 = vld [vmem:[%s442 + $0x20] sm:$0xff]
                  %449 = vst [vmem:[%s443 + $0x10] sm:$0xff] %v448
                  %v450 = vld [vmem:[%s442 + $0x30] sm:$0xff]
                  %451 = vst [vmem:[%s443 + $0x18] sm:$0xff] %v450
                  %v452 = vld [vmem:[%s442 + $0x40] sm:$0xff]
                  %453 = vst [vmem:[%s443 + $0x20] sm:$0xff] %v452
                  %v454 = vld [vmem:[%s442 + $0x50] sm:$0xff]
                  %455 = vst [vmem:[%s443 + $0x28] sm:$0xff] %v454
                  %v456 = vld [vmem:[%s442 + $0x60] sm:$0xff]
                  %457 = vst [vmem:[%s443 + $0x30] sm:$0xff] %v456
                  %v458 = vld [vmem:[%s442 + $0x70] sm:$0xff]
                  %459 = vst [vmem:[%s443 + $0x38] sm:$0xff] %v458
                $region96: #{tpu_custom_call.1} parent=90 // loop_footer
                  %s441 = sadd.s32 1, %s437
                $region97: #{tpu_custom_call.1} parent=90 // loop_footer_branch
                  %436 = sbr.rel target = $region93
                $region98: #{tpu_custom_call.1} parent=90 // loop_exit
                  _
              $region91: #{tpu_custom_call.1} parent=75 // pred_fallthru
                _
              // Predicated region
              $region99: #{tpu_custom_call.1} parent=75 // pred_check
                _
              $region100: #{tpu_custom_call.1} parent=75 // pred_check_branch
                %461 = sbr.rel target = $region102
              $region101: #{tpu_custom_call.1} parent=75 // pred_region
                _
              $region102: #{tpu_custom_call.1} parent=75 // pred_fallthru
                _
            $region76: #{tpu_custom_call.1} parent=71 // pred_fallthru
              _
            // Predicated region
            $region77: #{tpu_custom_call.1} parent=71 // pred_check
              _
            $region78: #{tpu_custom_call.1} parent=71 // pred_check_branch
              %408 = sbr.rel target = $region80
            $region79: #{tpu_custom_call.1} parent=71 // pred_region
              loop: start=0, step=1, limit=1
              $region81: #{tpu_custom_call.1} parent=79 // loop_pre_header
                _
              $region82: #{tpu_custom_call.1} parent=79 // loop_header
                %s411 = sphi 0, %s415
                %p412 = scmp.ge.s32.totalorder %s411, 1
                %s416 = sphi %s402, %s402
                %s417 = sphi %s400, %s400
              $region83: #{tpu_custom_call.1} parent=79 // loop_header_branch
                %414 = sbr.rel (%p412) target = $region87
              $region84: #{tpu_custom_call.1} parent=79 // loop_body
                %v418 = vld [vmem:[%s416] sm:$0xff]
                %419 = vst [vmem:[%s417] sm:$0xff] %v418
                %v420 = vld [vmem:[%s416 + $0x10] sm:$0xff]
                %421 = vst [vmem:[%s417 + $0x8] sm:$0xff] %v420
                %v422 = vld [vmem:[%s416 + $0x20] sm:$0xff]
                %423 = vst [vmem:[%s417 + $0x10] sm:$0xff] %v422
                %v424 = vld [vmem:[%s416 + $0x30] sm:$0xff]
                %425 = vst [vmem:[%s417 + $0x18] sm:$0xff] %v424
                %v426 = vld [vmem:[%s416 + $0x40] sm:$0xff]
                %427 = vst [vmem:[%s417 + $0x20] sm:$0xff] %v426
                %v428 = vld [vmem:[%s416 + $0x50] sm:$0xff]
                %429 = vst [vmem:[%s417 + $0x28] sm:$0xff] %v428
                %v430 = vld [vmem:[%s416 + $0x60] sm:$0xff]
                %431 = vst [vmem:[%s417 + $0x30] sm:$0xff] %v430
                %v432 = vld [vmem:[%s416 + $0x70] sm:$0xff]
                %433 = vst [vmem:[%s417 + $0x38] sm:$0xff] %v432
              $region85: #{tpu_custom_call.1} parent=79 // loop_footer
                %s415 = sadd.s32 1, %s411
              $region86: #{tpu_custom_call.1} parent=79 // loop_footer_branch
                %410 = sbr.rel target = $region82
              $region87: #{tpu_custom_call.1} parent=79 // loop_exit
                _
            $region80: #{tpu_custom_call.1} parent=71 // pred_fallthru
              _
          $region72: #{tpu_custom_call.1} parent=67 // pred_fallthru
            _
          %462 = vnop
        $region68: #{tpu_custom_call.1} parent=63 // pred_fallthru
          _
      $region64: #{tpu_custom_call.1} parent=5 // pred_fallthru
        _
      %p463 = scmp.le.s32.totalorder 1, %s25
      %p464 = scmp.lt.s32.totalorder %s25, 3
      %p465 = pnand %p463, %p464
      %p466 = pneg %p465
      // Predicated region
      $region103: #{tpu_custom_call.1} parent=5 // pred_check
        _
      $region104: #{tpu_custom_call.1} parent=5 // pred_check_branch
        %468 = sbr.rel (%p465) target = $region106
      $region105: #{tpu_custom_call.1} parent=5 // pred_region
        %s469 = ssub.s32 %s25, 1
        %s470 = sand.u32 %s38, 1
        %s471 = sand.u32 %s38, 1
        %s472 = smul.addr %s471, 64
        %s473 = scalar_lea.vmem [#allocation3], %s472
        // Predicated region
        $region107: #{tpu_custom_call.1} parent=105 // pred_check
          %p474 = pneg %p51
        $region108: #{tpu_custom_call.1} parent=105 // pred_check_branch
          %476 = sbr.rel (%p474) target = $region110
        $region109: #{tpu_custom_call.1} parent=105 // pred_region
          _
        $region110: #{tpu_custom_call.1} parent=105 // pred_fallthru
          _
        // Predicated region
        $region111: #{tpu_custom_call.1} parent=105 // pred_check
          %p477 = pneg %p72
        $region112: #{tpu_custom_call.1} parent=105 // pred_check_branch
          %479 = sbr.rel (%p477) target = $region114
        $region113: #{tpu_custom_call.1} parent=105 // pred_region
          %480 = dma.done [#allocation5], 384
        $region114: #{tpu_custom_call.1} parent=105 // pred_fallthru
          _
        %s481 = sand.u32 %s38, 1
        %s482 = sand.u32 %s38, 1
        %s483 = smul.addr %s482, 64
        %s484 = scalar_lea.vmem [#allocation3], %s483
        %p485 = pneg %p51
        %p486 = pneg %p48
        %p487 = pneg %p72
        %p488 = pneg %p69
        %p489 = pneg %p93
        %p490 = pneg %p90
        %p491 = pneg %p114
        %p492 = pneg %p111
        %p493 = pneg %p135
        %p494 = pneg %p132
        %p495 = pneg %p156
        %p496 = pneg %p153
        %p497 = pneg %p177
        %p498 = pneg %p174
        %p499 = pneg %p198
        %p500 = pneg %p195
        %p501 = pneg %p219
        %p502 = pneg %p216
        %p503 = pneg %p240
        %p504 = pneg %p237
        %p505 = pneg %p261
        %p506 = pneg %p258
        %p507 = pneg %p282
        %p508 = pneg %p279
        %p509 = pneg %p303
        %p510 = pneg %p300
        %p511 = pneg %p329
        %p512 = pneg %p326
        %s513 = sand.u32 %s316, 1
        %s514 = scalar_lea.sflag [#allocation6], %s513
        %s515 = sand.u32 %s316, 1
        %s516 = smul.addr %s515, 8
        %s517 = scalar_lea.vmem [#allocation7], %s516
        %v518 = vld [vmem:[%s473] sm:$0xff]
        %v519 = vld [vmem:[%s473 + $0x8] sm:$0xff]
        %v520 = vld [vmem:[%s473 + $0x10] sm:$0xff]
        %v521 = vld [vmem:[%s473 + $0x18] sm:$0xff]
        %v522 = vld [vmem:[%s473 + $0x20] sm:$0xff]
        %v523 = vld [vmem:[%s473 + $0x28] sm:$0xff]
        %v524 = vld [vmem:[%s473 + $0x30] sm:$0xff]
        %v525 = vld [vmem:[%s473 + $0x38] sm:$0xff]
        %v526 = vld [vmem:[#allocation4] sm:$0xf]
        %v527 = vld [vmem:[#allocation4 + $0x4] sm:$0xf]
        %v528 = vld [vmem:[#allocation4 + $0x8] sm:$0xf]
        %v529 = vld [vmem:[#allocation4 + $0xc] sm:$0xf]
        %v530 = vld [vmem:[#allocation4 + $0x10] sm:$0xf]
        %v531 = vld [vmem:[#allocation4 + $0x14] sm:$0xf]
        %v532 = vld [vmem:[%s3] sm:$0x1]
        %v533 = vld [vmem:[%s3 + $0x1] sm:$0x1]
        %v534 = vld [vmem:[%s3 + $0x2] sm:$0x1]
        %v535 = vld [vmem:[%s3 + $0x3] sm:$0x1]
        %v536 = vld [vmem:[%s3 + $0x4] sm:$0x1]
        %v537 = vld [vmem:[%s3 + $0x5] sm:$0x1]
        %v539 = vlaneseq
        %v540 = vshrl.u32 %v539, 7
        %v541 = vsub.s32 0, %v540
        %v542 = vrot.slane %v532, %v541
        %vm544 = vcmask 31744
        %v546 = vsel %vm544, %v518, 0
        %v549 = vsel %vm544, %v519, 0
        %v552 = vsel %vm544, %v520, 0
        %v555 = vsel %vm544, %v521, 0
        %v558 = vsel %vm544, %v522, 0
        %v561 = vsel %vm544, %v523, 0
        %v564 = vsel %vm544, %v524, 0
        %v567 = vsel %vm544, %v525, 0
        %vm569 = vcmask 1043456
        %v571 = vsel %vm569, %v526, 0
        %573 = vmatprep.subr.mxu0 0.0
        %574 = vmatpush1.msra.mxu0 %v571
        %575 = vmatprep.subr.mxu0 0.0
        %576 = vmatpush1.msra.mxu0 0.0
        %577 = vmatprep.subr.mxu0 0.0
        %578 = vmatpush1.msra.mxu0 0.0
        %579 = vmatprep.subr.mxu0 0.0
        %580 = vmatpush1.msra.mxu0 0.0
        %581 = vmatprep.subr.mxu0 0.0
        %582 = vmatpush1.msra.mxu0 0.0
        %583 = vmatprep.subr.mxu0 0.0
        %584 = vmatpush1.msra.mxu0 0.0
        %585 = vmatprep.subr.mxu0 0.0
        %586 = vmatpush1.msra.mxu0 0.0
        %587 = vmatprep.subr.mxu0 0.0
        %588 = vmatpush1.msra.mxu0 0.0
        %589 = vmatprep.subr.mxu0 0.0
        %590 = vmatpush1.msra.mxu0 0.0
        %591 = vmatprep.subr.mxu0 0.0
        %592 = vmatpush1.msra.mxu0 0.0
        %593 = vmatprep.subr.mxu0 0.0
        %594 = vmatpush1.msra.mxu0 0.0
        %595 = vmatprep.subr.mxu0 0.0
        %596 = vmatpush1.msra.mxu0 0.0
        %597 = vmatprep.subr.mxu0 0.0
        %598 = vmatpush1.msra.mxu0 0.0
        %599 = vmatprep.subr.mxu0 0.0
        %600 = vmatpush1.msra.mxu0 0.0
        %601 = vmatprep.subr.mxu0 0.0
        %602 = vmatpush1.msra.mxu0 0.0
        %603 = vmatprep.subr.mxu0 0.0
        %604 = vmatpush1.msra.mxu0 0.0
        %605 = vmatprep.subr.mxu0 0.0
        %606 = vmatpush1.msra.mxu0 0.0
        %607 = vmatprep.subr.mxu0 0.0
        %608 = vmatpush1.msra.mxu0 0.0
        %609 = vmatprep.subr.mxu0 0.0
        %610 = vmatpush1.msra.mxu0 0.0
        %611 = vmatprep.subr.mxu0 0.0
        %612 = vmatpush1.msra.mxu0 0.0
        %613 = vmatprep.subr.mxu0 0.0
        %614 = vmatpush1.msra.mxu0 0.0
        %615 = vmatprep.subr.mxu0 0.0
        %616 = vmatpush1.msra.mxu0 0.0
        %617 = vmatprep.subr.mxu0 0.0
        %618 = vmatpush1.msra.mxu0 0.0
        %619 = vmatprep.subr.mxu0 0.0
        %620 = vmatpush1.msra.mxu0 0.0
        %621 = vmatprep.subr.mxu0 0.0
        %622 = vmatpush1.msra.mxu0 0.0
        %623 = vmatprep.subr.mxu0 0.0
        %624 = vmatpush1.msra.mxu0 0.0
        %625 = vmatprep.subr.mxu0 0.0
        %626 = vmatpush1.msra.mxu0 0.0
        %627 = vmatprep.subr.mxu0 0.0
        %628 = vmatpush1.msra.mxu0 0.0
        %629 = vmatprep.subr.mxu0 0.0
        %630 = vmatpush1.msra.mxu0 0.0
        %631 = vmatprep.subr.mxu0 0.0
        %632 = vmatpush1.msra.mxu0 0.0
        %633 = vmatprep.subr.mxu0 0.0
        %634 = vmatpush1.msra.mxu0 0.0
        %635 = vmatprep.subr.mxu0 0.0
        %636 = vmatpush1.msra.mxu0 0.0
        %637 = vmatprep.mubr.f32.mxu0 0.0
        %638 = vmatmul.mubr.f32.gmra.mrb[0].mxu0 %v546
        %v639 = vpop.f32.mrb[0].mxu0
        %v640 = vadd.f32 %v542, %v639
        %v641 = vpop.f32.mrb[0].mxu0
        %642 = vmatprep.mubr.f32.mxu0 0.0
        %643 = vmatmul.mubr.f32.gmra.mrb[0].mxu0 %v549
        %v644 = vpop.f32.mrb[0].mxu0
        %v645 = vadd.f32 %v542, %v644
        %v646 = vpop.f32.mrb[0].mxu0
        %647 = vmatprep.mubr.f32.mxu0 0.0
        %648 = vmatmul.mubr.f32.gmra.mrb[0].mxu0 %v552
        %v649 = vpop.f32.mrb[0].mxu0
        %v650 = vadd.f32 %v542, %v649
        %v651 = vpop.f32.mrb[0].mxu0
        %652 = vmatprep.mubr.f32.mxu0 0.0
        %653 = vmatmul.mubr.f32.gmra.mrb[0].mxu0 %v555
        %v654 = vpop.f32.mrb[0].mxu0
        %v655 = vadd.f32 %v542, %v654
        %v656 = vpop.f32.mrb[0].mxu0
        %657 = vmatprep.mubr.f32.mxu0 0.0
        %658 = vmatmul.mubr.f32.gmra.mrb[0].mxu0 %v558
        %v659 = vpop.f32.mrb[0].mxu0
        %v660 = vadd.f32 %v542, %v659
        %v661 = vpop.f32.mrb[0].mxu0
        %662 = vmatprep.mubr.f32.mxu0 0.0
        %663 = vmatmul.mubr.f32.gmra.mrb[0].mxu0 %v561
        %v664 = vpop.f32.mrb[0].mxu0
        %v665 = vadd.f32 %v542, %v664
        %v666 = vpop.f32.mrb[0].mxu0
        %667 = vmatprep.mubr.f32.mxu0 0.0
        %668 = vmatmul.mubr.f32.gmra.mrb[0].mxu0 %v564
        %v669 = vpop.f32.mrb[0].mxu0
        %v670 = vadd.f32 %v542, %v669
        %v671 = vpop.f32.mrb[0].mxu0
        %672 = vmatprep.mubr.f32.mxu0 0.0
        %673 = vmatmul.mubr.f32.gmra.mrb[0].mxu0 %v567
        %v674 = vpop.f32.mrb[0].mxu0
        %v675 = vadd.f32 %v542, %v674
        %v676 = vpop.f32.mrb[0].mxu0
        %677 = vdwg.mxu0
        %v679 = vlaneseq
        %v680 = vshrl.u32 %v679, 7
        %v681 = vsub.s32 0, %v680
        %v682 = vrot.slane %v533, %v681
        %v685 = vsel %vm569, %v527, 0
        %687 = vmatprep.subr.mxu0 0.0
        %688 = vmatpush1.msra.mxu0 %v685
        %689 = vmatprep.subr.mxu0 0.0
        %690 = vmatpush1.msra.mxu0 0.0
        %691 = vmatprep.subr.mxu0 0.0
        %692 = vmatpush1.msra.mxu0 0.0
        %693 = vmatprep.subr.mxu0 0.0
        %694 = vmatpush1.msra.mxu0 0.0
        %695 = vmatprep.subr.mxu0 0.0
        %696 = vmatpush1.msra.mxu0 0.0
        %697 = vmatprep.subr.mxu0 0.0
        %698 = vmatpush1.msra.mxu0 0.0
        %699 = vmatprep.subr.mxu0 0.0
        %700 = vmatpush1.msra.mxu0 0.0
        %701 = vmatprep.subr.mxu0 0.0
        %702 = vmatpush1.msra.mxu0 0.0
        %703 = vmatprep.subr.mxu0 0.0
        %704 = vmatpush1.msra.mxu0 0.0
        %705 = vmatprep.subr.mxu0 0.0
        %706 = vmatpush1.msra.mxu0 0.0
        %707 = vmatprep.subr.mxu0 0.0
        %708 = vmatpush1.msra.mxu0 0.0
        %709 = vmatprep.subr.mxu0 0.0
        %710 = vmatpush1.msra.mxu0 0.0
        %711 = vmatprep.subr.mxu0 0.0
        %712 = vmatpush1.msra.mxu0 0.0
        %713 = vmatprep.subr.mxu0 0.0
        %714 = vmatpush1.msra.mxu0 0.0
        %715 = vmatprep.subr.mxu0 0.0
        %716 = vmatpush1.msra.mxu0 0.0
        %717 = vmatprep.subr.mxu0 0.0
        %718 = vmatpush1.msra.mxu0 0.0
        %719 = vmatprep.subr.mxu0 0.0
        %720 = vmatpush1.msra.mxu0 0.0
        %721 = vmatprep.subr.mxu0 0.0
        %722 = vmatpush1.msra.mxu0 0.0
        %723 = vmatprep.subr.mxu0 0.0
        %724 = vmatpush1.msra.mxu0 0.0
        %725 = vmatprep.subr.mxu0 0.0
        %726 = vmatpush1.msra.mxu0 0.0
        %727 = vmatprep.subr.mxu0 0.0
        %728 = vmatpush1.msra.mxu0 0.0
        %729 = vmatprep.subr.mxu0 0.0
        %730 = vmatpush1.msra.mxu0 0.0
        %731 = vmatprep.subr.mxu0 0.0
        %732 = vmatpush1.msra.mxu0 0.0
        %733 = vmatprep.subr.mxu0 0.0
        %734 = vmatpush1.msra.mxu0 0.0
        %735 = vmatprep.subr.mxu0 0.0
        %736 = vmatpush1.msra.mxu0 0.0
        %737 = vmatprep.subr.mxu0 0.0
        %738 = vmatpush1.msra.mxu0 0.0
        %739 = vmatprep.subr.mxu0 0.0
        %740 = vmatpush1.msra.mxu0 0.0
        %741 = vmatprep.subr.mxu0 0.0
        %742 = vmatpush1.msra.mxu0 0.0
        %743 = vmatprep.subr.mxu0 0.0
        %744 = vmatpush1.msra.mxu0 0.0
        %745 = vmatprep.subr.mxu0 0.0
        %746 = vmatpush1.msra.mxu0 0.0
        %747 = vmatprep.subr.mxu0 0.0
        %748 = vmatpush1.msra.mxu0 0.0
        %749 = vmatprep.subr.mxu0 0.0
        %750 = vmatpush1.msra.mxu0 0.0
        %751 = vmatprep.mubr.f32.mxu0 0.0
        %752 = vmatmul.mubr.f32.gmra.mrb[0].mxu0 %v546
        %v753 = vpop.f32.mrb[0].mxu0
        %v754 = vadd.f32 %v682, %v753
        %v755 = vpop.f32.mrb[0].mxu0
        %756 = vmatprep.mubr.f32.mxu0 0.0
        %757 = vmatmul.mubr.f32.gmra.mrb[0].mxu0 %v549
        %v758 = vpop.f32.mrb[0].mxu0
        %v759 = vadd.f32 %v682, %v758
        %v760 = vpop.f32.mrb[0].mxu0
        %761 = vmatprep.mubr.f32.mxu0 0.0
        %762 = vmatmul.mubr.f32.gmra.mrb[0].mxu0 %v552
        %v763 = vpop.f32.mrb[0].mxu0
        %v764 = vadd.f32 %v682, %v763
        %v765 = vpop.f32.mrb[0].mxu0
        %766 = vmatprep.mubr.f32.mxu0 0.0
        %767 = vmatmul.mubr.f32.gmra.mrb[0].mxu0 %v555
        %v768 = vpop.f32.mrb[0].mxu0
        %v769 = vadd.f32 %v682, %v768
        %v770 = vpop.f32.mrb[0].mxu0
        %771 = vmatprep.mubr.f32.mxu0 0.0
        %772 = vmatmul.mubr.f32.gmra.mrb[0].mxu0 %v558
        %v773 = vpop.f32.mrb[0].mxu0
        %v774 = vadd.f32 %v682, %v773
        %v775 = vpop.f32.mrb[0].mxu0
        %776 = vmatprep.mubr.f32.mxu0 0.0
        %777 = vmatmul.mubr.f32.gmra.mrb[0].mxu0 %v561
        %v778 = vpop.f32.mrb[0].mxu0
        %v779 = vadd.f32 %v682, %v778
        %v780 = vpop.f32.mrb[0].mxu0
        %781 = vmatprep.mubr.f32.mxu0 0.0
        %782 = vmatmul.mubr.f32.gmra.mrb[0].mxu0 %v564
        %v783 = vpop.f32.mrb[0].mxu0
        %v784 = vadd.f32 %v682, %v783
        %v785 = vpop.f32.mrb[0].mxu0
        %786 = vmatprep.mubr.f32.mxu0 0.0
        %787 = vmatmul.mubr.f32.gmra.mrb[0].mxu0 %v567
        %v788 = vpop.f32.mrb[0].mxu0
        %v789 = vadd.f32 %v682, %v788
        %v790 = vpop.f32.mrb[0].mxu0
        %791 = vdwg.mxu0
        %v793 = vlaneseq
        %v794 = vshrl.u32 %v793, 7
        %v795 = vsub.s32 0, %v794
        %v796 = vrot.slane %v534, %v795
        %v799 = vsel %vm569, %v528, 0
        %801 = vmatprep.subr.mxu0 0.0
        %802 = vmatpush1.msra.mxu0 %v799
        %803 = vmatprep.subr.mxu0 0.0
        %804 = vmatpush1.msra.mxu0 0.0
        %805 = vmatprep.subr.mxu0 0.0
        %806 = vmatpush1.msra.mxu0 0.0
        %807 = vmatprep.subr.mxu0 0.0
        %808 = vmatpush1.msra.mxu0 0.0
        %809 = vmatprep.subr.mxu0 0.0
        %810 = vmatpush1.msra.mxu0 0.0
        %811 = vmatprep.subr.mxu0 0.0
        %812 = vmatpush1.msra.mxu0 0.0
        %813 = vmatprep.subr.mxu0 0.0
        %814 = vmatpush1.msra.mxu0 0.0
        %815 = vmatprep.subr.mxu0 0.0
        %816 = vmatpush1.msra.mxu0 0.0
        %817 = vmatprep.subr.mxu0 0.0
        %818 = vmatpush1.msra.mxu0 0.0
        %819 = vmatprep.subr.mxu0 0.0
        %820 = vmatpush1.msra.mxu0 0.0
        %821 = vmatprep.subr.mxu0 0.0
        %822 = vmatpush1.msra.mxu0 0.0
        %823 = vmatprep.subr.mxu0 0.0
        %824 = vmatpush1.msra.mxu0 0.0
        %825 = vmatprep.subr.mxu0 0.0
        %826 = vmatpush1.msra.mxu0 0.0
        %827 = vmatprep.subr.mxu0 0.0
        %828 = vmatpush1.msra.mxu0 0.0
        %829 = vmatprep.subr.mxu0 0.0
        %830 = vmatpush1.msra.mxu0 0.0
        %831 = vmatprep.subr.mxu0 0.0
        %832 = vmatpush1.msra.mxu0 0.0
        %833 = vmatprep.subr.mxu0 0.0
        %834 = vmatpush1.msra.mxu0 0.0
        %835 = vmatprep.subr.mxu0 0.0
        %836 = vmatpush1.msra.mxu0 0.0
        %837 = vmatprep.subr.mxu0 0.0
        %838 = vmatpush1.msra.mxu0 0.0
        %839 = vmatprep.subr.mxu0 0.0
        %840 = vmatpush1.msra.mxu0 0.0
        %841 = vmatprep.subr.mxu0 0.0
        %842 = vmatpush1.msra.mxu0 0.0
        %843 = vmatprep.subr.mxu0 0.0
        %844 = vmatpush1.msra.mxu0 0.0
        %845 = vmatprep.subr.mxu0 0.0
        %846 = vmatpush1.msra.mxu0 0.0
        %847 = vmatprep.subr.mxu0 0.0
        %848 = vmatpush1.msra.mxu0 0.0
        %849 = vmatprep.subr.mxu0 0.0
        %850 = vmatpush1.msra.mxu0 0.0
        %851 = vmatprep.subr.mxu0 0.0
        %852 = vmatpush1.msra.mxu0 0.0
        %853 = vmatprep.subr.mxu0 0.0
        %854 = vmatpush1.msra.mxu0 0.0
        %855 = vmatprep.subr.mxu0 0.0
        %856 = vmatpush1.msra.mxu0 0.0
        %857 = vmatprep.subr.mxu0 0.0
        %858 = vmatpush1.msra.mxu0 0.0
        %859 = vmatprep.subr.mxu0 0.0
        %860 = vmatpush1.msra.mxu0 0.0
        %861 = vmatprep.subr.mxu0 0.0
        %862 = vmatpush1.msra.mxu0 0.0
        %863 = vmatprep.subr.mxu0 0.0
        %864 = vmatpush1.msra.mxu0 0.0
        %865 = vmatprep.mubr.f32.mxu0 0.0
        %866 = vmatmul.mubr.f32.gmra.mrb[0].mxu0 %v546
        %v867 = vpop.f32.mrb[0].mxu0
        %v868 = vadd.f32 %v796, %v867
        %v869 = vpop.f32.mrb[0].mxu0
        %870 = vmatprep.mubr.f32.mxu0 0.0
        %871 = vmatmul.mubr.f32.gmra.mrb[0].mxu0 %v549
        %v872 = vpop.f32.mrb[0].mxu0
        %v873 = vadd.f32 %v796, %v872
        %v874 = vpop.f32.mrb[0].mxu0
        %875 = vmatprep.mubr.f32.mxu0 0.0
        %876 = vmatmul.mubr.f32.gmra.mrb[0].mxu0 %v552
        %v877 = vpop.f32.mrb[0].mxu0
        %v878 = vadd.f32 %v796, %v877
        %v879 = vpop.f32.mrb[0].mxu0
        %880 = vmatprep.mubr.f32.mxu0 0.0
        %881 = vmatmul.mubr.f32.gmra.mrb[0].mxu0 %v555
        %v882 = vpop.f32.mrb[0].mxu0
        %v883 = vadd.f32 %v796, %v882
        %v884 = vpop.f32.mrb[0].mxu0
        %885 = vmatprep.mubr.f32.mxu0 0.0
        %886 = vmatmul.mubr.f32.gmra.mrb[0].mxu0 %v558
        %v887 = vpop.f32.mrb[0].mxu0
        %v888 = vadd.f32 %v796, %v887
        %v889 = vpop.f32.mrb[0].mxu0
        %890 = vmatprep.mubr.f32.mxu0 0.0
        %891 = vmatmul.mubr.f32.gmra.mrb[0].mxu0 %v561
        %v892 = vpop.f32.mrb[0].mxu0
        %v893 = vadd.f32 %v796, %v892
        %v894 = vpop.f32.mrb[0].mxu0
        %895 = vmatprep.mubr.f32.mxu0 0.0
        %896 = vmatmul.mubr.f32.gmra.mrb[0].mxu0 %v564
        %v897 = vpop.f32.mrb[0].mxu0
        %v898 = vadd.f32 %v796, %v897
        %v899 = vpop.f32.mrb[0].mxu0
        %900 = vmatprep.mubr.f32.mxu0 0.0
        %901 = vmatmul.mubr.f32.gmra.mrb[0].mxu0 %v567
        %v902 = vpop.f32.mrb[0].mxu0
        %v903 = vadd.f32 %v796, %v902
        %v904 = vpop.f32.mrb[0].mxu0
        %905 = vdwg.mxu0
        %v907 = vlaneseq
        %v908 = vshrl.u32 %v907, 7
        %v909 = vsub.s32 0, %v908
        %v910 = vrot.slane %v535, %v909
        %v913 = vsel %vm569, %v529, 0
        %915 = vmatprep.subr.mxu0 0.0
        %916 = vmatpush1.msra.mxu0 %v913
        %917 = vmatprep.subr.mxu0 0.0
        %918 = vmatpush1.msra.mxu0 0.0
        %919 = vmatprep.subr.mxu0 0.0
        %920 = vmatpush1.msra.mxu0 0.0
        %921 = vmatprep.subr.mxu0 0.0
        %922 = vmatpush1.msra.mxu0 0.0
        %923 = vmatprep.subr.mxu0 0.0
        %924 = vmatpush1.msra.mxu0 0.0
        %925 = vmatprep.subr.mxu0 0.0
        %926 = vmatpush1.msra.mxu0 0.0
        %927 = vmatprep.subr.mxu0 0.0
        %928 = vmatpush1.msra.mxu0 0.0
        %929 = vmatprep.subr.mxu0 0.0
        %930 = vmatpush1.msra.mxu0 0.0
        %931 = vmatprep.subr.mxu0 0.0
        %932 = vmatpush1.msra.mxu0 0.0
        %933 = vmatprep.subr.mxu0 0.0
        %934 = vmatpush1.msra.mxu0 0.0
        %935 = vmatprep.subr.mxu0 0.0
        %936 = vmatpush1.msra.mxu0 0.0
        %937 = vmatprep.subr.mxu0 0.0
        %938 = vmatpush1.msra.mxu0 0.0
        %939 = vmatprep.subr.mxu0 0.0
        %940 = vmatpush1.msra.mxu0 0.0
        %941 = vmatprep.subr.mxu0 0.0
        %942 = vmatpush1.msra.mxu0 0.0
        %943 = vmatprep.subr.mxu0 0.0
        %944 = vmatpush1.msra.mxu0 0.0
        %945 = vmatprep.subr.mxu0 0.0
        %946 = vmatpush1.msra.mxu0 0.0
        %947 = vmatprep.subr.mxu0 0.0
        %948 = vmatpush1.msra.mxu0 0.0
        %949 = vmatprep.subr.mxu0 0.0
        %950 = vmatpush1.msra.mxu0 0.0
        %951 = vmatprep.subr.mxu0 0.0
        %952 = vmatpush1.msra.mxu0 0.0
        %953 = vmatprep.subr.mxu0 0.0
        %954 = vmatpush1.msra.mxu0 0.0
        %955 = vmatprep.subr.mxu0 0.0
        %956 = vmatpush1.msra.mxu0 0.0
        %957 = vmatprep.subr.mxu0 0.0
        %958 = vmatpush1.msra.mxu0 0.0
        %959 = vmatprep.subr.mxu0 0.0
        %960 = vmatpush1.msra.mxu0 0.0
        %961 = vmatprep.subr.mxu0 0.0
        %962 = vmatpush1.msra.mxu0 0.0
        %963 = vmatprep.subr.mxu0 0.0
        %964 = vmatpush1.msra.mxu0 0.0
        %965 = vmatprep.subr.mxu0 0.0
        %966 = vmatpush1.msra.mxu0 0.0
        %967 = vmatprep.subr.mxu0 0.0
        %968 = vmatpush1.msra.mxu0 0.0
        %969 = vmatprep.subr.mxu0 0.0
        %970 = vmatpush1.msra.mxu0 0.0
        %971 = vmatprep.subr.mxu0 0.0
        %972 = vmatpush1.msra.mxu0 0.0
        %973 = vmatprep.subr.mxu0 0.0
        %974 = vmatpush1.msra.mxu0 0.0
        %975 = vmatprep.subr.mxu0 0.0
        %976 = vmatpush1.msra.mxu0 0.0
        %977 = vmatprep.subr.mxu0 0.0
        %978 = vmatpush1.msra.mxu0 0.0
        %979 = vmatprep.mubr.f32.mxu0 0.0
        %980 = vmatmul.mubr.f32.gmra.mrb[0].mxu0 %v546
        %v981 = vpop.f32.mrb[0].mxu0
        %v982 = vadd.f32 %v910, %v981
        %v983 = vpop.f32.mrb[0].mxu0
        %984 = vmatprep.mubr.f32.mxu0 0.0
        %985 = vmatmul.mubr.f32.gmra.mrb[0].mxu0 %v549
        %v986 = vpop.f32.mrb[0].mxu0
        %v987 = vadd.f32 %v910, %v986
        %v988 = vpop.f32.mrb[0].mxu0
        %989 = vmatprep.mubr.f32.mxu0 0.0
        %990 = vmatmul.mubr.f32.gmra.mrb[0].mxu0 %v552
        %v991 = vpop.f32.mrb[0].mxu0
        %v992 = vadd.f32 %v910, %v991
        %v993 = vpop.f32.mrb[0].mxu0
        %994 = vmatprep.mubr.f32.mxu0 0.0
        %995 = vmatmul.mubr.f32.gmra.mrb[0].mxu0 %v555
        %v996 = vpop.f32.mrb[0].mxu0
        %v997 = vadd.f32 %v910, %v996
        %v998 = vpop.f32.mrb[0].mxu0
        %999 = vmatprep.mubr.f32.mxu0 0.0
        %1000 = vmatmul.mubr.f32.gmra.mrb[0].mxu0 %v558
        %v1001 = vpop.f32.mrb[0].mxu0
        %v1002 = vadd.f32 %v910, %v1001
        %v1003 = vpop.f32.mrb[0].mxu0
        %1004 = vmatprep.mubr.f32.mxu0 0.0
        %1005 = vmatmul.mubr.f32.gmra.mrb[0].mxu0 %v561
        %v1006 = vpop.f32.mrb[0].mxu0
        %v1007 = vadd.f32 %v910, %v1006
        %v1008 = vpop.f32.mrb[0].mxu0
        %1009 = vmatprep.mubr.f32.mxu0 0.0
        %1010 = vmatmul.mubr.f32.gmra.mrb[0].mxu0 %v564
        %v1011 = vpop.f32.mrb[0].mxu0
        %v1012 = vadd.f32 %v910, %v1011
        %v1013 = vpop.f32.mrb[0].mxu0
        %1014 = vmatprep.mubr.f32.mxu0 0.0
        %1015 = vmatmul.mubr.f32.gmra.mrb[0].mxu0 %v567
        %v1016 = vpop.f32.mrb[0].mxu0
        %v1017 = vadd.f32 %v910, %v1016
        %v1018 = vpop.f32.mrb[0].mxu0
        %1019 = vdwg.mxu0
        %v1021 = vlaneseq
        %v1022 = vshrl.u32 %v1021, 7
        %v1023 = vsub.s32 0, %v1022
        %v1024 = vrot.slane %v536, %v1023
        %v1027 = vsel %vm569, %v530, 0
        %1029 = vmatprep.subr.mxu0 0.0
        %1030 = vmatpush1.msra.mxu0 %v1027
        %1031 = vmatprep.subr.mxu0 0.0
        %1032 = vmatpush1.msra.mxu0 0.0
        %1033 = vmatprep.subr.mxu0 0.0
        %1034 = vmatpush1.msra.mxu0 0.0
        %1035 = vmatprep.subr.mxu0 0.0
        %1036 = vmatpush1.msra.mxu0 0.0
        %1037 = vmatprep.subr.mxu0 0.0
        %1038 = vmatpush1.msra.mxu0 0.0
        %1039 = vmatprep.subr.mxu0 0.0
        %1040 = vmatpush1.msra.mxu0 0.0
        %1041 = vmatprep.subr.mxu0 0.0
        %1042 = vmatpush1.msra.mxu0 0.0
        %1043 = vmatprep.subr.mxu0 0.0
        %1044 = vmatpush1.msra.mxu0 0.0
        %1045 = vmatprep.subr.mxu0 0.0
        %1046 = vmatpush1.msra.mxu0 0.0
        %1047 = vmatprep.subr.mxu0 0.0
        %1048 = vmatpush1.msra.mxu0 0.0
        %1049 = vmatprep.subr.mxu0 0.0
        %1050 = vmatpush1.msra.mxu0 0.0
        %1051 = vmatprep.subr.mxu0 0.0
        %1052 = vmatpush1.msra.mxu0 0.0
        %1053 = vmatprep.subr.mxu0 0.0
        %1054 = vmatpush1.msra.mxu0 0.0
        %1055 = vmatprep.subr.mxu0 0.0
        %1056 = vmatpush1.msra.mxu0 0.0
        %1057 = vmatprep.subr.mxu0 0.0
        %1058 = vmatpush1.msra.mxu0 0.0
        %1059 = vmatprep.subr.mxu0 0.0
        %1060 = vmatpush1.msra.mxu0 0.0
        %1061 = vmatprep.subr.mxu0 0.0
        %1062 = vmatpush1.msra.mxu0 0.0
        %1063 = vmatprep.subr.mxu0 0.0
        %1064 = vmatpush1.msra.mxu0 0.0
        %1065 = vmatprep.subr.mxu0 0.0
        %1066 = vmatpush1.msra.mxu0 0.0
        %1067 = vmatprep.subr.mxu0 0.0
        %1068 = vmatpush1.msra.mxu0 0.0
        %1069 = vmatprep.subr.mxu0 0.0
        %1070 = vmatpush1.msra.mxu0 0.0
        %1071 = vmatprep.subr.mxu0 0.0
        %1072 = vmatpush1.msra.mxu0 0.0
        %1073 = vmatprep.subr.mxu0 0.0
        %1074 = vmatpush1.msra.mxu0 0.0
        %1075 = vmatprep.subr.mxu0 0.0
        %1076 = vmatpush1.msra.mxu0 0.0
        %1077 = vmatprep.subr.mxu0 0.0
        %1078 = vmatpush1.msra.mxu0 0.0
        %1079 = vmatprep.subr.mxu0 0.0
        %1080 = vmatpush1.msra.mxu0 0.0
        %1081 = vmatprep.subr.mxu0 0.0
        %1082 = vmatpush1.msra.mxu0 0.0
        %1083 = vmatprep.subr.mxu0 0.0
        %1084 = vmatpush1.msra.mxu0 0.0
        %1085 = vmatprep.subr.mxu0 0.0
        %1086 = vmatpush1.msra.mxu0 0.0
        %1087 = vmatprep.subr.mxu0 0.0
        %1088 = vmatpush1.msra.mxu0 0.0
        %1089 = vmatprep.subr.mxu0 0.0
        %1090 = vmatpush1.msra.mxu0 0.0
        %1091 = vmatprep.subr.mxu0 0.0
        %1092 = vmatpush1.msra.mxu0 0.0
        %1093 = vmatprep.mubr.f32.mxu0 0.0
        %1094 = vmatmul.mubr.f32.gmra.mrb[0].mxu0 %v546
        %v1095 = vpop.f32.mrb[0].mxu0
        %v1096 = vadd.f32 %v1024, %v1095
        %v1097 = vpop.f32.mrb[0].mxu0
        %1098 = vmatprep.mubr.f32.mxu0 0.0
        %1099 = vmatmul.mubr.f32.gmra.mrb[0].mxu0 %v549
        %v1100 = vpop.f32.mrb[0].mxu0
        %v1101 = vadd.f32 %v1024, %v1100
        %v1102 = vpop.f32.mrb[0].mxu0
        %1103 = vmatprep.mubr.f32.mxu0 0.0
        %1104 = vmatmul.mubr.f32.gmra.mrb[0].mxu0 %v552
        %v1105 = vpop.f32.mrb[0].mxu0
        %v1106 = vadd.f32 %v1024, %v1105
        %v1107 = vpop.f32.mrb[0].mxu0
        %1108 = vmatprep.mubr.f32.mxu0 0.0
        %1109 = vmatmul.mubr.f32.gmra.mrb[0].mxu0 %v555
        %v1110 = vpop.f32.mrb[0].mxu0
        %v1111 = vadd.f32 %v1024, %v1110
        %v1112 = vpop.f32.mrb[0].mxu0
        %1113 = vmatprep.mubr.f32.mxu0 0.0
        %1114 = vmatmul.mubr.f32.gmra.mrb[0].mxu0 %v558
        %v1115 = vpop.f32.mrb[0].mxu0
        %v1116 = vadd.f32 %v1024, %v1115
        %v1117 = vpop.f32.mrb[0].mxu0
        %1118 = vmatprep.mubr.f32.mxu0 0.0
        %1119 = vmatmul.mubr.f32.gmra.mrb[0].mxu0 %v561
        %v1120 = vpop.f32.mrb[0].mxu0
        %v1121 = vadd.f32 %v1024, %v1120
        %v1122 = vpop.f32.mrb[0].mxu0
        %1123 = vmatprep.mubr.f32.mxu0 0.0
        %1124 = vmatmul.mubr.f32.gmra.mrb[0].mxu0 %v564
        %v1125 = vpop.f32.mrb[0].mxu0
        %v1126 = vadd.f32 %v1024, %v1125
        %v1127 = vpop.f32.mrb[0].mxu0
        %1128 = vmatprep.mubr.f32.mxu0 0.0
        %1129 = vmatmul.mubr.f32.gmra.mrb[0].mxu0 %v567
        %v1130 = vpop.f32.mrb[0].mxu0
        %v1131 = vadd.f32 %v1024, %v1130
        %v1132 = vpop.f32.mrb[0].mxu0
        %1133 = vdwg.mxu0
        %v1135 = vlaneseq
        %v1136 = vshrl.u32 %v1135, 7
        %v1137 = vsub.s32 0, %v1136
        %v1138 = vrot.slane %v537, %v1137
        %v1141 = vsel %vm569, %v531, 0
        %1143 = vmatprep.subr.mxu0 0.0
        %1144 = vmatpush1.msra.mxu0 %v1141
        %1145 = vmatprep.subr.mxu0 0.0
        %1146 = vmatpush1.msra.mxu0 0.0
        %1147 = vmatprep.subr.mxu0 0.0
        %1148 = vmatpush1.msra.mxu0 0.0
        %1149 = vmatprep.subr.mxu0 0.0
        %1150 = vmatpush1.msra.mxu0 0.0
        %1151 = vmatprep.subr.mxu0 0.0
        %1152 = vmatpush1.msra.mxu0 0.0
        %1153 = vmatprep.subr.mxu0 0.0
        %1154 = vmatpush1.msra.mxu0 0.0
        %1155 = vmatprep.subr.mxu0 0.0
        %1156 = vmatpush1.msra.mxu0 0.0
        %1157 = vmatprep.subr.mxu0 0.0
        %1158 = vmatpush1.msra.mxu0 0.0
        %1159 = vmatprep.subr.mxu0 0.0
        %1160 = vmatpush1.msra.mxu0 0.0
        %1161 = vmatprep.subr.mxu0 0.0
        %1162 = vmatpush1.msra.mxu0 0.0
        %1163 = vmatprep.subr.mxu0 0.0
        %1164 = vmatpush1.msra.mxu0 0.0
        %1165 = vmatprep.subr.mxu0 0.0
        %1166 = vmatpush1.msra.mxu0 0.0
        %1167 = vmatprep.subr.mxu0 0.0
        %1168 = vmatpush1.msra.mxu0 0.0
        %1169 = vmatprep.subr.mxu0 0.0
        %1170 = vmatpush1.msra.mxu0 0.0
        %1171 = vmatprep.subr.mxu0 0.0
        %1172 = vmatpush1.msra.mxu0 0.0
        %1173 = vmatprep.subr.mxu0 0.0
        %1174 = vmatpush1.msra.mxu0 0.0
        %1175 = vmatprep.subr.mxu0 0.0
        %1176 = vmatpush1.msra.mxu0 0.0
        %1177 = vmatprep.subr.mxu0 0.0
        %1178 = vmatpush1.msra.mxu0 0.0
        %1179 = vmatprep.subr.mxu0 0.0
        %1180 = vmatpush1.msra.mxu0 0.0
        %1181 = vmatprep.subr.mxu0 0.0
        %1182 = vmatpush1.msra.mxu0 0.0
        %1183 = vmatprep.subr.mxu0 0.0
        %1184 = vmatpush1.msra.mxu0 0.0
        %1185 = vmatprep.subr.mxu0 0.0
        %1186 = vmatpush1.msra.mxu0 0.0
        %1187 = vmatprep.subr.mxu0 0.0
        %1188 = vmatpush1.msra.mxu0 0.0
        %1189 = vmatprep.subr.mxu0 0.0
        %1190 = vmatpush1.msra.mxu0 0.0
        %1191 = vmatprep.subr.mxu0 0.0
        %1192 = vmatpush1.msra.mxu0 0.0
        %1193 = vmatprep.subr.mxu0 0.0
        %1194 = vmatpush1.msra.mxu0 0.0
        %1195 = vmatprep.subr.mxu0 0.0
        %1196 = vmatpush1.msra.mxu0 0.0
        %1197 = vmatprep.subr.mxu0 0.0
        %1198 = vmatpush1.msra.mxu0 0.0
        %1199 = vmatprep.subr.mxu0 0.0
        %1200 = vmatpush1.msra.mxu0 0.0
        %1201 = vmatprep.subr.mxu0 0.0
        %1202 = vmatpush1.msra.mxu0 0.0
        %1203 = vmatprep.subr.mxu0 0.0
        %1204 = vmatpush1.msra.mxu0 0.0
        %1205 = vmatprep.subr.mxu0 0.0
        %1206 = vmatpush1.msra.mxu0 0.0
        %1207 = vmatprep.mubr.f32.mxu0 0.0
        %1208 = vmatmul.mubr.f32.gmra.mrb[0].mxu0 %v546
        %v1209 = vpop.f32.mrb[0].mxu0
        %v1210 = vadd.f32 %v1138, %v1209
        %v1211 = vpop.f32.mrb[0].mxu0
        %1212 = vmatprep.mubr.f32.mxu0 0.0
        %1213 = vmatmul.mubr.f32.gmra.mrb[0].mxu0 %v549
        %v1214 = vpop.f32.mrb[0].mxu0
        %v1215 = vadd.f32 %v1138, %v1214
        %v1216 = vpop.f32.mrb[0].mxu0
        %1217 = vmatprep.mubr.f32.mxu0 0.0
        %1218 = vmatmul.mubr.f32.gmra.mrb[0].mxu0 %v552
        %v1219 = vpop.f32.mrb[0].mxu0
        %v1220 = vadd.f32 %v1138, %v1219
        %v1221 = vpop.f32.mrb[0].mxu0
        %1222 = vmatprep.mubr.f32.mxu0 0.0
        %1223 = vmatmul.mubr.f32.gmra.mrb[0].mxu0 %v555
        %v1224 = vpop.f32.mrb[0].mxu0
        %v1225 = vadd.f32 %v1138, %v1224
        %v1226 = vpop.f32.mrb[0].mxu0
        %1227 = vmatprep.mubr.f32.mxu0 0.0
        %1228 = vmatmul.mubr.f32.gmra.mrb[0].mxu0 %v558
        %v1229 = vpop.f32.mrb[0].mxu0
        %v1230 = vadd.f32 %v1138, %v1229
        %v1231 = vpop.f32.mrb[0].mxu0
        %1232 = vmatprep.mubr.f32.mxu0 0.0
        %1233 = vmatmul.mubr.f32.gmra.mrb[0].mxu0 %v561
        %v1234 = vpop.f32.mrb[0].mxu0
        %v1235 = vadd.f32 %v1138, %v1234
        %v1236 = vpop.f32.mrb[0].mxu0
        %1237 = vmatprep.mubr.f32.mxu0 0.0
        %1238 = vmatmul.mubr.f32.gmra.mrb[0].mxu0 %v564
        %v1239 = vpop.f32.mrb[0].mxu0
        %v1240 = vadd.f32 %v1138, %v1239
        %v1241 = vpop.f32.mrb[0].mxu0
        %1242 = vmatprep.mubr.f32.mxu0 0.0
        %1243 = vmatmul.mubr.f32.gmra.mrb[0].mxu0 %v567
        %v1244 = vpop.f32.mrb[0].mxu0
        %v1245 = vadd.f32 %v1138, %v1244
        %v1246 = vpop.f32.mrb[0].mxu0
        %1247 = vdwg.mxu0
        %v1248 = vld [vmem:[%s2] sm:$0xff]
        %v1249 = vld [vmem:[%s2 + $0x8] sm:$0xff]
        %v1250 = vld [vmem:[%s2 + $0x10] sm:$0xff]
        %v1251 = vld [vmem:[%s2 + $0x18] sm:$0xff]
        %v1252 = vld [vmem:[%s2 + $0x20] sm:$0xff]
        %v1253 = vld [vmem:[%s2 + $0x28] sm:$0xff]
        %v1254 = vld [vmem:[%s2 + $0x30] sm:$0xff]
        %v1255 = vld [vmem:[%s2 + $0x38] sm:$0xff]
        %v1256 = vld [vmem:[%s2 + $0x40] sm:$0xff]
        %v1257 = vld [vmem:[%s2 + $0x48] sm:$0xff]
        %v1258 = vld [vmem:[%s2 + $0x50] sm:$0xff]
        %v1259 = vld [vmem:[%s2 + $0x58] sm:$0xff]
        %v1260 = vld [vmem:[%s4] sm:$0x1]
        %s1261 = scalar_lea.vmem %s4, 1
        %v1262 = vld [vmem:[%s1261] sm:$0x1]
        %vm1263 = vcmask 130048
        %v1265 = vsel %vm1263, 0.0, 0
        %1267 = vmatprep.subr.mxu0 0.0
        %1268 = vmatpush1.msra.mxu0 %v1248
        %1269 = vmatprep.subr.mxu0 0.0
        %1270 = vmatpush1.msra.mxu0 %v1249
        %1271 = vmatprep.subr.mxu0 0.0
        %1272 = vmatpush1.msra.mxu0 0.0
        %1273 = vmatprep.subr.mxu0 0.0
        %1274 = vmatpush1.msra.mxu0 0.0
        %1275 = vmatprep.subr.mxu0 0.0
        %1276 = vmatpush1.msra.mxu0 0.0
        %1277 = vmatprep.subr.mxu0 0.0
        %1278 = vmatpush1.msra.mxu0 0.0
        %1279 = vmatprep.subr.mxu0 0.0
        %1280 = vmatpush1.msra.mxu0 0.0
        %1281 = vmatprep.subr.mxu0 0.0
        %1282 = vmatpush1.msra.mxu0 0.0
        %1283 = vmatprep.subr.mxu0 0.0
        %1284 = vmatpush1.msra.mxu0 0.0
        %1285 = vmatprep.subr.mxu0 0.0
        %1286 = vmatpush1.msra.mxu0 0.0
        %1287 = vmatprep.subr.mxu0 0.0
        %1288 = vmatpush1.msra.mxu0 0.0
        %1289 = vmatprep.subr.mxu0 0.0
        %1290 = vmatpush1.msra.mxu0 0.0
        %1291 = vmatprep.subr.mxu0 0.0
        %1292 = vmatpush1.msra.mxu0 0.0
        %1293 = vmatprep.subr.mxu0 0.0
        %1294 = vmatpush1.msra.mxu0 0.0
        %1295 = vmatprep.subr.mxu0 0.0
        %1296 = vmatpush1.msra.mxu0 0.0
        %1297 = vmatprep.subr.mxu0 0.0
        %1298 = vmatpush1.msra.mxu0 0.0
        %1299 = vmatprep.subr.mxu0 0.0
        %1300 = vmatpush1.msra.mxu0 0.0
        %1301 = vmatprep.subr.mxu0 0.0
        %1302 = vmatpush1.msra.mxu0 0.0
        %1303 = vmatprep.subr.mxu0 0.0
        %1304 = vmatpush1.msra.mxu0 0.0
        %1305 = vmatprep.subr.mxu0 0.0
        %1306 = vmatpush1.msra.mxu0 0.0
        %1307 = vmatprep.subr.mxu0 0.0
        %1308 = vmatpush1.msra.mxu0 0.0
        %1309 = vmatprep.subr.mxu0 0.0
        %1310 = vmatpush1.msra.mxu0 0.0
        %1311 = vmatprep.subr.mxu0 0.0
        %1312 = vmatpush1.msra.mxu0 0.0
        %1313 = vmatprep.subr.mxu0 0.0
        %1314 = vmatpush1.msra.mxu0 0.0
        %1315 = vmatprep.subr.mxu0 0.0
        %1316 = vmatpush1.msra.mxu0 0.0
        %1317 = vmatprep.subr.mxu0 0.0
        %1318 = vmatpush1.msra.mxu0 0.0
        %1319 = vmatprep.subr.mxu0 0.0
        %1320 = vmatpush1.msra.mxu0 0.0
        %1321 = vmatprep.subr.mxu0 0.0
        %1322 = vmatpush1.msra.mxu0 0.0
        %1323 = vmatprep.subr.mxu0 0.0
        %1324 = vmatpush1.msra.mxu0 0.0
        %1325 = vmatprep.subr.mxu0 0.0
        %1326 = vmatpush1.msra.mxu0 0.0
        %1327 = vmatprep.subr.mxu0 0.0
        %1328 = vmatpush1.msra.mxu0 0.0
        %1329 = vmatprep.subr.mxu0 0.0
        %1330 = vmatpush1.msra.mxu0 0.0
        %1331 = vmatprep.mubr.f32.mxu0 0.0
        %1332 = vmatmul.mubr.f32.gmra.mrb[0].mxu0 %v1265
        %v1333 = vpop.f32.mrb[0].mxu0
        %v1334 = vadd.f32 0.0, %v1333
        %v1335 = vpop.f32.mrb[0].mxu0
        %1336 = vdwg.mxu0
        %1337 = vmatprep.subr.mxu0 0.0
        %1338 = vmatpush1.msra.mxu0 %v1250
        %1339 = vmatprep.subr.mxu0 0.0
        %1340 = vmatpush1.msra.mxu0 %v1251
        %1341 = vmatprep.subr.mxu0 0.0
        %1342 = vmatpush1.msra.mxu0 0.0
        %1343 = vmatprep.subr.mxu0 0.0
        %1344 = vmatpush1.msra.mxu0 0.0
        %1345 = vmatprep.subr.mxu0 0.0
        %1346 = vmatpush1.msra.mxu0 0.0
        %1347 = vmatprep.subr.mxu0 0.0
        %1348 = vmatpush1.msra.mxu0 0.0
        %1349 = vmatprep.subr.mxu0 0.0
        %1350 = vmatpush1.msra.mxu0 0.0
        %1351 = vmatprep.subr.mxu0 0.0
        %1352 = vmatpush1.msra.mxu0 0.0
        %1353 = vmatprep.subr.mxu0 0.0
        %1354 = vmatpush1.msra.mxu0 0.0
        %1355 = vmatprep.subr.mxu0 0.0
        %1356 = vmatpush1.msra.mxu0 0.0
        %1357 = vmatprep.subr.mxu0 0.0
        %1358 = vmatpush1.msra.mxu0 0.0
        %1359 = vmatprep.subr.mxu0 0.0
        %1360 = vmatpush1.msra.mxu0 0.0
        %1361 = vmatprep.subr.mxu0 0.0
        %1362 = vmatpush1.msra.mxu0 0.0
        %1363 = vmatprep.subr.mxu0 0.0
        %1364 = vmatpush1.msra.mxu0 0.0
        %1365 = vmatprep.subr.mxu0 0.0
        %1366 = vmatpush1.msra.mxu0 0.0
        %1367 = vmatprep.subr.mxu0 0.0
        %1368 = vmatpush1.msra.mxu0 0.0
        %1369 = vmatprep.subr.mxu0 0.0
        %1370 = vmatpush1.msra.mxu0 0.0
        %1371 = vmatprep.subr.mxu0 0.0
        %1372 = vmatpush1.msra.mxu0 0.0
        %1373 = vmatprep.subr.mxu0 0.0
        %1374 = vmatpush1.msra.mxu0 0.0
        %1375 = vmatprep.subr.mxu0 0.0
        %1376 = vmatpush1.msra.mxu0 0.0
        %1377 = vmatprep.subr.mxu0 0.0
        %1378 = vmatpush1.msra.mxu0 0.0
        %1379 = vmatprep.subr.mxu0 0.0
        %1380 = vmatpush1.msra.mxu0 0.0
        %1381 = vmatprep.subr.mxu0 0.0
        %1382 = vmatpush1.msra.mxu0 0.0
        %1383 = vmatprep.subr.mxu0 0.0
        %1384 = vmatpush1.msra.mxu0 0.0
        %1385 = vmatprep.subr.mxu0 0.0
        %1386 = vmatpush1.msra.mxu0 0.0
        %1387 = vmatprep.subr.mxu0 0.0
        %1388 = vmatpush1.msra.mxu0 0.0
        %1389 = vmatprep.subr.mxu0 0.0
        %1390 = vmatpush1.msra.mxu0 0.0
        %1391 = vmatprep.subr.mxu0 0.0
        %1392 = vmatpush1.msra.mxu0 0.0
        %1393 = vmatprep.subr.mxu0 0.0
        %1394 = vmatpush1.msra.mxu0 0.0
        %1395 = vmatprep.subr.mxu0 0.0
        %1396 = vmatpush1.msra.mxu0 0.0
        %1397 = vmatprep.subr.mxu0 0.0
        %1398 = vmatpush1.msra.mxu0 0.0
        %1399 = vmatprep.subr.mxu0 0.0
        %1400 = vmatpush1.msra.mxu0 0.0
        %1401 = vmatprep.mubr.f32.mxu0 0.0
        %1402 = vmatmul.mubr.f32.gmra.mrb[0].mxu0 %v1265
        %v1403 = vpop.f32.mrb[0].mxu0
        %v1404 = vadd.f32 0.0, %v1403
        %v1405 = vpop.f32.mrb[0].mxu0
        %1406 = vdwg.mxu0
        %v1408 = vlaneseq
        %v1409 = vshrl.u32 %v1408, 7
        %v1410 = vsub.s32 0, %v1409
        %v1411 = vrot.slane %v1260, %v1410
        %1413 = vmatprep.subr.mxu0 0.0
        %1414 = vmatpush1.msra.mxu0 %v1252
        %1415 = vmatprep.subr.mxu0 0.0
        %1416 = vmatpush1.msra.mxu0 %v1253
        %1417 = vmatprep.subr.mxu0 0.0
        %1418 = vmatpush1.msra.mxu0 0.0
        %1419 = vmatprep.subr.mxu0 0.0
        %1420 = vmatpush1.msra.mxu0 0.0
        %1421 = vmatprep.subr.mxu0 0.0
        %1422 = vmatpush1.msra.mxu0 0.0
        %1423 = vmatprep.subr.mxu0 0.0
        %1424 = vmatpush1.msra.mxu0 0.0
        %1425 = vmatprep.subr.mxu0 0.0
        %1426 = vmatpush1.msra.mxu0 0.0
        %1427 = vmatprep.subr.mxu0 0.0
        %1428 = vmatpush1.msra.mxu0 0.0
        %1429 = vmatprep.subr.mxu0 0.0
        %1430 = vmatpush1.msra.mxu0 0.0
        %1431 = vmatprep.subr.mxu0 0.0
        %1432 = vmatpush1.msra.mxu0 0.0
        %1433 = vmatprep.subr.mxu0 0.0
        %1434 = vmatpush1.msra.mxu0 0.0
        %1435 = vmatprep.subr.mxu0 0.0
        %1436 = vmatpush1.msra.mxu0 0.0
        %1437 = vmatprep.subr.mxu0 0.0
        %1438 = vmatpush1.msra.mxu0 0.0
        %1439 = vmatprep.subr.mxu0 0.0
        %1440 = vmatpush1.msra.mxu0 0.0
        %1441 = vmatprep.subr.mxu0 0.0
        %1442 = vmatpush1.msra.mxu0 0.0
        %1443 = vmatprep.subr.mxu0 0.0
        %1444 = vmatpush1.msra.mxu0 0.0
        %1445 = vmatprep.subr.mxu0 0.0
        %1446 = vmatpush1.msra.mxu0 0.0
        %1447 = vmatprep.subr.mxu0 0.0
        %1448 = vmatpush1.msra.mxu0 0.0
        %1449 = vmatprep.subr.mxu0 0.0
        %1450 = vmatpush1.msra.mxu0 0.0
        %1451 = vmatprep.subr.mxu0 0.0
        %1452 = vmatpush1.msra.mxu0 0.0
        %1453 = vmatprep.subr.mxu0 0.0
        %1454 = vmatpush1.msra.mxu0 0.0
        %1455 = vmatprep.subr.mxu0 0.0
        %1456 = vmatpush1.msra.mxu0 0.0
        %1457 = vmatprep.subr.mxu0 0.0
        %1458 = vmatpush1.msra.mxu0 0.0
        %1459 = vmatprep.subr.mxu0 0.0
        %1460 = vmatpush1.msra.mxu0 0.0
        %1461 = vmatprep.subr.mxu0 0.0
        %1462 = vmatpush1.msra.mxu0 0.0
        %1463 = vmatprep.subr.mxu0 0.0
        %1464 = vmatpush1.msra.mxu0 0.0
        %1465 = vmatprep.subr.mxu0 0.0
        %1466 = vmatpush1.msra.mxu0 0.0
        %1467 = vmatprep.subr.mxu0 0.0
        %1468 = vmatpush1.msra.mxu0 0.0
        %1469 = vmatprep.subr.mxu0 0.0
        %1470 = vmatpush1.msra.mxu0 0.0
        %1471 = vmatprep.subr.mxu0 0.0
        %1472 = vmatpush1.msra.mxu0 0.0
        %1473 = vmatprep.subr.mxu0 0.0
        %1474 = vmatpush1.msra.mxu0 0.0
        %1475 = vmatprep.subr.mxu0 0.0
        %1476 = vmatpush1.msra.mxu0 0.0
        %1477 = vmatprep.mubr.f32.mxu0 0.0
        %1478 = vmatmul.mubr.f32.gmra.mrb[0].mxu0 %v1265
        %v1479 = vpop.f32.mrb[0].mxu0
        %v1480 = vadd.f32 %v1411, %v1479
        %v1481 = vpop.f32.mrb[0].mxu0
        %1482 = vdwg.mxu0
        %1483 = vmatprep.subr.mxu0 0.0
        %1484 = vmatpush1.msra.mxu0 %v1254
        %1485 = vmatprep.subr.mxu0 0.0
        %1486 = vmatpush1.msra.mxu0 %v1255
        %1487 = vmatprep.subr.mxu0 0.0
        %1488 = vmatpush1.msra.mxu0 0.0
        %1489 = vmatprep.subr.mxu0 0.0
        %1490 = vmatpush1.msra.mxu0 0.0
        %1491 = vmatprep.subr.mxu0 0.0
        %1492 = vmatpush1.msra.mxu0 0.0
        %1493 = vmatprep.subr.mxu0 0.0
        %1494 = vmatpush1.msra.mxu0 0.0
        %1495 = vmatprep.subr.mxu0 0.0
        %1496 = vmatpush1.msra.mxu0 0.0
        %1497 = vmatprep.subr.mxu0 0.0
        %1498 = vmatpush1.msra.mxu0 0.0
        %1499 = vmatprep.subr.mxu0 0.0
        %1500 = vmatpush1.msra.mxu0 0.0
        %1501 = vmatprep.subr.mxu0 0.0
        %1502 = vmatpush1.msra.mxu0 0.0
        %1503 = vmatprep.subr.mxu0 0.0
        %1504 = vmatpush1.msra.mxu0 0.0
        %1505 = vmatprep.subr.mxu0 0.0
        %1506 = vmatpush1.msra.mxu0 0.0
        %1507 = vmatprep.subr.mxu0 0.0
        %1508 = vmatpush1.msra.mxu0 0.0
        %1509 = vmatprep.subr.mxu0 0.0
        %1510 = vmatpush1.msra.mxu0 0.0
        %1511 = vmatprep.subr.mxu0 0.0
        %1512 = vmatpush1.msra.mxu0 0.0
        %1513 = vmatprep.subr.mxu0 0.0
        %1514 = vmatpush1.msra.mxu0 0.0
        %1515 = vmatprep.subr.mxu0 0.0
        %1516 = vmatpush1.msra.mxu0 0.0
        %1517 = vmatprep.subr.mxu0 0.0
        %1518 = vmatpush1.msra.mxu0 0.0
        %1519 = vmatprep.subr.mxu0 0.0
        %1520 = vmatpush1.msra.mxu0 0.0
        %1521 = vmatprep.subr.mxu0 0.0
        %1522 = vmatpush1.msra.mxu0 0.0
        %1523 = vmatprep.subr.mxu0 0.0
        %1524 = vmatpush1.msra.mxu0 0.0
        %1525 = vmatprep.subr.mxu0 0.0
        %1526 = vmatpush1.msra.mxu0 0.0
        %1527 = vmatprep.subr.mxu0 0.0
        %1528 = vmatpush1.msra.mxu0 0.0
        %1529 = vmatprep.subr.mxu0 0.0
        %1530 = vmatpush1.msra.mxu0 0.0
        %1531 = vmatprep.subr.mxu0 0.0
        %1532 = vmatpush1.msra.mxu0 0.0
        %1533 = vmatprep.subr.mxu0 0.0
        %1534 = vmatpush1.msra.mxu0 0.0
        %1535 = vmatprep.subr.mxu0 0.0
        %1536 = vmatpush1.msra.mxu0 0.0
        %1537 = vmatprep.subr.mxu0 0.0
        %1538 = vmatpush1.msra.mxu0 0.0
        %1539 = vmatprep.subr.mxu0 0.0
        %1540 = vmatpush1.msra.mxu0 0.0
        %1541 = vmatprep.subr.mxu0 0.0
        %1542 = vmatpush1.msra.mxu0 0.0
        %1543 = vmatprep.subr.mxu0 0.0
        %1544 = vmatpush1.msra.mxu0 0.0
        %1545 = vmatprep.subr.mxu0 0.0
        %1546 = vmatpush1.msra.mxu0 0.0
        %1547 = vmatprep.mubr.f32.mxu0 0.0
        %1548 = vmatmul.mubr.f32.gmra.mrb[0].mxu0 %v1265
        %v1549 = vpop.f32.mrb[0].mxu0
        %v1550 = vadd.f32 0.0, %v1549
        %v1551 = vpop.f32.mrb[0].mxu0
        %1552 = vdwg.mxu0
        %1553 = vmatprep.subr.mxu0 0.0
        %1554 = vmatpush1.msra.mxu0 %v1256
        %1555 = vmatprep.subr.mxu0 0.0
        %1556 = vmatpush1.msra.mxu0 %v1257
        %1557 = vmatprep.subr.mxu0 0.0
        %1558 = vmatpush1.msra.mxu0 0.0
        %1559 = vmatprep.subr.mxu0 0.0
        %1560 = vmatpush1.msra.mxu0 0.0
        %1561 = vmatprep.subr.mxu0 0.0
        %1562 = vmatpush1.msra.mxu0 0.0
        %1563 = vmatprep.subr.mxu0 0.0
        %1564 = vmatpush1.msra.mxu0 0.0
        %1565 = vmatprep.subr.mxu0 0.0
        %1566 = vmatpush1.msra.mxu0 0.0
        %1567 = vmatprep.subr.mxu0 0.0
        %1568 = vmatpush1.msra.mxu0 0.0
        %1569 = vmatprep.subr.mxu0 0.0
        %1570 = vmatpush1.msra.mxu0 0.0
        %1571 = vmatprep.subr.mxu0 0.0
        %1572 = vmatpush1.msra.mxu0 0.0
        %1573 = vmatprep.subr.mxu0 0.0
        %1574 = vmatpush1.msra.mxu0 0.0
        %1575 = vmatprep.subr.mxu0 0.0
        %1576 = vmatpush1.msra.mxu0 0.0
        %1577 = vmatprep.subr.mxu0 0.0
        %1578 = vmatpush1.msra.mxu0 0.0
        %1579 = vmatprep.subr.mxu0 0.0
        %1580 = vmatpush1.msra.mxu0 0.0
        %1581 = vmatprep.subr.mxu0 0.0
        %1582 = vmatpush1.msra.mxu0 0.0
        %1583 = vmatprep.subr.mxu0 0.0
        %1584 = vmatpush1.msra.mxu0 0.0
        %1585 = vmatprep.subr.mxu0 0.0
        %1586 = vmatpush1.msra.mxu0 0.0
        %1587 = vmatprep.subr.mxu0 0.0
        %1588 = vmatpush1.msra.mxu0 0.0
        %1589 = vmatprep.subr.mxu0 0.0
        %1590 = vmatpush1.msra.mxu0 0.0
        %1591 = vmatprep.subr.mxu0 0.0
        %1592 = vmatpush1.msra.mxu0 0.0
        %1593 = vmatprep.subr.mxu0 0.0
        %1594 = vmatpush1.msra.mxu0 0.0
        %1595 = vmatprep.subr.mxu0 0.0
        %1596 = vmatpush1.msra.mxu0 0.0
        %1597 = vmatprep.subr.mxu0 0.0
        %1598 = vmatpush1.msra.mxu0 0.0
        %1599 = vmatprep.subr.mxu0 0.0
        %1600 = vmatpush1.msra.mxu0 0.0
        %1601 = vmatprep.subr.mxu0 0.0
        %1602 = vmatpush1.msra.mxu0 0.0
        %1603 = vmatprep.subr.mxu0 0.0
        %1604 = vmatpush1.msra.mxu0 0.0
        %1605 = vmatprep.subr.mxu0 0.0
        %1606 = vmatpush1.msra.mxu0 0.0
        %1607 = vmatprep.subr.mxu0 0.0
        %1608 = vmatpush1.msra.mxu0 0.0
        %1609 = vmatprep.subr.mxu0 0.0
        %1610 = vmatpush1.msra.mxu0 0.0
        %1611 = vmatprep.subr.mxu0 0.0
        %1612 = vmatpush1.msra.mxu0 0.0
        %1613 = vmatprep.subr.mxu0 0.0
        %1614 = vmatpush1.msra.mxu0 0.0
        %1615 = vmatprep.subr.mxu0 0.0
        %1616 = vmatpush1.msra.mxu0 0.0
        %1617 = vmatprep.mubr.f32.mxu0 0.0
        %1618 = vmatmul.mubr.f32.gmra.mrb[0].mxu0 %v1265
        %v1619 = vpop.f32.mrb[0].mxu0
        %v1620 = vadd.f32 0.0, %v1619
        %v1621 = vpop.f32.mrb[0].mxu0
        %1622 = vdwg.mxu0
        %v1624 = vlaneseq
        %v1625 = vshrl.u32 %v1624, 7
        %v1626 = vsub.s32 0, %v1625
        %v1627 = vrot.slane %v1262, %v1626
        %1629 = vmatprep.subr.mxu0 0.0
        %1630 = vmatpush1.msra.mxu0 %v1258
        %1631 = vmatprep.subr.mxu0 0.0
        %1632 = vmatpush1.msra.mxu0 %v1259
        %1633 = vmatprep.subr.mxu0 0.0
        %1634 = vmatpush1.msra.mxu0 0.0
        %1635 = vmatprep.subr.mxu0 0.0
        %1636 = vmatpush1.msra.mxu0 0.0
        %1637 = vmatprep.subr.mxu0 0.0
        %1638 = vmatpush1.msra.mxu0 0.0
        %1639 = vmatprep.subr.mxu0 0.0
        %1640 = vmatpush1.msra.mxu0 0.0
        %1641 = vmatprep.subr.mxu0 0.0
        %1642 = vmatpush1.msra.mxu0 0.0
        %1643 = vmatprep.subr.mxu0 0.0
        %1644 = vmatpush1.msra.mxu0 0.0
        %1645 = vmatprep.subr.mxu0 0.0
        %1646 = vmatpush1.msra.mxu0 0.0
        %1647 = vmatprep.subr.mxu0 0.0
        %1648 = vmatpush1.msra.mxu0 0.0
        %1649 = vmatprep.subr.mxu0 0.0
        %1650 = vmatpush1.msra.mxu0 0.0
        %1651 = vmatprep.subr.mxu0 0.0
        %1652 = vmatpush1.msra.mxu0 0.0
        %1653 = vmatprep.subr.mxu0 0.0
        %1654 = vmatpush1.msra.mxu0 0.0
        %1655 = vmatprep.subr.mxu0 0.0
        %1656 = vmatpush1.msra.mxu0 0.0
        %1657 = vmatprep.subr.mxu0 0.0
        %1658 = vmatpush1.msra.mxu0 0.0
        %1659 = vmatprep.subr.mxu0 0.0
        %1660 = vmatpush1.msra.mxu0 0.0
        %1661 = vmatprep.subr.mxu0 0.0
        %1662 = vmatpush1.msra.mxu0 0.0
        %1663 = vmatprep.subr.mxu0 0.0
        %1664 = vmatpush1.msra.mxu0 0.0
        %1665 = vmatprep.subr.mxu0 0.0
        %1666 = vmatpush1.msra.mxu0 0.0
        %1667 = vmatprep.subr.mxu0 0.0
        %1668 = vmatpush1.msra.mxu0 0.0
        %1669 = vmatprep.subr.mxu0 0.0
        %1670 = vmatpush1.msra.mxu0 0.0
        %1671 = vmatprep.subr.mxu0 0.0
        %1672 = vmatpush1.msra.mxu0 0.0
        %1673 = vmatprep.subr.mxu0 0.0
        %1674 = vmatpush1.msra.mxu0 0.0
        %1675 = vmatprep.subr.mxu0 0.0
        %1676 = vmatpush1.msra.mxu0 0.0
        %1677 = vmatprep.subr.mxu0 0.0
        %1678 = vmatpush1.msra.mxu0 0.0
        %1679 = vmatprep.subr.mxu0 0.0
        %1680 = vmatpush1.msra.mxu0 0.0
        %1681 = vmatprep.subr.mxu0 0.0
        %1682 = vmatpush1.msra.mxu0 0.0
        %1683 = vmatprep.subr.mxu0 0.0
        %1684 = vmatpush1.msra.mxu0 0.0
        %1685 = vmatprep.subr.mxu0 0.0
        %1686 = vmatpush1.msra.mxu0 0.0
        %1687 = vmatprep.subr.mxu0 0.0
        %1688 = vmatpush1.msra.mxu0 0.0
        %1689 = vmatprep.subr.mxu0 0.0
        %1690 = vmatpush1.msra.mxu0 0.0
        %1691 = vmatprep.subr.mxu0 0.0
        %1692 = vmatpush1.msra.mxu0 0.0
        %1693 = vmatprep.mubr.f32.mxu0 0.0
        %1694 = vmatmul.mubr.f32.gmra.mrb[0].mxu0 %v1265
        %v1695 = vpop.f32.mrb[0].mxu0
        %v1696 = vadd.f32 %v1627, %v1695
        %v1697 = vpop.f32.mrb[0].mxu0
        %1698 = vdwg.mxu0
        %v1699 = vadd.f32 %v640, %v1334
        %v1700 = vand.u32 2147483647, %v1699
        %v1701 = vsub.f32 0.0, %v1700
        %v1702 = vmul.f32 %v1701, 1.442695
        %v1703 = vpow.pop %v1702
        %vm1704 = vcmp.ge.f32.partialorder %v1699, 0.0
        %v1705 = vadd.f32 %v1703, 1.0
        %v1706 = vrcp.pop %v1705
        %v1707 = vmul.f32 1.0, %v1706
        %v1708 = vmul.f32 %v1703, %v1706
        %v1709 = vsel %vm1704, %v1707, %v1708
        %v1710 = vadd.f32 %v754, %v1404
        %v1711 = vand.u32 2147483647, %v1710
        %v1712 = vsub.f32 0.0, %v1711
        %v1713 = vmul.f32 %v1712, 1.442695
        %v1714 = vpow.pop %v1713
        %vm1715 = vcmp.ge.f32.partialorder %v1710, 0.0
        %v1716 = vadd.f32 %v1714, 1.0
        %v1717 = vrcp.pop %v1716
        %v1718 = vmul.f32 1.0, %v1717
        %v1719 = vmul.f32 %v1714, %v1717
        %v1720 = vsel %vm1715, %v1718, %v1719
        %v1721 = vmul.f32 %v1709, %v1480
        %v1722 = vadd.f32 %v868, %v1721
        %v1723 = vtanh.pop %v1722
        %v1724 = vsub.f32 1.0, %v1720
        %v1725 = vmul.f32 %v1724, %v1723
        %v1726 = vmul.f32 %v1720, 0.0
        %v1727 = vadd.f32 %v1725, %v1726
        %v1728 = vadd.f32 %v1727, 0.0
        %v1729 = vadd.f32 %v1017, %v1550
        %v1730 = vand.u32 2147483647, %v1729
        %v1731 = vsub.f32 0.0, %v1730
        %v1732 = vmul.f32 %v1731, 1.442695
        %v1733 = vpow.pop %v1732
        %vm1734 = vcmp.ge.f32.partialorder %v1729, 0.0
        %v1735 = vadd.f32 %v1733, 1.0
        %v1736 = vrcp.pop %v1735
        %v1737 = vmul.f32 1.0, %v1736
        %v1738 = vmul.f32 %v1733, %v1736
        %v1739 = vsel %vm1734, %v1737, %v1738
        %v1740 = vadd.f32 %v1131, %v1620
        %v1741 = vand.u32 2147483647, %v1740
        %v1742 = vsub.f32 0.0, %v1741
        %v1743 = vmul.f32 %v1742, 1.442695
        %v1744 = vpow.pop %v1743
        %vm1745 = vcmp.ge.f32.partialorder %v1740, 0.0
        %v1746 = vadd.f32 %v1744, 1.0
        %v1747 = vrcp.pop %v1746
        %v1748 = vmul.f32 1.0, %v1747
        %v1749 = vmul.f32 %v1744, %v1747
        %v1750 = vsel %vm1745, %v1748, %v1749
        %v1751 = vmul.f32 %v1739, %v1696
        %v1752 = vadd.f32 %v1245, %v1751
        %v1753 = vtanh.pop %v1752
        %v1754 = vsub.f32 1.0, %v1750
        %v1755 = vmul.f32 %v1754, %v1753
        %v1756 = vmul.f32 %v1750, 0.0
        %v1757 = vadd.f32 %v1755, %v1756
        %v1758 = vadd.f32 %v1757, 0.0
        %v1760 = vsel %vm1263, %v1727, 0
        %1762 = vmatprep.subr.mxu0 0.0
        %1763 = vmatpush1.msra.mxu0 %v1248
        %1764 = vmatprep.subr.mxu0 0.0
        %1765 = vmatpush1.msra.mxu0 %v1249
        %1766 = vmatprep.subr.mxu0 0.0
        %1767 = vmatpush1.msra.mxu0 0.0
        %1768 = vmatprep.subr.mxu0 0.0
        %1769 = vmatpush1.msra.mxu0 0.0
        %1770 = vmatprep.subr.mxu0 0.0
        %1771 = vmatpush1.msra.mxu0 0.0
        %1772 = vmatprep.subr.mxu0 0.0
        %1773 = vmatpush1.msra.mxu0 0.0
        %1774 = vmatprep.subr.mxu0 0.0
        %1775 = vmatpush1.msra.mxu0 0.0
        %1776 = vmatprep.subr.mxu0 0.0
        %1777 = vmatpush1.msra.mxu0 0.0
        %1778 = vmatprep.subr.mxu0 0.0
        %1779 = vmatpush1.msra.mxu0 0.0
        %1780 = vmatprep.subr.mxu0 0.0
        %1781 = vmatpush1.msra.mxu0 0.0
        %1782 = vmatprep.subr.mxu0 0.0
        %1783 = vmatpush1.msra.mxu0 0.0
        %1784 = vmatprep.subr.mxu0 0.0
        %1785 = vmatpush1.msra.mxu0 0.0
        %1786 = vmatprep.subr.mxu0 0.0
        %1787 = vmatpush1.msra.mxu0 0.0
        %1788 = vmatprep.subr.mxu0 0.0
        %1789 = vmatpush1.msra.mxu0 0.0
        %1790 = vmatprep.subr.mxu0 0.0
        %1791 = vmatpush1.msra.mxu0 0.0
        %1792 = vmatprep.subr.mxu0 0.0
        %1793 = vmatpush1.msra.mxu0 0.0
        %1794 = vmatprep.subr.mxu0 0.0
        %1795 = vmatpush1.msra.mxu0 0.0
        %1796 = vmatprep.subr.mxu0 0.0
        %1797 = vmatpush1.msra.mxu0 0.0
        %1798 = vmatprep.subr.mxu0 0.0
        %1799 = vmatpush1.msra.mxu0 0.0
        %1800 = vmatprep.subr.mxu0 0.0
        %1801 = vmatpush1.msra.mxu0 0.0
        %1802 = vmatprep.subr.mxu0 0.0
        %1803 = vmatpush1.msra.mxu0 0.0
        %1804 = vmatprep.subr.mxu0 0.0
        %1805 = vmatpush1.msra.mxu0 0.0
        %1806 = vmatprep.subr.mxu0 0.0
        %1807 = vmatpush1.msra.mxu0 0.0
        %1808 = vmatprep.subr.mxu0 0.0
        %1809 = vmatpush1.msra.mxu0 0.0
        %1810 = vmatprep.subr.mxu0 0.0
        %1811 = vmatpush1.msra.mxu0 0.0
        %1812 = vmatprep.subr.mxu0 0.0
        %1813 = vmatpush1.msra.mxu0 0.0
        %1814 = vmatprep.subr.mxu0 0.0
        %1815 = vmatpush1.msra.mxu0 0.0
        %1816 = vmatprep.subr.mxu0 0.0
        %1817 = vmatpush1.msra.mxu0 0.0
        %1818 = vmatprep.subr.mxu0 0.0
        %1819 = vmatpush1.msra.mxu0 0.0
        %1820 = vmatprep.subr.mxu0 0.0
        %1821 = vmatpush1.msra.mxu0 0.0
        %1822 = vmatprep.subr.mxu0 0.0
        %1823 = vmatpush1.msra.mxu0 0.0
        %1824 = vmatprep.subr.mxu0 0.0
        %1825 = vmatpush1.msra.mxu0 0.0
        %1826 = vmatprep.mubr.f32.mxu0 0.0
        %1827 = vmatmul.mubr.f32.gmra.mrb[0].mxu0 %v1760
        %v1828 = vpop.f32.mrb[0].mxu0
        %v1829 = vadd.f32 0.0, %v1828
        %v1830 = vpop.f32.mrb[0].mxu0
        %1831 = vdwg.mxu0
        %1832 = vmatprep.subr.mxu0 0.0
        %1833 = vmatpush1.msra.mxu0 %v1250
        %1834 = vmatprep.subr.mxu0 0.0
        %1835 = vmatpush1.msra.mxu0 %v1251
        %1836 = vmatprep.subr.mxu0 0.0
        %1837 = vmatpush1.msra.mxu0 0.0
        %1838 = vmatprep.subr.mxu0 0.0
        %1839 = vmatpush1.msra.mxu0 0.0
        %1840 = vmatprep.subr.mxu0 0.0
        %1841 = vmatpush1.msra.mxu0 0.0
        %1842 = vmatprep.subr.mxu0 0.0
        %1843 = vmatpush1.msra.mxu0 0.0
        %1844 = vmatprep.subr.mxu0 0.0
        %1845 = vmatpush1.msra.mxu0 0.0
        %1846 = vmatprep.subr.mxu0 0.0
        %1847 = vmatpush1.msra.mxu0 0.0
        %1848 = vmatprep.subr.mxu0 0.0
        %1849 = vmatpush1.msra.mxu0 0.0
        %1850 = vmatprep.subr.mxu0 0.0
        %1851 = vmatpush1.msra.mxu0 0.0
        %1852 = vmatprep.subr.mxu0 0.0
        %1853 = vmatpush1.msra.mxu0 0.0
        %1854 = vmatprep.subr.mxu0 0.0
        %1855 = vmatpush1.msra.mxu0 0.0
        %1856 = vmatprep.subr.mxu0 0.0
        %1857 = vmatpush1.msra.mxu0 0.0
        %1858 = vmatprep.subr.mxu0 0.0
        %1859 = vmatpush1.msra.mxu0 0.0
        %1860 = vmatprep.subr.mxu0 0.0
        %1861 = vmatpush1.msra.mxu0 0.0
        %1862 = vmatprep.subr.mxu0 0.0
        %1863 = vmatpush1.msra.mxu0 0.0
        %1864 = vmatprep.subr.mxu0 0.0
        %1865 = vmatpush1.msra.mxu0 0.0
        %1866 = vmatprep.subr.mxu0 0.0
        %1867 = vmatpush1.msra.mxu0 0.0
        %1868 = vmatprep.subr.mxu0 0.0
        %1869 = vmatpush1.msra.mxu0 0.0
        %1870 = vmatprep.subr.mxu0 0.0
        %1871 = vmatpush1.msra.mxu0 0.0
        %1872 = vmatprep.subr.mxu0 0.0
        %1873 = vmatpush1.msra.mxu0 0.0
        %1874 = vmatprep.subr.mxu0 0.0
        %1875 = vmatpush1.msra.mxu0 0.0
        %1876 = vmatprep.subr.mxu0 0.0
        %1877 = vmatpush1.msra.mxu0 0.0
        %1878 = vmatprep.subr.mxu0 0.0
        %1879 = vmatpush1.msra.mxu0 0.0
        %1880 = vmatprep.subr.mxu0 0.0
        %1881 = vmatpush1.msra.mxu0 0.0
        %1882 = vmatprep.subr.mxu0 0.0
        %1883 = vmatpush1.msra.mxu0 0.0
        %1884 = vmatprep.subr.mxu0 0.0
        %1885 = vmatpush1.msra.mxu0 0.0
        %1886 = vmatprep.subr.mxu0 0.0
        %1887 = vmatpush1.msra.mxu0 0.0
        %1888 = vmatprep.subr.mxu0 0.0
        %1889 = vmatpush1.msra.mxu0 0.0
        %1890 = vmatprep.subr.mxu0 0.0
        %1891 = vmatpush1.msra.mxu0 0.0
        %1892 = vmatprep.subr.mxu0 0.0
        %1893 = vmatpush1.msra.mxu0 0.0
        %1894 = vmatprep.subr.mxu0 0.0
        %1895 = vmatpush1.msra.mxu0 0.0
        %1896 = vmatprep.mubr.f32.mxu0 0.0
        %1897 = vmatmul.mubr.f32.gmra.mrb[0].mxu0 %v1760
        %v1898 = vpop.f32.mrb[0].mxu0
        %v1899 = vadd.f32 0.0, %v1898
        %v1900 = vpop.f32.mrb[0].mxu0
        %1901 = vdwg.mxu0
        %1902 = vmatprep.subr.mxu0 0.0
        %1903 = vmatpush1.msra.mxu0 %v1252
        %1904 = vmatprep.subr.mxu0 0.0
        %1905 = vmatpush1.msra.mxu0 %v1253
        %1906 = vmatprep.subr.mxu0 0.0
        %1907 = vmatpush1.msra.mxu0 0.0
        %1908 = vmatprep.subr.mxu0 0.0
        %1909 = vmatpush1.msra.mxu0 0.0
        %1910 = vmatprep.subr.mxu0 0.0
        %1911 = vmatpush1.msra.mxu0 0.0
        %1912 = vmatprep.subr.mxu0 0.0
        %1913 = vmatpush1.msra.mxu0 0.0
        %1914 = vmatprep.subr.mxu0 0.0
        %1915 = vmatpush1.msra.mxu0 0.0
        %1916 = vmatprep.subr.mxu0 0.0
        %1917 = vmatpush1.msra.mxu0 0.0
        %1918 = vmatprep.subr.mxu0 0.0
        %1919 = vmatpush1.msra.mxu0 0.0
        %1920 = vmatprep.subr.mxu0 0.0
        %1921 = vmatpush1.msra.mxu0 0.0
        %1922 = vmatprep.subr.mxu0 0.0
        %1923 = vmatpush1.msra.mxu0 0.0
        %1924 = vmatprep.subr.mxu0 0.0
        %1925 = vmatpush1.msra.mxu0 0.0
        %1926 = vmatprep.subr.mxu0 0.0
        %1927 = vmatpush1.msra.mxu0 0.0
        %1928 = vmatprep.subr.mxu0 0.0
        %1929 = vmatpush1.msra.mxu0 0.0
        %1930 = vmatprep.subr.mxu0 0.0
        %1931 = vmatpush1.msra.mxu0 0.0
        %1932 = vmatprep.subr.mxu0 0.0
        %1933 = vmatpush1.msra.mxu0 0.0
        %1934 = vmatprep.subr.mxu0 0.0
        %1935 = vmatpush1.msra.mxu0 0.0
        %1936 = vmatprep.subr.mxu0 0.0
        %1937 = vmatpush1.msra.mxu0 0.0
        %1938 = vmatprep.subr.mxu0 0.0
        %1939 = vmatpush1.msra.mxu0 0.0
        %1940 = vmatprep.subr.mxu0 0.0
        %1941 = vmatpush1.msra.mxu0 0.0
        %1942 = vmatprep.subr.mxu0 0.0
        %1943 = vmatpush1.msra.mxu0 0.0
        %1944 = vmatprep.subr.mxu0 0.0
        %1945 = vmatpush1.msra.mxu0 0.0
        %1946 = vmatprep.subr.mxu0 0.0
        %1947 = vmatpush1.msra.mxu0 0.0
        %1948 = vmatprep.subr.mxu0 0.0
        %1949 = vmatpush1.msra.mxu0 0.0
        %1950 = vmatprep.subr.mxu0 0.0
        %1951 = vmatpush1.msra.mxu0 0.0
        %1952 = vmatprep.subr.mxu0 0.0
        %1953 = vmatpush1.msra.mxu0 0.0
        %1954 = vmatprep.subr.mxu0 0.0
        %1955 = vmatpush1.msra.mxu0 0.0
        %1956 = vmatprep.subr.mxu0 0.0
        %1957 = vmatpush1.msra.mxu0 0.0
        %1958 = vmatprep.subr.mxu0 0.0
        %1959 = vmatpush1.msra.mxu0 0.0
        %1960 = vmatprep.subr.mxu0 0.0
        %1961 = vmatpush1.msra.mxu0 0.0
        %1962 = vmatprep.subr.mxu0 0.0
        %1963 = vmatpush1.msra.mxu0 0.0
        %1964 = vmatprep.subr.mxu0 0.0
        %1965 = vmatpush1.msra.mxu0 0.0
        %1966 = vmatprep.mubr.f32.mxu0 0.0
        %1967 = vmatmul.mubr.f32.gmra.mrb[0].mxu0 %v1760
        %v1968 = vpop.f32.mrb[0].mxu0
        %v1969 = vadd.f32 %v1411, %v1968
        %v1970 = vpop.f32.mrb[0].mxu0
        %1971 = vdwg.mxu0
        %v1973 = vsel %vm1263, %v1757, 0
        %1975 = vmatprep.subr.mxu0 0.0
        %1976 = vmatpush1.msra.mxu0 %v1254
        %1977 = vmatprep.subr.mxu0 0.0
        %1978 = vmatpush1.msra.mxu0 %v1255
        %1979 = vmatprep.subr.mxu0 0.0
        %1980 = vmatpush1.msra.mxu0 0.0
        %1981 = vmatprep.subr.mxu0 0.0
        %1982 = vmatpush1.msra.mxu0 0.0
        %1983 = vmatprep.subr.mxu0 0.0
        %1984 = vmatpush1.msra.mxu0 0.0
        %1985 = vmatprep.subr.mxu0 0.0
        %1986 = vmatpush1.msra.mxu0 0.0
        %1987 = vmatprep.subr.mxu0 0.0
        %1988 = vmatpush1.msra.mxu0 0.0
        %1989 = vmatprep.subr.mxu0 0.0
        %1990 = vmatpush1.msra.mxu0 0.0
        %1991 = vmatprep.subr.mxu0 0.0
        %1992 = vmatpush1.msra.mxu0 0.0
        %1993 = vmatprep.subr.mxu0 0.0
        %1994 = vmatpush1.msra.mxu0 0.0
        %1995 = vmatprep.subr.mxu0 0.0
        %1996 = vmatpush1.msra.mxu0 0.0
        %1997 = vmatprep.subr.mxu0 0.0
        %1998 = vmatpush1.msra.mxu0 0.0
        %1999 = vmatprep.subr.mxu0 0.0
        %2000 = vmatpush1.msra.mxu0 0.0
        %2001 = vmatprep.subr.mxu0 0.0
        %2002 = vmatpush1.msra.mxu0 0.0
        %2003 = vmatprep.subr.mxu0 0.0
        %2004 = vmatpush1.msra.mxu0 0.0
        %2005 = vmatprep.subr.mxu0 0.0
        %2006 = vmatpush1.msra.mxu0 0.0
        %2007 = vmatprep.subr.mxu0 0.0
        %2008 = vmatpush1.msra.mxu0 0.0
        %2009 = vmatprep.subr.mxu0 0.0
        %2010 = vmatpush1.msra.mxu0 0.0
        %2011 = vmatprep.subr.mxu0 0.0
        %2012 = vmatpush1.msra.mxu0 0.0
        %2013 = vmatprep.subr.mxu0 0.0
        %2014 = vmatpush1.msra.mxu0 0.0
        %2015 = vmatprep.subr.mxu0 0.0
        %2016 = vmatpush1.msra.mxu0 0.0
        %2017 = vmatprep.subr.mxu0 0.0
        %2018 = vmatpush1.msra.mxu0 0.0
        %2019 = vmatprep.subr.mxu0 0.0
        %2020 = vmatpush1.msra.mxu0 0.0
        %2021 = vmatprep.subr.mxu0 0.0
        %2022 = vmatpush1.msra.mxu0 0.0
        %2023 = vmatprep.subr.mxu0 0.0
        %2024 = vmatpush1.msra.mxu0 0.0
        %2025 = vmatprep.subr.mxu0 0.0
        %2026 = vmatpush1.msra.mxu0 0.0
        %2027 = vmatprep.subr.mxu0 0.0
        %2028 = vmatpush1.msra.mxu0 0.0
        %2029 = vmatprep.subr.mxu0 0.0
        %2030 = vmatpush1.msra.mxu0 0.0
        %2031 = vmatprep.subr.mxu0 0.0
        %2032 = vmatpush1.msra.mxu0 0.0
        %2033 = vmatprep.subr.mxu0 0.0
        %2034 = vmatpush1.msra.mxu0 0.0
        %2035 = vmatprep.subr.mxu0 0.0
        %2036 = vmatpush1.msra.mxu0 0.0
        %2037 = vmatprep.subr.mxu0 0.0
        %2038 = vmatpush1.msra.mxu0 0.0
        %2039 = vmatprep.mubr.f32.mxu0 0.0
        %2040 = vmatmul.mubr.f32.gmra.mrb[0].mxu0 %v1973
        %v2041 = vpop.f32.mrb[0].mxu0
        %v2042 = vadd.f32 0.0, %v2041
        %v2043 = vpop.f32.mrb[0].mxu0
        %2044 = vdwg.mxu0
        %2045 = vmatprep.subr.mxu0 0.0
        %2046 = vmatpush1.msra.mxu0 %v1256
        %2047 = vmatprep.subr.mxu0 0.0
        %2048 = vmatpush1.msra.mxu0 %v1257
        %2049 = vmatprep.subr.mxu0 0.0
        %2050 = vmatpush1.msra.mxu0 0.0
        %2051 = vmatprep.subr.mxu0 0.0
        %2052 = vmatpush1.msra.mxu0 0.0
        %2053 = vmatprep.subr.mxu0 0.0
        %2054 = vmatpush1.msra.mxu0 0.0
        %2055 = vmatprep.subr.mxu0 0.0
        %2056 = vmatpush1.msra.mxu0 0.0
        %2057 = vmatprep.subr.mxu0 0.0
        %2058 = vmatpush1.msra.mxu0 0.0
        %2059 = vmatprep.subr.mxu0 0.0
        %2060 = vmatpush1.msra.mxu0 0.0
        %2061 = vmatprep.subr.mxu0 0.0
        %2062 = vmatpush1.msra.mxu0 0.0
        %2063 = vmatprep.subr.mxu0 0.0
        %2064 = vmatpush1.msra.mxu0 0.0
        %2065 = vmatprep.subr.mxu0 0.0
        %2066 = vmatpush1.msra.mxu0 0.0
        %2067 = vmatprep.subr.mxu0 0.0
        %2068 = vmatpush1.msra.mxu0 0.0
        %2069 = vmatprep.subr.mxu0 0.0
        %2070 = vmatpush1.msra.mxu0 0.0
        %2071 = vmatprep.subr.mxu0 0.0
        %2072 = vmatpush1.msra.mxu0 0.0
        %2073 = vmatprep.subr.mxu0 0.0
        %2074 = vmatpush1.msra.mxu0 0.0
        %2075 = vmatprep.subr.mxu0 0.0
        %2076 = vmatpush1.msra.mxu0 0.0
        %2077 = vmatprep.subr.mxu0 0.0
        %2078 = vmatpush1.msra.mxu0 0.0
        %2079 = vmatprep.subr.mxu0 0.0
        %2080 = vmatpush1.msra.mxu0 0.0
        %2081 = vmatprep.subr.mxu0 0.0
        %2082 = vmatpush1.msra.mxu0 0.0
        %2083 = vmatprep.subr.mxu0 0.0
        %2084 = vmatpush1.msra.mxu0 0.0
        %2085 = vmatprep.subr.mxu0 0.0
        %2086 = vmatpush1.msra.mxu0 0.0
        %2087 = vmatprep.subr.mxu0 0.0
        %2088 = vmatpush1.msra.mxu0 0.0
        %2089 = vmatprep.subr.mxu0 0.0
        %2090 = vmatpush1.msra.mxu0 0.0
        %2091 = vmatprep.subr.mxu0 0.0
        %2092 = vmatpush1.msra.mxu0 0.0
        %2093 = vmatprep.subr.mxu0 0.0
        %2094 = vmatpush1.msra.mxu0 0.0
        %2095 = vmatprep.subr.mxu0 0.0
        %2096 = vmatpush1.msra.mxu0 0.0
        %2097 = vmatprep.subr.mxu0 0.0
        %2098 = vmatpush1.msra.mxu0 0.0
        %2099 = vmatprep.subr.mxu0 0.0
        %2100 = vmatpush1.msra.mxu0 0.0
        %2101 = vmatprep.subr.mxu0 0.0
        %2102 = vmatpush1.msra.mxu0 0.0
        %2103 = vmatprep.subr.mxu0 0.0
        %2104 = vmatpush1.msra.mxu0 0.0
        %2105 = vmatprep.subr.mxu0 0.0
        %2106 = vmatpush1.msra.mxu0 0.0
        %2107 = vmatprep.subr.mxu0 0.0
        %2108 = vmatpush1.msra.mxu0 0.0
        %2109 = vmatprep.mubr.f32.mxu0 0.0
        %2110 = vmatmul.mubr.f32.gmra.mrb[0].mxu0 %v1973
        %v2111 = vpop.f32.mrb[0].mxu0
        %v2112 = vadd.f32 0.0, %v2111
        %v2113 = vpop.f32.mrb[0].mxu0
        %2114 = vdwg.mxu0
        %2115 = vmatprep.subr.mxu0 0.0
        %2116 = vmatpush1.msra.mxu0 %v1258
        %2117 = vmatprep.subr.mxu0 0.0
        %2118 = vmatpush1.msra.mxu0 %v1259
        %2119 = vmatprep.subr.mxu0 0.0
        %2120 = vmatpush1.msra.mxu0 0.0
        %2121 = vmatprep.subr.mxu0 0.0
        %2122 = vmatpush1.msra.mxu0 0.0
        %2123 = vmatprep.subr.mxu0 0.0
        %2124 = vmatpush1.msra.mxu0 0.0
        %2125 = vmatprep.subr.mxu0 0.0
        %2126 = vmatpush1.msra.mxu0 0.0
        %2127 = vmatprep.subr.mxu0 0.0
        %2128 = vmatpush1.msra.mxu0 0.0
        %2129 = vmatprep.subr.mxu0 0.0
        %2130 = vmatpush1.msra.mxu0 0.0
        %2131 = vmatprep.subr.mxu0 0.0
        %2132 = vmatpush1.msra.mxu0 0.0
        %2133 = vmatprep.subr.mxu0 0.0
        %2134 = vmatpush1.msra.mxu0 0.0
        %2135 = vmatprep.subr.mxu0 0.0
        %2136 = vmatpush1.msra.mxu0 0.0
        %2137 = vmatprep.subr.mxu0 0.0
        %2138 = vmatpush1.msra.mxu0 0.0
        %2139 = vmatprep.subr.mxu0 0.0
        %2140 = vmatpush1.msra.mxu0 0.0
        %2141 = vmatprep.subr.mxu0 0.0
        %2142 = vmatpush1.msra.mxu0 0.0
        %2143 = vmatprep.subr.mxu0 0.0
        %2144 = vmatpush1.msra.mxu0 0.0
        %2145 = vmatprep.subr.mxu0 0.0
        %2146 = vmatpush1.msra.mxu0 0.0
        %2147 = vmatprep.subr.mxu0 0.0
        %2148 = vmatpush1.msra.mxu0 0.0
        %2149 = vmatprep.subr.mxu0 0.0
        %2150 = vmatpush1.msra.mxu0 0.0
        %2151 = vmatprep.subr.mxu0 0.0
        %2152 = vmatpush1.msra.mxu0 0.0
        %2153 = vmatprep.subr.mxu0 0.0
        %2154 = vmatpush1.msra.mxu0 0.0
        %2155 = vmatprep.subr.mxu0 0.0
        %2156 = vmatpush1.msra.mxu0 0.0
        %2157 = vmatprep.subr.mxu0 0.0
        %2158 = vmatpush1.msra.mxu0 0.0
        %2159 = vmatprep.subr.mxu0 0.0
        %2160 = vmatpush1.msra.mxu0 0.0
        %2161 = vmatprep.subr.mxu0 0.0
        %2162 = vmatpush1.msra.mxu0 0.0
        %2163 = vmatprep.subr.mxu0 0.0
        %2164 = vmatpush1.msra.mxu0 0.0
        %2165 = vmatprep.subr.mxu0 0.0
        %2166 = vmatpush1.msra.mxu0 0.0
        %2167 = vmatprep.subr.mxu0 0.0
        %2168 = vmatpush1.msra.mxu0 0.0
        %2169 = vmatprep.subr.mxu0 0.0
        %2170 = vmatpush1.msra.mxu0 0.0
        %2171 = vmatprep.subr.mxu0 0.0
        %2172 = vmatpush1.msra.mxu0 0.0
        %2173 = vmatprep.subr.mxu0 0.0
        %2174 = vmatpush1.msra.mxu0 0.0
        %2175 = vmatprep.subr.mxu0 0.0
        %2176 = vmatpush1.msra.mxu0 0.0
        %2177 = vmatprep.subr.mxu0 0.0
        %2178 = vmatpush1.msra.mxu0 0.0
        %2179 = vmatprep.mubr.f32.mxu0 0.0
        %2180 = vmatmul.mubr.f32.gmra.mrb[0].mxu0 %v1973
        %v2181 = vpop.f32.mrb[0].mxu0
        %v2182 = vadd.f32 %v1627, %v2181
        %v2183 = vpop.f32.mrb[0].mxu0
        %2184 = vdwg.mxu0
        %v2185 = vadd.f32 %v645, %v1829
        %v2186 = vand.u32 2147483647, %v2185
        %v2187 = vsub.f32 0.0, %v2186
        %v2188 = vmul.f32 %v2187, 1.442695
        %v2189 = vpow.pop %v2188
        %vm2190 = vcmp.ge.f32.partialorder %v2185, 0.0
        %v2191 = vadd.f32 %v2189, 1.0
        %v2192 = vrcp.pop %v2191
        %v2193 = vmul.f32 1.0, %v2192
        %v2194 = vmul.f32 %v2189, %v2192
        %v2195 = vsel %vm2190, %v2193, %v2194
        %v2196 = vadd.f32 %v759, %v1899
        %v2197 = vand.u32 2147483647, %v2196
        %v2198 = vsub.f32 0.0, %v2197
        %v2199 = vmul.f32 %v2198, 1.442695
        %v2200 = vpow.pop %v2199
        %vm2201 = vcmp.ge.f32.partialorder %v2196, 0.0
        %v2202 = vadd.f32 %v2200, 1.0
        %v2203 = vrcp.pop %v2202
        %v2204 = vmul.f32 1.0, %v2203
        %v2205 = vmul.f32 %v2200, %v2203
        %v2206 = vsel %vm2201, %v2204, %v2205
        %v2207 = vmul.f32 %v2195, %v1969
        %v2208 = vadd.f32 %v873, %v2207
        %v2209 = vtanh.pop %v2208
        %v2210 = vsub.f32 1.0, %v2206
        %v2211 = vmul.f32 %v2210, %v2209
        %v2212 = vmul.f32 %v2206, %v1727
        %v2213 = vadd.f32 %v2211, %v2212
        %v2214 = vadd.f32 %v1728, %v2213
        %v2215 = vadd.f32 %v1012, %v2042
        %v2216 = vand.u32 2147483647, %v2215
        %v2217 = vsub.f32 0.0, %v2216
        %v2218 = vmul.f32 %v2217, 1.442695
        %v2219 = vpow.pop %v2218
        %vm2220 = vcmp.ge.f32.partialorder %v2215, 0.0
        %v2221 = vadd.f32 %v2219, 1.0
        %v2222 = vrcp.pop %v2221
        %v2223 = vmul.f32 1.0, %v2222
        %v2224 = vmul.f32 %v2219, %v2222
        %v2225 = vsel %vm2220, %v2223, %v2224
        %v2226 = vadd.f32 %v1126, %v2112
        %v2227 = vand.u32 2147483647, %v2226
        %v2228 = vsub.f32 0.0, %v2227
        %v2229 = vmul.f32 %v2228, 1.442695
        %v2230 = vpow.pop %v2229
        %vm2231 = vcmp.ge.f32.partialorder %v2226, 0.0
        %v2232 = vadd.f32 %v2230, 1.0
        %v2233 = vrcp.pop %v2232
        %v2234 = vmul.f32 1.0, %v2233
        %v2235 = vmul.f32 %v2230, %v2233
        %v2236 = vsel %vm2231, %v2234, %v2235
        %v2237 = vmul.f32 %v2225, %v2182
        %v2238 = vadd.f32 %v1240, %v2237
        %v2239 = vtanh.pop %v2238
        %v2240 = vsub.f32 1.0, %v2236
        %v2241 = vmul.f32 %v2240, %v2239
        %v2242 = vmul.f32 %v2236, %v1757
        %v2243 = vadd.f32 %v2241, %v2242
        %v2244 = vadd.f32 %v1758, %v2243
        %v2246 = vsel %vm1263, %v2213, 0
        %2248 = vmatprep.subr.mxu0 0.0
        %2249 = vmatpush1.msra.mxu0 %v1248
        %2250 = vmatprep.subr.mxu0 0.0
        %2251 = vmatpush1.msra.mxu0 %v1249
        %2252 = vmatprep.subr.mxu0 0.0
        %2253 = vmatpush1.msra.mxu0 0.0
        %2254 = vmatprep.subr.mxu0 0.0
        %2255 = vmatpush1.msra.mxu0 0.0
        %2256 = vmatprep.subr.mxu0 0.0
        %2257 = vmatpush1.msra.mxu0 0.0
        %2258 = vmatprep.subr.mxu0 0.0
        %2259 = vmatpush1.msra.mxu0 0.0
        %2260 = vmatprep.subr.mxu0 0.0
        %2261 = vmatpush1.msra.mxu0 0.0
        %2262 = vmatprep.subr.mxu0 0.0
        %2263 = vmatpush1.msra.mxu0 0.0
        %2264 = vmatprep.subr.mxu0 0.0
        %2265 = vmatpush1.msra.mxu0 0.0
        %2266 = vmatprep.subr.mxu0 0.0
        %2267 = vmatpush1.msra.mxu0 0.0
        %2268 = vmatprep.subr.mxu0 0.0
        %2269 = vmatpush1.msra.mxu0 0.0
        %2270 = vmatprep.subr.mxu0 0.0
        %2271 = vmatpush1.msra.mxu0 0.0
        %2272 = vmatprep.subr.mxu0 0.0
        %2273 = vmatpush1.msra.mxu0 0.0
        %2274 = vmatprep.subr.mxu0 0.0
        %2275 = vmatpush1.msra.mxu0 0.0
        %2276 = vmatprep.subr.mxu0 0.0
        %2277 = vmatpush1.msra.mxu0 0.0
        %2278 = vmatprep.subr.mxu0 0.0
        %2279 = vmatpush1.msra.mxu0 0.0
        %2280 = vmatprep.subr.mxu0 0.0
        %2281 = vmatpush1.msra.mxu0 0.0
        %2282 = vmatprep.subr.mxu0 0.0
        %2283 = vmatpush1.msra.mxu0 0.0
        %2284 = vmatprep.subr.mxu0 0.0
        %2285 = vmatpush1.msra.mxu0 0.0
        %2286 = vmatprep.subr.mxu0 0.0
        %2287 = vmatpush1.msra.mxu0 0.0
        %2288 = vmatprep.subr.mxu0 0.0
        %2289 = vmatpush1.msra.mxu0 0.0
        %2290 = vmatprep.subr.mxu0 0.0
        %2291 = vmatpush1.msra.mxu0 0.0
        %2292 = vmatprep.subr.mxu0 0.0
        %2293 = vmatpush1.msra.mxu0 0.0
        %2294 = vmatprep.subr.mxu0 0.0
        %2295 = vmatpush1.msra.mxu0 0.0
        %2296 = vmatprep.subr.mxu0 0.0
        %2297 = vmatpush1.msra.mxu0 0.0
        %2298 = vmatprep.subr.mxu0 0.0
        %2299 = vmatpush1.msra.mxu0 0.0
        %2300 = vmatprep.subr.mxu0 0.0
        %2301 = vmatpush1.msra.mxu0 0.0
        %2302 = vmatprep.subr.mxu0 0.0
        %2303 = vmatpush1.msra.mxu0 0.0
        %2304 = vmatprep.subr.mxu0 0.0
        %2305 = vmatpush1.msra.mxu0 0.0
        %2306 = vmatprep.subr.mxu0 0.0
        %2307 = vmatpush1.msra.mxu0 0.0
        %2308 = vmatprep.subr.mxu0 0.0
        %2309 = vmatpush1.msra.mxu0 0.0
        %2310 = vmatprep.subr.mxu0 0.0
        %2311 = vmatpush1.msra.mxu0 0.0
        %2312 = vmatprep.mubr.f32.mxu0 0.0
        %2313 = vmatmul.mubr.f32.gmra.mrb[0].mxu0 %v2246
        %v2314 = vpop.f32.mrb[0].mxu0
        %v2315 = vadd.f32 0.0, %v2314
        %v2316 = vpop.f32.mrb[0].mxu0
        %2317 = vdwg.mxu0
        %2318 = vmatprep.subr.mxu0 0.0
        %2319 = vmatpush1.msra.mxu0 %v1250
        %2320 = vmatprep.subr.mxu0 0.0
        %2321 = vmatpush1.msra.mxu0 %v1251
        %2322 = vmatprep.subr.mxu0 0.0
        %2323 = vmatpush1.msra.mxu0 0.0
        %2324 = vmatprep.subr.mxu0 0.0
        %2325 = vmatpush1.msra.mxu0 0.0
        %2326 = vmatprep.subr.mxu0 0.0
        %2327 = vmatpush1.msra.mxu0 0.0
        %2328 = vmatprep.subr.mxu0 0.0
        %2329 = vmatpush1.msra.mxu0 0.0
        %2330 = vmatprep.subr.mxu0 0.0
        %2331 = vmatpush1.msra.mxu0 0.0
        %2332 = vmatprep.subr.mxu0 0.0
        %2333 = vmatpush1.msra.mxu0 0.0
        %2334 = vmatprep.subr.mxu0 0.0
        %2335 = vmatpush1.msra.mxu0 0.0
        %2336 = vmatprep.subr.mxu0 0.0
        %2337 = vmatpush1.msra.mxu0 0.0
        %2338 = vmatprep.subr.mxu0 0.0
        %2339 = vmatpush1.msra.mxu0 0.0
        %2340 = vmatprep.subr.mxu0 0.0
        %2341 = vmatpush1.msra.mxu0 0.0
        %2342 = vmatprep.subr.mxu0 0.0
        %2343 = vmatpush1.msra.mxu0 0.0
        %2344 = vmatprep.subr.mxu0 0.0
        %2345 = vmatpush1.msra.mxu0 0.0
        %2346 = vmatprep.subr.mxu0 0.0
        %2347 = vmatpush1.msra.mxu0 0.0
        %2348 = vmatprep.subr.mxu0 0.0
        %2349 = vmatpush1.msra.mxu0 0.0
        %2350 = vmatprep.subr.mxu0 0.0
        %2351 = vmatpush1.msra.mxu0 0.0
        %2352 = vmatprep.subr.mxu0 0.0
        %2353 = vmatpush1.msra.mxu0 0.0
        %2354 = vmatprep.subr.mxu0 0.0
        %2355 = vmatpush1.msra.mxu0 0.0
        %2356 = vmatprep.subr.mxu0 0.0
        %2357 = vmatpush1.msra.mxu0 0.0
        %2358 = vmatprep.subr.mxu0 0.0
        %2359 = vmatpush1.msra.mxu0 0.0
        %2360 = vmatprep.subr.mxu0 0.0
        %2361 = vmatpush1.msra.mxu0 0.0
        %2362 = vmatprep.subr.mxu0 0.0
        %2363 = vmatpush1.msra.mxu0 0.0
        %2364 = vmatprep.subr.mxu0 0.0
        %2365 = vmatpush1.msra.mxu0 0.0
        %2366 = vmatprep.subr.mxu0 0.0
        %2367 = vmatpush1.msra.mxu0 0.0
        %2368 = vmatprep.subr.mxu0 0.0
        %2369 = vmatpush1.msra.mxu0 0.0
        %2370 = vmatprep.subr.mxu0 0.0
        %2371 = vmatpush1.msra.mxu0 0.0
        %2372 = vmatprep.subr.mxu0 0.0
        %2373 = vmatpush1.msra.mxu0 0.0
        %2374 = vmatprep.subr.mxu0 0.0
        %2375 = vmatpush1.msra.mxu0 0.0
        %2376 = vmatprep.subr.mxu0 0.0
        %2377 = vmatpush1.msra.mxu0 0.0
        %2378 = vmatprep.subr.mxu0 0.0
        %2379 = vmatpush1.msra.mxu0 0.0
        %2380 = vmatprep.subr.mxu0 0.0
        %2381 = vmatpush1.msra.mxu0 0.0
        %2382 = vmatprep.mubr.f32.mxu0 0.0
        %2383 = vmatmul.mubr.f32.gmra.mrb[0].mxu0 %v2246
        %v2384 = vpop.f32.mrb[0].mxu0
        %v2385 = vadd.f32 0.0, %v2384
        %v2386 = vpop.f32.mrb[0].mxu0
        %2387 = vdwg.mxu0
        %2388 = vmatprep.subr.mxu0 0.0
        %2389 = vmatpush1.msra.mxu0 %v1252
        %2390 = vmatprep.subr.mxu0 0.0
        %2391 = vmatpush1.msra.mxu0 %v1253
        %2392 = vmatprep.subr.mxu0 0.0
        %2393 = vmatpush1.msra.mxu0 0.0
        %2394 = vmatprep.subr.mxu0 0.0
        %2395 = vmatpush1.msra.mxu0 0.0
        %2396 = vmatprep.subr.mxu0 0.0
        %2397 = vmatpush1.msra.mxu0 0.0
        %2398 = vmatprep.subr.mxu0 0.0
        %2399 = vmatpush1.msra.mxu0 0.0
        %2400 = vmatprep.subr.mxu0 0.0
        %2401 = vmatpush1.msra.mxu0 0.0
        %2402 = vmatprep.subr.mxu0 0.0
        %2403 = vmatpush1.msra.mxu0 0.0
        %2404 = vmatprep.subr.mxu0 0.0
        %2405 = vmatpush1.msra.mxu0 0.0
        %2406 = vmatprep.subr.mxu0 0.0
        %2407 = vmatpush1.msra.mxu0 0.0
        %2408 = vmatprep.subr.mxu0 0.0
        %2409 = vmatpush1.msra.mxu0 0.0
        %2410 = vmatprep.subr.mxu0 0.0
        %2411 = vmatpush1.msra.mxu0 0.0
        %2412 = vmatprep.subr.mxu0 0.0
        %2413 = vmatpush1.msra.mxu0 0.0
        %2414 = vmatprep.subr.mxu0 0.0
        %2415 = vmatpush1.msra.mxu0 0.0
        %2416 = vmatprep.subr.mxu0 0.0
        %2417 = vmatpush1.msra.mxu0 0.0
        %2418 = vmatprep.subr.mxu0 0.0
        %2419 = vmatpush1.msra.mxu0 0.0
        %2420 = vmatprep.subr.mxu0 0.0
        %2421 = vmatpush1.msra.mxu0 0.0
        %2422 = vmatprep.subr.mxu0 0.0
        %2423 = vmatpush1.msra.mxu0 0.0
        %2424 = vmatprep.subr.mxu0 0.0
        %2425 = vmatpush1.msra.mxu0 0.0
        %2426 = vmatprep.subr.mxu0 0.0
        %2427 = vmatpush1.msra.mxu0 0.0
        %2428 = vmatprep.subr.mxu0 0.0
        %2429 = vmatpush1.msra.mxu0 0.0
        %2430 = vmatprep.subr.mxu0 0.0
        %2431 = vmatpush1.msra.mxu0 0.0
        %2432 = vmatprep.subr.mxu0 0.0
        %2433 = vmatpush1.msra.mxu0 0.0
        %2434 = vmatprep.subr.mxu0 0.0
        %2435 = vmatpush1.msra.mxu0 0.0
        %2436 = vmatprep.subr.mxu0 0.0
        %2437 = vmatpush1.msra.mxu0 0.0
        %2438 = vmatprep.subr.mxu0 0.0
        %2439 = vmatpush1.msra.mxu0 0.0
        %2440 = vmatprep.subr.mxu0 0.0
        %2441 = vmatpush1.msra.mxu0 0.0
        %2442 = vmatprep.subr.mxu0 0.0
        %2443 = vmatpush1.msra.mxu0 0.0
        %2444 = vmatprep.subr.mxu0 0.0
        %2445 = vmatpush1.msra.mxu0 0.0
        %2446 = vmatprep.subr.mxu0 0.0
        %2447 = vmatpush1.msra.mxu0 0.0
        %2448 = vmatprep.subr.mxu0 0.0
        %2449 = vmatpush1.msra.mxu0 0.0
        %2450 = vmatprep.subr.mxu0 0.0
        %2451 = vmatpush1.msra.mxu0 0.0
        %2452 = vmatprep.mubr.f32.mxu0 0.0
        %2453 = vmatmul.mubr.f32.gmra.mrb[0].mxu0 %v2246
        %v2454 = vpop.f32.mrb[0].mxu0
        %v2455 = vadd.f32 %v1411, %v2454
        %v2456 = vpop.f32.mrb[0].mxu0
        %2457 = vdwg.mxu0
        %v2459 = vsel %vm1263, %v2243, 0
        %2461 = vmatprep.subr.mxu0 0.0
        %2462 = vmatpush1.msra.mxu0 %v1254
        %2463 = vmatprep.subr.mxu0 0.0
        %2464 = vmatpush1.msra.mxu0 %v1255
        %2465 = vmatprep.subr.mxu0 0.0
        %2466 = vmatpush1.msra.mxu0 0.0
        %2467 = vmatprep.subr.mxu0 0.0
        %2468 = vmatpush1.msra.mxu0 0.0
        %2469 = vmatprep.subr.mxu0 0.0
        %2470 = vmatpush1.msra.mxu0 0.0
        %2471 = vmatprep.subr.mxu0 0.0
        %2472 = vmatpush1.msra.mxu0 0.0
        %2473 = vmatprep.subr.mxu0 0.0
        %2474 = vmatpush1.msra.mxu0 0.0
        %2475 = vmatprep.subr.mxu0 0.0
        %2476 = vmatpush1.msra.mxu0 0.0
        %2477 = vmatprep.subr.mxu0 0.0
        %2478 = vmatpush1.msra.mxu0 0.0
        %2479 = vmatprep.subr.mxu0 0.0
        %2480 = vmatpush1.msra.mxu0 0.0
        %2481 = vmatprep.subr.mxu0 0.0
        %2482 = vmatpush1.msra.mxu0 0.0
        %2483 = vmatprep.subr.mxu0 0.0
        %2484 = vmatpush1.msra.mxu0 0.0
        %2485 = vmatprep.subr.mxu0 0.0
        %2486 = vmatpush1.msra.mxu0 0.0
        %2487 = vmatprep.subr.mxu0 0.0
        %2488 = vmatpush1.msra.mxu0 0.0
        %2489 = vmatprep.subr.mxu0 0.0
        %2490 = vmatpush1.msra.mxu0 0.0
        %2491 = vmatprep.subr.mxu0 0.0
        %2492 = vmatpush1.msra.mxu0 0.0
        %2493 = vmatprep.subr.mxu0 0.0
        %2494 = vmatpush1.msra.mxu0 0.0
        %2495 = vmatprep.subr.mxu0 0.0
        %2496 = vmatpush1.msra.mxu0 0.0
        %2497 = vmatprep.subr.mxu0 0.0
        %2498 = vmatpush1.msra.mxu0 0.0
        %2499 = vmatprep.subr.mxu0 0.0
        %2500 = vmatpush1.msra.mxu0 0.0
        %2501 = vmatprep.subr.mxu0 0.0
        %2502 = vmatpush1.msra.mxu0 0.0
        %2503 = vmatprep.subr.mxu0 0.0
        %2504 = vmatpush1.msra.mxu0 0.0
        %2505 = vmatprep.subr.mxu0 0.0
        %2506 = vmatpush1.msra.mxu0 0.0
        %2507 = vmatprep.subr.mxu0 0.0
        %2508 = vmatpush1.msra.mxu0 0.0
        %2509 = vmatprep.subr.mxu0 0.0
        %2510 = vmatpush1.msra.mxu0 0.0
        %2511 = vmatprep.subr.mxu0 0.0
        %2512 = vmatpush1.msra.mxu0 0.0
        %2513 = vmatprep.subr.mxu0 0.0
        %2514 = vmatpush1.msra.mxu0 0.0
        %2515 = vmatprep.subr.mxu0 0.0
        %2516 = vmatpush1.msra.mxu0 0.0
        %2517 = vmatprep.subr.mxu0 0.0
        %2518 = vmatpush1.msra.mxu0 0.0
        %2519 = vmatprep.subr.mxu0 0.0
        %2520 = vmatpush1.msra.mxu0 0.0
        %2521 = vmatprep.subr.mxu0 0.0
        %2522 = vmatpush1.msra.mxu0 0.0
        %2523 = vmatprep.subr.mxu0 0.0
        %2524 = vmatpush1.msra.mxu0 0.0
        %2525 = vmatprep.mubr.f32.mxu0 0.0
        %2526 = vmatmul.mubr.f32.gmra.mrb[0].mxu0 %v2459
        %v2527 = vpop.f32.mrb[0].mxu0
        %v2528 = vadd.f32 0.0, %v2527
        %v2529 = vpop.f32.mrb[0].mxu0
        %2530 = vdwg.mxu0
        %2531 = vmatprep.subr.mxu0 0.0
        %2532 = vmatpush1.msra.mxu0 %v1256
        %2533 = vmatprep.subr.mxu0 0.0
        %2534 = vmatpush1.msra.mxu0 %v1257
        %2535 = vmatprep.subr.mxu0 0.0
        %2536 = vmatpush1.msra.mxu0 0.0
        %2537 = vmatprep.subr.mxu0 0.0
        %2538 = vmatpush1.msra.mxu0 0.0
        %2539 = vmatprep.subr.mxu0 0.0
        %2540 = vmatpush1.msra.mxu0 0.0
        %2541 = vmatprep.subr.mxu0 0.0
        %2542 = vmatpush1.msra.mxu0 0.0
        %2543 = vmatprep.subr.mxu0 0.0
        %2544 = vmatpush1.msra.mxu0 0.0
        %2545 = vmatprep.subr.mxu0 0.0
        %2546 = vmatpush1.msra.mxu0 0.0
        %2547 = vmatprep.subr.mxu0 0.0
        %2548 = vmatpush1.msra.mxu0 0.0
        %2549 = vmatprep.subr.mxu0 0.0
        %2550 = vmatpush1.msra.mxu0 0.0
        %2551 = vmatprep.subr.mxu0 0.0
        %2552 = vmatpush1.msra.mxu0 0.0
        %2553 = vmatprep.subr.mxu0 0.0
        %2554 = vmatpush1.msra.mxu0 0.0
        %2555 = vmatprep.subr.mxu0 0.0
        %2556 = vmatpush1.msra.mxu0 0.0
        %2557 = vmatprep.subr.mxu0 0.0
        %2558 = vmatpush1.msra.mxu0 0.0
        %2559 = vmatprep.subr.mxu0 0.0
        %2560 = vmatpush1.msra.mxu0 0.0
        %2561 = vmatprep.subr.mxu0 0.0
        %2562 = vmatpush1.msra.mxu0 0.0
        %2563 = vmatprep.subr.mxu0 0.0
        %2564 = vmatpush1.msra.mxu0 0.0
        %2565 = vmatprep.subr.mxu0 0.0
        %2566 = vmatpush1.msra.mxu0 0.0
        %2567 = vmatprep.subr.mxu0 0.0
        %2568 = vmatpush1.msra.mxu0 0.0
        %2569 = vmatprep.subr.mxu0 0.0
        %2570 = vmatpush1.msra.mxu0 0.0
        %2571 = vmatprep.subr.mxu0 0.0
        %2572 = vmatpush1.msra.mxu0 0.0
        %2573 = vmatprep.subr.mxu0 0.0
        %2574 = vmatpush1.msra.mxu0 0.0
        %2575 = vmatprep.subr.mxu0 0.0
        %2576 = vmatpush1.msra.mxu0 0.0
        %2577 = vmatprep.subr.mxu0 0.0
        %2578 = vmatpush1.msra.mxu0 0.0
        %2579 = vmatprep.subr.mxu0 0.0
        %2580 = vmatpush1.msra.mxu0 0.0
        %2581 = vmatprep.subr.mxu0 0.0
        %2582 = vmatpush1.msra.mxu0 0.0
        %2583 = vmatprep.subr.mxu0 0.0
        %2584 = vmatpush1.msra.mxu0 0.0
        %2585 = vmatprep.subr.mxu0 0.0
        %2586 = vmatpush1.msra.mxu0 0.0
        %2587 = vmatprep.subr.mxu0 0.0
        %2588 = vmatpush1.msra.mxu0 0.0
        %2589 = vmatprep.subr.mxu0 0.0
        %2590 = vmatpush1.msra.mxu0 0.0
        %2591 = vmatprep.subr.mxu0 0.0
        %2592 = vmatpush1.msra.mxu0 0.0
        %2593 = vmatprep.subr.mxu0 0.0
        %2594 = vmatpush1.msra.mxu0 0.0
        %2595 = vmatprep.mubr.f32.mxu0 0.0
        %2596 = vmatmul.mubr.f32.gmra.mrb[0].mxu0 %v2459
        %v2597 = vpop.f32.mrb[0].mxu0
        %v2598 = vadd.f32 0.0, %v2597
        %v2599 = vpop.f32.mrb[0].mxu0
        %2600 = vdwg.mxu0
        %2601 = vmatprep.subr.mxu0 0.0
        %2602 = vmatpush1.msra.mxu0 %v1258
        %2603 = vmatprep.subr.mxu0 0.0
        %2604 = vmatpush1.msra.mxu0 %v1259
        %2605 = vmatprep.subr.mxu0 0.0
        %2606 = vmatpush1.msra.mxu0 0.0
        %2607 = vmatprep.subr.mxu0 0.0
        %2608 = vmatpush1.msra.mxu0 0.0
        %2609 = vmatprep.subr.mxu0 0.0
        %2610 = vmatpush1.msra.mxu0 0.0
        %2611 = vmatprep.subr.mxu0 0.0
        %2612 = vmatpush1.msra.mxu0 0.0
        %2613 = vmatprep.subr.mxu0 0.0
        %2614 = vmatpush1.msra.mxu0 0.0
        %2615 = vmatprep.subr.mxu0 0.0
        %2616 = vmatpush1.msra.mxu0 0.0
        %2617 = vmatprep.subr.mxu0 0.0
        %2618 = vmatpush1.msra.mxu0 0.0
        %2619 = vmatprep.subr.mxu0 0.0
        %2620 = vmatpush1.msra.mxu0 0.0
        %2621 = vmatprep.subr.mxu0 0.0
        %2622 = vmatpush1.msra.mxu0 0.0
        %2623 = vmatprep.subr.mxu0 0.0
        %2624 = vmatpush1.msra.mxu0 0.0
        %2625 = vmatprep.subr.mxu0 0.0
        %2626 = vmatpush1.msra.mxu0 0.0
        %2627 = vmatprep.subr.mxu0 0.0
        %2628 = vmatpush1.msra.mxu0 0.0
        %2629 = vmatprep.subr.mxu0 0.0
        %2630 = vmatpush1.msra.mxu0 0.0
        %2631 = vmatprep.subr.mxu0 0.0
        %2632 = vmatpush1.msra.mxu0 0.0
        %2633 = vmatprep.subr.mxu0 0.0
        %2634 = vmatpush1.msra.mxu0 0.0
        %2635 = vmatprep.subr.mxu0 0.0
        %2636 = vmatpush1.msra.mxu0 0.0
        %2637 = vmatprep.subr.mxu0 0.0
        %2638 = vmatpush1.msra.mxu0 0.0
        %2639 = vmatprep.subr.mxu0 0.0
        %2640 = vmatpush1.msra.mxu0 0.0
        %2641 = vmatprep.subr.mxu0 0.0
        %2642 = vmatpush1.msra.mxu0 0.0
        %2643 = vmatprep.subr.mxu0 0.0
        %2644 = vmatpush1.msra.mxu0 0.0
        %2645 = vmatprep.subr.mxu0 0.0
        %2646 = vmatpush1.msra.mxu0 0.0
        %2647 = vmatprep.subr.mxu0 0.0
        %2648 = vmatpush1.msra.mxu0 0.0
        %2649 = vmatprep.subr.mxu0 0.0
        %2650 = vmatpush1.msra.mxu0 0.0
        %2651 = vmatprep.subr.mxu0 0.0
        %2652 = vmatpush1.msra.mxu0 0.0
        %2653 = vmatprep.subr.mxu0 0.0
        %2654 = vmatpush1.msra.mxu0 0.0
        %2655 = vmatprep.subr.mxu0 0.0
        %2656 = vmatpush1.msra.mxu0 0.0
        %2657 = vmatprep.subr.mxu0 0.0
        %2658 = vmatpush1.msra.mxu0 0.0
        %2659 = vmatprep.subr.mxu0 0.0
        %2660 = vmatpush1.msra.mxu0 0.0
        %2661 = vmatprep.subr.mxu0 0.0
        %2662 = vmatpush1.msra.mxu0 0.0
        %2663 = vmatprep.subr.mxu0 0.0
        %2664 = vmatpush1.msra.mxu0 0.0
        %2665 = vmatprep.mubr.f32.mxu0 0.0
        %2666 = vmatmul.mubr.f32.gmra.mrb[0].mxu0 %v2459
        %v2667 = vpop.f32.mrb[0].mxu0
        %v2668 = vadd.f32 %v1627, %v2667
        %v2669 = vpop.f32.mrb[0].mxu0
        %2670 = vdwg.mxu0
        %v2671 = vadd.f32 %v650, %v2315
        %v2672 = vand.u32 2147483647, %v2671
        %v2673 = vsub.f32 0.0, %v2672
        %v2674 = vmul.f32 %v2673, 1.442695
        %v2675 = vpow.pop %v2674
        %vm2676 = vcmp.ge.f32.partialorder %v2671, 0.0
        %v2677 = vadd.f32 %v2675, 1.0
        %v2678 = vrcp.pop %v2677
        %v2679 = vmul.f32 1.0, %v2678
        %v2680 = vmul.f32 %v2675, %v2678
        %v2681 = vsel %vm2676, %v2679, %v2680
        %v2682 = vadd.f32 %v764, %v2385
        %v2683 = vand.u32 2147483647, %v2682
        %v2684 = vsub.f32 0.0, %v2683
        %v2685 = vmul.f32 %v2684, 1.442695
        %v2686 = vpow.pop %v2685
        %vm2687 = vcmp.ge.f32.partialorder %v2682, 0.0
        %v2688 = vadd.f32 %v2686, 1.0
        %v2689 = vrcp.pop %v2688
        %v2690 = vmul.f32 1.0, %v2689
        %v2691 = vmul.f32 %v2686, %v2689
        %v2692 = vsel %vm2687, %v2690, %v2691
        %v2693 = vmul.f32 %v2681, %v2455
        %v2694 = vadd.f32 %v878, %v2693
        %v2695 = vtanh.pop %v2694
        %v2696 = vsub.f32 1.0, %v2692
        %v2697 = vmul.f32 %v2696, %v2695
        %v2698 = vmul.f32 %v2692, %v2213
        %v2699 = vadd.f32 %v2697, %v2698
        %v2700 = vadd.f32 %v2214, %v2699
        %v2701 = vadd.f32 %v1007, %v2528
        %v2702 = vand.u32 2147483647, %v2701
        %v2703 = vsub.f32 0.0, %v2702
        %v2704 = vmul.f32 %v2703, 1.442695
        %v2705 = vpow.pop %v2704
        %vm2706 = vcmp.ge.f32.partialorder %v2701, 0.0
        %v2707 = vadd.f32 %v2705, 1.0
        %v2708 = vrcp.pop %v2707
        %v2709 = vmul.f32 1.0, %v2708
        %v2710 = vmul.f32 %v2705, %v2708
        %v2711 = vsel %vm2706, %v2709, %v2710
        %v2712 = vadd.f32 %v1121, %v2598
        %v2713 = vand.u32 2147483647, %v2712
        %v2714 = vsub.f32 0.0, %v2713
        %v2715 = vmul.f32 %v2714, 1.442695
        %v2716 = vpow.pop %v2715
        %vm2717 = vcmp.ge.f32.partialorder %v2712, 0.0
        %v2718 = vadd.f32 %v2716, 1.0
        %v2719 = vrcp.pop %v2718
        %v2720 = vmul.f32 1.0, %v2719
        %v2721 = vmul.f32 %v2716, %v2719
        %v2722 = vsel %vm2717, %v2720, %v2721
        %v2723 = vmul.f32 %v2711, %v2668
        %v2724 = vadd.f32 %v1235, %v2723
        %v2725 = vtanh.pop %v2724
        %v2726 = vsub.f32 1.0, %v2722
        %v2727 = vmul.f32 %v2726, %v2725
        %v2728 = vmul.f32 %v2722, %v2243
        %v2729 = vadd.f32 %v2727, %v2728
        %v2730 = vadd.f32 %v2244, %v2729
        %v2732 = vsel %vm1263, %v2699, 0
        %2734 = vmatprep.subr.mxu0 0.0
        %2735 = vmatpush1.msra.mxu0 %v1248
        %2736 = vmatprep.subr.mxu0 0.0
        %2737 = vmatpush1.msra.mxu0 %v1249
        %2738 = vmatprep.subr.mxu0 0.0
        %2739 = vmatpush1.msra.mxu0 0.0
        %2740 = vmatprep.subr.mxu0 0.0
        %2741 = vmatpush1.msra.mxu0 0.0
        %2742 = vmatprep.subr.mxu0 0.0
        %2743 = vmatpush1.msra.mxu0 0.0
        %2744 = vmatprep.subr.mxu0 0.0
        %2745 = vmatpush1.msra.mxu0 0.0
        %2746 = vmatprep.subr.mxu0 0.0
        %2747 = vmatpush1.msra.mxu0 0.0
        %2748 = vmatprep.subr.mxu0 0.0
        %2749 = vmatpush1.msra.mxu0 0.0
        %2750 = vmatprep.subr.mxu0 0.0
        %2751 = vmatpush1.msra.mxu0 0.0
        %2752 = vmatprep.subr.mxu0 0.0
        %2753 = vmatpush1.msra.mxu0 0.0
        %2754 = vmatprep.subr.mxu0 0.0
        %2755 = vmatpush1.msra.mxu0 0.0
        %2756 = vmatprep.subr.mxu0 0.0
        %2757 = vmatpush1.msra.mxu0 0.0
        %2758 = vmatprep.subr.mxu0 0.0
        %2759 = vmatpush1.msra.mxu0 0.0
        %2760 = vmatprep.subr.mxu0 0.0
        %2761 = vmatpush1.msra.mxu0 0.0
        %2762 = vmatprep.subr.mxu0 0.0
        %2763 = vmatpush1.msra.mxu0 0.0
        %2764 = vmatprep.subr.mxu0 0.0
        %2765 = vmatpush1.msra.mxu0 0.0
        %2766 = vmatprep.subr.mxu0 0.0
        %2767 = vmatpush1.msra.mxu0 0.0
        %2768 = vmatprep.subr.mxu0 0.0
        %2769 = vmatpush1.msra.mxu0 0.0
        %2770 = vmatprep.subr.mxu0 0.0
        %2771 = vmatpush1.msra.mxu0 0.0
        %2772 = vmatprep.subr.mxu0 0.0
        %2773 = vmatpush1.msra.mxu0 0.0
        %2774 = vmatprep.subr.mxu0 0.0
        %2775 = vmatpush1.msra.mxu0 0.0
        %2776 = vmatprep.subr.mxu0 0.0
        %2777 = vmatpush1.msra.mxu0 0.0
        %2778 = vmatprep.subr.mxu0 0.0
        %2779 = vmatpush1.msra.mxu0 0.0
        %2780 = vmatprep.subr.mxu0 0.0
        %2781 = vmatpush1.msra.mxu0 0.0
        %2782 = vmatprep.subr.mxu0 0.0
        %2783 = vmatpush1.msra.mxu0 0.0
        %2784 = vmatprep.subr.mxu0 0.0
        %2785 = vmatpush1.msra.mxu0 0.0
        %2786 = vmatprep.subr.mxu0 0.0
        %2787 = vmatpush1.msra.mxu0 0.0
        %2788 = vmatprep.subr.mxu0 0.0
        %2789 = vmatpush1.msra.mxu0 0.0
        %2790 = vmatprep.subr.mxu0 0.0
        %2791 = vmatpush1.msra.mxu0 0.0
        %2792 = vmatprep.subr.mxu0 0.0
        %2793 = vmatpush1.msra.mxu0 0.0
        %2794 = vmatprep.subr.mxu0 0.0
        %2795 = vmatpush1.msra.mxu0 0.0
        %2796 = vmatprep.subr.mxu0 0.0
        %2797 = vmatpush1.msra.mxu0 0.0
        %2798 = vmatprep.mubr.f32.mxu0 0.0
        %2799 = vmatmul.mubr.f32.gmra.mrb[0].mxu0 %v2732
        %v2800 = vpop.f32.mrb[0].mxu0
        %v2801 = vadd.f32 0.0, %v2800
        %v2802 = vpop.f32.mrb[0].mxu0
        %2803 = vdwg.mxu0
        %2804 = vmatprep.subr.mxu0 0.0
        %2805 = vmatpush1.msra.mxu0 %v1250
        %2806 = vmatprep.subr.mxu0 0.0
        %2807 = vmatpush1.msra.mxu0 %v1251
        %2808 = vmatprep.subr.mxu0 0.0
        %2809 = vmatpush1.msra.mxu0 0.0
        %2810 = vmatprep.subr.mxu0 0.0
        %2811 = vmatpush1.msra.mxu0 0.0
        %2812 = vmatprep.subr.mxu0 0.0
        %2813 = vmatpush1.msra.mxu0 0.0
        %2814 = vmatprep.subr.mxu0 0.0
        %2815 = vmatpush1.msra.mxu0 0.0
        %2816 = vmatprep.subr.mxu0 0.0
        %2817 = vmatpush1.msra.mxu0 0.0
        %2818 = vmatprep.subr.mxu0 0.0
        %2819 = vmatpush1.msra.mxu0 0.0
        %2820 = vmatprep.subr.mxu0 0.0
        %2821 = vmatpush1.msra.mxu0 0.0
        %2822 = vmatprep.subr.mxu0 0.0
        %2823 = vmatpush1.msra.mxu0 0.0
        %2824 = vmatprep.subr.mxu0 0.0
        %2825 = vmatpush1.msra.mxu0 0.0
        %2826 = vmatprep.subr.mxu0 0.0
        %2827 = vmatpush1.msra.mxu0 0.0
        %2828 = vmatprep.subr.mxu0 0.0
        %2829 = vmatpush1.msra.mxu0 0.0
        %2830 = vmatprep.subr.mxu0 0.0
        %2831 = vmatpush1.msra.mxu0 0.0
        %2832 = vmatprep.subr.mxu0 0.0
        %2833 = vmatpush1.msra.mxu0 0.0
        %2834 = vmatprep.subr.mxu0 0.0
        %2835 = vmatpush1.msra.mxu0 0.0
        %2836 = vmatprep.subr.mxu0 0.0
        %2837 = vmatpush1.msra.mxu0 0.0
        %2838 = vmatprep.subr.mxu0 0.0
        %2839 = vmatpush1.msra.mxu0 0.0
        %2840 = vmatprep.subr.mxu0 0.0
        %2841 = vmatpush1.msra.mxu0 0.0
        %2842 = vmatprep.subr.mxu0 0.0
        %2843 = vmatpush1.msra.mxu0 0.0
        %2844 = vmatprep.subr.mxu0 0.0
        %2845 = vmatpush1.msra.mxu0 0.0
        %2846 = vmatprep.subr.mxu0 0.0
        %2847 = vmatpush1.msra.mxu0 0.0
        %2848 = vmatprep.subr.mxu0 0.0
        %2849 = vmatpush1.msra.mxu0 0.0
        %2850 = vmatprep.subr.mxu0 0.0
        %2851 = vmatpush1.msra.mxu0 0.0
        %2852 = vmatprep.subr.mxu0 0.0
        %2853 = vmatpush1.msra.mxu0 0.0
        %2854 = vmatprep.subr.mxu0 0.0
        %2855 = vmatpush1.msra.mxu0 0.0
        %2856 = vmatprep.subr.mxu0 0.0
        %2857 = vmatpush1.msra.mxu0 0.0
        %2858 = vmatprep.subr.mxu0 0.0
        %2859 = vmatpush1.msra.mxu0 0.0
        %2860 = vmatprep.subr.mxu0 0.0
        %2861 = vmatpush1.msra.mxu0 0.0
        %2862 = vmatprep.subr.mxu0 0.0
        %2863 = vmatpush1.msra.mxu0 0.0
        %2864 = vmatprep.subr.mxu0 0.0
        %2865 = vmatpush1.msra.mxu0 0.0
        %2866 = vmatprep.subr.mxu0 0.0
        %2867 = vmatpush1.msra.mxu0 0.0
        %2868 = vmatprep.mubr.f32.mxu0 0.0
        %2869 = vmatmul.mubr.f32.gmra.mrb[0].mxu0 %v2732
        %v2870 = vpop.f32.mrb[0].mxu0
        %v2871 = vadd.f32 0.0, %v2870
        %v2872 = vpop.f32.mrb[0].mxu0
        %2873 = vdwg.mxu0
        %2874 = vmatprep.subr.mxu0 0.0
        %2875 = vmatpush1.msra.mxu0 %v1252
        %2876 = vmatprep.subr.mxu0 0.0
        %2877 = vmatpush1.msra.mxu0 %v1253
        %2878 = vmatprep.subr.mxu0 0.0
        %2879 = vmatpush1.msra.mxu0 0.0
        %2880 = vmatprep.subr.mxu0 0.0
        %2881 = vmatpush1.msra.mxu0 0.0
        %2882 = vmatprep.subr.mxu0 0.0
        %2883 = vmatpush1.msra.mxu0 0.0
        %2884 = vmatprep.subr.mxu0 0.0
        %2885 = vmatpush1.msra.mxu0 0.0
        %2886 = vmatprep.subr.mxu0 0.0
        %2887 = vmatpush1.msra.mxu0 0.0
        %2888 = vmatprep.subr.mxu0 0.0
        %2889 = vmatpush1.msra.mxu0 0.0
        %2890 = vmatprep.subr.mxu0 0.0
        %2891 = vmatpush1.msra.mxu0 0.0
        %2892 = vmatprep.subr.mxu0 0.0
        %2893 = vmatpush1.msra.mxu0 0.0
        %2894 = vmatprep.subr.mxu0 0.0
        %2895 = vmatpush1.msra.mxu0 0.0
        %2896 = vmatprep.subr.mxu0 0.0
        %2897 = vmatpush1.msra.mxu0 0.0
        %2898 = vmatprep.subr.mxu0 0.0
        %2899 = vmatpush1.msra.mxu0 0.0
        %2900 = vmatprep.subr.mxu0 0.0
        %2901 = vmatpush1.msra.mxu0 0.0
        %2902 = vmatprep.subr.mxu0 0.0
        %2903 = vmatpush1.msra.mxu0 0.0
        %2904 = vmatprep.subr.mxu0 0.0
        %2905 = vmatpush1.msra.mxu0 0.0
        %2906 = vmatprep.subr.mxu0 0.0
        %2907 = vmatpush1.msra.mxu0 0.0
        %2908 = vmatprep.subr.mxu0 0.0
        %2909 = vmatpush1.msra.mxu0 0.0
        %2910 = vmatprep.subr.mxu0 0.0
        %2911 = vmatpush1.msra.mxu0 0.0
        %2912 = vmatprep.subr.mxu0 0.0
        %2913 = vmatpush1.msra.mxu0 0.0
        %2914 = vmatprep.subr.mxu0 0.0
        %2915 = vmatpush1.msra.mxu0 0.0
        %2916 = vmatprep.subr.mxu0 0.0
        %2917 = vmatpush1.msra.mxu0 0.0
        %2918 = vmatprep.subr.mxu0 0.0
        %2919 = vmatpush1.msra.mxu0 0.0
        %2920 = vmatprep.subr.mxu0 0.0
        %2921 = vmatpush1.msra.mxu0 0.0
        %2922 = vmatprep.subr.mxu0 0.0
        %2923 = vmatpush1.msra.mxu0 0.0
        %2924 = vmatprep.subr.mxu0 0.0
        %2925 = vmatpush1.msra.mxu0 0.0
        %2926 = vmatprep.subr.mxu0 0.0
        %2927 = vmatpush1.msra.mxu0 0.0
        %2928 = vmatprep.subr.mxu0 0.0
        %2929 = vmatpush1.msra.mxu0 0.0
        %2930 = vmatprep.subr.mxu0 0.0
        %2931 = vmatpush1.msra.mxu0 0.0
        %2932 = vmatprep.subr.mxu0 0.0
        %2933 = vmatpush1.msra.mxu0 0.0
        %2934 = vmatprep.subr.mxu0 0.0
        %2935 = vmatpush1.msra.mxu0 0.0
        %2936 = vmatprep.subr.mxu0 0.0
        %2937 = vmatpush1.msra.mxu0 0.0
        %2938 = vmatprep.mubr.f32.mxu0 0.0
        %2939 = vmatmul.mubr.f32.gmra.mrb[0].mxu0 %v2732
        %v2940 = vpop.f32.mrb[0].mxu0
        %v2941 = vadd.f32 %v1411, %v2940
        %v2942 = vpop.f32.mrb[0].mxu0
        %2943 = vdwg.mxu0
        %v2945 = vsel %vm1263, %v2729, 0
        %2947 = vmatprep.subr.mxu0 0.0
        %2948 = vmatpush1.msra.mxu0 %v1254
        %2949 = vmatprep.subr.mxu0 0.0
        %2950 = vmatpush1.msra.mxu0 %v1255
        %2951 = vmatprep.subr.mxu0 0.0
        %2952 = vmatpush1.msra.mxu0 0.0
        %2953 = vmatprep.subr.mxu0 0.0
        %2954 = vmatpush1.msra.mxu0 0.0
        %2955 = vmatprep.subr.mxu0 0.0
        %2956 = vmatpush1.msra.mxu0 0.0
        %2957 = vmatprep.subr.mxu0 0.0
        %2958 = vmatpush1.msra.mxu0 0.0
        %2959 = vmatprep.subr.mxu0 0.0
        %2960 = vmatpush1.msra.mxu0 0.0
        %2961 = vmatprep.subr.mxu0 0.0
        %2962 = vmatpush1.msra.mxu0 0.0
        %2963 = vmatprep.subr.mxu0 0.0
        %2964 = vmatpush1.msra.mxu0 0.0
        %2965 = vmatprep.subr.mxu0 0.0
        %2966 = vmatpush1.msra.mxu0 0.0
        %2967 = vmatprep.subr.mxu0 0.0
        %2968 = vmatpush1.msra.mxu0 0.0
        %2969 = vmatprep.subr.mxu0 0.0
        %2970 = vmatpush1.msra.mxu0 0.0
        %2971 = vmatprep.subr.mxu0 0.0
        %2972 = vmatpush1.msra.mxu0 0.0
        %2973 = vmatprep.subr.mxu0 0.0
        %2974 = vmatpush1.msra.mxu0 0.0
        %2975 = vmatprep.subr.mxu0 0.0
        %2976 = vmatpush1.msra.mxu0 0.0
        %2977 = vmatprep.subr.mxu0 0.0
        %2978 = vmatpush1.msra.mxu0 0.0
        %2979 = vmatprep.subr.mxu0 0.0
        %2980 = vmatpush1.msra.mxu0 0.0
        %2981 = vmatprep.subr.mxu0 0.0
        %2982 = vmatpush1.msra.mxu0 0.0
        %2983 = vmatprep.subr.mxu0 0.0
        %2984 = vmatpush1.msra.mxu0 0.0
        %2985 = vmatprep.subr.mxu0 0.0
        %2986 = vmatpush1.msra.mxu0 0.0
        %2987 = vmatprep.subr.mxu0 0.0
        %2988 = vmatpush1.msra.mxu0 0.0
        %2989 = vmatprep.subr.mxu0 0.0
        %2990 = vmatpush1.msra.mxu0 0.0
        %2991 = vmatprep.subr.mxu0 0.0
        %2992 = vmatpush1.msra.mxu0 0.0
        %2993 = vmatprep.subr.mxu0 0.0
        %2994 = vmatpush1.msra.mxu0 0.0
        %2995 = vmatprep.subr.mxu0 0.0
        %2996 = vmatpush1.msra.mxu0 0.0
        %2997 = vmatprep.subr.mxu0 0.0
        %2998 = vmatpush1.msra.mxu0 0.0
        %2999 = vmatprep.subr.mxu0 0.0
        %3000 = vmatpush1.msra.mxu0 0.0
        %3001 = vmatprep.subr.mxu0 0.0
        %3002 = vmatpush1.msra.mxu0 0.0
        %3003 = vmatprep.subr.mxu0 0.0
        %3004 = vmatpush1.msra.mxu0 0.0
        %3005 = vmatprep.subr.mxu0 0.0
        %3006 = vmatpush1.msra.mxu0 0.0
        %3007 = vmatprep.subr.mxu0 0.0
        %3008 = vmatpush1.msra.mxu0 0.0
        %3009 = vmatprep.subr.mxu0 0.0
        %3010 = vmatpush1.msra.mxu0 0.0
        %3011 = vmatprep.mubr.f32.mxu0 0.0
        %3012 = vmatmul.mubr.f32.gmra.mrb[0].mxu0 %v2945
        %v3013 = vpop.f32.mrb[0].mxu0
        %v3014 = vadd.f32 0.0, %v3013
        %v3015 = vpop.f32.mrb[0].mxu0
        %3016 = vdwg.mxu0
        %3017 = vmatprep.subr.mxu0 0.0
        %3018 = vmatpush1.msra.mxu0 %v1256
        %3019 = vmatprep.subr.mxu0 0.0
        %3020 = vmatpush1.msra.mxu0 %v1257
        %3021 = vmatprep.subr.mxu0 0.0
        %3022 = vmatpush1.msra.mxu0 0.0
        %3023 = vmatprep.subr.mxu0 0.0
        %3024 = vmatpush1.msra.mxu0 0.0
        %3025 = vmatprep.subr.mxu0 0.0
        %3026 = vmatpush1.msra.mxu0 0.0
        %3027 = vmatprep.subr.mxu0 0.0
        %3028 = vmatpush1.msra.mxu0 0.0
        %3029 = vmatprep.subr.mxu0 0.0
        %3030 = vmatpush1.msra.mxu0 0.0
        %3031 = vmatprep.subr.mxu0 0.0
        %3032 = vmatpush1.msra.mxu0 0.0
        %3033 = vmatprep.subr.mxu0 0.0
        %3034 = vmatpush1.msra.mxu0 0.0
        %3035 = vmatprep.subr.mxu0 0.0
        %3036 = vmatpush1.msra.mxu0 0.0
        %3037 = vmatprep.subr.mxu0 0.0
        %3038 = vmatpush1.msra.mxu0 0.0
        %3039 = vmatprep.subr.mxu0 0.0
        %3040 = vmatpush1.msra.mxu0 0.0
        %3041 = vmatprep.subr.mxu0 0.0
        %3042 = vmatpush1.msra.mxu0 0.0
        %3043 = vmatprep.subr.mxu0 0.0
        %3044 = vmatpush1.msra.mxu0 0.0
        %3045 = vmatprep.subr.mxu0 0.0
        %3046 = vmatpush1.msra.mxu0 0.0
        %3047 = vmatprep.subr.mxu0 0.0
        %3048 = vmatpush1.msra.mxu0 0.0
        %3049 = vmatprep.subr.mxu0 0.0
        %3050 = vmatpush1.msra.mxu0 0.0
        %3051 = vmatprep.subr.mxu0 0.0
        %3052 = vmatpush1.msra.mxu0 0.0
        %3053 = vmatprep.subr.mxu0 0.0
        %3054 = vmatpush1.msra.mxu0 0.0
        %3055 = vmatprep.subr.mxu0 0.0
        %3056 = vmatpush1.msra.mxu0 0.0
        %3057 = vmatprep.subr.mxu0 0.0
        %3058 = vmatpush1.msra.mxu0 0.0
        %3059 = vmatprep.subr.mxu0 0.0
        %3060 = vmatpush1.msra.mxu0 0.0
        %3061 = vmatprep.subr.mxu0 0.0
        %3062 = vmatpush1.msra.mxu0 0.0
        %3063 = vmatprep.subr.mxu0 0.0
        %3064 = vmatpush1.msra.mxu0 0.0
        %3065 = vmatprep.subr.mxu0 0.0
        %3066 = vmatpush1.msra.mxu0 0.0
        %3067 = vmatprep.subr.mxu0 0.0
        %3068 = vmatpush1.msra.mxu0 0.0
        %3069 = vmatprep.subr.mxu0 0.0
        %3070 = vmatpush1.msra.mxu0 0.0
        %3071 = vmatprep.subr.mxu0 0.0
        %3072 = vmatpush1.msra.mxu0 0.0
        %3073 = vmatprep.subr.mxu0 0.0
        %3074 = vmatpush1.msra.mxu0 0.0
        %3075 = vmatprep.subr.mxu0 0.0
        %3076 = vmatpush1.msra.mxu0 0.0
        %3077 = vmatprep.subr.mxu0 0.0
        %3078 = vmatpush1.msra.mxu0 0.0
        %3079 = vmatprep.subr.mxu0 0.0
        %3080 = vmatpush1.msra.mxu0 0.0
        %3081 = vmatprep.mubr.f32.mxu0 0.0
        %3082 = vmatmul.mubr.f32.gmra.mrb[0].mxu0 %v2945
        %v3083 = vpop.f32.mrb[0].mxu0
        %v3084 = vadd.f32 0.0, %v3083
        %v3085 = vpop.f32.mrb[0].mxu0
        %3086 = vdwg.mxu0
        %3087 = vmatprep.subr.mxu0 0.0
        %3088 = vmatpush1.msra.mxu0 %v1258
        %3089 = vmatprep.subr.mxu0 0.0
        %3090 = vmatpush1.msra.mxu0 %v1259
        %3091 = vmatprep.subr.mxu0 0.0
        %3092 = vmatpush1.msra.mxu0 0.0
        %3093 = vmatprep.subr.mxu0 0.0
        %3094 = vmatpush1.msra.mxu0 0.0
        %3095 = vmatprep.subr.mxu0 0.0
        %3096 = vmatpush1.msra.mxu0 0.0
        %3097 = vmatprep.subr.mxu0 0.0
        %3098 = vmatpush1.msra.mxu0 0.0
        %3099 = vmatprep.subr.mxu0 0.0
        %3100 = vmatpush1.msra.mxu0 0.0
        %3101 = vmatprep.subr.mxu0 0.0
        %3102 = vmatpush1.msra.mxu0 0.0
        %3103 = vmatprep.subr.mxu0 0.0
        %3104 = vmatpush1.msra.mxu0 0.0
        %3105 = vmatprep.subr.mxu0 0.0
        %3106 = vmatpush1.msra.mxu0 0.0
        %3107 = vmatprep.subr.mxu0 0.0
        %3108 = vmatpush1.msra.mxu0 0.0
        %3109 = vmatprep.subr.mxu0 0.0
        %3110 = vmatpush1.msra.mxu0 0.0
        %3111 = vmatprep.subr.mxu0 0.0
        %3112 = vmatpush1.msra.mxu0 0.0
        %3113 = vmatprep.subr.mxu0 0.0
        %3114 = vmatpush1.msra.mxu0 0.0
        %3115 = vmatprep.subr.mxu0 0.0
        %3116 = vmatpush1.msra.mxu0 0.0
        %3117 = vmatprep.subr.mxu0 0.0
        %3118 = vmatpush1.msra.mxu0 0.0
        %3119 = vmatprep.subr.mxu0 0.0
        %3120 = vmatpush1.msra.mxu0 0.0
        %3121 = vmatprep.subr.mxu0 0.0
        %3122 = vmatpush1.msra.mxu0 0.0
        %3123 = vmatprep.subr.mxu0 0.0
        %3124 = vmatpush1.msra.mxu0 0.0
        %3125 = vmatprep.subr.mxu0 0.0
        %3126 = vmatpush1.msra.mxu0 0.0
        %3127 = vmatprep.subr.mxu0 0.0
        %3128 = vmatpush1.msra.mxu0 0.0
        %3129 = vmatprep.subr.mxu0 0.0
        %3130 = vmatpush1.msra.mxu0 0.0
        %3131 = vmatprep.subr.mxu0 0.0
        %3132 = vmatpush1.msra.mxu0 0.0
        %3133 = vmatprep.subr.mxu0 0.0
        %3134 = vmatpush1.msra.mxu0 0.0
        %3135 = vmatprep.subr.mxu0 0.0
        %3136 = vmatpush1.msra.mxu0 0.0
        %3137 = vmatprep.subr.mxu0 0.0
        %3138 = vmatpush1.msra.mxu0 0.0
        %3139 = vmatprep.subr.mxu0 0.0
        %3140 = vmatpush1.msra.mxu0 0.0
        %3141 = vmatprep.subr.mxu0 0.0
        %3142 = vmatpush1.msra.mxu0 0.0
        %3143 = vmatprep.subr.mxu0 0.0
        %3144 = vmatpush1.msra.mxu0 0.0
        %3145 = vmatprep.subr.mxu0 0.0
        %3146 = vmatpush1.msra.mxu0 0.0
        %3147 = vmatprep.subr.mxu0 0.0
        %3148 = vmatpush1.msra.mxu0 0.0
        %3149 = vmatprep.subr.mxu0 0.0
        %3150 = vmatpush1.msra.mxu0 0.0
        %3151 = vmatprep.mubr.f32.mxu0 0.0
        %3152 = vmatmul.mubr.f32.gmra.mrb[0].mxu0 %v2945
        %v3153 = vpop.f32.mrb[0].mxu0
        %v3154 = vadd.f32 %v1627, %v3153
        %v3155 = vpop.f32.mrb[0].mxu0
        %3156 = vdwg.mxu0
        %v3157 = vadd.f32 %v655, %v2801
        %v3158 = vand.u32 2147483647, %v3157
        %v3159 = vsub.f32 0.0, %v3158
        %v3160 = vmul.f32 %v3159, 1.442695
        %v3161 = vpow.pop %v3160
        %vm3162 = vcmp.ge.f32.partialorder %v3157, 0.0
        %v3163 = vadd.f32 %v3161, 1.0
        %v3164 = vrcp.pop %v3163
        %v3165 = vmul.f32 1.0, %v3164
        %v3166 = vmul.f32 %v3161, %v3164
        %v3167 = vsel %vm3162, %v3165, %v3166
        %v3168 = vadd.f32 %v769, %v2871
        %v3169 = vand.u32 2147483647, %v3168
        %v3170 = vsub.f32 0.0, %v3169
        %v3171 = vmul.f32 %v3170, 1.442695
        %v3172 = vpow.pop %v3171
        %vm3173 = vcmp.ge.f32.partialorder %v3168, 0.0
        %v3174 = vadd.f32 %v3172, 1.0
        %v3175 = vrcp.pop %v3174
        %v3176 = vmul.f32 1.0, %v3175
        %v3177 = vmul.f32 %v3172, %v3175
        %v3178 = vsel %vm3173, %v3176, %v3177
        %v3179 = vmul.f32 %v3167, %v2941
        %v3180 = vadd.f32 %v883, %v3179
        %v3181 = vtanh.pop %v3180
        %v3182 = vsub.f32 1.0, %v3178
        %v3183 = vmul.f32 %v3182, %v3181
        %v3184 = vmul.f32 %v3178, %v2699
        %v3185 = vadd.f32 %v3183, %v3184
        %v3186 = vadd.f32 %v2700, %v3185
        %v3187 = vadd.f32 %v1002, %v3014
        %v3188 = vand.u32 2147483647, %v3187
        %v3189 = vsub.f32 0.0, %v3188
        %v3190 = vmul.f32 %v3189, 1.442695
        %v3191 = vpow.pop %v3190
        %vm3192 = vcmp.ge.f32.partialorder %v3187, 0.0
        %v3193 = vadd.f32 %v3191, 1.0
        %v3194 = vrcp.pop %v3193
        %v3195 = vmul.f32 1.0, %v3194
        %v3196 = vmul.f32 %v3191, %v3194
        %v3197 = vsel %vm3192, %v3195, %v3196
        %v3198 = vadd.f32 %v1116, %v3084
        %v3199 = vand.u32 2147483647, %v3198
        %v3200 = vsub.f32 0.0, %v3199
        %v3201 = vmul.f32 %v3200, 1.442695
        %v3202 = vpow.pop %v3201
        %vm3203 = vcmp.ge.f32.partialorder %v3198, 0.0
        %v3204 = vadd.f32 %v3202, 1.0
        %v3205 = vrcp.pop %v3204
        %v3206 = vmul.f32 1.0, %v3205
        %v3207 = vmul.f32 %v3202, %v3205
        %v3208 = vsel %vm3203, %v3206, %v3207
        %v3209 = vmul.f32 %v3197, %v3154
        %v3210 = vadd.f32 %v1230, %v3209
        %v3211 = vtanh.pop %v3210
        %v3212 = vsub.f32 1.0, %v3208
        %v3213 = vmul.f32 %v3212, %v3211
        %v3214 = vmul.f32 %v3208, %v2729
        %v3215 = vadd.f32 %v3213, %v3214
        %v3216 = vadd.f32 %v2730, %v3215
        %v3218 = vsel %vm1263, %v3185, 0
        %3220 = vmatprep.subr.mxu0 0.0
        %3221 = vmatpush1.msra.mxu0 %v1248
        %3222 = vmatprep.subr.mxu0 0.0
        %3223 = vmatpush1.msra.mxu0 %v1249
        %3224 = vmatprep.subr.mxu0 0.0
        %3225 = vmatpush1.msra.mxu0 0.0
        %3226 = vmatprep.subr.mxu0 0.0
        %3227 = vmatpush1.msra.mxu0 0.0
        %3228 = vmatprep.subr.mxu0 0.0
        %3229 = vmatpush1.msra.mxu0 0.0
        %3230 = vmatprep.subr.mxu0 0.0
        %3231 = vmatpush1.msra.mxu0 0.0
        %3232 = vmatprep.subr.mxu0 0.0
        %3233 = vmatpush1.msra.mxu0 0.0
        %3234 = vmatprep.subr.mxu0 0.0
        %3235 = vmatpush1.msra.mxu0 0.0
        %3236 = vmatprep.subr.mxu0 0.0
        %3237 = vmatpush1.msra.mxu0 0.0
        %3238 = vmatprep.subr.mxu0 0.0
        %3239 = vmatpush1.msra.mxu0 0.0
        %3240 = vmatprep.subr.mxu0 0.0
        %3241 = vmatpush1.msra.mxu0 0.0
        %3242 = vmatprep.subr.mxu0 0.0
        %3243 = vmatpush1.msra.mxu0 0.0
        %3244 = vmatprep.subr.mxu0 0.0
        %3245 = vmatpush1.msra.mxu0 0.0
        %3246 = vmatprep.subr.mxu0 0.0
        %3247 = vmatpush1.msra.mxu0 0.0
        %3248 = vmatprep.subr.mxu0 0.0
        %3249 = vmatpush1.msra.mxu0 0.0
        %3250 = vmatprep.subr.mxu0 0.0
        %3251 = vmatpush1.msra.mxu0 0.0
        %3252 = vmatprep.subr.mxu0 0.0
        %3253 = vmatpush1.msra.mxu0 0.0
        %3254 = vmatprep.subr.mxu0 0.0
        %3255 = vmatpush1.msra.mxu0 0.0
        %3256 = vmatprep.subr.mxu0 0.0
        %3257 = vmatpush1.msra.mxu0 0.0
        %3258 = vmatprep.subr.mxu0 0.0
        %3259 = vmatpush1.msra.mxu0 0.0
        %3260 = vmatprep.subr.mxu0 0.0
        %3261 = vmatpush1.msra.mxu0 0.0
        %3262 = vmatprep.subr.mxu0 0.0
        %3263 = vmatpush1.msra.mxu0 0.0
        %3264 = vmatprep.subr.mxu0 0.0
        %3265 = vmatpush1.msra.mxu0 0.0
        %3266 = vmatprep.subr.mxu0 0.0
        %3267 = vmatpush1.msra.mxu0 0.0
        %3268 = vmatprep.subr.mxu0 0.0
        %3269 = vmatpush1.msra.mxu0 0.0
        %3270 = vmatprep.subr.mxu0 0.0
        %3271 = vmatpush1.msra.mxu0 0.0
        %3272 = vmatprep.subr.mxu0 0.0
        %3273 = vmatpush1.msra.mxu0 0.0
        %3274 = vmatprep.subr.mxu0 0.0
        %3275 = vmatpush1.msra.mxu0 0.0
        %3276 = vmatprep.subr.mxu0 0.0
        %3277 = vmatpush1.msra.mxu0 0.0
        %3278 = vmatprep.subr.mxu0 0.0
        %3279 = vmatpush1.msra.mxu0 0.0
        %3280 = vmatprep.subr.mxu0 0.0
        %3281 = vmatpush1.msra.mxu0 0.0
        %3282 = vmatprep.subr.mxu0 0.0
        %3283 = vmatpush1.msra.mxu0 0.0
        %3284 = vmatprep.mubr.f32.mxu0 0.0
        %3285 = vmatmul.mubr.f32.gmra.mrb[0].mxu0 %v3218
        %v3286 = vpop.f32.mrb[0].mxu0
        %v3287 = vadd.f32 0.0, %v3286
        %v3288 = vpop.f32.mrb[0].mxu0
        %3289 = vdwg.mxu0
        %3290 = vmatprep.subr.mxu0 0.0
        %3291 = vmatpush1.msra.mxu0 %v1250
        %3292 = vmatprep.subr.mxu0 0.0
        %3293 = vmatpush1.msra.mxu0 %v1251
        %3294 = vmatprep.subr.mxu0 0.0
        %3295 = vmatpush1.msra.mxu0 0.0
        %3296 = vmatprep.subr.mxu0 0.0
        %3297 = vmatpush1.msra.mxu0 0.0
        %3298 = vmatprep.subr.mxu0 0.0
        %3299 = vmatpush1.msra.mxu0 0.0
        %3300 = vmatprep.subr.mxu0 0.0
        %3301 = vmatpush1.msra.mxu0 0.0
        %3302 = vmatprep.subr.mxu0 0.0
        %3303 = vmatpush1.msra.mxu0 0.0
        %3304 = vmatprep.subr.mxu0 0.0
        %3305 = vmatpush1.msra.mxu0 0.0
        %3306 = vmatprep.subr.mxu0 0.0
        %3307 = vmatpush1.msra.mxu0 0.0
        %3308 = vmatprep.subr.mxu0 0.0
        %3309 = vmatpush1.msra.mxu0 0.0
        %3310 = vmatprep.subr.mxu0 0.0
        %3311 = vmatpush1.msra.mxu0 0.0
        %3312 = vmatprep.subr.mxu0 0.0
        %3313 = vmatpush1.msra.mxu0 0.0
        %3314 = vmatprep.subr.mxu0 0.0
        %3315 = vmatpush1.msra.mxu0 0.0
        %3316 = vmatprep.subr.mxu0 0.0
        %3317 = vmatpush1.msra.mxu0 0.0
        %3318 = vmatprep.subr.mxu0 0.0
        %3319 = vmatpush1.msra.mxu0 0.0
        %3320 = vmatprep.subr.mxu0 0.0
        %3321 = vmatpush1.msra.mxu0 0.0
        %3322 = vmatprep.subr.mxu0 0.0
        %3323 = vmatpush1.msra.mxu0 0.0
        %3324 = vmatprep.subr.mxu0 0.0
        %3325 = vmatpush1.msra.mxu0 0.0
        %3326 = vmatprep.subr.mxu0 0.0
        %3327 = vmatpush1.msra.mxu0 0.0
        %3328 = vmatprep.subr.mxu0 0.0
        %3329 = vmatpush1.msra.mxu0 0.0
        %3330 = vmatprep.subr.mxu0 0.0
        %3331 = vmatpush1.msra.mxu0 0.0
        %3332 = vmatprep.subr.mxu0 0.0
        %3333 = vmatpush1.msra.mxu0 0.0
        %3334 = vmatprep.subr.mxu0 0.0
        %3335 = vmatpush1.msra.mxu0 0.0
        %3336 = vmatprep.subr.mxu0 0.0
        %3337 = vmatpush1.msra.mxu0 0.0
        %3338 = vmatprep.subr.mxu0 0.0
        %3339 = vmatpush1.msra.mxu0 0.0
        %3340 = vmatprep.subr.mxu0 0.0
        %3341 = vmatpush1.msra.mxu0 0.0
        %3342 = vmatprep.subr.mxu0 0.0
        %3343 = vmatpush1.msra.mxu0 0.0
        %3344 = vmatprep.subr.mxu0 0.0
        %3345 = vmatpush1.msra.mxu0 0.0
        %3346 = vmatprep.subr.mxu0 0.0
        %3347 = vmatpush1.msra.mxu0 0.0
        %3348 = vmatprep.subr.mxu0 0.0
        %3349 = vmatpush1.msra.mxu0 0.0
        %3350 = vmatprep.subr.mxu0 0.0
        %3351 = vmatpush1.msra.mxu0 0.0
        %3352 = vmatprep.subr.mxu0 0.0
        %3353 = vmatpush1.msra.mxu0 0.0
        %3354 = vmatprep.mubr.f32.mxu0 0.0
        %3355 = vmatmul.mubr.f32.gmra.mrb[0].mxu0 %v3218
        %v3356 = vpop.f32.mrb[0].mxu0
        %v3357 = vadd.f32 0.0, %v3356
        %v3358 = vpop.f32.mrb[0].mxu0
        %3359 = vdwg.mxu0
        %3360 = vmatprep.subr.mxu0 0.0
        %3361 = vmatpush1.msra.mxu0 %v1252
        %3362 = vmatprep.subr.mxu0 0.0
        %3363 = vmatpush1.msra.mxu0 %v1253
        %3364 = vmatprep.subr.mxu0 0.0
        %3365 = vmatpush1.msra.mxu0 0.0
        %3366 = vmatprep.subr.mxu0 0.0
        %3367 = vmatpush1.msra.mxu0 0.0
        %3368 = vmatprep.subr.mxu0 0.0
        %3369 = vmatpush1.msra.mxu0 0.0
        %3370 = vmatprep.subr.mxu0 0.0
        %3371 = vmatpush1.msra.mxu0 0.0
        %3372 = vmatprep.subr.mxu0 0.0
        %3373 = vmatpush1.msra.mxu0 0.0
        %3374 = vmatprep.subr.mxu0 0.0
        %3375 = vmatpush1.msra.mxu0 0.0
        %3376 = vmatprep.subr.mxu0 0.0
        %3377 = vmatpush1.msra.mxu0 0.0
        %3378 = vmatprep.subr.mxu0 0.0
        %3379 = vmatpush1.msra.mxu0 0.0
        %3380 = vmatprep.subr.mxu0 0.0
        %3381 = vmatpush1.msra.mxu0 0.0
        %3382 = vmatprep.subr.mxu0 0.0
        %3383 = vmatpush1.msra.mxu0 0.0
        %3384 = vmatprep.subr.mxu0 0.0
        %3385 = vmatpush1.msra.mxu0 0.0
        %3386 = vmatprep.subr.mxu0 0.0
        %3387 = vmatpush1.msra.mxu0 0.0
        %3388 = vmatprep.subr.mxu0 0.0
        %3389 = vmatpush1.msra.mxu0 0.0
        %3390 = vmatprep.subr.mxu0 0.0
        %3391 = vmatpush1.msra.mxu0 0.0
        %3392 = vmatprep.subr.mxu0 0.0
        %3393 = vmatpush1.msra.mxu0 0.0
        %3394 = vmatprep.subr.mxu0 0.0
        %3395 = vmatpush1.msra.mxu0 0.0
        %3396 = vmatprep.subr.mxu0 0.0
        %3397 = vmatpush1.msra.mxu0 0.0
        %3398 = vmatprep.subr.mxu0 0.0
        %3399 = vmatpush1.msra.mxu0 0.0
        %3400 = vmatprep.subr.mxu0 0.0
        %3401 = vmatpush1.msra.mxu0 0.0
        %3402 = vmatprep.subr.mxu0 0.0
        %3403 = vmatpush1.msra.mxu0 0.0
        %3404 = vmatprep.subr.mxu0 0.0
        %3405 = vmatpush1.msra.mxu0 0.0
        %3406 = vmatprep.subr.mxu0 0.0
        %3407 = vmatpush1.msra.mxu0 0.0
        %3408 = vmatprep.subr.mxu0 0.0
        %3409 = vmatpush1.msra.mxu0 0.0
        %3410 = vmatprep.subr.mxu0 0.0
        %3411 = vmatpush1.msra.mxu0 0.0
        %3412 = vmatprep.subr.mxu0 0.0
        %3413 = vmatpush1.msra.mxu0 0.0
        %3414 = vmatprep.subr.mxu0 0.0
        %3415 = vmatpush1.msra.mxu0 0.0
        %3416 = vmatprep.subr.mxu0 0.0
        %3417 = vmatpush1.msra.mxu0 0.0
        %3418 = vmatprep.subr.mxu0 0.0
        %3419 = vmatpush1.msra.mxu0 0.0
        %3420 = vmatprep.subr.mxu0 0.0
        %3421 = vmatpush1.msra.mxu0 0.0
        %3422 = vmatprep.subr.mxu0 0.0
        %3423 = vmatpush1.msra.mxu0 0.0
        %3424 = vmatprep.mubr.f32.mxu0 0.0
        %3425 = vmatmul.mubr.f32.gmra.mrb[0].mxu0 %v3218
        %v3426 = vpop.f32.mrb[0].mxu0
        %v3427 = vadd.f32 %v1411, %v3426
        %v3428 = vpop.f32.mrb[0].mxu0
        %3429 = vdwg.mxu0
        %v3431 = vsel %vm1263, %v3215, 0
        %3433 = vmatprep.subr.mxu0 0.0
        %3434 = vmatpush1.msra.mxu0 %v1254
        %3435 = vmatprep.subr.mxu0 0.0
        %3436 = vmatpush1.msra.mxu0 %v1255
        %3437 = vmatprep.subr.mxu0 0.0
        %3438 = vmatpush1.msra.mxu0 0.0
        %3439 = vmatprep.subr.mxu0 0.0
        %3440 = vmatpush1.msra.mxu0 0.0
        %3441 = vmatprep.subr.mxu0 0.0
        %3442 = vmatpush1.msra.mxu0 0.0
        %3443 = vmatprep.subr.mxu0 0.0
        %3444 = vmatpush1.msra.mxu0 0.0
        %3445 = vmatprep.subr.mxu0 0.0
        %3446 = vmatpush1.msra.mxu0 0.0
        %3447 = vmatprep.subr.mxu0 0.0
        %3448 = vmatpush1.msra.mxu0 0.0
        %3449 = vmatprep.subr.mxu0 0.0
        %3450 = vmatpush1.msra.mxu0 0.0
        %3451 = vmatprep.subr.mxu0 0.0
        %3452 = vmatpush1.msra.mxu0 0.0
        %3453 = vmatprep.subr.mxu0 0.0
        %3454 = vmatpush1.msra.mxu0 0.0
        %3455 = vmatprep.subr.mxu0 0.0
        %3456 = vmatpush1.msra.mxu0 0.0
        %3457 = vmatprep.subr.mxu0 0.0
        %3458 = vmatpush1.msra.mxu0 0.0
        %3459 = vmatprep.subr.mxu0 0.0
        %3460 = vmatpush1.msra.mxu0 0.0
        %3461 = vmatprep.subr.mxu0 0.0
        %3462 = vmatpush1.msra.mxu0 0.0
        %3463 = vmatprep.subr.mxu0 0.0
        %3464 = vmatpush1.msra.mxu0 0.0
        %3465 = vmatprep.subr.mxu0 0.0
        %3466 = vmatpush1.msra.mxu0 0.0
        %3467 = vmatprep.subr.mxu0 0.0
        %3468 = vmatpush1.msra.mxu0 0.0
        %3469 = vmatprep.subr.mxu0 0.0
        %3470 = vmatpush1.msra.mxu0 0.0
        %3471 = vmatprep.subr.mxu0 0.0
        %3472 = vmatpush1.msra.mxu0 0.0
        %3473 = vmatprep.subr.mxu0 0.0
        %3474 = vmatpush1.msra.mxu0 0.0
        %3475 = vmatprep.subr.mxu0 0.0
        %3476 = vmatpush1.msra.mxu0 0.0
        %3477 = vmatprep.subr.mxu0 0.0
        %3478 = vmatpush1.msra.mxu0 0.0
        %3479 = vmatprep.subr.mxu0 0.0
        %3480 = vmatpush1.msra.mxu0 0.0
        %3481 = vmatprep.subr.mxu0 0.0
        %3482 = vmatpush1.msra.mxu0 0.0
        %3483 = vmatprep.subr.mxu0 0.0
        %3484 = vmatpush1.msra.mxu0 0.0
        %3485 = vmatprep.subr.mxu0 0.0
        %3486 = vmatpush1.msra.mxu0 0.0
        %3487 = vmatprep.subr.mxu0 0.0
        %3488 = vmatpush1.msra.mxu0 0.0
        %3489 = vmatprep.subr.mxu0 0.0
        %3490 = vmatpush1.msra.mxu0 0.0
        %3491 = vmatprep.subr.mxu0 0.0
        %3492 = vmatpush1.msra.mxu0 0.0
        %3493 = vmatprep.subr.mxu0 0.0
        %3494 = vmatpush1.msra.mxu0 0.0
        %3495 = vmatprep.subr.mxu0 0.0
        %3496 = vmatpush1.msra.mxu0 0.0
        %3497 = vmatprep.mubr.f32.mxu0 0.0
        %3498 = vmatmul.mubr.f32.gmra.mrb[0].mxu0 %v3431
        %v3499 = vpop.f32.mrb[0].mxu0
        %v3500 = vadd.f32 0.0, %v3499
        %v3501 = vpop.f32.mrb[0].mxu0
        %3502 = vdwg.mxu0
        %3503 = vmatprep.subr.mxu0 0.0
        %3504 = vmatpush1.msra.mxu0 %v1256
        %3505 = vmatprep.subr.mxu0 0.0
        %3506 = vmatpush1.msra.mxu0 %v1257
        %3507 = vmatprep.subr.mxu0 0.0
        %3508 = vmatpush1.msra.mxu0 0.0
        %3509 = vmatprep.subr.mxu0 0.0
        %3510 = vmatpush1.msra.mxu0 0.0
        %3511 = vmatprep.subr.mxu0 0.0
        %3512 = vmatpush1.msra.mxu0 0.0
        %3513 = vmatprep.subr.mxu0 0.0
        %3514 = vmatpush1.msra.mxu0 0.0
        %3515 = vmatprep.subr.mxu0 0.0
        %3516 = vmatpush1.msra.mxu0 0.0
        %3517 = vmatprep.subr.mxu0 0.0
        %3518 = vmatpush1.msra.mxu0 0.0
        %3519 = vmatprep.subr.mxu0 0.0
        %3520 = vmatpush1.msra.mxu0 0.0
        %3521 = vmatprep.subr.mxu0 0.0
        %3522 = vmatpush1.msra.mxu0 0.0
        %3523 = vmatprep.subr.mxu0 0.0
        %3524 = vmatpush1.msra.mxu0 0.0
        %3525 = vmatprep.subr.mxu0 0.0
        %3526 = vmatpush1.msra.mxu0 0.0
        %3527 = vmatprep.subr.mxu0 0.0
        %3528 = vmatpush1.msra.mxu0 0.0
        %3529 = vmatprep.subr.mxu0 0.0
        %3530 = vmatpush1.msra.mxu0 0.0
        %3531 = vmatprep.subr.mxu0 0.0
        %3532 = vmatpush1.msra.mxu0 0.0
        %3533 = vmatprep.subr.mxu0 0.0
        %3534 = vmatpush1.msra.mxu0 0.0
        %3535 = vmatprep.subr.mxu0 0.0
        %3536 = vmatpush1.msra.mxu0 0.0
        %3537 = vmatprep.subr.mxu0 0.0
        %3538 = vmatpush1.msra.mxu0 0.0
        %3539 = vmatprep.subr.mxu0 0.0
        %3540 = vmatpush1.msra.mxu0 0.0
        %3541 = vmatprep.subr.mxu0 0.0
        %3542 = vmatpush1.msra.mxu0 0.0
        %3543 = vmatprep.subr.mxu0 0.0
        %3544 = vmatpush1.msra.mxu0 0.0
        %3545 = vmatprep.subr.mxu0 0.0
        %3546 = vmatpush1.msra.mxu0 0.0
        %3547 = vmatprep.subr.mxu0 0.0
        %3548 = vmatpush1.msra.mxu0 0.0
        %3549 = vmatprep.subr.mxu0 0.0
        %3550 = vmatpush1.msra.mxu0 0.0
        %3551 = vmatprep.subr.mxu0 0.0
        %3552 = vmatpush1.msra.mxu0 0.0
        %3553 = vmatprep.subr.mxu0 0.0
        %3554 = vmatpush1.msra.mxu0 0.0
        %3555 = vmatprep.subr.mxu0 0.0
        %3556 = vmatpush1.msra.mxu0 0.0
        %3557 = vmatprep.subr.mxu0 0.0
        %3558 = vmatpush1.msra.mxu0 0.0
        %3559 = vmatprep.subr.mxu0 0.0
        %3560 = vmatpush1.msra.mxu0 0.0
        %3561 = vmatprep.subr.mxu0 0.0
        %3562 = vmatpush1.msra.mxu0 0.0
        %3563 = vmatprep.subr.mxu0 0.0
        %3564 = vmatpush1.msra.mxu0 0.0
        %3565 = vmatprep.subr.mxu0 0.0
        %3566 = vmatpush1.msra.mxu0 0.0
        %3567 = vmatprep.mubr.f32.mxu0 0.0
        %3568 = vmatmul.mubr.f32.gmra.mrb[0].mxu0 %v3431
        %v3569 = vpop.f32.mrb[0].mxu0
        %v3570 = vadd.f32 0.0, %v3569
        %v3571 = vpop.f32.mrb[0].mxu0
        %3572 = vdwg.mxu0
        %3573 = vmatprep.subr.mxu0 0.0
        %3574 = vmatpush1.msra.mxu0 %v1258
        %3575 = vmatprep.subr.mxu0 0.0
        %3576 = vmatpush1.msra.mxu0 %v1259
        %3577 = vmatprep.subr.mxu0 0.0
        %3578 = vmatpush1.msra.mxu0 0.0
        %3579 = vmatprep.subr.mxu0 0.0
        %3580 = vmatpush1.msra.mxu0 0.0
        %3581 = vmatprep.subr.mxu0 0.0
        %3582 = vmatpush1.msra.mxu0 0.0
        %3583 = vmatprep.subr.mxu0 0.0
        %3584 = vmatpush1.msra.mxu0 0.0
        %3585 = vmatprep.subr.mxu0 0.0
        %3586 = vmatpush1.msra.mxu0 0.0
        %3587 = vmatprep.subr.mxu0 0.0
        %3588 = vmatpush1.msra.mxu0 0.0
        %3589 = vmatprep.subr.mxu0 0.0
        %3590 = vmatpush1.msra.mxu0 0.0
        %3591 = vmatprep.subr.mxu0 0.0
        %3592 = vmatpush1.msra.mxu0 0.0
        %3593 = vmatprep.subr.mxu0 0.0
        %3594 = vmatpush1.msra.mxu0 0.0
        %3595 = vmatprep.subr.mxu0 0.0
        %3596 = vmatpush1.msra.mxu0 0.0
        %3597 = vmatprep.subr.mxu0 0.0
        %3598 = vmatpush1.msra.mxu0 0.0
        %3599 = vmatprep.subr.mxu0 0.0
        %3600 = vmatpush1.msra.mxu0 0.0
        %3601 = vmatprep.subr.mxu0 0.0
        %3602 = vmatpush1.msra.mxu0 0.0
        %3603 = vmatprep.subr.mxu0 0.0
        %3604 = vmatpush1.msra.mxu0 0.0
        %3605 = vmatprep.subr.mxu0 0.0
        %3606 = vmatpush1.msra.mxu0 0.0
        %3607 = vmatprep.subr.mxu0 0.0
        %3608 = vmatpush1.msra.mxu0 0.0
        %3609 = vmatprep.subr.mxu0 0.0
        %3610 = vmatpush1.msra.mxu0 0.0
        %3611 = vmatprep.subr.mxu0 0.0
        %3612 = vmatpush1.msra.mxu0 0.0
        %3613 = vmatprep.subr.mxu0 0.0
        %3614 = vmatpush1.msra.mxu0 0.0
        %3615 = vmatprep.subr.mxu0 0.0
        %3616 = vmatpush1.msra.mxu0 0.0
        %3617 = vmatprep.subr.mxu0 0.0
        %3618 = vmatpush1.msra.mxu0 0.0
        %3619 = vmatprep.subr.mxu0 0.0
        %3620 = vmatpush1.msra.mxu0 0.0
        %3621 = vmatprep.subr.mxu0 0.0
        %3622 = vmatpush1.msra.mxu0 0.0
        %3623 = vmatprep.subr.mxu0 0.0
        %3624 = vmatpush1.msra.mxu0 0.0
        %3625 = vmatprep.subr.mxu0 0.0
        %3626 = vmatpush1.msra.mxu0 0.0
        %3627 = vmatprep.subr.mxu0 0.0
        %3628 = vmatpush1.msra.mxu0 0.0
        %3629 = vmatprep.subr.mxu0 0.0
        %3630 = vmatpush1.msra.mxu0 0.0
        %3631 = vmatprep.subr.mxu0 0.0
        %3632 = vmatpush1.msra.mxu0 0.0
        %3633 = vmatprep.subr.mxu0 0.0
        %3634 = vmatpush1.msra.mxu0 0.0
        %3635 = vmatprep.subr.mxu0 0.0
        %3636 = vmatpush1.msra.mxu0 0.0
        %3637 = vmatprep.mubr.f32.mxu0 0.0
        %3638 = vmatmul.mubr.f32.gmra.mrb[0].mxu0 %v3431
        %v3639 = vpop.f32.mrb[0].mxu0
        %v3640 = vadd.f32 %v1627, %v3639
        %v3641 = vpop.f32.mrb[0].mxu0
        %3642 = vdwg.mxu0
        %v3643 = vadd.f32 %v660, %v3287
        %v3644 = vand.u32 2147483647, %v3643
        %v3645 = vsub.f32 0.0, %v3644
        %v3646 = vmul.f32 %v3645, 1.442695
        %v3647 = vpow.pop %v3646
        %vm3648 = vcmp.ge.f32.partialorder %v3643, 0.0
        %v3649 = vadd.f32 %v3647, 1.0
        %v3650 = vrcp.pop %v3649
        %v3651 = vmul.f32 1.0, %v3650
        %v3652 = vmul.f32 %v3647, %v3650
        %v3653 = vsel %vm3648, %v3651, %v3652
        %v3654 = vadd.f32 %v774, %v3357
        %v3655 = vand.u32 2147483647, %v3654
        %v3656 = vsub.f32 0.0, %v3655
        %v3657 = vmul.f32 %v3656, 1.442695
        %v3658 = vpow.pop %v3657
        %vm3659 = vcmp.ge.f32.partialorder %v3654, 0.0
        %v3660 = vadd.f32 %v3658, 1.0
        %v3661 = vrcp.pop %v3660
        %v3662 = vmul.f32 1.0, %v3661
        %v3663 = vmul.f32 %v3658, %v3661
        %v3664 = vsel %vm3659, %v3662, %v3663
        %v3665 = vmul.f32 %v3653, %v3427
        %v3666 = vadd.f32 %v888, %v3665
        %v3667 = vtanh.pop %v3666
        %v3668 = vsub.f32 1.0, %v3664
        %v3669 = vmul.f32 %v3668, %v3667
        %v3670 = vmul.f32 %v3664, %v3185
        %v3671 = vadd.f32 %v3669, %v3670
        %v3672 = vadd.f32 %v3186, %v3671
        %v3673 = vadd.f32 %v997, %v3500
        %v3674 = vand.u32 2147483647, %v3673
        %v3675 = vsub.f32 0.0, %v3674
        %v3676 = vmul.f32 %v3675, 1.442695
        %v3677 = vpow.pop %v3676
        %vm3678 = vcmp.ge.f32.partialorder %v3673, 0.0
        %v3679 = vadd.f32 %v3677, 1.0
        %v3680 = vrcp.pop %v3679
        %v3681 = vmul.f32 1.0, %v3680
        %v3682 = vmul.f32 %v3677, %v3680
        %v3683 = vsel %vm3678, %v3681, %v3682
        %v3684 = vadd.f32 %v1111, %v3570
        %v3685 = vand.u32 2147483647, %v3684
        %v3686 = vsub.f32 0.0, %v3685
        %v3687 = vmul.f32 %v3686, 1.442695
        %v3688 = vpow.pop %v3687
        %vm3689 = vcmp.ge.f32.partialorder %v3684, 0.0
        %v3690 = vadd.f32 %v3688, 1.0
        %v3691 = vrcp.pop %v3690
        %v3692 = vmul.f32 1.0, %v3691
        %v3693 = vmul.f32 %v3688, %v3691
        %v3694 = vsel %vm3689, %v3692, %v3693
        %v3695 = vmul.f32 %v3683, %v3640
        %v3696 = vadd.f32 %v1225, %v3695
        %v3697 = vtanh.pop %v3696
        %v3698 = vsub.f32 1.0, %v3694
        %v3699 = vmul.f32 %v3698, %v3697
        %v3700 = vmul.f32 %v3694, %v3215
        %v3701 = vadd.f32 %v3699, %v3700
        %v3702 = vadd.f32 %v3216, %v3701
        %v3704 = vsel %vm1263, %v3671, 0
        %3706 = vmatprep.subr.mxu0 0.0
        %3707 = vmatpush1.msra.mxu0 %v1248
        %3708 = vmatprep.subr.mxu0 0.0
        %3709 = vmatpush1.msra.mxu0 %v1249
        %3710 = vmatprep.subr.mxu0 0.0
        %3711 = vmatpush1.msra.mxu0 0.0
        %3712 = vmatprep.subr.mxu0 0.0
        %3713 = vmatpush1.msra.mxu0 0.0
        %3714 = vmatprep.subr.mxu0 0.0
        %3715 = vmatpush1.msra.mxu0 0.0
        %3716 = vmatprep.subr.mxu0 0.0
        %3717 = vmatpush1.msra.mxu0 0.0
        %3718 = vmatprep.subr.mxu0 0.0
        %3719 = vmatpush1.msra.mxu0 0.0
        %3720 = vmatprep.subr.mxu0 0.0
        %3721 = vmatpush1.msra.mxu0 0.0
        %3722 = vmatprep.subr.mxu0 0.0
        %3723 = vmatpush1.msra.mxu0 0.0
        %3724 = vmatprep.subr.mxu0 0.0
        %3725 = vmatpush1.msra.mxu0 0.0
        %3726 = vmatprep.subr.mxu0 0.0
        %3727 = vmatpush1.msra.mxu0 0.0
        %3728 = vmatprep.subr.mxu0 0.0
        %3729 = vmatpush1.msra.mxu0 0.0
        %3730 = vmatprep.subr.mxu0 0.0
        %3731 = vmatpush1.msra.mxu0 0.0
        %3732 = vmatprep.subr.mxu0 0.0
        %3733 = vmatpush1.msra.mxu0 0.0
        %3734 = vmatprep.subr.mxu0 0.0
        %3735 = vmatpush1.msra.mxu0 0.0
        %3736 = vmatprep.subr.mxu0 0.0
        %3737 = vmatpush1.msra.mxu0 0.0
        %3738 = vmatprep.subr.mxu0 0.0
        %3739 = vmatpush1.msra.mxu0 0.0
        %3740 = vmatprep.subr.mxu0 0.0
        %3741 = vmatpush1.msra.mxu0 0.0
        %3742 = vmatprep.subr.mxu0 0.0
        %3743 = vmatpush1.msra.mxu0 0.0
        %3744 = vmatprep.subr.mxu0 0.0
        %3745 = vmatpush1.msra.mxu0 0.0
        %3746 = vmatprep.subr.mxu0 0.0
        %3747 = vmatpush1.msra.mxu0 0.0
        %3748 = vmatprep.subr.mxu0 0.0
        %3749 = vmatpush1.msra.mxu0 0.0
        %3750 = vmatprep.subr.mxu0 0.0
        %3751 = vmatpush1.msra.mxu0 0.0
        %3752 = vmatprep.subr.mxu0 0.0
        %3753 = vmatpush1.msra.mxu0 0.0
        %3754 = vmatprep.subr.mxu0 0.0
        %3755 = vmatpush1.msra.mxu0 0.0
        %3756 = vmatprep.subr.mxu0 0.0
        %3757 = vmatpush1.msra.mxu0 0.0
        %3758 = vmatprep.subr.mxu0 0.0
        %3759 = vmatpush1.msra.mxu0 0.0
        %3760 = vmatprep.subr.mxu0 0.0
        %3761 = vmatpush1.msra.mxu0 0.0
        %3762 = vmatprep.subr.mxu0 0.0
        %3763 = vmatpush1.msra.mxu0 0.0
        %3764 = vmatprep.subr.mxu0 0.0
        %3765 = vmatpush1.msra.mxu0 0.0
        %3766 = vmatprep.subr.mxu0 0.0
        %3767 = vmatpush1.msra.mxu0 0.0
        %3768 = vmatprep.subr.mxu0 0.0
        %3769 = vmatpush1.msra.mxu0 0.0
        %3770 = vmatprep.mubr.f32.mxu0 0.0
        %3771 = vmatmul.mubr.f32.gmra.mrb[0].mxu0 %v3704
        %v3772 = vpop.f32.mrb[0].mxu0
        %v3773 = vadd.f32 0.0, %v3772
        %v3774 = vpop.f32.mrb[0].mxu0
        %3775 = vdwg.mxu0
        %3776 = vmatprep.subr.mxu0 0.0
        %3777 = vmatpush1.msra.mxu0 %v1250
        %3778 = vmatprep.subr.mxu0 0.0
        %3779 = vmatpush1.msra.mxu0 %v1251
        %3780 = vmatprep.subr.mxu0 0.0
        %3781 = vmatpush1.msra.mxu0 0.0
        %3782 = vmatprep.subr.mxu0 0.0
        %3783 = vmatpush1.msra.mxu0 0.0
        %3784 = vmatprep.subr.mxu0 0.0
        %3785 = vmatpush1.msra.mxu0 0.0
        %3786 = vmatprep.subr.mxu0 0.0
        %3787 = vmatpush1.msra.mxu0 0.0
        %3788 = vmatprep.subr.mxu0 0.0
        %3789 = vmatpush1.msra.mxu0 0.0
        %3790 = vmatprep.subr.mxu0 0.0
        %3791 = vmatpush1.msra.mxu0 0.0
        %3792 = vmatprep.subr.mxu0 0.0
        %3793 = vmatpush1.msra.mxu0 0.0
        %3794 = vmatprep.subr.mxu0 0.0
        %3795 = vmatpush1.msra.mxu0 0.0
        %3796 = vmatprep.subr.mxu0 0.0
        %3797 = vmatpush1.msra.mxu0 0.0
        %3798 = vmatprep.subr.mxu0 0.0
        %3799 = vmatpush1.msra.mxu0 0.0
        %3800 = vmatprep.subr.mxu0 0.0
        %3801 = vmatpush1.msra.mxu0 0.0
        %3802 = vmatprep.subr.mxu0 0.0
        %3803 = vmatpush1.msra.mxu0 0.0
        %3804 = vmatprep.subr.mxu0 0.0
        %3805 = vmatpush1.msra.mxu0 0.0
        %3806 = vmatprep.subr.mxu0 0.0
        %3807 = vmatpush1.msra.mxu0 0.0
        %3808 = vmatprep.subr.mxu0 0.0
        %3809 = vmatpush1.msra.mxu0 0.0
        %3810 = vmatprep.subr.mxu0 0.0
        %3811 = vmatpush1.msra.mxu0 0.0
        %3812 = vmatprep.subr.mxu0 0.0
        %3813 = vmatpush1.msra.mxu0 0.0
        %3814 = vmatprep.subr.mxu0 0.0
        %3815 = vmatpush1.msra.mxu0 0.0
        %3816 = vmatprep.subr.mxu0 0.0
        %3817 = vmatpush1.msra.mxu0 0.0
        %3818 = vmatprep.subr.mxu0 0.0
        %3819 = vmatpush1.msra.mxu0 0.0
        %3820 = vmatprep.subr.mxu0 0.0
        %3821 = vmatpush1.msra.mxu0 0.0
        %3822 = vmatprep.subr.mxu0 0.0
        %3823 = vmatpush1.msra.mxu0 0.0
        %3824 = vmatprep.subr.mxu0 0.0
        %3825 = vmatpush1.msra.mxu0 0.0
        %3826 = vmatprep.subr.mxu0 0.0
        %3827 = vmatpush1.msra.mxu0 0.0
        %3828 = vmatprep.subr.mxu0 0.0
        %3829 = vmatpush1.msra.mxu0 0.0
        %3830 = vmatprep.subr.mxu0 0.0
        %3831 = vmatpush1.msra.mxu0 0.0
        %3832 = vmatprep.subr.mxu0 0.0
        %3833 = vmatpush1.msra.mxu0 0.0
        %3834 = vmatprep.subr.mxu0 0.0
        %3835 = vmatpush1.msra.mxu0 0.0
        %3836 = vmatprep.subr.mxu0 0.0
        %3837 = vmatpush1.msra.mxu0 0.0
        %3838 = vmatprep.subr.mxu0 0.0
        %3839 = vmatpush1.msra.mxu0 0.0
        %3840 = vmatprep.mubr.f32.mxu0 0.0
        %3841 = vmatmul.mubr.f32.gmra.mrb[0].mxu0 %v3704
        %v3842 = vpop.f32.mrb[0].mxu0
        %v3843 = vadd.f32 0.0, %v3842
        %v3844 = vpop.f32.mrb[0].mxu0
        %3845 = vdwg.mxu0
        %3846 = vmatprep.subr.mxu0 0.0
        %3847 = vmatpush1.msra.mxu0 %v1252
        %3848 = vmatprep.subr.mxu0 0.0
        %3849 = vmatpush1.msra.mxu0 %v1253
        %3850 = vmatprep.subr.mxu0 0.0
        %3851 = vmatpush1.msra.mxu0 0.0
        %3852 = vmatprep.subr.mxu0 0.0
        %3853 = vmatpush1.msra.mxu0 0.0
        %3854 = vmatprep.subr.mxu0 0.0
        %3855 = vmatpush1.msra.mxu0 0.0
        %3856 = vmatprep.subr.mxu0 0.0
        %3857 = vmatpush1.msra.mxu0 0.0
        %3858 = vmatprep.subr.mxu0 0.0
        %3859 = vmatpush1.msra.mxu0 0.0
        %3860 = vmatprep.subr.mxu0 0.0
        %3861 = vmatpush1.msra.mxu0 0.0
        %3862 = vmatprep.subr.mxu0 0.0
        %3863 = vmatpush1.msra.mxu0 0.0
        %3864 = vmatprep.subr.mxu0 0.0
        %3865 = vmatpush1.msra.mxu0 0.0
        %3866 = vmatprep.subr.mxu0 0.0
        %3867 = vmatpush1.msra.mxu0 0.0
        %3868 = vmatprep.subr.mxu0 0.0
        %3869 = vmatpush1.msra.mxu0 0.0
        %3870 = vmatprep.subr.mxu0 0.0
        %3871 = vmatpush1.msra.mxu0 0.0
        %3872 = vmatprep.subr.mxu0 0.0
        %3873 = vmatpush1.msra.mxu0 0.0
        %3874 = vmatprep.subr.mxu0 0.0
        %3875 = vmatpush1.msra.mxu0 0.0
        %3876 = vmatprep.subr.mxu0 0.0
        %3877 = vmatpush1.msra.mxu0 0.0
        %3878 = vmatprep.subr.mxu0 0.0
        %3879 = vmatpush1.msra.mxu0 0.0
        %3880 = vmatprep.subr.mxu0 0.0
        %3881 = vmatpush1.msra.mxu0 0.0
        %3882 = vmatprep.subr.mxu0 0.0
        %3883 = vmatpush1.msra.mxu0 0.0
        %3884 = vmatprep.subr.mxu0 0.0
        %3885 = vmatpush1.msra.mxu0 0.0
        %3886 = vmatprep.subr.mxu0 0.0
        %3887 = vmatpush1.msra.mxu0 0.0
        %3888 = vmatprep.subr.mxu0 0.0
        %3889 = vmatpush1.msra.mxu0 0.0
        %3890 = vmatprep.subr.mxu0 0.0
        %3891 = vmatpush1.msra.mxu0 0.0
        %3892 = vmatprep.subr.mxu0 0.0
        %3893 = vmatpush1.msra.mxu0 0.0
        %3894 = vmatprep.subr.mxu0 0.0
        %3895 = vmatpush1.msra.mxu0 0.0
        %3896 = vmatprep.subr.mxu0 0.0
        %3897 = vmatpush1.msra.mxu0 0.0
        %3898 = vmatprep.subr.mxu0 0.0
        %3899 = vmatpush1.msra.mxu0 0.0
        %3900 = vmatprep.subr.mxu0 0.0
        %3901 = vmatpush1.msra.mxu0 0.0
        %3902 = vmatprep.subr.mxu0 0.0
        %3903 = vmatpush1.msra.mxu0 0.0
        %3904 = vmatprep.subr.mxu0 0.0
        %3905 = vmatpush1.msra.mxu0 0.0
        %3906 = vmatprep.subr.mxu0 0.0
        %3907 = vmatpush1.msra.mxu0 0.0
        %3908 = vmatprep.subr.mxu0 0.0
        %3909 = vmatpush1.msra.mxu0 0.0
        %3910 = vmatprep.mubr.f32.mxu0 0.0
        %3911 = vmatmul.mubr.f32.gmra.mrb[0].mxu0 %v3704
        %v3912 = vpop.f32.mrb[0].mxu0
        %v3913 = vadd.f32 %v1411, %v3912
        %v3914 = vpop.f32.mrb[0].mxu0
        %3915 = vdwg.mxu0
        %v3917 = vsel %vm1263, %v3701, 0
        %3919 = vmatprep.subr.mxu0 0.0
        %3920 = vmatpush1.msra.mxu0 %v1254
        %3921 = vmatprep.subr.mxu0 0.0
        %3922 = vmatpush1.msra.mxu0 %v1255
        %3923 = vmatprep.subr.mxu0 0.0
        %3924 = vmatpush1.msra.mxu0 0.0
        %3925 = vmatprep.subr.mxu0 0.0
        %3926 = vmatpush1.msra.mxu0 0.0
        %3927 = vmatprep.subr.mxu0 0.0
        %3928 = vmatpush1.msra.mxu0 0.0
        %3929 = vmatprep.subr.mxu0 0.0
        %3930 = vmatpush1.msra.mxu0 0.0
        %3931 = vmatprep.subr.mxu0 0.0
        %3932 = vmatpush1.msra.mxu0 0.0
        %3933 = vmatprep.subr.mxu0 0.0
        %3934 = vmatpush1.msra.mxu0 0.0
        %3935 = vmatprep.subr.mxu0 0.0
        %3936 = vmatpush1.msra.mxu0 0.0
        %3937 = vmatprep.subr.mxu0 0.0
        %3938 = vmatpush1.msra.mxu0 0.0
        %3939 = vmatprep.subr.mxu0 0.0
        %3940 = vmatpush1.msra.mxu0 0.0
        %3941 = vmatprep.subr.mxu0 0.0
        %3942 = vmatpush1.msra.mxu0 0.0
        %3943 = vmatprep.subr.mxu0 0.0
        %3944 = vmatpush1.msra.mxu0 0.0
        %3945 = vmatprep.subr.mxu0 0.0
        %3946 = vmatpush1.msra.mxu0 0.0
        %3947 = vmatprep.subr.mxu0 0.0
        %3948 = vmatpush1.msra.mxu0 0.0
        %3949 = vmatprep.subr.mxu0 0.0
        %3950 = vmatpush1.msra.mxu0 0.0
        %3951 = vmatprep.subr.mxu0 0.0
        %3952 = vmatpush1.msra.mxu0 0.0
        %3953 = vmatprep.subr.mxu0 0.0
        %3954 = vmatpush1.msra.mxu0 0.0
        %3955 = vmatprep.subr.mxu0 0.0
        %3956 = vmatpush1.msra.mxu0 0.0
        %3957 = vmatprep.subr.mxu0 0.0
        %3958 = vmatpush1.msra.mxu0 0.0
        %3959 = vmatprep.subr.mxu0 0.0
        %3960 = vmatpush1.msra.mxu0 0.0
        %3961 = vmatprep.subr.mxu0 0.0
        %3962 = vmatpush1.msra.mxu0 0.0
        %3963 = vmatprep.subr.mxu0 0.0
        %3964 = vmatpush1.msra.mxu0 0.0
        %3965 = vmatprep.subr.mxu0 0.0
        %3966 = vmatpush1.msra.mxu0 0.0
        %3967 = vmatprep.subr.mxu0 0.0
        %3968 = vmatpush1.msra.mxu0 0.0
        %3969 = vmatprep.subr.mxu0 0.0
        %3970 = vmatpush1.msra.mxu0 0.0
        %3971 = vmatprep.subr.mxu0 0.0
        %3972 = vmatpush1.msra.mxu0 0.0
        %3973 = vmatprep.subr.mxu0 0.0
        %3974 = vmatpush1.msra.mxu0 0.0
        %3975 = vmatprep.subr.mxu0 0.0
        %3976 = vmatpush1.msra.mxu0 0.0
        %3977 = vmatprep.subr.mxu0 0.0
        %3978 = vmatpush1.msra.mxu0 0.0
        %3979 = vmatprep.subr.mxu0 0.0
        %3980 = vmatpush1.msra.mxu0 0.0
        %3981 = vmatprep.subr.mxu0 0.0
        %3982 = vmatpush1.msra.mxu0 0.0
        %3983 = vmatprep.mubr.f32.mxu0 0.0
        %3984 = vmatmul.mubr.f32.gmra.mrb[0].mxu0 %v3917
        %v3985 = vpop.f32.mrb[0].mxu0
        %v3986 = vadd.f32 0.0, %v3985
        %v3987 = vpop.f32.mrb[0].mxu0
        %3988 = vdwg.mxu0
        %3989 = vmatprep.subr.mxu0 0.0
        %3990 = vmatpush1.msra.mxu0 %v1256
        %3991 = vmatprep.subr.mxu0 0.0
        %3992 = vmatpush1.msra.mxu0 %v1257
        %3993 = vmatprep.subr.mxu0 0.0
        %3994 = vmatpush1.msra.mxu0 0.0
        %3995 = vmatprep.subr.mxu0 0.0
        %3996 = vmatpush1.msra.mxu0 0.0
        %3997 = vmatprep.subr.mxu0 0.0
        %3998 = vmatpush1.msra.mxu0 0.0
        %3999 = vmatprep.subr.mxu0 0.0
        %4000 = vmatpush1.msra.mxu0 0.0
        %4001 = vmatprep.subr.mxu0 0.0
        %4002 = vmatpush1.msra.mxu0 0.0
        %4003 = vmatprep.subr.mxu0 0.0
        %4004 = vmatpush1.msra.mxu0 0.0
        %4005 = vmatprep.subr.mxu0 0.0
        %4006 = vmatpush1.msra.mxu0 0.0
        %4007 = vmatprep.subr.mxu0 0.0
        %4008 = vmatpush1.msra.mxu0 0.0
        %4009 = vmatprep.subr.mxu0 0.0
        %4010 = vmatpush1.msra.mxu0 0.0
        %4011 = vmatprep.subr.mxu0 0.0
        %4012 = vmatpush1.msra.mxu0 0.0
        %4013 = vmatprep.subr.mxu0 0.0
        %4014 = vmatpush1.msra.mxu0 0.0
        %4015 = vmatprep.subr.mxu0 0.0
        %4016 = vmatpush1.msra.mxu0 0.0
        %4017 = vmatprep.subr.mxu0 0.0
        %4018 = vmatpush1.msra.mxu0 0.0
        %4019 = vmatprep.subr.mxu0 0.0
        %4020 = vmatpush1.msra.mxu0 0.0
        %4021 = vmatprep.subr.mxu0 0.0
        %4022 = vmatpush1.msra.mxu0 0.0
        %4023 = vmatprep.subr.mxu0 0.0
        %4024 = vmatpush1.msra.mxu0 0.0
        %4025 = vmatprep.subr.mxu0 0.0
        %4026 = vmatpush1.msra.mxu0 0.0
        %4027 = vmatprep.subr.mxu0 0.0
        %4028 = vmatpush1.msra.mxu0 0.0
        %4029 = vmatprep.subr.mxu0 0.0
        %4030 = vmatpush1.msra.mxu0 0.0
        %4031 = vmatprep.subr.mxu0 0.0
        %4032 = vmatpush1.msra.mxu0 0.0
        %4033 = vmatprep.subr.mxu0 0.0
        %4034 = vmatpush1.msra.mxu0 0.0
        %4035 = vmatprep.subr.mxu0 0.0
        %4036 = vmatpush1.msra.mxu0 0.0
        %4037 = vmatprep.subr.mxu0 0.0
        %4038 = vmatpush1.msra.mxu0 0.0
        %4039 = vmatprep.subr.mxu0 0.0
        %4040 = vmatpush1.msra.mxu0 0.0
        %4041 = vmatprep.subr.mxu0 0.0
        %4042 = vmatpush1.msra.mxu0 0.0
        %4043 = vmatprep.subr.mxu0 0.0
        %4044 = vmatpush1.msra.mxu0 0.0
        %4045 = vmatprep.subr.mxu0 0.0
        %4046 = vmatpush1.msra.mxu0 0.0
        %4047 = vmatprep.subr.mxu0 0.0
        %4048 = vmatpush1.msra.mxu0 0.0
        %4049 = vmatprep.subr.mxu0 0.0
        %4050 = vmatpush1.msra.mxu0 0.0
        %4051 = vmatprep.subr.mxu0 0.0
        %4052 = vmatpush1.msra.mxu0 0.0
        %4053 = vmatprep.mubr.f32.mxu0 0.0
        %4054 = vmatmul.mubr.f32.gmra.mrb[0].mxu0 %v3917
        %v4055 = vpop.f32.mrb[0].mxu0
        %v4056 = vadd.f32 0.0, %v4055
        %v4057 = vpop.f32.mrb[0].mxu0
        %4058 = vdwg.mxu0
        %4059 = vmatprep.subr.mxu0 0.0
        %4060 = vmatpush1.msra.mxu0 %v1258
        %4061 = vmatprep.subr.mxu0 0.0
        %4062 = vmatpush1.msra.mxu0 %v1259
        %4063 = vmatprep.subr.mxu0 0.0
        %4064 = vmatpush1.msra.mxu0 0.0
        %4065 = vmatprep.subr.mxu0 0.0
        %4066 = vmatpush1.msra.mxu0 0.0
        %4067 = vmatprep.subr.mxu0 0.0
        %4068 = vmatpush1.msra.mxu0 0.0
        %4069 = vmatprep.subr.mxu0 0.0
        %4070 = vmatpush1.msra.mxu0 0.0
        %4071 = vmatprep.subr.mxu0 0.0
        %4072 = vmatpush1.msra.mxu0 0.0
        %4073 = vmatprep.subr.mxu0 0.0
        %4074 = vmatpush1.msra.mxu0 0.0
        %4075 = vmatprep.subr.mxu0 0.0
        %4076 = vmatpush1.msra.mxu0 0.0
        %4077 = vmatprep.subr.mxu0 0.0
        %4078 = vmatpush1.msra.mxu0 0.0
        %4079 = vmatprep.subr.mxu0 0.0
        %4080 = vmatpush1.msra.mxu0 0.0
        %4081 = vmatprep.subr.mxu0 0.0
        %4082 = vmatpush1.msra.mxu0 0.0
        %4083 = vmatprep.subr.mxu0 0.0
        %4084 = vmatpush1.msra.mxu0 0.0
        %4085 = vmatprep.subr.mxu0 0.0
        %4086 = vmatpush1.msra.mxu0 0.0
        %4087 = vmatprep.subr.mxu0 0.0
        %4088 = vmatpush1.msra.mxu0 0.0
        %4089 = vmatprep.subr.mxu0 0.0
        %4090 = vmatpush1.msra.mxu0 0.0
        %4091 = vmatprep.subr.mxu0 0.0
        %4092 = vmatpush1.msra.mxu0 0.0
        %4093 = vmatprep.subr.mxu0 0.0
        %4094 = vmatpush1.msra.mxu0 0.0
        %4095 = vmatprep.subr.mxu0 0.0
        %4096 = vmatpush1.msra.mxu0 0.0
        %4097 = vmatprep.subr.mxu0 0.0
        %4098 = vmatpush1.msra.mxu0 0.0
        %4099 = vmatprep.subr.mxu0 0.0
        %4100 = vmatpush1.msra.mxu0 0.0
        %4101 = vmatprep.subr.mxu0 0.0
        %4102 = vmatpush1.msra.mxu0 0.0
        %4103 = vmatprep.subr.mxu0 0.0
        %4104 = vmatpush1.msra.mxu0 0.0
        %4105 = vmatprep.subr.mxu0 0.0
        %4106 = vmatpush1.msra.mxu0 0.0
        %4107 = vmatprep.subr.mxu0 0.0
        %4108 = vmatpush1.msra.mxu0 0.0
        %4109 = vmatprep.subr.mxu0 0.0
        %4110 = vmatpush1.msra.mxu0 0.0
        %4111 = vmatprep.subr.mxu0 0.0
        %4112 = vmatpush1.msra.mxu0 0.0
        %4113 = vmatprep.subr.mxu0 0.0
        %4114 = vmatpush1.msra.mxu0 0.0
        %4115 = vmatprep.subr.mxu0 0.0
        %4116 = vmatpush1.msra.mxu0 0.0
        %4117 = vmatprep.subr.mxu0 0.0
        %4118 = vmatpush1.msra.mxu0 0.0
        %4119 = vmatprep.subr.mxu0 0.0
        %4120 = vmatpush1.msra.mxu0 0.0
        %4121 = vmatprep.subr.mxu0 0.0
        %4122 = vmatpush1.msra.mxu0 0.0
        %4123 = vmatprep.mubr.f32.mxu0 0.0
        %4124 = vmatmul.mubr.f32.gmra.mrb[0].mxu0 %v3917
        %v4125 = vpop.f32.mrb[0].mxu0
        %v4126 = vadd.f32 %v1627, %v4125
        %v4127 = vpop.f32.mrb[0].mxu0
        %4128 = vdwg.mxu0
        %v4129 = vadd.f32 %v665, %v3773
        %v4130 = vand.u32 2147483647, %v4129
        %v4131 = vsub.f32 0.0, %v4130
        %v4132 = vmul.f32 %v4131, 1.442695
        %v4133 = vpow.pop %v4132
        %vm4134 = vcmp.ge.f32.partialorder %v4129, 0.0
        %v4135 = vadd.f32 %v4133, 1.0
        %v4136 = vrcp.pop %v4135
        %v4137 = vmul.f32 1.0, %v4136
        %v4138 = vmul.f32 %v4133, %v4136
        %v4139 = vsel %vm4134, %v4137, %v4138
        %v4140 = vadd.f32 %v779, %v3843
        %v4141 = vand.u32 2147483647, %v4140
        %v4142 = vsub.f32 0.0, %v4141
        %v4143 = vmul.f32 %v4142, 1.442695
        %v4144 = vpow.pop %v4143
        %vm4145 = vcmp.ge.f32.partialorder %v4140, 0.0
        %v4146 = vadd.f32 %v4144, 1.0
        %v4147 = vrcp.pop %v4146
        %v4148 = vmul.f32 1.0, %v4147
        %v4149 = vmul.f32 %v4144, %v4147
        %v4150 = vsel %vm4145, %v4148, %v4149
        %v4151 = vmul.f32 %v4139, %v3913
        %v4152 = vadd.f32 %v893, %v4151
        %v4153 = vtanh.pop %v4152
        %v4154 = vsub.f32 1.0, %v4150
        %v4155 = vmul.f32 %v4154, %v4153
        %v4156 = vmul.f32 %v4150, %v3671
        %v4157 = vadd.f32 %v4155, %v4156
        %v4158 = vadd.f32 %v3672, %v4157
        %v4159 = vadd.f32 %v992, %v3986
        %v4160 = vand.u32 2147483647, %v4159
        %v4161 = vsub.f32 0.0, %v4160
        %v4162 = vmul.f32 %v4161, 1.442695
        %v4163 = vpow.pop %v4162
        %vm4164 = vcmp.ge.f32.partialorder %v4159, 0.0
        %v4165 = vadd.f32 %v4163, 1.0
        %v4166 = vrcp.pop %v4165
        %v4167 = vmul.f32 1.0, %v4166
        %v4168 = vmul.f32 %v4163, %v4166
        %v4169 = vsel %vm4164, %v4167, %v4168
        %v4170 = vadd.f32 %v1106, %v4056
        %v4171 = vand.u32 2147483647, %v4170
        %v4172 = vsub.f32 0.0, %v4171
        %v4173 = vmul.f32 %v4172, 1.442695
        %v4174 = vpow.pop %v4173
        %vm4175 = vcmp.ge.f32.partialorder %v4170, 0.0
        %v4176 = vadd.f32 %v4174, 1.0
        %v4177 = vrcp.pop %v4176
        %v4178 = vmul.f32 1.0, %v4177
        %v4179 = vmul.f32 %v4174, %v4177
        %v4180 = vsel %vm4175, %v4178, %v4179
        %v4181 = vmul.f32 %v4169, %v4126
        %v4182 = vadd.f32 %v1220, %v4181
        %v4183 = vtanh.pop %v4182
        %v4184 = vsub.f32 1.0, %v4180
        %v4185 = vmul.f32 %v4184, %v4183
        %v4186 = vmul.f32 %v4180, %v3701
        %v4187 = vadd.f32 %v4185, %v4186
        %v4188 = vadd.f32 %v3702, %v4187
        %v4190 = vsel %vm1263, %v4157, 0
        %4192 = vmatprep.subr.mxu0 0.0
        %4193 = vmatpush1.msra.mxu0 %v1248
        %4194 = vmatprep.subr.mxu0 0.0
        %4195 = vmatpush1.msra.mxu0 %v1249
        %4196 = vmatprep.subr.mxu0 0.0
        %4197 = vmatpush1.msra.mxu0 0.0
        %4198 = vmatprep.subr.mxu0 0.0
        %4199 = vmatpush1.msra.mxu0 0.0
        %4200 = vmatprep.subr.mxu0 0.0
        %4201 = vmatpush1.msra.mxu0 0.0
        %4202 = vmatprep.subr.mxu0 0.0
        %4203 = vmatpush1.msra.mxu0 0.0
        %4204 = vmatprep.subr.mxu0 0.0
        %4205 = vmatpush1.msra.mxu0 0.0
        %4206 = vmatprep.subr.mxu0 0.0
        %4207 = vmatpush1.msra.mxu0 0.0
        %4208 = vmatprep.subr.mxu0 0.0
        %4209 = vmatpush1.msra.mxu0 0.0
        %4210 = vmatprep.subr.mxu0 0.0
        %4211 = vmatpush1.msra.mxu0 0.0
        %4212 = vmatprep.subr.mxu0 0.0
        %4213 = vmatpush1.msra.mxu0 0.0
        %4214 = vmatprep.subr.mxu0 0.0
        %4215 = vmatpush1.msra.mxu0 0.0
        %4216 = vmatprep.subr.mxu0 0.0
        %4217 = vmatpush1.msra.mxu0 0.0
        %4218 = vmatprep.subr.mxu0 0.0
        %4219 = vmatpush1.msra.mxu0 0.0
        %4220 = vmatprep.subr.mxu0 0.0
        %4221 = vmatpush1.msra.mxu0 0.0
        %4222 = vmatprep.subr.mxu0 0.0
        %4223 = vmatpush1.msra.mxu0 0.0
        %4224 = vmatprep.subr.mxu0 0.0
        %4225 = vmatpush1.msra.mxu0 0.0
        %4226 = vmatprep.subr.mxu0 0.0
        %4227 = vmatpush1.msra.mxu0 0.0
        %4228 = vmatprep.subr.mxu0 0.0
        %4229 = vmatpush1.msra.mxu0 0.0
        %4230 = vmatprep.subr.mxu0 0.0
        %4231 = vmatpush1.msra.mxu0 0.0
        %4232 = vmatprep.subr.mxu0 0.0
        %4233 = vmatpush1.msra.mxu0 0.0
        %4234 = vmatprep.subr.mxu0 0.0
        %4235 = vmatpush1.msra.mxu0 0.0
        %4236 = vmatprep.subr.mxu0 0.0
        %4237 = vmatpush1.msra.mxu0 0.0
        %4238 = vmatprep.subr.mxu0 0.0
        %4239 = vmatpush1.msra.mxu0 0.0
        %4240 = vmatprep.subr.mxu0 0.0
        %4241 = vmatpush1.msra.mxu0 0.0
        %4242 = vmatprep.subr.mxu0 0.0
        %4243 = vmatpush1.msra.mxu0 0.0
        %4244 = vmatprep.subr.mxu0 0.0
        %4245 = vmatpush1.msra.mxu0 0.0
        %4246 = vmatprep.subr.mxu0 0.0
        %4247 = vmatpush1.msra.mxu0 0.0
        %4248 = vmatprep.subr.mxu0 0.0
        %4249 = vmatpush1.msra.mxu0 0.0
        %4250 = vmatprep.subr.mxu0 0.0
        %4251 = vmatpush1.msra.mxu0 0.0
        %4252 = vmatprep.subr.mxu0 0.0
        %4253 = vmatpush1.msra.mxu0 0.0
        %4254 = vmatprep.subr.mxu0 0.0
        %4255 = vmatpush1.msra.mxu0 0.0
        %4256 = vmatprep.mubr.f32.mxu0 0.0
        %4257 = vmatmul.mubr.f32.gmra.mrb[0].mxu0 %v4190
        %v4258 = vpop.f32.mrb[0].mxu0
        %v4259 = vadd.f32 0.0, %v4258
        %v4260 = vpop.f32.mrb[0].mxu0
        %4261 = vdwg.mxu0
        %4262 = vmatprep.subr.mxu0 0.0
        %4263 = vmatpush1.msra.mxu0 %v1250
        %4264 = vmatprep.subr.mxu0 0.0
        %4265 = vmatpush1.msra.mxu0 %v1251
        %4266 = vmatprep.subr.mxu0 0.0
        %4267 = vmatpush1.msra.mxu0 0.0
        %4268 = vmatprep.subr.mxu0 0.0
        %4269 = vmatpush1.msra.mxu0 0.0
        %4270 = vmatprep.subr.mxu0 0.0
        %4271 = vmatpush1.msra.mxu0 0.0
        %4272 = vmatprep.subr.mxu0 0.0
        %4273 = vmatpush1.msra.mxu0 0.0
        %4274 = vmatprep.subr.mxu0 0.0
        %4275 = vmatpush1.msra.mxu0 0.0
        %4276 = vmatprep.subr.mxu0 0.0
        %4277 = vmatpush1.msra.mxu0 0.0
        %4278 = vmatprep.subr.mxu0 0.0
        %4279 = vmatpush1.msra.mxu0 0.0
        %4280 = vmatprep.subr.mxu0 0.0
        %4281 = vmatpush1.msra.mxu0 0.0
        %4282 = vmatprep.subr.mxu0 0.0
        %4283 = vmatpush1.msra.mxu0 0.0
        %4284 = vmatprep.subr.mxu0 0.0
        %4285 = vmatpush1.msra.mxu0 0.0
        %4286 = vmatprep.subr.mxu0 0.0
        %4287 = vmatpush1.msra.mxu0 0.0
        %4288 = vmatprep.subr.mxu0 0.0
        %4289 = vmatpush1.msra.mxu0 0.0
        %4290 = vmatprep.subr.mxu0 0.0
        %4291 = vmatpush1.msra.mxu0 0.0
        %4292 = vmatprep.subr.mxu0 0.0
        %4293 = vmatpush1.msra.mxu0 0.0
        %4294 = vmatprep.subr.mxu0 0.0
        %4295 = vmatpush1.msra.mxu0 0.0
        %4296 = vmatprep.subr.mxu0 0.0
        %4297 = vmatpush1.msra.mxu0 0.0
        %4298 = vmatprep.subr.mxu0 0.0
        %4299 = vmatpush1.msra.mxu0 0.0
        %4300 = vmatprep.subr.mxu0 0.0
        %4301 = vmatpush1.msra.mxu0 0.0
        %4302 = vmatprep.subr.mxu0 0.0
        %4303 = vmatpush1.msra.mxu0 0.0
        %4304 = vmatprep.subr.mxu0 0.0
        %4305 = vmatpush1.msra.mxu0 0.0
        %4306 = vmatprep.subr.mxu0 0.0
        %4307 = vmatpush1.msra.mxu0 0.0
        %4308 = vmatprep.subr.mxu0 0.0
        %4309 = vmatpush1.msra.mxu0 0.0
        %4310 = vmatprep.subr.mxu0 0.0
        %4311 = vmatpush1.msra.mxu0 0.0
        %4312 = vmatprep.subr.mxu0 0.0
        %4313 = vmatpush1.msra.mxu0 0.0
        %4314 = vmatprep.subr.mxu0 0.0
        %4315 = vmatpush1.msra.mxu0 0.0
        %4316 = vmatprep.subr.mxu0 0.0
        %4317 = vmatpush1.msra.mxu0 0.0
        %4318 = vmatprep.subr.mxu0 0.0
        %4319 = vmatpush1.msra.mxu0 0.0
        %4320 = vmatprep.subr.mxu0 0.0
        %4321 = vmatpush1.msra.mxu0 0.0
        %4322 = vmatprep.subr.mxu0 0.0
        %4323 = vmatpush1.msra.mxu0 0.0
        %4324 = vmatprep.subr.mxu0 0.0
        %4325 = vmatpush1.msra.mxu0 0.0
        %4326 = vmatprep.mubr.f32.mxu0 0.0
        %4327 = vmatmul.mubr.f32.gmra.mrb[0].mxu0 %v4190
        %v4328 = vpop.f32.mrb[0].mxu0
        %v4329 = vadd.f32 0.0, %v4328
        %v4330 = vpop.f32.mrb[0].mxu0
        %4331 = vdwg.mxu0
        %4332 = vmatprep.subr.mxu0 0.0
        %4333 = vmatpush1.msra.mxu0 %v1252
        %4334 = vmatprep.subr.mxu0 0.0
        %4335 = vmatpush1.msra.mxu0 %v1253
        %4336 = vmatprep.subr.mxu0 0.0
        %4337 = vmatpush1.msra.mxu0 0.0
        %4338 = vmatprep.subr.mxu0 0.0
        %4339 = vmatpush1.msra.mxu0 0.0
        %4340 = vmatprep.subr.mxu0 0.0
        %4341 = vmatpush1.msra.mxu0 0.0
        %4342 = vmatprep.subr.mxu0 0.0
        %4343 = vmatpush1.msra.mxu0 0.0
        %4344 = vmatprep.subr.mxu0 0.0
        %4345 = vmatpush1.msra.mxu0 0.0
        %4346 = vmatprep.subr.mxu0 0.0
        %4347 = vmatpush1.msra.mxu0 0.0
        %4348 = vmatprep.subr.mxu0 0.0
        %4349 = vmatpush1.msra.mxu0 0.0
        %4350 = vmatprep.subr.mxu0 0.0
        %4351 = vmatpush1.msra.mxu0 0.0
        %4352 = vmatprep.subr.mxu0 0.0
        %4353 = vmatpush1.msra.mxu0 0.0
        %4354 = vmatprep.subr.mxu0 0.0
        %4355 = vmatpush1.msra.mxu0 0.0
        %4356 = vmatprep.subr.mxu0 0.0
        %4357 = vmatpush1.msra.mxu0 0.0
        %4358 = vmatprep.subr.mxu0 0.0
        %4359 = vmatpush1.msra.mxu0 0.0
        %4360 = vmatprep.subr.mxu0 0.0
        %4361 = vmatpush1.msra.mxu0 0.0
        %4362 = vmatprep.subr.mxu0 0.0
        %4363 = vmatpush1.msra.mxu0 0.0
        %4364 = vmatprep.subr.mxu0 0.0
        %4365 = vmatpush1.msra.mxu0 0.0
        %4366 = vmatprep.subr.mxu0 0.0
        %4367 = vmatpush1.msra.mxu0 0.0
        %4368 = vmatprep.subr.mxu0 0.0
        %4369 = vmatpush1.msra.mxu0 0.0
        %4370 = vmatprep.subr.mxu0 0.0
        %4371 = vmatpush1.msra.mxu0 0.0
        %4372 = vmatprep.subr.mxu0 0.0
        %4373 = vmatpush1.msra.mxu0 0.0
        %4374 = vmatprep.subr.mxu0 0.0
        %4375 = vmatpush1.msra.mxu0 0.0
        %4376 = vmatprep.subr.mxu0 0.0
        %4377 = vmatpush1.msra.mxu0 0.0
        %4378 = vmatprep.subr.mxu0 0.0
        %4379 = vmatpush1.msra.mxu0 0.0
        %4380 = vmatprep.subr.mxu0 0.0
        %4381 = vmatpush1.msra.mxu0 0.0
        %4382 = vmatprep.subr.mxu0 0.0
        %4383 = vmatpush1.msra.mxu0 0.0
        %4384 = vmatprep.subr.mxu0 0.0
        %4385 = vmatpush1.msra.mxu0 0.0
        %4386 = vmatprep.subr.mxu0 0.0
        %4387 = vmatpush1.msra.mxu0 0.0
        %4388 = vmatprep.subr.mxu0 0.0
        %4389 = vmatpush1.msra.mxu0 0.0
        %4390 = vmatprep.subr.mxu0 0.0
        %4391 = vmatpush1.msra.mxu0 0.0
        %4392 = vmatprep.subr.mxu0 0.0
        %4393 = vmatpush1.msra.mxu0 0.0
        %4394 = vmatprep.subr.mxu0 0.0
        %4395 = vmatpush1.msra.mxu0 0.0
        %4396 = vmatprep.mubr.f32.mxu0 0.0
        %4397 = vmatmul.mubr.f32.gmra.mrb[0].mxu0 %v4190
        %v4398 = vpop.f32.mrb[0].mxu0
        %v4399 = vadd.f32 %v1411, %v4398
        %v4400 = vpop.f32.mrb[0].mxu0
        %4401 = vdwg.mxu0
        %v4403 = vsel %vm1263, %v4187, 0
        %4405 = vmatprep.subr.mxu0 0.0
        %4406 = vmatpush1.msra.mxu0 %v1254
        %4407 = vmatprep.subr.mxu0 0.0
        %4408 = vmatpush1.msra.mxu0 %v1255
        %4409 = vmatprep.subr.mxu0 0.0
        %4410 = vmatpush1.msra.mxu0 0.0
        %4411 = vmatprep.subr.mxu0 0.0
        %4412 = vmatpush1.msra.mxu0 0.0
        %4413 = vmatprep.subr.mxu0 0.0
        %4414 = vmatpush1.msra.mxu0 0.0
        %4415 = vmatprep.subr.mxu0 0.0
        %4416 = vmatpush1.msra.mxu0 0.0
        %4417 = vmatprep.subr.mxu0 0.0
        %4418 = vmatpush1.msra.mxu0 0.0
        %4419 = vmatprep.subr.mxu0 0.0
        %4420 = vmatpush1.msra.mxu0 0.0
        %4421 = vmatprep.subr.mxu0 0.0
        %4422 = vmatpush1.msra.mxu0 0.0
        %4423 = vmatprep.subr.mxu0 0.0
        %4424 = vmatpush1.msra.mxu0 0.0
        %4425 = vmatprep.subr.mxu0 0.0
        %4426 = vmatpush1.msra.mxu0 0.0
        %4427 = vmatprep.subr.mxu0 0.0
        %4428 = vmatpush1.msra.mxu0 0.0
        %4429 = vmatprep.subr.mxu0 0.0
        %4430 = vmatpush1.msra.mxu0 0.0
        %4431 = vmatprep.subr.mxu0 0.0
        %4432 = vmatpush1.msra.mxu0 0.0
        %4433 = vmatprep.subr.mxu0 0.0
        %4434 = vmatpush1.msra.mxu0 0.0
        %4435 = vmatprep.subr.mxu0 0.0
        %4436 = vmatpush1.msra.mxu0 0.0
        %4437 = vmatprep.subr.mxu0 0.0
        %4438 = vmatpush1.msra.mxu0 0.0
        %4439 = vmatprep.subr.mxu0 0.0
        %4440 = vmatpush1.msra.mxu0 0.0
        %4441 = vmatprep.subr.mxu0 0.0
        %4442 = vmatpush1.msra.mxu0 0.0
        %4443 = vmatprep.subr.mxu0 0.0
        %4444 = vmatpush1.msra.mxu0 0.0
        %4445 = vmatprep.subr.mxu0 0.0
        %4446 = vmatpush1.msra.mxu0 0.0
        %4447 = vmatprep.subr.mxu0 0.0
        %4448 = vmatpush1.msra.mxu0 0.0
        %4449 = vmatprep.subr.mxu0 0.0
        %4450 = vmatpush1.msra.mxu0 0.0
        %4451 = vmatprep.subr.mxu0 0.0
        %4452 = vmatpush1.msra.mxu0 0.0
        %4453 = vmatprep.subr.mxu0 0.0
        %4454 = vmatpush1.msra.mxu0 0.0
        %4455 = vmatprep.subr.mxu0 0.0
        %4456 = vmatpush1.msra.mxu0 0.0
        %4457 = vmatprep.subr.mxu0 0.0
        %4458 = vmatpush1.msra.mxu0 0.0
        %4459 = vmatprep.subr.mxu0 0.0
        %4460 = vmatpush1.msra.mxu0 0.0
        %4461 = vmatprep.subr.mxu0 0.0
        %4462 = vmatpush1.msra.mxu0 0.0
        %4463 = vmatprep.subr.mxu0 0.0
        %4464 = vmatpush1.msra.mxu0 0.0
        %4465 = vmatprep.subr.mxu0 0.0
        %4466 = vmatpush1.msra.mxu0 0.0
        %4467 = vmatprep.subr.mxu0 0.0
        %4468 = vmatpush1.msra.mxu0 0.0
        %4469 = vmatprep.mubr.f32.mxu0 0.0
        %4470 = vmatmul.mubr.f32.gmra.mrb[0].mxu0 %v4403
        %v4471 = vpop.f32.mrb[0].mxu0
        %v4472 = vadd.f32 0.0, %v4471
        %v4473 = vpop.f32.mrb[0].mxu0
        %4474 = vdwg.mxu0
        %4475 = vmatprep.subr.mxu0 0.0
        %4476 = vmatpush1.msra.mxu0 %v1256
        %4477 = vmatprep.subr.mxu0 0.0
        %4478 = vmatpush1.msra.mxu0 %v1257
        %4479 = vmatprep.subr.mxu0 0.0
        %4480 = vmatpush1.msra.mxu0 0.0
        %4481 = vmatprep.subr.mxu0 0.0
        %4482 = vmatpush1.msra.mxu0 0.0
        %4483 = vmatprep.subr.mxu0 0.0
        %4484 = vmatpush1.msra.mxu0 0.0
        %4485 = vmatprep.subr.mxu0 0.0
        %4486 = vmatpush1.msra.mxu0 0.0
        %4487 = vmatprep.subr.mxu0 0.0
        %4488 = vmatpush1.msra.mxu0 0.0
        %4489 = vmatprep.subr.mxu0 0.0
        %4490 = vmatpush1.msra.mxu0 0.0
        %4491 = vmatprep.subr.mxu0 0.0
        %4492 = vmatpush1.msra.mxu0 0.0
        %4493 = vmatprep.subr.mxu0 0.0
        %4494 = vmatpush1.msra.mxu0 0.0
        %4495 = vmatprep.subr.mxu0 0.0
        %4496 = vmatpush1.msra.mxu0 0.0
        %4497 = vmatprep.subr.mxu0 0.0
        %4498 = vmatpush1.msra.mxu0 0.0
        %4499 = vmatprep.subr.mxu0 0.0
        %4500 = vmatpush1.msra.mxu0 0.0
        %4501 = vmatprep.subr.mxu0 0.0
        %4502 = vmatpush1.msra.mxu0 0.0
        %4503 = vmatprep.subr.mxu0 0.0
        %4504 = vmatpush1.msra.mxu0 0.0
        %4505 = vmatprep.subr.mxu0 0.0
        %4506 = vmatpush1.msra.mxu0 0.0
        %4507 = vmatprep.subr.mxu0 0.0
        %4508 = vmatpush1.msra.mxu0 0.0
        %4509 = vmatprep.subr.mxu0 0.0
        %4510 = vmatpush1.msra.mxu0 0.0
        %4511 = vmatprep.subr.mxu0 0.0
        %4512 = vmatpush1.msra.mxu0 0.0
        %4513 = vmatprep.subr.mxu0 0.0
        %4514 = vmatpush1.msra.mxu0 0.0
        %4515 = vmatprep.subr.mxu0 0.0
        %4516 = vmatpush1.msra.mxu0 0.0
        %4517 = vmatprep.subr.mxu0 0.0
        %4518 = vmatpush1.msra.mxu0 0.0
        %4519 = vmatprep.subr.mxu0 0.0
        %4520 = vmatpush1.msra.mxu0 0.0
        %4521 = vmatprep.subr.mxu0 0.0
        %4522 = vmatpush1.msra.mxu0 0.0
        %4523 = vmatprep.subr.mxu0 0.0
        %4524 = vmatpush1.msra.mxu0 0.0
        %4525 = vmatprep.subr.mxu0 0.0
        %4526 = vmatpush1.msra.mxu0 0.0
        %4527 = vmatprep.subr.mxu0 0.0
        %4528 = vmatpush1.msra.mxu0 0.0
        %4529 = vmatprep.subr.mxu0 0.0
        %4530 = vmatpush1.msra.mxu0 0.0
        %4531 = vmatprep.subr.mxu0 0.0
        %4532 = vmatpush1.msra.mxu0 0.0
        %4533 = vmatprep.subr.mxu0 0.0
        %4534 = vmatpush1.msra.mxu0 0.0
        %4535 = vmatprep.subr.mxu0 0.0
        %4536 = vmatpush1.msra.mxu0 0.0
        %4537 = vmatprep.subr.mxu0 0.0
        %4538 = vmatpush1.msra.mxu0 0.0
        %4539 = vmatprep.mubr.f32.mxu0 0.0
        %4540 = vmatmul.mubr.f32.gmra.mrb[0].mxu0 %v4403
        %v4541 = vpop.f32.mrb[0].mxu0
        %v4542 = vadd.f32 0.0, %v4541
        %v4543 = vpop.f32.mrb[0].mxu0
        %4544 = vdwg.mxu0
        %4545 = vmatprep.subr.mxu0 0.0
        %4546 = vmatpush1.msra.mxu0 %v1258
        %4547 = vmatprep.subr.mxu0 0.0
        %4548 = vmatpush1.msra.mxu0 %v1259
        %4549 = vmatprep.subr.mxu0 0.0
        %4550 = vmatpush1.msra.mxu0 0.0
        %4551 = vmatprep.subr.mxu0 0.0
        %4552 = vmatpush1.msra.mxu0 0.0
        %4553 = vmatprep.subr.mxu0 0.0
        %4554 = vmatpush1.msra.mxu0 0.0
        %4555 = vmatprep.subr.mxu0 0.0
        %4556 = vmatpush1.msra.mxu0 0.0
        %4557 = vmatprep.subr.mxu0 0.0
        %4558 = vmatpush1.msra.mxu0 0.0
        %4559 = vmatprep.subr.mxu0 0.0
        %4560 = vmatpush1.msra.mxu0 0.0
        %4561 = vmatprep.subr.mxu0 0.0
        %4562 = vmatpush1.msra.mxu0 0.0
        %4563 = vmatprep.subr.mxu0 0.0
        %4564 = vmatpush1.msra.mxu0 0.0
        %4565 = vmatprep.subr.mxu0 0.0
        %4566 = vmatpush1.msra.mxu0 0.0
        %4567 = vmatprep.subr.mxu0 0.0
        %4568 = vmatpush1.msra.mxu0 0.0
        %4569 = vmatprep.subr.mxu0 0.0
        %4570 = vmatpush1.msra.mxu0 0.0
        %4571 = vmatprep.subr.mxu0 0.0
        %4572 = vmatpush1.msra.mxu0 0.0
        %4573 = vmatprep.subr.mxu0 0.0
        %4574 = vmatpush1.msra.mxu0 0.0
        %4575 = vmatprep.subr.mxu0 0.0
        %4576 = vmatpush1.msra.mxu0 0.0
        %4577 = vmatprep.subr.mxu0 0.0
        %4578 = vmatpush1.msra.mxu0 0.0
        %4579 = vmatprep.subr.mxu0 0.0
        %4580 = vmatpush1.msra.mxu0 0.0
        %4581 = vmatprep.subr.mxu0 0.0
        %4582 = vmatpush1.msra.mxu0 0.0
        %4583 = vmatprep.subr.mxu0 0.0
        %4584 = vmatpush1.msra.mxu0 0.0
        %4585 = vmatprep.subr.mxu0 0.0
        %4586 = vmatpush1.msra.mxu0 0.0
        %4587 = vmatprep.subr.mxu0 0.0
        %4588 = vmatpush1.msra.mxu0 0.0
        %4589 = vmatprep.subr.mxu0 0.0
        %4590 = vmatpush1.msra.mxu0 0.0
        %4591 = vmatprep.subr.mxu0 0.0
        %4592 = vmatpush1.msra.mxu0 0.0
        %4593 = vmatprep.subr.mxu0 0.0
        %4594 = vmatpush1.msra.mxu0 0.0
        %4595 = vmatprep.subr.mxu0 0.0
        %4596 = vmatpush1.msra.mxu0 0.0
        %4597 = vmatprep.subr.mxu0 0.0
        %4598 = vmatpush1.msra.mxu0 0.0
        %4599 = vmatprep.subr.mxu0 0.0
        %4600 = vmatpush1.msra.mxu0 0.0
        %4601 = vmatprep.subr.mxu0 0.0
        %4602 = vmatpush1.msra.mxu0 0.0
        %4603 = vmatprep.subr.mxu0 0.0
        %4604 = vmatpush1.msra.mxu0 0.0
        %4605 = vmatprep.subr.mxu0 0.0
        %4606 = vmatpush1.msra.mxu0 0.0
        %4607 = vmatprep.subr.mxu0 0.0
        %4608 = vmatpush1.msra.mxu0 0.0
        %4609 = vmatprep.mubr.f32.mxu0 0.0
        %4610 = vmatmul.mubr.f32.gmra.mrb[0].mxu0 %v4403
        %v4611 = vpop.f32.mrb[0].mxu0
        %v4612 = vadd.f32 %v1627, %v4611
        %v4613 = vpop.f32.mrb[0].mxu0
        %4614 = vdwg.mxu0
        %v4615 = vadd.f32 %v670, %v4259
        %v4616 = vand.u32 2147483647, %v4615
        %v4617 = vsub.f32 0.0, %v4616
        %v4618 = vmul.f32 %v4617, 1.442695
        %v4619 = vpow.pop %v4618
        %vm4620 = vcmp.ge.f32.partialorder %v4615, 0.0
        %v4621 = vadd.f32 %v4619, 1.0
        %v4622 = vrcp.pop %v4621
        %v4623 = vmul.f32 1.0, %v4622
        %v4624 = vmul.f32 %v4619, %v4622
        %v4625 = vsel %vm4620, %v4623, %v4624
        %v4626 = vadd.f32 %v784, %v4329
        %v4627 = vand.u32 2147483647, %v4626
        %v4628 = vsub.f32 0.0, %v4627
        %v4629 = vmul.f32 %v4628, 1.442695
        %v4630 = vpow.pop %v4629
        %vm4631 = vcmp.ge.f32.partialorder %v4626, 0.0
        %v4632 = vadd.f32 %v4630, 1.0
        %v4633 = vrcp.pop %v4632
        %v4634 = vmul.f32 1.0, %v4633
        %v4635 = vmul.f32 %v4630, %v4633
        %v4636 = vsel %vm4631, %v4634, %v4635
        %v4637 = vmul.f32 %v4625, %v4399
        %v4638 = vadd.f32 %v898, %v4637
        %v4639 = vtanh.pop %v4638
        %v4640 = vsub.f32 1.0, %v4636
        %v4641 = vmul.f32 %v4640, %v4639
        %v4642 = vmul.f32 %v4636, %v4157
        %v4643 = vadd.f32 %v4641, %v4642
        %v4644 = vadd.f32 %v4158, %v4643
        %v4645 = vadd.f32 %v987, %v4472
        %v4646 = vand.u32 2147483647, %v4645
        %v4647 = vsub.f32 0.0, %v4646
        %v4648 = vmul.f32 %v4647, 1.442695
        %v4649 = vpow.pop %v4648
        %vm4650 = vcmp.ge.f32.partialorder %v4645, 0.0
        %v4651 = vadd.f32 %v4649, 1.0
        %v4652 = vrcp.pop %v4651
        %v4653 = vmul.f32 1.0, %v4652
        %v4654 = vmul.f32 %v4649, %v4652
        %v4655 = vsel %vm4650, %v4653, %v4654
        %v4656 = vadd.f32 %v1101, %v4542
        %v4657 = vand.u32 2147483647, %v4656
        %v4658 = vsub.f32 0.0, %v4657
        %v4659 = vmul.f32 %v4658, 1.442695
        %v4660 = vpow.pop %v4659
        %vm4661 = vcmp.ge.f32.partialorder %v4656, 0.0
        %v4662 = vadd.f32 %v4660, 1.0
        %v4663 = vrcp.pop %v4662
        %v4664 = vmul.f32 1.0, %v4663
        %v4665 = vmul.f32 %v4660, %v4663
        %v4666 = vsel %vm4661, %v4664, %v4665
        %v4667 = vmul.f32 %v4655, %v4612
        %v4668 = vadd.f32 %v1215, %v4667
        %v4669 = vtanh.pop %v4668
        %v4670 = vsub.f32 1.0, %v4666
        %v4671 = vmul.f32 %v4670, %v4669
        %v4672 = vmul.f32 %v4666, %v4187
        %v4673 = vadd.f32 %v4671, %v4672
        %v4674 = vadd.f32 %v4188, %v4673
        %v4676 = vsel %vm1263, %v4643, 0
        %4678 = vmatprep.subr.mxu0 0.0
        %4679 = vmatpush1.msra.mxu0 %v1248
        %4680 = vmatprep.subr.mxu0 0.0
        %4681 = vmatpush1.msra.mxu0 %v1249
        %4682 = vmatprep.subr.mxu0 0.0
        %4683 = vmatpush1.msra.mxu0 0.0
        %4684 = vmatprep.subr.mxu0 0.0
        %4685 = vmatpush1.msra.mxu0 0.0
        %4686 = vmatprep.subr.mxu0 0.0
        %4687 = vmatpush1.msra.mxu0 0.0
        %4688 = vmatprep.subr.mxu0 0.0
        %4689 = vmatpush1.msra.mxu0 0.0
        %4690 = vmatprep.subr.mxu0 0.0
        %4691 = vmatpush1.msra.mxu0 0.0
        %4692 = vmatprep.subr.mxu0 0.0
        %4693 = vmatpush1.msra.mxu0 0.0
        %4694 = vmatprep.subr.mxu0 0.0
        %4695 = vmatpush1.msra.mxu0 0.0
        %4696 = vmatprep.subr.mxu0 0.0
        %4697 = vmatpush1.msra.mxu0 0.0
        %4698 = vmatprep.subr.mxu0 0.0
        %4699 = vmatpush1.msra.mxu0 0.0
        %4700 = vmatprep.subr.mxu0 0.0
        %4701 = vmatpush1.msra.mxu0 0.0
        %4702 = vmatprep.subr.mxu0 0.0
        %4703 = vmatpush1.msra.mxu0 0.0
        %4704 = vmatprep.subr.mxu0 0.0
        %4705 = vmatpush1.msra.mxu0 0.0
        %4706 = vmatprep.subr.mxu0 0.0
        %4707 = vmatpush1.msra.mxu0 0.0
        %4708 = vmatprep.subr.mxu0 0.0
        %4709 = vmatpush1.msra.mxu0 0.0
        %4710 = vmatprep.subr.mxu0 0.0
        %4711 = vmatpush1.msra.mxu0 0.0
        %4712 = vmatprep.subr.mxu0 0.0
        %4713 = vmatpush1.msra.mxu0 0.0
        %4714 = vmatprep.subr.mxu0 0.0
        %4715 = vmatpush1.msra.mxu0 0.0
        %4716 = vmatprep.subr.mxu0 0.0
        %4717 = vmatpush1.msra.mxu0 0.0
        %4718 = vmatprep.subr.mxu0 0.0
        %4719 = vmatpush1.msra.mxu0 0.0
        %4720 = vmatprep.subr.mxu0 0.0
        %4721 = vmatpush1.msra.mxu0 0.0
        %4722 = vmatprep.subr.mxu0 0.0
        %4723 = vmatpush1.msra.mxu0 0.0
        %4724 = vmatprep.subr.mxu0 0.0
        %4725 = vmatpush1.msra.mxu0 0.0
        %4726 = vmatprep.subr.mxu0 0.0
        %4727 = vmatpush1.msra.mxu0 0.0
        %4728 = vmatprep.subr.mxu0 0.0
        %4729 = vmatpush1.msra.mxu0 0.0
        %4730 = vmatprep.subr.mxu0 0.0
        %4731 = vmatpush1.msra.mxu0 0.0
        %4732 = vmatprep.subr.mxu0 0.0
        %4733 = vmatpush1.msra.mxu0 0.0
        %4734 = vmatprep.subr.mxu0 0.0
        %4735 = vmatpush1.msra.mxu0 0.0
        %4736 = vmatprep.subr.mxu0 0.0
        %4737 = vmatpush1.msra.mxu0 0.0
        %4738 = vmatprep.subr.mxu0 0.0
        %4739 = vmatpush1.msra.mxu0 0.0
        %4740 = vmatprep.subr.mxu0 0.0
        %4741 = vmatpush1.msra.mxu0 0.0
        %4742 = vmatprep.mubr.f32.mxu0 0.0
        %4743 = vmatmul.mubr.f32.gmra.mrb[0].mxu0 %v4676
        %v4744 = vpop.f32.mrb[0].mxu0
        %v4745 = vadd.f32 0.0, %v4744
        %v4746 = vpop.f32.mrb[0].mxu0
        %4747 = vdwg.mxu0
        %4748 = vmatprep.subr.mxu0 0.0
        %4749 = vmatpush1.msra.mxu0 %v1250
        %4750 = vmatprep.subr.mxu0 0.0
        %4751 = vmatpush1.msra.mxu0 %v1251
        %4752 = vmatprep.subr.mxu0 0.0
        %4753 = vmatpush1.msra.mxu0 0.0
        %4754 = vmatprep.subr.mxu0 0.0
        %4755 = vmatpush1.msra.mxu0 0.0
        %4756 = vmatprep.subr.mxu0 0.0
        %4757 = vmatpush1.msra.mxu0 0.0
        %4758 = vmatprep.subr.mxu0 0.0
        %4759 = vmatpush1.msra.mxu0 0.0
        %4760 = vmatprep.subr.mxu0 0.0
        %4761 = vmatpush1.msra.mxu0 0.0
        %4762 = vmatprep.subr.mxu0 0.0
        %4763 = vmatpush1.msra.mxu0 0.0
        %4764 = vmatprep.subr.mxu0 0.0
        %4765 = vmatpush1.msra.mxu0 0.0
        %4766 = vmatprep.subr.mxu0 0.0
        %4767 = vmatpush1.msra.mxu0 0.0
        %4768 = vmatprep.subr.mxu0 0.0
        %4769 = vmatpush1.msra.mxu0 0.0
        %4770 = vmatprep.subr.mxu0 0.0
        %4771 = vmatpush1.msra.mxu0 0.0
        %4772 = vmatprep.subr.mxu0 0.0
        %4773 = vmatpush1.msra.mxu0 0.0
        %4774 = vmatprep.subr.mxu0 0.0
        %4775 = vmatpush1.msra.mxu0 0.0
        %4776 = vmatprep.subr.mxu0 0.0
        %4777 = vmatpush1.msra.mxu0 0.0
        %4778 = vmatprep.subr.mxu0 0.0
        %4779 = vmatpush1.msra.mxu0 0.0
        %4780 = vmatprep.subr.mxu0 0.0
        %4781 = vmatpush1.msra.mxu0 0.0
        %4782 = vmatprep.subr.mxu0 0.0
        %4783 = vmatpush1.msra.mxu0 0.0
        %4784 = vmatprep.subr.mxu0 0.0
        %4785 = vmatpush1.msra.mxu0 0.0
        %4786 = vmatprep.subr.mxu0 0.0
        %4787 = vmatpush1.msra.mxu0 0.0
        %4788 = vmatprep.subr.mxu0 0.0
        %4789 = vmatpush1.msra.mxu0 0.0
        %4790 = vmatprep.subr.mxu0 0.0
        %4791 = vmatpush1.msra.mxu0 0.0
        %4792 = vmatprep.subr.mxu0 0.0
        %4793 = vmatpush1.msra.mxu0 0.0
        %4794 = vmatprep.subr.mxu0 0.0
        %4795 = vmatpush1.msra.mxu0 0.0
        %4796 = vmatprep.subr.mxu0 0.0
        %4797 = vmatpush1.msra.mxu0 0.0
        %4798 = vmatprep.subr.mxu0 0.0
        %4799 = vmatpush1.msra.mxu0 0.0
        %4800 = vmatprep.subr.mxu0 0.0
        %4801 = vmatpush1.msra.mxu0 0.0
        %4802 = vmatprep.subr.mxu0 0.0
        %4803 = vmatpush1.msra.mxu0 0.0
        %4804 = vmatprep.subr.mxu0 0.0
        %4805 = vmatpush1.msra.mxu0 0.0
        %4806 = vmatprep.subr.mxu0 0.0
        %4807 = vmatpush1.msra.mxu0 0.0
        %4808 = vmatprep.subr.mxu0 0.0
        %4809 = vmatpush1.msra.mxu0 0.0
        %4810 = vmatprep.subr.mxu0 0.0
        %4811 = vmatpush1.msra.mxu0 0.0
        %4812 = vmatprep.mubr.f32.mxu0 0.0
        %4813 = vmatmul.mubr.f32.gmra.mrb[0].mxu0 %v4676
        %v4814 = vpop.f32.mrb[0].mxu0
        %v4815 = vadd.f32 0.0, %v4814
        %v4816 = vpop.f32.mrb[0].mxu0
        %4817 = vdwg.mxu0
        %4818 = vmatprep.subr.mxu0 0.0
        %4819 = vmatpush1.msra.mxu0 %v1252
        %4820 = vmatprep.subr.mxu0 0.0
        %4821 = vmatpush1.msra.mxu0 %v1253
        %4822 = vmatprep.subr.mxu0 0.0
        %4823 = vmatpush1.msra.mxu0 0.0
        %4824 = vmatprep.subr.mxu0 0.0
        %4825 = vmatpush1.msra.mxu0 0.0
        %4826 = vmatprep.subr.mxu0 0.0
        %4827 = vmatpush1.msra.mxu0 0.0
        %4828 = vmatprep.subr.mxu0 0.0
        %4829 = vmatpush1.msra.mxu0 0.0
        %4830 = vmatprep.subr.mxu0 0.0
        %4831 = vmatpush1.msra.mxu0 0.0
        %4832 = vmatprep.subr.mxu0 0.0
        %4833 = vmatpush1.msra.mxu0 0.0
        %4834 = vmatprep.subr.mxu0 0.0
        %4835 = vmatpush1.msra.mxu0 0.0
        %4836 = vmatprep.subr.mxu0 0.0
        %4837 = vmatpush1.msra.mxu0 0.0
        %4838 = vmatprep.subr.mxu0 0.0
        %4839 = vmatpush1.msra.mxu0 0.0
        %4840 = vmatprep.subr.mxu0 0.0
        %4841 = vmatpush1.msra.mxu0 0.0
        %4842 = vmatprep.subr.mxu0 0.0
        %4843 = vmatpush1.msra.mxu0 0.0
        %4844 = vmatprep.subr.mxu0 0.0
        %4845 = vmatpush1.msra.mxu0 0.0
        %4846 = vmatprep.subr.mxu0 0.0
        %4847 = vmatpush1.msra.mxu0 0.0
        %4848 = vmatprep.subr.mxu0 0.0
        %4849 = vmatpush1.msra.mxu0 0.0
        %4850 = vmatprep.subr.mxu0 0.0
        %4851 = vmatpush1.msra.mxu0 0.0
        %4852 = vmatprep.subr.mxu0 0.0
        %4853 = vmatpush1.msra.mxu0 0.0
        %4854 = vmatprep.subr.mxu0 0.0
        %4855 = vmatpush1.msra.mxu0 0.0
        %4856 = vmatprep.subr.mxu0 0.0
        %4857 = vmatpush1.msra.mxu0 0.0
        %4858 = vmatprep.subr.mxu0 0.0
        %4859 = vmatpush1.msra.mxu0 0.0
        %4860 = vmatprep.subr.mxu0 0.0
        %4861 = vmatpush1.msra.mxu0 0.0
        %4862 = vmatprep.subr.mxu0 0.0
        %4863 = vmatpush1.msra.mxu0 0.0
        %4864 = vmatprep.subr.mxu0 0.0
        %4865 = vmatpush1.msra.mxu0 0.0
        %4866 = vmatprep.subr.mxu0 0.0
        %4867 = vmatpush1.msra.mxu0 0.0
        %4868 = vmatprep.subr.mxu0 0.0
        %4869 = vmatpush1.msra.mxu0 0.0
        %4870 = vmatprep.subr.mxu0 0.0
        %4871 = vmatpush1.msra.mxu0 0.0
        %4872 = vmatprep.subr.mxu0 0.0
        %4873 = vmatpush1.msra.mxu0 0.0
        %4874 = vmatprep.subr.mxu0 0.0
        %4875 = vmatpush1.msra.mxu0 0.0
        %4876 = vmatprep.subr.mxu0 0.0
        %4877 = vmatpush1.msra.mxu0 0.0
        %4878 = vmatprep.subr.mxu0 0.0
        %4879 = vmatpush1.msra.mxu0 0.0
        %4880 = vmatprep.subr.mxu0 0.0
        %4881 = vmatpush1.msra.mxu0 0.0
        %4882 = vmatprep.mubr.f32.mxu0 0.0
        %4883 = vmatmul.mubr.f32.gmra.mrb[0].mxu0 %v4676
        %v4884 = vpop.f32.mrb[0].mxu0
        %v4885 = vadd.f32 %v1411, %v4884
        %v4886 = vpop.f32.mrb[0].mxu0
        %4887 = vdwg.mxu0
        %v4889 = vsel %vm1263, %v4673, 0
        %4891 = vmatprep.subr.mxu0 0.0
        %4892 = vmatpush1.msra.mxu0 %v1254
        %4893 = vmatprep.subr.mxu0 0.0
        %4894 = vmatpush1.msra.mxu0 %v1255
        %4895 = vmatprep.subr.mxu0 0.0
        %4896 = vmatpush1.msra.mxu0 0.0
        %4897 = vmatprep.subr.mxu0 0.0
        %4898 = vmatpush1.msra.mxu0 0.0
        %4899 = vmatprep.subr.mxu0 0.0
        %4900 = vmatpush1.msra.mxu0 0.0
        %4901 = vmatprep.subr.mxu0 0.0
        %4902 = vmatpush1.msra.mxu0 0.0
        %4903 = vmatprep.subr.mxu0 0.0
        %4904 = vmatpush1.msra.mxu0 0.0
        %4905 = vmatprep.subr.mxu0 0.0
        %4906 = vmatpush1.msra.mxu0 0.0
        %4907 = vmatprep.subr.mxu0 0.0
        %4908 = vmatpush1.msra.mxu0 0.0
        %4909 = vmatprep.subr.mxu0 0.0
        %4910 = vmatpush1.msra.mxu0 0.0
        %4911 = vmatprep.subr.mxu0 0.0
        %4912 = vmatpush1.msra.mxu0 0.0
        %4913 = vmatprep.subr.mxu0 0.0
        %4914 = vmatpush1.msra.mxu0 0.0
        %4915 = vmatprep.subr.mxu0 0.0
        %4916 = vmatpush1.msra.mxu0 0.0
        %4917 = vmatprep.subr.mxu0 0.0
        %4918 = vmatpush1.msra.mxu0 0.0
        %4919 = vmatprep.subr.mxu0 0.0
        %4920 = vmatpush1.msra.mxu0 0.0
        %4921 = vmatprep.subr.mxu0 0.0
        %4922 = vmatpush1.msra.mxu0 0.0
        %4923 = vmatprep.subr.mxu0 0.0
        %4924 = vmatpush1.msra.mxu0 0.0
        %4925 = vmatprep.subr.mxu0 0.0
        %4926 = vmatpush1.msra.mxu0 0.0
        %4927 = vmatprep.subr.mxu0 0.0
        %4928 = vmatpush1.msra.mxu0 0.0
        %4929 = vmatprep.subr.mxu0 0.0
        %4930 = vmatpush1.msra.mxu0 0.0
        %4931 = vmatprep.subr.mxu0 0.0
        %4932 = vmatpush1.msra.mxu0 0.0
        %4933 = vmatprep.subr.mxu0 0.0
        %4934 = vmatpush1.msra.mxu0 0.0
        %4935 = vmatprep.subr.mxu0 0.0
        %4936 = vmatpush1.msra.mxu0 0.0
        %4937 = vmatprep.subr.mxu0 0.0
        %4938 = vmatpush1.msra.mxu0 0.0
        %4939 = vmatprep.subr.mxu0 0.0
        %4940 = vmatpush1.msra.mxu0 0.0
        %4941 = vmatprep.subr.mxu0 0.0
        %4942 = vmatpush1.msra.mxu0 0.0
        %4943 = vmatprep.subr.mxu0 0.0
        %4944 = vmatpush1.msra.mxu0 0.0
        %4945 = vmatprep.subr.mxu0 0.0
        %4946 = vmatpush1.msra.mxu0 0.0
        %4947 = vmatprep.subr.mxu0 0.0
        %4948 = vmatpush1.msra.mxu0 0.0
        %4949 = vmatprep.subr.mxu0 0.0
        %4950 = vmatpush1.msra.mxu0 0.0
        %4951 = vmatprep.subr.mxu0 0.0
        %4952 = vmatpush1.msra.mxu0 0.0
        %4953 = vmatprep.subr.mxu0 0.0
        %4954 = vmatpush1.msra.mxu0 0.0
        %4955 = vmatprep.mubr.f32.mxu0 0.0
        %4956 = vmatmul.mubr.f32.gmra.mrb[0].mxu0 %v4889
        %v4957 = vpop.f32.mrb[0].mxu0
        %v4958 = vadd.f32 0.0, %v4957
        %v4959 = vpop.f32.mrb[0].mxu0
        %4960 = vdwg.mxu0
        %4961 = vmatprep.subr.mxu0 0.0
        %4962 = vmatpush1.msra.mxu0 %v1256
        %4963 = vmatprep.subr.mxu0 0.0
        %4964 = vmatpush1.msra.mxu0 %v1257
        %4965 = vmatprep.subr.mxu0 0.0
        %4966 = vmatpush1.msra.mxu0 0.0
        %4967 = vmatprep.subr.mxu0 0.0
        %4968 = vmatpush1.msra.mxu0 0.0
        %4969 = vmatprep.subr.mxu0 0.0
        %4970 = vmatpush1.msra.mxu0 0.0
        %4971 = vmatprep.subr.mxu0 0.0
        %4972 = vmatpush1.msra.mxu0 0.0
        %4973 = vmatprep.subr.mxu0 0.0
        %4974 = vmatpush1.msra.mxu0 0.0
        %4975 = vmatprep.subr.mxu0 0.0
        %4976 = vmatpush1.msra.mxu0 0.0
        %4977 = vmatprep.subr.mxu0 0.0
        %4978 = vmatpush1.msra.mxu0 0.0
        %4979 = vmatprep.subr.mxu0 0.0
        %4980 = vmatpush1.msra.mxu0 0.0
        %4981 = vmatprep.subr.mxu0 0.0
        %4982 = vmatpush1.msra.mxu0 0.0
        %4983 = vmatprep.subr.mxu0 0.0
        %4984 = vmatpush1.msra.mxu0 0.0
        %4985 = vmatprep.subr.mxu0 0.0
        %4986 = vmatpush1.msra.mxu0 0.0
        %4987 = vmatprep.subr.mxu0 0.0
        %4988 = vmatpush1.msra.mxu0 0.0
        %4989 = vmatprep.subr.mxu0 0.0
        %4990 = vmatpush1.msra.mxu0 0.0
        %4991 = vmatprep.subr.mxu0 0.0
        %4992 = vmatpush1.msra.mxu0 0.0
        %4993 = vmatprep.subr.mxu0 0.0
        %4994 = vmatpush1.msra.mxu0 0.0
        %4995 = vmatprep.subr.mxu0 0.0
        %4996 = vmatpush1.msra.mxu0 0.0
        %4997 = vmatprep.subr.mxu0 0.0
        %4998 = vmatpush1.msra.mxu0 0.0
        %4999 = vmatprep.subr.mxu0 0.0
        %5000 = vmatpush1.msra.mxu0 0.0
        %5001 = vmatprep.subr.mxu0 0.0
        %5002 = vmatpush1.msra.mxu0 0.0
        %5003 = vmatprep.subr.mxu0 0.0
        %5004 = vmatpush1.msra.mxu0 0.0
        %5005 = vmatprep.subr.mxu0 0.0
        %5006 = vmatpush1.msra.mxu0 0.0
        %5007 = vmatprep.subr.mxu0 0.0
        %5008 = vmatpush1.msra.mxu0 0.0
        %5009 = vmatprep.subr.mxu0 0.0
        %5010 = vmatpush1.msra.mxu0 0.0
        %5011 = vmatprep.subr.mxu0 0.0
        %5012 = vmatpush1.msra.mxu0 0.0
        %5013 = vmatprep.subr.mxu0 0.0
        %5014 = vmatpush1.msra.mxu0 0.0
        %5015 = vmatprep.subr.mxu0 0.0
        %5016 = vmatpush1.msra.mxu0 0.0
        %5017 = vmatprep.subr.mxu0 0.0
        %5018 = vmatpush1.msra.mxu0 0.0
        %5019 = vmatprep.subr.mxu0 0.0
        %5020 = vmatpush1.msra.mxu0 0.0
        %5021 = vmatprep.subr.mxu0 0.0
        %5022 = vmatpush1.msra.mxu0 0.0
        %5023 = vmatprep.subr.mxu0 0.0
        %5024 = vmatpush1.msra.mxu0 0.0
        %5025 = vmatprep.mubr.f32.mxu0 0.0
        %5026 = vmatmul.mubr.f32.gmra.mrb[0].mxu0 %v4889
        %v5027 = vpop.f32.mrb[0].mxu0
        %v5028 = vadd.f32 0.0, %v5027
        %v5029 = vpop.f32.mrb[0].mxu0
        %5030 = vdwg.mxu0
        %5031 = vmatprep.subr.mxu0 0.0
        %5032 = vmatpush1.msra.mxu0 %v1258
        %5033 = vmatprep.subr.mxu0 0.0
        %5034 = vmatpush1.msra.mxu0 %v1259
        %5035 = vmatprep.subr.mxu0 0.0
        %5036 = vmatpush1.msra.mxu0 0.0
        %5037 = vmatprep.subr.mxu0 0.0
        %5038 = vmatpush1.msra.mxu0 0.0
        %5039 = vmatprep.subr.mxu0 0.0
        %5040 = vmatpush1.msra.mxu0 0.0
        %5041 = vmatprep.subr.mxu0 0.0
        %5042 = vmatpush1.msra.mxu0 0.0
        %5043 = vmatprep.subr.mxu0 0.0
        %5044 = vmatpush1.msra.mxu0 0.0
        %5045 = vmatprep.subr.mxu0 0.0
        %5046 = vmatpush1.msra.mxu0 0.0
        %5047 = vmatprep.subr.mxu0 0.0
        %5048 = vmatpush1.msra.mxu0 0.0
        %5049 = vmatprep.subr.mxu0 0.0
        %5050 = vmatpush1.msra.mxu0 0.0
        %5051 = vmatprep.subr.mxu0 0.0
        %5052 = vmatpush1.msra.mxu0 0.0
        %5053 = vmatprep.subr.mxu0 0.0
        %5054 = vmatpush1.msra.mxu0 0.0
        %5055 = vmatprep.subr.mxu0 0.0
        %5056 = vmatpush1.msra.mxu0 0.0
        %5057 = vmatprep.subr.mxu0 0.0
        %5058 = vmatpush1.msra.mxu0 0.0
        %5059 = vmatprep.subr.mxu0 0.0
        %5060 = vmatpush1.msra.mxu0 0.0
        %5061 = vmatprep.subr.mxu0 0.0
        %5062 = vmatpush1.msra.mxu0 0.0
        %5063 = vmatprep.subr.mxu0 0.0
        %5064 = vmatpush1.msra.mxu0 0.0
        %5065 = vmatprep.subr.mxu0 0.0
        %5066 = vmatpush1.msra.mxu0 0.0
        %5067 = vmatprep.subr.mxu0 0.0
        %5068 = vmatpush1.msra.mxu0 0.0
        %5069 = vmatprep.subr.mxu0 0.0
        %5070 = vmatpush1.msra.mxu0 0.0
        %5071 = vmatprep.subr.mxu0 0.0
        %5072 = vmatpush1.msra.mxu0 0.0
        %5073 = vmatprep.subr.mxu0 0.0
        %5074 = vmatpush1.msra.mxu0 0.0
        %5075 = vmatprep.subr.mxu0 0.0
        %5076 = vmatpush1.msra.mxu0 0.0
        %5077 = vmatprep.subr.mxu0 0.0
        %5078 = vmatpush1.msra.mxu0 0.0
        %5079 = vmatprep.subr.mxu0 0.0
        %5080 = vmatpush1.msra.mxu0 0.0
        %5081 = vmatprep.subr.mxu0 0.0
        %5082 = vmatpush1.msra.mxu0 0.0
        %5083 = vmatprep.subr.mxu0 0.0
        %5084 = vmatpush1.msra.mxu0 0.0
        %5085 = vmatprep.subr.mxu0 0.0
        %5086 = vmatpush1.msra.mxu0 0.0
        %5087 = vmatprep.subr.mxu0 0.0
        %5088 = vmatpush1.msra.mxu0 0.0
        %5089 = vmatprep.subr.mxu0 0.0
        %5090 = vmatpush1.msra.mxu0 0.0
        %5091 = vmatprep.subr.mxu0 0.0
        %5092 = vmatpush1.msra.mxu0 0.0
        %5093 = vmatprep.subr.mxu0 0.0
        %5094 = vmatpush1.msra.mxu0 0.0
        %5095 = vmatprep.mubr.f32.mxu0 0.0
        %5096 = vmatmul.mubr.f32.gmra.mrb[0].mxu0 %v4889
        %v5097 = vpop.f32.mrb[0].mxu0
        %v5098 = vadd.f32 %v1627, %v5097
        %v5099 = vpop.f32.mrb[0].mxu0
        %5100 = vdwg.mxu0
        %v5101 = vadd.f32 %v675, %v4745
        %v5102 = vand.u32 2147483647, %v5101
        %v5103 = vsub.f32 0.0, %v5102
        %v5104 = vmul.f32 %v5103, 1.442695
        %v5105 = vpow.pop %v5104
        %vm5106 = vcmp.ge.f32.partialorder %v5101, 0.0
        %v5107 = vadd.f32 %v5105, 1.0
        %v5108 = vrcp.pop %v5107
        %v5109 = vmul.f32 1.0, %v5108
        %v5110 = vmul.f32 %v5105, %v5108
        %v5111 = vsel %vm5106, %v5109, %v5110
        %v5112 = vadd.f32 %v789, %v4815
        %v5113 = vand.u32 2147483647, %v5112
        %v5114 = vsub.f32 0.0, %v5113
        %v5115 = vmul.f32 %v5114, 1.442695
        %v5116 = vpow.pop %v5115
        %vm5117 = vcmp.ge.f32.partialorder %v5112, 0.0
        %v5118 = vadd.f32 %v5116, 1.0
        %v5119 = vrcp.pop %v5118
        %v5120 = vmul.f32 1.0, %v5119
        %v5121 = vmul.f32 %v5116, %v5119
        %v5122 = vsel %vm5117, %v5120, %v5121
        %v5123 = vmul.f32 %v5111, %v4885
        %v5124 = vadd.f32 %v903, %v5123
        %v5125 = vtanh.pop %v5124
        %v5126 = vsub.f32 1.0, %v5122
        %v5127 = vmul.f32 %v5126, %v5125
        %v5128 = vmul.f32 %v5122, %v4643
        %v5129 = vadd.f32 %v5127, %v5128
        %v5130 = vadd.f32 %v4644, %v5129
        %v5131 = vadd.f32 %v982, %v4958
        %v5132 = vand.u32 2147483647, %v5131
        %v5133 = vsub.f32 0.0, %v5132
        %v5134 = vmul.f32 %v5133, 1.442695
        %v5135 = vpow.pop %v5134
        %vm5136 = vcmp.ge.f32.partialorder %v5131, 0.0
        %v5137 = vadd.f32 %v5135, 1.0
        %v5138 = vrcp.pop %v5137
        %v5139 = vmul.f32 1.0, %v5138
        %v5140 = vmul.f32 %v5135, %v5138
        %v5141 = vsel %vm5136, %v5139, %v5140
        %v5142 = vadd.f32 %v1096, %v5028
        %v5143 = vand.u32 2147483647, %v5142
        %v5144 = vsub.f32 0.0, %v5143
        %v5145 = vmul.f32 %v5144, 1.442695
        %v5146 = vpow.pop %v5145
        %vm5147 = vcmp.ge.f32.partialorder %v5142, 0.0
        %v5148 = vadd.f32 %v5146, 1.0
        %v5149 = vrcp.pop %v5148
        %v5150 = vmul.f32 1.0, %v5149
        %v5151 = vmul.f32 %v5146, %v5149
        %v5152 = vsel %vm5147, %v5150, %v5151
        %v5153 = vmul.f32 %v5141, %v5098
        %v5154 = vadd.f32 %v1210, %v5153
        %v5155 = vtanh.pop %v5154
        %v5156 = vsub.f32 1.0, %v5152
        %v5157 = vmul.f32 %v5156, %v5155
        %v5158 = vmul.f32 %v5152, %v4673
        %v5159 = vadd.f32 %v5157, %v5158
        %v5160 = vadd.f32 %v4674, %v5159
        %v5161 = vmul.f32 %v5130, 0.125
        %v5162 = vmul.f32 %v5160, 0.125
        %5164 = vrot.lane.b32.xlu0 %v5162, 16
        %v5165 = vpop.permute.xlu0 %5164
        %v5167 = vsel %vm1263, %v5161, %v5165
        %v5168 = vld [vmem:[%s5] sm:$0xff]
        %v5169 = vld [vmem:[%s6] sm:$0xff]
        %v5170 = vld [vmem:[%s6 + $0x8] sm:$0xff]
        %v5171 = vld [vmem:[%s6 + $0x10] sm:$0xff]
        %v5172 = vld [vmem:[%s6 + $0x18] sm:$0xff]
        %vm5173 = vcmask 261120
        %v5175 = vsel %vm5173, %v5167, 0
        %5177 = vmatprep.subr.mxu0 0.0
        %5178 = vmatpush1.msra.mxu0 %v5169
        %5179 = vmatprep.subr.mxu0 0.0
        %5180 = vmatpush1.msra.mxu0 %v5170
        %5181 = vmatprep.subr.mxu0 0.0
        %5182 = vmatpush1.msra.mxu0 %v5171
        %5183 = vmatprep.subr.mxu0 0.0
        %5184 = vmatpush1.msra.mxu0 %v5172
        %5185 = vmatprep.subr.mxu0 0.0
        %5186 = vmatpush1.msra.mxu0 0.0
        %5187 = vmatprep.subr.mxu0 0.0
        %5188 = vmatpush1.msra.mxu0 0.0
        %5189 = vmatprep.subr.mxu0 0.0
        %5190 = vmatpush1.msra.mxu0 0.0
        %5191 = vmatprep.subr.mxu0 0.0
        %5192 = vmatpush1.msra.mxu0 0.0
        %5193 = vmatprep.subr.mxu0 0.0
        %5194 = vmatpush1.msra.mxu0 0.0
        %5195 = vmatprep.subr.mxu0 0.0
        %5196 = vmatpush1.msra.mxu0 0.0
        %5197 = vmatprep.subr.mxu0 0.0
        %5198 = vmatpush1.msra.mxu0 0.0
        %5199 = vmatprep.subr.mxu0 0.0
        %5200 = vmatpush1.msra.mxu0 0.0
        %5201 = vmatprep.subr.mxu0 0.0
        %5202 = vmatpush1.msra.mxu0 0.0
        %5203 = vmatprep.subr.mxu0 0.0
        %5204 = vmatpush1.msra.mxu0 0.0
        %5205 = vmatprep.subr.mxu0 0.0
        %5206 = vmatpush1.msra.mxu0 0.0
        %5207 = vmatprep.subr.mxu0 0.0
        %5208 = vmatpush1.msra.mxu0 0.0
        %5209 = vmatprep.subr.mxu0 0.0
        %5210 = vmatpush1.msra.mxu0 0.0
        %5211 = vmatprep.subr.mxu0 0.0
        %5212 = vmatpush1.msra.mxu0 0.0
        %5213 = vmatprep.subr.mxu0 0.0
        %5214 = vmatpush1.msra.mxu0 0.0
        %5215 = vmatprep.subr.mxu0 0.0
        %5216 = vmatpush1.msra.mxu0 0.0
        %5217 = vmatprep.subr.mxu0 0.0
        %5218 = vmatpush1.msra.mxu0 0.0
        %5219 = vmatprep.subr.mxu0 0.0
        %5220 = vmatpush1.msra.mxu0 0.0
        %5221 = vmatprep.subr.mxu0 0.0
        %5222 = vmatpush1.msra.mxu0 0.0
        %5223 = vmatprep.subr.mxu0 0.0
        %5224 = vmatpush1.msra.mxu0 0.0
        %5225 = vmatprep.subr.mxu0 0.0
        %5226 = vmatpush1.msra.mxu0 0.0
        %5227 = vmatprep.subr.mxu0 0.0
        %5228 = vmatpush1.msra.mxu0 0.0
        %5229 = vmatprep.subr.mxu0 0.0
        %5230 = vmatpush1.msra.mxu0 0.0
        %5231 = vmatprep.subr.mxu0 0.0
        %5232 = vmatpush1.msra.mxu0 0.0
        %5233 = vmatprep.subr.mxu0 0.0
        %5234 = vmatpush1.msra.mxu0 0.0
        %5235 = vmatprep.subr.mxu0 0.0
        %5236 = vmatpush1.msra.mxu0 0.0
        %5237 = vmatprep.subr.mxu0 0.0
        %5238 = vmatpush1.msra.mxu0 0.0
        %5239 = vmatprep.subr.mxu0 0.0
        %5240 = vmatpush1.msra.mxu0 0.0
        %5241 = vmatprep.mubr.f32.mxu0 0.0
        %5242 = vmatmul.mubr.f32.gmra.mrb[0].mxu0 %v5175
        %v5243 = vpop.f32.mrb[0].mxu0
        %v5244 = vadd.f32 0.0, %v5243
        %v5245 = vpop.f32.mrb[0].mxu0
        %5246 = vdwg.mxu0
        %v5247 = vld [vmem:[%s7] sm:$0x1]
        %v5249 = vlaneseq
        %v5250 = vshrl.u32 %v5249, 7
        %v5251 = vsub.s32 0, %v5250
        %v5252 = vrot.slane %v5247, %v5251
        %vm5254 = vcmask 64512
        %v5256 = vsel %vm5254, %v5168, 0
        %5258 = vmatprep.subr.mxu0 0.0
        %5259 = vmatpush1.msra.mxu0 %v5244
        %5260 = vmatprep.subr.mxu0 0.0
        %5261 = vmatpush1.msra.mxu0 0.0
        %5262 = vmatprep.subr.mxu0 0.0
        %5263 = vmatpush1.msra.mxu0 0.0
        %5264 = vmatprep.subr.mxu0 0.0
        %5265 = vmatpush1.msra.mxu0 0.0
        %5266 = vmatprep.subr.mxu0 0.0
        %5267 = vmatpush1.msra.mxu0 0.0
        %5268 = vmatprep.subr.mxu0 0.0
        %5269 = vmatpush1.msra.mxu0 0.0
        %5270 = vmatprep.subr.mxu0 0.0
        %5271 = vmatpush1.msra.mxu0 0.0
        %5272 = vmatprep.subr.mxu0 0.0
        %5273 = vmatpush1.msra.mxu0 0.0
        %5274 = vmatprep.subr.mxu0 0.0
        %5275 = vmatpush1.msra.mxu0 0.0
        %5276 = vmatprep.subr.mxu0 0.0
        %5277 = vmatpush1.msra.mxu0 0.0
        %5278 = vmatprep.subr.mxu0 0.0
        %5279 = vmatpush1.msra.mxu0 0.0
        %5280 = vmatprep.subr.mxu0 0.0
        %5281 = vmatpush1.msra.mxu0 0.0
        %5282 = vmatprep.subr.mxu0 0.0
        %5283 = vmatpush1.msra.mxu0 0.0
        %5284 = vmatprep.subr.mxu0 0.0
        %5285 = vmatpush1.msra.mxu0 0.0
        %5286 = vmatprep.subr.mxu0 0.0
        %5287 = vmatpush1.msra.mxu0 0.0
        %5288 = vmatprep.subr.mxu0 0.0
        %5289 = vmatpush1.msra.mxu0 0.0
        %5290 = vmatprep.subr.mxu0 0.0
        %5291 = vmatpush1.msra.mxu0 0.0
        %5292 = vmatprep.subr.mxu0 0.0
        %5293 = vmatpush1.msra.mxu0 0.0
        %5294 = vmatprep.subr.mxu0 0.0
        %5295 = vmatpush1.msra.mxu0 0.0
        %5296 = vmatprep.subr.mxu0 0.0
        %5297 = vmatpush1.msra.mxu0 0.0
        %5298 = vmatprep.subr.mxu0 0.0
        %5299 = vmatpush1.msra.mxu0 0.0
        %5300 = vmatprep.subr.mxu0 0.0
        %5301 = vmatpush1.msra.mxu0 0.0
        %5302 = vmatprep.subr.mxu0 0.0
        %5303 = vmatpush1.msra.mxu0 0.0
        %5304 = vmatprep.subr.mxu0 0.0
        %5305 = vmatpush1.msra.mxu0 0.0
        %5306 = vmatprep.subr.mxu0 0.0
        %5307 = vmatpush1.msra.mxu0 0.0
        %5308 = vmatprep.subr.mxu0 0.0
        %5309 = vmatpush1.msra.mxu0 0.0
        %5310 = vmatprep.subr.mxu0 0.0
        %5311 = vmatpush1.msra.mxu0 0.0
        %5312 = vmatprep.subr.mxu0 0.0
        %5313 = vmatpush1.msra.mxu0 0.0
        %5314 = vmatprep.subr.mxu0 0.0
        %5315 = vmatpush1.msra.mxu0 0.0
        %5316 = vmatprep.subr.mxu0 0.0
        %5317 = vmatpush1.msra.mxu0 0.0
        %5318 = vmatprep.subr.mxu0 0.0
        %5319 = vmatpush1.msra.mxu0 0.0
        %5320 = vmatprep.subr.mxu0 0.0
        %5321 = vmatpush1.msra.mxu0 0.0
        %5322 = vmatprep.mubr.f32.mxu0 0.0
        %5323 = vmatmul.mubr.f32.gmra.mrb[0].mxu0 %v5256
        %v5324 = vpop.f32.mrb[0].mxu0
        %v5325 = vadd.f32 %v5252, %v5324
        %v5326 = vpop.f32.mrb[0].mxu0
        %5327 = vdwg.mxu0
        %v5328 = vmax.f32 %v5325, 0.0
        %v5329 = vld [vmem:[%s8] sm:$0xff]
        %v5330 = vld [vmem:[%s8 + $0x8] sm:$0xff]
        %v5331 = vld [vmem:[%s8 + $0x10] sm:$0xff]
        %v5332 = vld [vmem:[%s8 + $0x18] sm:$0xff]
        %v5334 = vsel %vm5173, %v5328, 0
        %5336 = vmatprep.subr.mxu0 0.0
        %5337 = vmatpush1.msra.mxu0 %v5329
        %5338 = vmatprep.subr.mxu0 0.0
        %5339 = vmatpush1.msra.mxu0 %v5330
        %5340 = vmatprep.subr.mxu0 0.0
        %5341 = vmatpush1.msra.mxu0 %v5331
        %5342 = vmatprep.subr.mxu0 0.0
        %5343 = vmatpush1.msra.mxu0 %v5332
        %5344 = vmatprep.subr.mxu0 0.0
        %5345 = vmatpush1.msra.mxu0 0.0
        %5346 = vmatprep.subr.mxu0 0.0
        %5347 = vmatpush1.msra.mxu0 0.0
        %5348 = vmatprep.subr.mxu0 0.0
        %5349 = vmatpush1.msra.mxu0 0.0
        %5350 = vmatprep.subr.mxu0 0.0
        %5351 = vmatpush1.msra.mxu0 0.0
        %5352 = vmatprep.subr.mxu0 0.0
        %5353 = vmatpush1.msra.mxu0 0.0
        %5354 = vmatprep.subr.mxu0 0.0
        %5355 = vmatpush1.msra.mxu0 0.0
        %5356 = vmatprep.subr.mxu0 0.0
        %5357 = vmatpush1.msra.mxu0 0.0
        %5358 = vmatprep.subr.mxu0 0.0
        %5359 = vmatpush1.msra.mxu0 0.0
        %5360 = vmatprep.subr.mxu0 0.0
        %5361 = vmatpush1.msra.mxu0 0.0
        %5362 = vmatprep.subr.mxu0 0.0
        %5363 = vmatpush1.msra.mxu0 0.0
        %5364 = vmatprep.subr.mxu0 0.0
        %5365 = vmatpush1.msra.mxu0 0.0
        %5366 = vmatprep.subr.mxu0 0.0
        %5367 = vmatpush1.msra.mxu0 0.0
        %5368 = vmatprep.subr.mxu0 0.0
        %5369 = vmatpush1.msra.mxu0 0.0
        %5370 = vmatprep.subr.mxu0 0.0
        %5371 = vmatpush1.msra.mxu0 0.0
        %5372 = vmatprep.subr.mxu0 0.0
        %5373 = vmatpush1.msra.mxu0 0.0
        %5374 = vmatprep.subr.mxu0 0.0
        %5375 = vmatpush1.msra.mxu0 0.0
        %5376 = vmatprep.subr.mxu0 0.0
        %5377 = vmatpush1.msra.mxu0 0.0
        %5378 = vmatprep.subr.mxu0 0.0
        %5379 = vmatpush1.msra.mxu0 0.0
        %5380 = vmatprep.subr.mxu0 0.0
        %5381 = vmatpush1.msra.mxu0 0.0
        %5382 = vmatprep.subr.mxu0 0.0
        %5383 = vmatpush1.msra.mxu0 0.0
        %5384 = vmatprep.subr.mxu0 0.0
        %5385 = vmatpush1.msra.mxu0 0.0
        %5386 = vmatprep.subr.mxu0 0.0
        %5387 = vmatpush1.msra.mxu0 0.0
        %5388 = vmatprep.subr.mxu0 0.0
        %5389 = vmatpush1.msra.mxu0 0.0
        %5390 = vmatprep.subr.mxu0 0.0
        %5391 = vmatpush1.msra.mxu0 0.0
        %5392 = vmatprep.subr.mxu0 0.0
        %5393 = vmatpush1.msra.mxu0 0.0
        %5394 = vmatprep.subr.mxu0 0.0
        %5395 = vmatpush1.msra.mxu0 0.0
        %5396 = vmatprep.subr.mxu0 0.0
        %5397 = vmatpush1.msra.mxu0 0.0
        %5398 = vmatprep.subr.mxu0 0.0
        %5399 = vmatpush1.msra.mxu0 0.0
        %5400 = vmatprep.mubr.f32.mxu0 0.0
        %5401 = vmatmul.mubr.f32.gmra.mrb[0].mxu0 %v5334
        %v5402 = vpop.f32.mrb[0].mxu0
        %v5403 = vadd.f32 0.0, %v5402
        %v5404 = vpop.f32.mrb[0].mxu0
        %5405 = vdwg.mxu0
        %v5406 = vld [vmem:[%s9] sm:$0x1]
        %v5408 = vlaneseq
        %v5409 = vshrl.u32 %v5408, 7
        %v5410 = vsub.s32 0, %v5409
        %v5411 = vrot.slane %v5406, %v5410
        %5413 = vmatprep.subr.mxu0 0.0
        %5414 = vmatpush1.msra.mxu0 %v5403
        %5415 = vmatprep.subr.mxu0 0.0
        %5416 = vmatpush1.msra.mxu0 0.0
        %5417 = vmatprep.subr.mxu0 0.0
        %5418 = vmatpush1.msra.mxu0 0.0
        %5419 = vmatprep.subr.mxu0 0.0
        %5420 = vmatpush1.msra.mxu0 0.0
        %5421 = vmatprep.subr.mxu0 0.0
        %5422 = vmatpush1.msra.mxu0 0.0
        %5423 = vmatprep.subr.mxu0 0.0
        %5424 = vmatpush1.msra.mxu0 0.0
        %5425 = vmatprep.subr.mxu0 0.0
        %5426 = vmatpush1.msra.mxu0 0.0
        %5427 = vmatprep.subr.mxu0 0.0
        %5428 = vmatpush1.msra.mxu0 0.0
        %5429 = vmatprep.subr.mxu0 0.0
        %5430 = vmatpush1.msra.mxu0 0.0
        %5431 = vmatprep.subr.mxu0 0.0
        %5432 = vmatpush1.msra.mxu0 0.0
        %5433 = vmatprep.subr.mxu0 0.0
        %5434 = vmatpush1.msra.mxu0 0.0
        %5435 = vmatprep.subr.mxu0 0.0
        %5436 = vmatpush1.msra.mxu0 0.0
        %5437 = vmatprep.subr.mxu0 0.0
        %5438 = vmatpush1.msra.mxu0 0.0
        %5439 = vmatprep.subr.mxu0 0.0
        %5440 = vmatpush1.msra.mxu0 0.0
        %5441 = vmatprep.subr.mxu0 0.0
        %5442 = vmatpush1.msra.mxu0 0.0
        %5443 = vmatprep.subr.mxu0 0.0
        %5444 = vmatpush1.msra.mxu0 0.0
        %5445 = vmatprep.subr.mxu0 0.0
        %5446 = vmatpush1.msra.mxu0 0.0
        %5447 = vmatprep.subr.mxu0 0.0
        %5448 = vmatpush1.msra.mxu0 0.0
        %5449 = vmatprep.subr.mxu0 0.0
        %5450 = vmatpush1.msra.mxu0 0.0
        %5451 = vmatprep.subr.mxu0 0.0
        %5452 = vmatpush1.msra.mxu0 0.0
        %5453 = vmatprep.subr.mxu0 0.0
        %5454 = vmatpush1.msra.mxu0 0.0
        %5455 = vmatprep.subr.mxu0 0.0
        %5456 = vmatpush1.msra.mxu0 0.0
        %5457 = vmatprep.subr.mxu0 0.0
        %5458 = vmatpush1.msra.mxu0 0.0
        %5459 = vmatprep.subr.mxu0 0.0
        %5460 = vmatpush1.msra.mxu0 0.0
        %5461 = vmatprep.subr.mxu0 0.0
        %5462 = vmatpush1.msra.mxu0 0.0
        %5463 = vmatprep.subr.mxu0 0.0
        %5464 = vmatpush1.msra.mxu0 0.0
        %5465 = vmatprep.subr.mxu0 0.0
        %5466 = vmatpush1.msra.mxu0 0.0
        %5467 = vmatprep.subr.mxu0 0.0
        %5468 = vmatpush1.msra.mxu0 0.0
        %5469 = vmatprep.subr.mxu0 0.0
        %5470 = vmatpush1.msra.mxu0 0.0
        %5471 = vmatprep.subr.mxu0 0.0
        %5472 = vmatpush1.msra.mxu0 0.0
        %5473 = vmatprep.subr.mxu0 0.0
        %5474 = vmatpush1.msra.mxu0 0.0
        %5475 = vmatprep.subr.mxu0 0.0
        %5476 = vmatpush1.msra.mxu0 0.0
        %5477 = vmatprep.mubr.f32.mxu0 0.0
        %5478 = vmatmul.mubr.f32.gmra.mrb[0].mxu0 %v5256
        %v5479 = vpop.f32.mrb[0].mxu0
        %v5480 = vadd.f32 %v5411, %v5479
        %v5481 = vpop.f32.mrb[0].mxu0
        %5482 = vdwg.mxu0
        %v5483 = vmax.f32 %v5480, 0.0
        %v5484 = vld [vmem:[%s10] sm:$0xff]
        %v5485 = vld [vmem:[%s10 + $0x8] sm:$0xff]
        %v5486 = vld [vmem:[%s10 + $0x10] sm:$0xff]
        %v5487 = vld [vmem:[%s10 + $0x18] sm:$0xff]
        %v5488 = vld [vmem:[#allocation2] sm:$0x1]
        %v5490 = vlaneseq
        %v5491 = vshrl.u32 %v5490, 7
        %v5492 = vsub.s32 0, %v5491
        %v5493 = vrot.slane %v5488, %v5492
        %v5496 = vsel %vm5173, %v5483, 0
        %5498 = vmatprep.subr.mxu0 0.0
        %5499 = vmatpush1.msra.mxu0 %v5484
        %5500 = vmatprep.subr.mxu0 0.0
        %5501 = vmatpush1.msra.mxu0 %v5485
        %5502 = vmatprep.subr.mxu0 0.0
        %5503 = vmatpush1.msra.mxu0 %v5486
        %5504 = vmatprep.subr.mxu0 0.0
        %5505 = vmatpush1.msra.mxu0 %v5487
        %5506 = vmatprep.subr.mxu0 0.0
        %5507 = vmatpush1.msra.mxu0 0.0
        %5508 = vmatprep.subr.mxu0 0.0
        %5509 = vmatpush1.msra.mxu0 0.0
        %5510 = vmatprep.subr.mxu0 0.0
        %5511 = vmatpush1.msra.mxu0 0.0
        %5512 = vmatprep.subr.mxu0 0.0
        %5513 = vmatpush1.msra.mxu0 0.0
        %5514 = vmatprep.subr.mxu0 0.0
        %5515 = vmatpush1.msra.mxu0 0.0
        %5516 = vmatprep.subr.mxu0 0.0
        %5517 = vmatpush1.msra.mxu0 0.0
        %5518 = vmatprep.subr.mxu0 0.0
        %5519 = vmatpush1.msra.mxu0 0.0
        %5520 = vmatprep.subr.mxu0 0.0
        %5521 = vmatpush1.msra.mxu0 0.0
        %5522 = vmatprep.subr.mxu0 0.0
        %5523 = vmatpush1.msra.mxu0 0.0
        %5524 = vmatprep.subr.mxu0 0.0
        %5525 = vmatpush1.msra.mxu0 0.0
        %5526 = vmatprep.subr.mxu0 0.0
        %5527 = vmatpush1.msra.mxu0 0.0
        %5528 = vmatprep.subr.mxu0 0.0
        %5529 = vmatpush1.msra.mxu0 0.0
        %5530 = vmatprep.subr.mxu0 0.0
        %5531 = vmatpush1.msra.mxu0 0.0
        %5532 = vmatprep.subr.mxu0 0.0
        %5533 = vmatpush1.msra.mxu0 0.0
        %5534 = vmatprep.subr.mxu0 0.0
        %5535 = vmatpush1.msra.mxu0 0.0
        %5536 = vmatprep.subr.mxu0 0.0
        %5537 = vmatpush1.msra.mxu0 0.0
        %5538 = vmatprep.subr.mxu0 0.0
        %5539 = vmatpush1.msra.mxu0 0.0
        %5540 = vmatprep.subr.mxu0 0.0
        %5541 = vmatpush1.msra.mxu0 0.0
        %5542 = vmatprep.subr.mxu0 0.0
        %5543 = vmatpush1.msra.mxu0 0.0
        %5544 = vmatprep.subr.mxu0 0.0
        %5545 = vmatpush1.msra.mxu0 0.0
        %5546 = vmatprep.subr.mxu0 0.0
        %5547 = vmatpush1.msra.mxu0 0.0
        %5548 = vmatprep.subr.mxu0 0.0
        %5549 = vmatpush1.msra.mxu0 0.0
        %5550 = vmatprep.subr.mxu0 0.0
        %5551 = vmatpush1.msra.mxu0 0.0
        %5552 = vmatprep.subr.mxu0 0.0
        %5553 = vmatpush1.msra.mxu0 0.0
        %5554 = vmatprep.subr.mxu0 0.0
        %5555 = vmatpush1.msra.mxu0 0.0
        %5556 = vmatprep.subr.mxu0 0.0
        %5557 = vmatpush1.msra.mxu0 0.0
        %5558 = vmatprep.subr.mxu0 0.0
        %5559 = vmatpush1.msra.mxu0 0.0
        %5560 = vmatprep.subr.mxu0 0.0
        %5561 = vmatpush1.msra.mxu0 0.0
        %5562 = vmatprep.mubr.f32.mxu0 0.0
        %5563 = vmatmul.mubr.f32.gmra.mrb[0].mxu0 %v5496
        %v5564 = vpop.f32.mrb[0].mxu0
        %v5565 = vadd.f32 %v5493, %v5564
        %v5566 = vpop.f32.mrb[0].mxu0
        %5567 = vdwg.mxu0
        %v5568 = vld [vmem:[%s12] sm:$0xff]
        %vm5569 = vcmp.eq.f32.partialorder %v5568, 0.0
        %5571 = vset.pattern.permute.xlu0 0
        %5572 = vperm.xlu0 %5571, %v5565
        %v5573 = vpop.permute.xlu0 %5572
        %v5575 = vsel %vm5569, -1e+09, %v5573
        %vm5576 = vcmask 23552
        %v5577 = vsel %vm5576, %v5575, -inf
        %v5578 = vrot.slane %v5577, 4
        %v5579 = vmax.f32 %v5577, %v5578
        %v5580 = vrot.slane %v5579, 2
        %v5581 = vmax.f32 %v5579, %v5580
        %v5582 = vrot.slane %v5581, 1
        %v5583 = vmax.f32 %v5581, %v5582
        %v5584 = vsub.f32 %v5575, %v5583
        %v5585 = vmul.f32 %v5584, 1.442695
        %v5586 = vpow.pop %v5585
        %v5587 = vsel %vm5576, %v5586, 0.0
        %v5588 = vrot.slane %v5587, 4
        %v5589 = vadd.f32 %v5587, %v5588
        %v5590 = vrot.slane %v5589, 2
        %v5591 = vadd.f32 %v5589, %v5590
        %v5592 = vrot.slane %v5591, 1
        %v5593 = vadd.f32 %v5591, %v5592
        %v5594 = vlog2.pop %v5593
        %v5595 = vmul.f32 %v5594, 0.6931472
        %v5596 = vsub.f32 %v5584, %v5595
        %v5597 = vsel %vm5576, %v5596, 0.0
        %vm5598 = vcmask 97280
        %5599 = vst.msk [vmem:[%s517] sm:$0xff] %vm5598, %v5597
        %s5600 = sand.u32 %s316, 1
        %s5601 = scalar_lea.sflag [#allocation6], %s5600
        %s5602 = sand.u32 %s316, 1
        %s5603 = smul.addr %s5602, 8
        %s5604 = scalar_lea.vmem [#allocation7], %s5603
        // Predicated region
        $region115: #{tpu_custom_call.1} parent=105 // pred_check
          %p5605 = pneg %p326
        $region116: #{tpu_custom_call.1} parent=105 // pred_check_branch
          %5607 = sbr.rel (%p5605) target = $region118
        $region117: #{tpu_custom_call.1} parent=105 // pred_region
          %s5609 = ssub.s32 128, 128
          %5610 = vsyncadd %s5601, %s5609
          %s5611 = smul.addr %s30, 128
          %s5612 = scalar_lea.hbm %s13, %s5611
          %s5614 = sshll.u32 %s5604, 4
          %s5615 = int_to_ptr.vmem [resolvable:$true] %s5614
          %5617 = dma.vmem_to_hbm [thread:$0]  %s5615, 128, %s5612, %s5601
        $region118: #{tpu_custom_call.1} parent=105 // pred_fallthru
          _
      $region106: #{tpu_custom_call.1} parent=5 // pred_fallthru
        _
      %p5618 = scmp.le.s32.totalorder 2, %s25
      // Predicated region
      $region119: #{tpu_custom_call.1} parent=5 // pred_check
        %p5619 = pneg %p5618
      $region120: #{tpu_custom_call.1} parent=5 // pred_check_branch
        %5621 = sbr.rel (%p5619) target = $region122
      $region121: #{tpu_custom_call.1} parent=5 // pred_region
        %s5622 = ssub.s32 %s25, 2
        // Predicated region
        $region123: #{tpu_custom_call.1} parent=121 // pred_check
          %p5623 = pneg %p332
        $region124: #{tpu_custom_call.1} parent=121 // pred_check_branch
          %5625 = sbr.rel (%p5623) target = $region126
        $region125: #{tpu_custom_call.1} parent=121 // pred_region
          %s5626 = sand.u32 %s317, 1
          %s5627 = scalar_lea.sflag [#allocation6], %s5626
          %s5628 = sand.u32 %s317, 1
          %s5629 = smul.addr %s5628, 8
          %s5630 = scalar_lea.vmem [#allocation7], %s5629
          %5631 = dma.done %s5627, 128
        $region126: #{tpu_custom_call.1} parent=121 // pred_fallthru
          _
      $region122: #{tpu_custom_call.1} parent=5 // pred_fallthru
        _
    $region6: #{tpu_custom_call.1} parent=1 // loop_footer
      %s29 = sadd.s32 1, %s25
    $region7: #{tpu_custom_call.1} parent=1 // loop_footer_branch
      %24 = sbr.rel target = $region3
    $region8: #{tpu_custom_call.1} parent=1 // loop_exit
      _
    %5632 = vsyncpa [#allocation5], 1
    %s5633 = scalar_lea.sflag [#allocation5], 1
    %5634 = vsyncpa %s5633, 1
    %5635 = vsyncpa [#allocation6], 1
    %s5636 = scalar_lea.sflag [#allocation6], 1
    %5637 = vsyncpa %s5636, 1

</llo_original>
